<compile_context>
chip_gen: v5e
topology: v5e:2x2
jax: 0.10.0
libtpu: 0.0.40
codegen_flags: <defaults>
</compile_context>

<pallas_src>
import functools

import jax
import jax.numpy as jnp
from jax.experimental import pallas as pl
from jax.experimental.pallas import tpu as pltpu

BN_EPS = 1e-5
SUBLANE_PACK = 16          # bf16 sublane tile; Cin is zero-padded up to this


def _round_up(x, m):
    return (x + m - 1) // m * m


# ------------------------------ Pallas kernel --------------------------------
def _left_to_right_kernel(*refs, meta):
    """refs = (x0..x4, w0..w4, b0..b4, out0..out4, slab0..slab4).
    meta[lv] = (taps, m): taps = 36 static lane offsets into the flattened
    halo-padded image (branch-major, then ky, kx); m = H * Wp."""
    nl = len(meta)
    x_refs = refs[0:nl]
    w_refs = refs[nl:2 * nl]
    b_refs = refs[2 * nl:3 * nl]
    out_refs = refs[3 * nl:4 * nl]
    slab_refs = refs[4 * nl:5 * nl]

    for lv, (taps, m) in enumerate(meta):
        x = x_refs[lv][0]                       # (Cin_p, L) bf16 (few vregs)
        slab = slab_refs[lv]                    # (36*Cin_p, m) bf16 VMEM scratch
        cin_p = x.shape[0]

        # im2col: each tap is a pure lane slice; stores are sublane-tile aligned.
        for t, s in enumerate(taps):
            slab[t * cin_p:(t + 1) * cin_p, :] = x[:, s:s + m]

        # one fused MXU matmul: 4 dilated 3x3 convs + folded 1x1 skip, all + BN.
        acc = jnp.dot(w_refs[lv][...], slab[...],
                      preferred_element_type=jnp.float32)      # (Cout, m) f32
        out_refs[lv][0] = jnp.maximum(acc + b_refs[lv][...], 0.0)


# ------------------------------ glue / wrapper --------------------------------
def _fold_and_pack(folded_params, cin, cout, cin_p):
    """Pack 4 dilated-conv (+BN) weights and the 1x1 skip (+BN) into one
    (Cout, 36*Cin_p) bf16 weight (skip folded into each branch's centre tap)
    plus a (Cout, 1) f32 bias."""
    wd, bd, ws, bs = folded_params   # (4,3,3,cin,cq), (4,1,cq), (cin,cout), (1,cout)
    cq = cout // 4
    w_all = jnp.zeros((cout, 36 * cin_p), jnp.float32)
    for i in range(4):
        rows = slice(i * cq, (i + 1) * cq)
        for t in range(9):
            ky, kx = divmod(t, 3)
            c0 = (i * 9 + t) * cin_p
            w_all = w_all.at[rows, c0:c0 + cin].set(wd[i, ky, kx].T)   # (cq, cin)
        # fold 1x1 skip conv into this branch's centre tap (dy = dx = 0)
        c0 = (i * 9 + 4) * cin_p
        w_all = w_all.at[rows, c0:c0 + cin].add(ws[:, rows].T)
    bias = (jnp.concatenate([bd[i, 0] for i in range(4)]) + bs[0]).reshape(cout, 1)
    return w_all.astype(jnp.bfloat16), bias


def left_to_right_pallas(inputs_nchw, all_params, all_dilations):
    """inputs: list of 5 NCHW f32 arrays -> tuple of 5 NCHW f32 outputs."""
    N = inputs_nchw[0].shape[0]

    xs, ws, bs = [], [], []
    in_specs, out_specs, out_shapes, scratch_shapes = [], [], [], []
    meta, post = [], []

    for x, params, dils in zip(inputs_nchw, all_params, all_dilations):
        _, cin, H, W = x.shape
        cout = params[2].shape[1]
        cin_p = _round_up(cin, SUBLANE_PACK)
        pad = max(dils)
        Hp, Wp = H + 2 * pad, W + 2 * pad
        L = Hp * Wp + 2 * pad          # flat spatial + halo for extreme taps
        m = H * Wp                     # "extended" output width (cols sliced later)

        # activation: channel-major, zero-pad channels to cin_p, flatten spatial
        xp = jnp.pad(x, ((0, 0), (0, cin_p - cin), (pad, pad), (pad, pad)))
        xf = jnp.pad(xp.reshape(N, cin_p, Hp * Wp), ((0, 0), (0, 0), (pad, pad)))
        xs.append(xf.astype(jnp.bfloat16))

        w_all, b_all = _fold_and_pack(params, cin, cout, cin_p)
        ws.append(w_all)
        bs.append(b_all)

        taps = tuple(pad + (pad + (ky - 1) * d) * Wp + (kx - 1) * d
                     for d in dils for ky in range(3) for kx in range(3))
        meta.append((taps, m))
        post.append((cout, H, W, Wp, pad))

        in_specs.append(pl.BlockSpec((1, cin_p, L), lambda b: (b, 0, 0)))
        out_specs.append(pl.BlockSpec((1, cout, m), lambda b: (b, 0, 0)))
        out_shapes.append(jax.ShapeDtypeStruct((N, cout, m), jnp.float32))
        scratch_shapes.append(pltpu.VMEM((36 * cin_p, m), jnp.bfloat16))

    w_specs = [pl.BlockSpec(w.shape, lambda b: (0, 0)) for w in ws]
    b_specs = [pl.BlockSpec(b.shape, lambda b: (0, 0)) for b in bs]

    kernel = functools.partial(_left_to_right_kernel, meta=tuple(meta))
    outs = pl.pallas_call(
        kernel,
        out_shape=tuple(out_shapes),
        grid=(N,),
        in_specs=in_specs + w_specs + b_specs,
        out_specs=tuple(out_specs),
        scratch_shapes=scratch_shapes,
        compiler_params=pltpu.CompilerParams(
            # batch elements are independent: lets v7x's 2 TCs split the batch;
            # no-op on single-TC v5e/v6e.
            dimension_semantics=("parallel",)),
    )(*xs, *ws, *bs)

    results = []
    for y, (cout, H, W, Wp, pad) in zip(outs, post):
        results.append(y.reshape(N, cout, H, Wp)[:, :, :, pad:pad + W])
    return tuple(results)


# ------------------------ parameter construction (glue) -----------------------
def make_skip_basic_params(key, cin, cout):
    """Deterministic weights; BN (eval) folded into conv weight + bias."""
    cq = cout // 4
    keys = jax.random.split(key, 25)
    k = 0
    wd, bd = [], []
    for _ in range(4):
        w = 0.1 * jax.random.normal(keys[k], (3, 3, cin, cq), jnp.float32); k += 1
        gamma = 1.0 + 0.1 * jax.random.normal(keys[k], (cq,), jnp.float32); k += 1
        beta = 0.1 * jax.random.normal(keys[k], (cq,), jnp.float32); k += 1
        mean = 0.1 * jax.random.normal(keys[k], (cq,), jnp.float32); k += 1
        var = jax.random.uniform(keys[k], (cq,), jnp.float32, 0.5, 1.5); k += 1
        scale = gamma / jnp.sqrt(var + BN_EPS)
        wd.append(w * scale[None, None, None, :])
        bd.append((beta - mean * scale)[None, :])          # (1, cq)
    ws = 0.1 * jax.random.normal(keys[k], (cin, cout), jnp.float32); k += 1
    gamma = 1.0 + 0.1 * jax.random.normal(keys[k], (cout,), jnp.float32); k += 1
    beta = 0.1 * jax.random.normal(keys[k], (cout,), jnp.float32); k += 1
    mean = 0.1 * jax.random.normal(keys[k], (cout,), jnp.float32); k += 1
    var = jax.random.uniform(keys[k], (cout,), jnp.float32, 0.5, 1.5); k += 1
    scale = gamma / jnp.sqrt(var + BN_EPS)
    ws = ws * scale[None, :]
    bs = (beta - mean * scale)[None, :]                    # (1, cout)
    return jnp.stack(wd, 0), jnp.stack(bd, 0), ws, bs      # (4,3,3,cin,cq), (4,1,cq)


# --------------------------- plain-JAX reference ------------------------------
def skip_basic_ref(x_nhwc, folded_params, dilations):
    wd, bd, ws, bs = folded_params
    outs = []
    for i, dil in enumerate(dilations):
        y = jax.lax.conv_general_dilated(
            x_nhwc, wd[i], window_strides=(1, 1),
            padding=[(dil, dil), (dil, dil)], rhs_dilation=(dil, dil),
            dimension_numbers=("NHWC", "HWIO", "NHWC"),
            precision=jax.lax.Precision.HIGHEST)
        outs.append(y + bd[i][0])
    skip = jax.lax.conv_general_dilated(
        x_nhwc, ws[None, None], window_strides=(1, 1), padding="VALID",
        dimension_numbers=("NHWC", "HWIO", "NHWC"),
        precision=jax.lax.Precision.HIGHEST) + bs[0]
    return jnp.maximum(jnp.concatenate(outs, axis=-1) + skip, 0.0)


if __name__ == "__main__":
    N = 2
    in_c = [4, 8, 8, 16, 16]
    out_c = [16, 16, 32, 32, 32]
    d = [[1, 2, 3, 4], [1, 3, 5, 7], [1, 2, 3, 4], [1, 3, 5, 7], [1, 2, 3, 4]]
    spatial = [16, 16, 16, 8, 8]

    root = jax.random.PRNGKey(0)
    pkey, xkey = jax.random.split(root)
    pkeys = jax.random.split(pkey, 5)
    xkeys = jax.random.split(xkey, 5)

    params = [make_skip_basic_params(pkeys[i], in_c[i], out_c[i]) for i in range(5)]
    # PyTorch-style NCHW inputs: r_level0 .. r_level4
    inputs = [jax.random.normal(xkeys[i], (N, in_c[i], spatial[i], spatial[i]),
                                jnp.float32) for i in range(5)]

    outs = left_to_right_pallas(inputs, params, d)
    outs = jax.block_until_ready(outs)

    ok = True
    for i in range(5):
        assert outs[i].shape == (N, out_c[i], spatial[i], spatial[i])
        x_nhwc = jnp.transpose(inputs[i], (0, 2, 3, 1))
        ref = jnp.transpose(skip_basic_ref(x_nhwc, params[i], d[i]), (0, 3, 1, 2))
        ok = ok and bool(jnp.allclose(outs[i], ref, atol=2e-2, rtol=2e-2))

    if ok:
        print("KERNEL_OK")
    else:
        print("MISMATCH")
</pallas_src>

<mosaic_0001>
module attributes {stable_mosaic.version = 11 : i64} {
  func.func @_left_to_right_kernel(%arg0: i32, %arg1: memref<1x16x584xbf16, #tpu.memory_space<vmem>>, %arg2: memref<1x16x914xbf16, #tpu.memory_space<vmem>>, %arg3: memref<1x16x584xbf16, #tpu.memory_space<vmem>>, %arg4: memref<1x16x498xbf16, #tpu.memory_space<vmem>>, %arg5: memref<1x16x264xbf16, #tpu.memory_space<vmem>>, %arg6: memref<16x576xbf16, #tpu.memory_space<vmem>>, %arg7: memref<16x576xbf16, #tpu.memory_space<vmem>>, %arg8: memref<32x576xbf16, #tpu.memory_space<vmem>>, %arg9: memref<32x576xbf16, #tpu.memory_space<vmem>>, %arg10: memref<32x576xbf16, #tpu.memory_space<vmem>>, %arg11: memref<16x1xf32, #tpu.memory_space<vmem>>, %arg12: memref<16x1xf32, #tpu.memory_space<vmem>>, %arg13: memref<32x1xf32, #tpu.memory_space<vmem>>, %arg14: memref<32x1xf32, #tpu.memory_space<vmem>>, %arg15: memref<32x1xf32, #tpu.memory_space<vmem>>, %arg16: memref<1x16x384xf32, #tpu.memory_space<vmem>>, %arg17: memref<1x16x480xf32, #tpu.memory_space<vmem>>, %arg18: memref<1x32x384xf32, #tpu.memory_space<vmem>>, %arg19: memref<1x32x176xf32, #tpu.memory_space<vmem>>, %arg20: memref<1x32x128xf32, #tpu.memory_space<vmem>>, %arg21: memref<576x384xbf16, #tpu.memory_space<vmem>>, %arg22: memref<576x480xbf16, #tpu.memory_space<vmem>>, %arg23: memref<576x384xbf16, #tpu.memory_space<vmem>>, %arg24: memref<576x176xbf16, #tpu.memory_space<vmem>>, %arg25: memref<576x128xbf16, #tpu.memory_space<vmem>>) attributes {dimension_semantics = [#tpu.dimension_semantics<parallel>], iteration_bounds = array<i64: 2>, scalar_prefetch = 0 : i64, scratch_operands = 5 : i64, tpu.core_type = #tpu.core_type<tc>, window_params = [{transform_indices = @transform_0, window_bounds = array<i64: 1, 16, 584>}, {transform_indices = @transform_1, window_bounds = array<i64: 1, 16, 914>}, {transform_indices = @transform_2, window_bounds = array<i64: 1, 16, 584>}, {transform_indices = @transform_3, window_bounds = array<i64: 1, 16, 498>}, {transform_indices = @transform_4, window_bounds = array<i64: 1, 16, 264>}, {pipeline_mode = #tpu.pipeline_mode<synchronous>, transform_indices = @transform_5, window_bounds = array<i64: 16, 576>}, {pipeline_mode = #tpu.pipeline_mode<synchronous>, transform_indices = @transform_6, window_bounds = array<i64: 16, 576>}, {pipeline_mode = #tpu.pipeline_mode<synchronous>, transform_indices = @transform_7, window_bounds = array<i64: 32, 576>}, {pipeline_mode = #tpu.pipeline_mode<synchronous>, transform_indices = @transform_8, window_bounds = array<i64: 32, 576>}, {pipeline_mode = #tpu.pipeline_mode<synchronous>, transform_indices = @transform_9, window_bounds = array<i64: 32, 576>}, {pipeline_mode = #tpu.pipeline_mode<synchronous>, transform_indices = @transform_10, window_bounds = array<i64: 16, 1>}, {pipeline_mode = #tpu.pipeline_mode<synchronous>, transform_indices = @transform_11, window_bounds = array<i64: 16, 1>}, {pipeline_mode = #tpu.pipeline_mode<synchronous>, transform_indices = @transform_12, window_bounds = array<i64: 32, 1>}, {pipeline_mode = #tpu.pipeline_mode<synchronous>, transform_indices = @transform_13, window_bounds = array<i64: 32, 1>}, {pipeline_mode = #tpu.pipeline_mode<synchronous>, transform_indices = @transform_14, window_bounds = array<i64: 32, 1>}, {transform_indices = @transform_15, window_bounds = array<i64: 1, 16, 384>}, {transform_indices = @transform_16, window_bounds = array<i64: 1, 16, 480>}, {transform_indices = @transform_17, window_bounds = array<i64: 1, 32, 384>}, {transform_indices = @transform_18, window_bounds = array<i64: 1, 32, 176>}, {transform_indices = @transform_19, window_bounds = array<i64: 1, 32, 128>}]} {
    %c0 = arith.constant 0 : index
    %c0_0 = arith.constant 0 : index
    %c0_1 = arith.constant 0 : index
    %0 = vector.load %arg1[%c0, %c0_0, %c0_1] : memref<1x16x584xbf16, #tpu.memory_space<vmem>>, vector<1x16x584xbf16>
    %1 = vector.shape_cast %0 : vector<1x16x584xbf16> to vector<16x584xbf16>
    %2 = vector.extract_strided_slice %1 {offsets = [0, 75], sizes = [16, 384], strides = [1, 1]} : vector<16x584xbf16> to vector<16x384xbf16>
    %c0_2 = arith.constant 0 : index
    %c0_3 = arith.constant 0 : index
    %3 = vector.load %arg21[%c0_2, %c0_3] : memref<576x384xbf16, #tpu.memory_space<vmem>>, vector<16x384xbf16>
    tpu.vector_store %arg21[%c0_2, %c0_3], %2 {strides = array<i32>} : memref<576x384xbf16, #tpu.memory_space<vmem>>, vector<16x384xbf16>,
    %4 = vector.extract_strided_slice %1 {offsets = [0, 76], sizes = [16, 384], strides = [1, 1]} : vector<16x584xbf16> to vector<16x384xbf16>
    %c16 = arith.constant 16 : index
    %c0_4 = arith.constant 0 : index
    %5 = vector.load %arg21[%c16, %c0_4] : memref<576x384xbf16, #tpu.memory_space<vmem>>, vector<16x384xbf16>
    tpu.vector_store %arg21[%c16, %c0_4], %4 {strides = array<i32>} : memref<576x384xbf16, #tpu.memory_space<vmem>>, vector<16x384xbf16>,
    %6 = vector.extract_strided_slice %1 {offsets = [0, 77], sizes = [16, 384], strides = [1, 1]} : vector<16x584xbf16> to vector<16x384xbf16>
    %c32 = arith.constant 32 : index
    %c0_5 = arith.constant 0 : index
    %7 = vector.load %arg21[%c32, %c0_5] : memref<576x384xbf16, #tpu.memory_space<vmem>>, vector<16x384xbf16>
    tpu.vector_store %arg21[%c32, %c0_5], %6 {strides = array<i32>} : memref<576x384xbf16, #tpu.memory_space<vmem>>, vector<16x384xbf16>,
    %8 = vector.extract_strided_slice %1 {offsets = [0, 99], sizes = [16, 384], strides = [1, 1]} : vector<16x584xbf16> to vector<16x384xbf16>
    %c48 = arith.constant 48 : index
    %c0_6 = arith.constant 0 : index
    %9 = vector.load %arg21[%c48, %c0_6] : memref<576x384xbf16, #tpu.memory_space<vmem>>, vector<16x384xbf16>
    tpu.vector_store %arg21[%c48, %c0_6], %8 {strides = array<i32>} : memref<576x384xbf16, #tpu.memory_space<vmem>>, vector<16x384xbf16>,
    %10 = vector.extract_strided_slice %1 {offsets = [0, 100], sizes = [16, 384], strides = [1, 1]} : vector<16x584xbf16> to vector<16x384xbf16>
    %c64 = arith.constant 64 : index
    %c0_7 = arith.constant 0 : index
    %11 = vector.load %arg21[%c64, %c0_7] : memref<576x384xbf16, #tpu.memory_space<vmem>>, vector<16x384xbf16>
    tpu.vector_store %arg21[%c64, %c0_7], %10 {strides = array<i32>} : memref<576x384xbf16, #tpu.memory_space<vmem>>, vector<16x384xbf16>,
    %12 = vector.extract_strided_slice %1 {offsets = [0, 101], sizes = [16, 384], strides = [1, 1]} : vector<16x584xbf16> to vector<16x384xbf16>
    %c80 = arith.constant 80 : index
    %c0_8 = arith.constant 0 : index
    %13 = vector.load %arg21[%c80, %c0_8] : memref<576x384xbf16, #tpu.memory_space<vmem>>, vector<16x384xbf16>
    tpu.vector_store %arg21[%c80, %c0_8], %12 {strides = array<i32>} : memref<576x384xbf16, #tpu.memory_space<vmem>>, vector<16x384xbf16>,
    %14 = vector.extract_strided_slice %1 {offsets = [0, 123], sizes = [16, 384], strides = [1, 1]} : vector<16x584xbf16> to vector<16x384xbf16>
    %c96 = arith.constant 96 : index
    %c0_9 = arith.constant 0 : index
    %15 = vector.load %arg21[%c96, %c0_9] : memref<576x384xbf16, #tpu.memory_space<vmem>>, vector<16x384xbf16>
    tpu.vector_store %arg21[%c96, %c0_9], %14 {strides = array<i32>} : memref<576x384xbf16, #tpu.memory_space<vmem>>, vector<16x384xbf16>,
    %16 = vector.extract_strided_slice %1 {offsets = [0, 124], sizes = [16, 384], strides = [1, 1]} : vector<16x584xbf16> to vector<16x384xbf16>
    %c112 = arith.constant 112 : index
    %c0_10 = arith.constant 0 : index
    %17 = vector.load %arg21[%c112, %c0_10] : memref<576x384xbf16, #tpu.memory_space<vmem>>, vector<16x384xbf16>
    tpu.vector_store %arg21[%c112, %c0_10], %16 {strides = array<i32>} : memref<576x384xbf16, #tpu.memory_space<vmem>>, vector<16x384xbf16>,
    %18 = vector.extract_strided_slice %1 {offsets = [0, 125], sizes = [16, 384], strides = [1, 1]} : vector<16x584xbf16> to vector<16x384xbf16>
    %c128 = arith.constant 128 : index
    %c0_11 = arith.constant 0 : index
    %19 = vector.load %arg21[%c128, %c0_11] : memref<576x384xbf16, #tpu.memory_space<vmem>>, vector<16x384xbf16>
    tpu.vector_store %arg21[%c128, %c0_11], %18 {strides = array<i32>} : memref<576x384xbf16, #tpu.memory_space<vmem>>, vector<16x384xbf16>,
    %20 = vector.extract_strided_slice %1 {offsets = [0, 50], sizes = [16, 384], strides = [1, 1]} : vector<16x584xbf16> to vector<16x384xbf16>
    %c144 = arith.constant 144 : index
    %c0_12 = arith.constant 0 : index
    %21 = vector.load %arg21[%c144, %c0_12] : memref<576x384xbf16, #tpu.memory_space<vmem>>, vector<16x384xbf16>
    tpu.vector_store %arg21[%c144, %c0_12], %20 {strides = array<i32>} : memref<576x384xbf16, #tpu.memory_space<vmem>>, vector<16x384xbf16>,
    %22 = vector.extract_strided_slice %1 {offsets = [0, 52], sizes = [16, 384], strides = [1, 1]} : vector<16x584xbf16> to vector<16x384xbf16>
    %c160 = arith.constant 160 : index
    %c0_13 = arith.constant 0 : index
    %23 = vector.load %arg21[%c160, %c0_13] : memref<576x384xbf16, #tpu.memory_space<vmem>>, vector<16x384xbf16>
    tpu.vector_store %arg21[%c160, %c0_13], %22 {strides = array<i32>} : memref<576x384xbf16, #tpu.memory_space<vmem>>, vector<16x384xbf16>,
    %24 = vector.extract_strided_slice %1 {offsets = [0, 54], sizes = [16, 384], strides = [1, 1]} : vector<16x584xbf16> to vector<16x384xbf16>
    %c176 = arith.constant 176 : index
    %c0_14 = arith.constant 0 : index
    %25 = vector.load %arg21[%c176, %c0_14] : memref<576x384xbf16, #tpu.memory_space<vmem>>, vector<16x384xbf16>
    tpu.vector_store %arg21[%c176, %c0_14], %24 {strides = array<i32>} : memref<576x384xbf16, #tpu.memory_space<vmem>>, vector<16x384xbf16>,
    %26 = vector.extract_strided_slice %1 {offsets = [0, 98], sizes = [16, 384], strides = [1, 1]} : vector<16x584xbf16> to vector<16x384xbf16>
    %c192 = arith.constant 192 : index
    %c0_15 = arith.constant 0 : index
    %27 = vector.load %arg21[%c192, %c0_15] : memref<576x384xbf16, #tpu.memory_space<vmem>>, vector<16x384xbf16>
    tpu.vector_store %arg21[%c192, %c0_15], %26 {strides = array<i32>} : memref<576x384xbf16, #tpu.memory_space<vmem>>, vector<16x384xbf16>,
    %28 = vector.extract_strided_slice %1 {offsets = [0, 100], sizes = [16, 384], strides = [1, 1]} : vector<16x584xbf16> to vector<16x384xbf16>
    %c208 = arith.constant 208 : index
    %c0_16 = arith.constant 0 : index
    %29 = vector.load %arg21[%c208, %c0_16] : memref<576x384xbf16, #tpu.memory_space<vmem>>, vector<16x384xbf16>
    tpu.vector_store %arg21[%c208, %c0_16], %28 {strides = array<i32>} : memref<576x384xbf16, #tpu.memory_space<vmem>>, vector<16x384xbf16>,
    %30 = vector.extract_strided_slice %1 {offsets = [0, 102], sizes = [16, 384], strides = [1, 1]} : vector<16x584xbf16> to vector<16x384xbf16>
    %c224 = arith.constant 224 : index
    %c0_17 = arith.constant 0 : index
    %31 = vector.load %arg21[%c224, %c0_17] : memref<576x384xbf16, #tpu.memory_space<vmem>>, vector<16x384xbf16>
    tpu.vector_store %arg21[%c224, %c0_17], %30 {strides = array<i32>} : memref<576x384xbf16, #tpu.memory_space<vmem>>, vector<16x384xbf16>,
    %32 = vector.extract_strided_slice %1 {offsets = [0, 146], sizes = [16, 384], strides = [1, 1]} : vector<16x584xbf16> to vector<16x384xbf16>
    %c240 = arith.constant 240 : index
    %c0_18 = arith.constant 0 : index
    %33 = vector.load %arg21[%c240, %c0_18] : memref<576x384xbf16, #tpu.memory_space<vmem>>, vector<16x384xbf16>
    tpu.vector_store %arg21[%c240, %c0_18], %32 {strides = array<i32>} : memref<576x384xbf16, #tpu.memory_space<vmem>>, vector<16x384xbf16>,
    %34 = vector.extract_strided_slice %1 {offsets = [0, 148], sizes = [16, 384], strides = [1, 1]} : vector<16x584xbf16> to vector<16x384xbf16>
    %c256 = arith.constant 256 : index
    %c0_19 = arith.constant 0 : index
    %35 = vector.load %arg21[%c256, %c0_19] : memref<576x384xbf16, #tpu.memory_space<vmem>>, vector<16x384xbf16>
    tpu.vector_store %arg21[%c256, %c0_19], %34 {strides = array<i32>} : memref<576x384xbf16, #tpu.memory_space<vmem>>, vector<16x384xbf16>,
    %36 = vector.extract_strided_slice %1 {offsets = [0, 150], sizes = [16, 384], strides = [1, 1]} : vector<16x584xbf16> to vector<16x384xbf16>
    %c272 = arith.constant 272 : index
    %c0_20 = arith.constant 0 : index
    %37 = vector.load %arg21[%c272, %c0_20] : memref<576x384xbf16, #tpu.memory_space<vmem>>, vector<16x384xbf16>
    tpu.vector_store %arg21[%c272, %c0_20], %36 {strides = array<i32>} : memref<576x384xbf16, #tpu.memory_space<vmem>>, vector<16x384xbf16>,
    %38 = vector.extract_strided_slice %1 {offsets = [0, 25], sizes = [16, 384], strides = [1, 1]} : vector<16x584xbf16> to vector<16x384xbf16>
    %c288 = arith.constant 288 : index
    %c0_21 = arith.constant 0 : index
    %39 = vector.load %arg21[%c288, %c0_21] : memref<576x384xbf16, #tpu.memory_space<vmem>>, vector<16x384xbf16>
    tpu.vector_store %arg21[%c288, %c0_21], %38 {strides = array<i32>} : memref<576x384xbf16, #tpu.memory_space<vmem>>, vector<16x384xbf16>,
    %40 = vector.extract_strided_slice %1 {offsets = [0, 28], sizes = [16, 384], strides = [1, 1]} : vector<16x584xbf16> to vector<16x384xbf16>
    %c304 = arith.constant 304 : index
    %c0_22 = arith.constant 0 : index
    %41 = vector.load %arg21[%c304, %c0_22] : memref<576x384xbf16, #tpu.memory_space<vmem>>, vector<16x384xbf16>
    tpu.vector_store %arg21[%c304, %c0_22], %40 {strides = array<i32>} : memref<576x384xbf16, #tpu.memory_space<vmem>>, vector<16x384xbf16>,
    %42 = vector.extract_strided_slice %1 {offsets = [0, 31], sizes = [16, 384], strides = [1, 1]} : vector<16x584xbf16> to vector<16x384xbf16>
    %c320 = arith.constant 320 : index
    %c0_23 = arith.constant 0 : index
    %43 = vector.load %arg21[%c320, %c0_23] : memref<576x384xbf16, #tpu.memory_space<vmem>>, vector<16x384xbf16>
    tpu.vector_store %arg21[%c320, %c0_23], %42 {strides = array<i32>} : memref<576x384xbf16, #tpu.memory_space<vmem>>, vector<16x384xbf16>,
    %44 = vector.extract_strided_slice %1 {offsets = [0, 97], sizes = [16, 384], strides = [1, 1]} : vector<16x584xbf16> to vector<16x384xbf16>
    %c336 = arith.constant 336 : index
    %c0_24 = arith.constant 0 : index
    %45 = vector.load %arg21[%c336, %c0_24] : memref<576x384xbf16, #tpu.memory_space<vmem>>, vector<16x384xbf16>
    tpu.vector_store %arg21[%c336, %c0_24], %44 {strides = array<i32>} : memref<576x384xbf16, #tpu.memory_space<vmem>>, vector<16x384xbf16>,
    %46 = vector.extract_strided_slice %1 {offsets = [0, 100], sizes = [16, 384], strides = [1, 1]} : vector<16x584xbf16> to vector<16x384xbf16>
    %c352 = arith.constant 352 : index
    %c0_25 = arith.constant 0 : index
    %47 = vector.load %arg21[%c352, %c0_25] : memref<576x384xbf16, #tpu.memory_space<vmem>>, vector<16x384xbf16>
    tpu.vector_store %arg21[%c352, %c0_25], %46 {strides = array<i32>} : memref<576x384xbf16, #tpu.memory_space<vmem>>, vector<16x384xbf16>,
    %48 = vector.extract_strided_slice %1 {offsets = [0, 103], sizes = [16, 384], strides = [1, 1]} : vector<16x584xbf16> to vector<16x384xbf16>
    %c368 = arith.constant 368 : index
    %c0_26 = arith.constant 0 : index
    %49 = vector.load %arg21[%c368, %c0_26] : memref<576x384xbf16, #tpu.memory_space<vmem>>, vector<16x384xbf16>
    tpu.vector_store %arg21[%c368, %c0_26], %48 {strides = array<i32>} : memref<576x384xbf16, #tpu.memory_space<vmem>>, vector<16x384xbf16>,
    %50 = vector.extract_strided_slice %1 {offsets = [0, 169], sizes = [16, 384], strides = [1, 1]} : vector<16x584xbf16> to vector<16x384xbf16>
    %c384 = arith.constant 384 : index
    %c0_27 = arith.constant 0 : index
    %51 = vector.load %arg21[%c384, %c0_27] : memref<576x384xbf16, #tpu.memory_space<vmem>>, vector<16x384xbf16>
    tpu.vector_store %arg21[%c384, %c0_27], %50 {strides = array<i32>} : memref<576x384xbf16, #tpu.memory_space<vmem>>, vector<16x384xbf16>,
    %52 = vector.extract_strided_slice %1 {offsets = [0, 172], sizes = [16, 384], strides = [1, 1]} : vector<16x584xbf16> to vector<16x384xbf16>
    %c400 = arith.constant 400 : index
    %c0_28 = arith.constant 0 : index
    %53 = vector.load %arg21[%c400, %c0_28] : memref<576x384xbf16, #tpu.memory_space<vmem>>, vector<16x384xbf16>
    tpu.vector_store %arg21[%c400, %c0_28], %52 {strides = array<i32>} : memref<576x384xbf16, #tpu.memory_space<vmem>>, vector<16x384xbf16>,
    %54 = vector.extract_strided_slice %1 {offsets = [0, 175], sizes = [16, 384], strides = [1, 1]} : vector<16x584xbf16> to vector<16x384xbf16>
    %c416 = arith.constant 416 : index
    %c0_29 = arith.constant 0 : index
    %55 = vector.load %arg21[%c416, %c0_29] : memref<576x384xbf16, #tpu.memory_space<vmem>>, vector<16x384xbf16>
    tpu.vector_store %arg21[%c416, %c0_29], %54 {strides = array<i32>} : memref<576x384xbf16, #tpu.memory_space<vmem>>, vector<16x384xbf16>,
    %56 = vector.extract_strided_slice %1 {offsets = [0, 0], sizes = [16, 384], strides = [1, 1]} : vector<16x584xbf16> to vector<16x384xbf16>
    %c432 = arith.constant 432 : index
    %c0_30 = arith.constant 0 : index
    %57 = vector.load %arg21[%c432, %c0_30] : memref<576x384xbf16, #tpu.memory_space<vmem>>, vector<16x384xbf16>
    tpu.vector_store %arg21[%c432, %c0_30], %56 {strides = array<i32>} : memref<576x384xbf16, #tpu.memory_space<vmem>>, vector<16x384xbf16>,
    %58 = vector.extract_strided_slice %1 {offsets = [0, 4], sizes = [16, 384], strides = [1, 1]} : vector<16x584xbf16> to vector<16x384xbf16>
    %c448 = arith.constant 448 : index
    %c0_31 = arith.constant 0 : index
    %59 = vector.load %arg21[%c448, %c0_31] : memref<576x384xbf16, #tpu.memory_space<vmem>>, vector<16x384xbf16>
    tpu.vector_store %arg21[%c448, %c0_31], %58 {strides = array<i32>} : memref<576x384xbf16, #tpu.memory_space<vmem>>, vector<16x384xbf16>,
    %60 = vector.extract_strided_slice %1 {offsets = [0, 8], sizes = [16, 384], strides = [1, 1]} : vector<16x584xbf16> to vector<16x384xbf16>
    %c464 = arith.constant 464 : index
    %c0_32 = arith.constant 0 : index
    %61 = vector.load %arg21[%c464, %c0_32] : memref<576x384xbf16, #tpu.memory_space<vmem>>, vector<16x384xbf16>
    tpu.vector_store %arg21[%c464, %c0_32], %60 {strides = array<i32>} : memref<576x384xbf16, #tpu.memory_space<vmem>>, vector<16x384xbf16>,
    %62 = vector.extract_strided_slice %1 {offsets = [0, 96], sizes = [16, 384], strides = [1, 1]} : vector<16x584xbf16> to vector<16x384xbf16>
    %c480 = arith.constant 480 : index
    %c0_33 = arith.constant 0 : index
    %63 = vector.load %arg21[%c480, %c0_33] : memref<576x384xbf16, #tpu.memory_space<vmem>>, vector<16x384xbf16>
    tpu.vector_store %arg21[%c480, %c0_33], %62 {strides = array<i32>} : memref<576x384xbf16, #tpu.memory_space<vmem>>, vector<16x384xbf16>,
    %64 = vector.extract_strided_slice %1 {offsets = [0, 100], sizes = [16, 384], strides = [1, 1]} : vector<16x584xbf16> to vector<16x384xbf16>
    %c496 = arith.constant 496 : index
    %c0_34 = arith.constant 0 : index
    %65 = vector.load %arg21[%c496, %c0_34] : memref<576x384xbf16, #tpu.memory_space<vmem>>, vector<16x384xbf16>
    tpu.vector_store %arg21[%c496, %c0_34], %64 {strides = array<i32>} : memref<576x384xbf16, #tpu.memory_space<vmem>>, vector<16x384xbf16>,
    %66 = vector.extract_strided_slice %1 {offsets = [0, 104], sizes = [16, 384], strides = [1, 1]} : vector<16x584xbf16> to vector<16x384xbf16>
    %c512 = arith.constant 512 : index
    %c0_35 = arith.constant 0 : index
    %67 = vector.load %arg21[%c512, %c0_35] : memref<576x384xbf16, #tpu.memory_space<vmem>>, vector<16x384xbf16>
    tpu.vector_store %arg21[%c512, %c0_35], %66 {strides = array<i32>} : memref<576x384xbf16, #tpu.memory_space<vmem>>, vector<16x384xbf16>,
    %68 = vector.extract_strided_slice %1 {offsets = [0, 192], sizes = [16, 384], strides = [1, 1]} : vector<16x584xbf16> to vector<16x384xbf16>
    %c528 = arith.constant 528 : index
    %c0_36 = arith.constant 0 : index
    %69 = vector.load %arg21[%c528, %c0_36] : memref<576x384xbf16, #tpu.memory_space<vmem>>, vector<16x384xbf16>
    tpu.vector_store %arg21[%c528, %c0_36], %68 {strides = array<i32>} : memref<576x384xbf16, #tpu.memory_space<vmem>>, vector<16x384xbf16>,
    %70 = vector.extract_strided_slice %1 {offsets = [0, 196], sizes = [16, 384], strides = [1, 1]} : vector<16x584xbf16> to vector<16x384xbf16>
    %c544 = arith.constant 544 : index
    %c0_37 = arith.constant 0 : index
    %71 = vector.load %arg21[%c544, %c0_37] : memref<576x384xbf16, #tpu.memory_space<vmem>>, vector<16x384xbf16>
    tpu.vector_store %arg21[%c544, %c0_37], %70 {strides = array<i32>} : memref<576x384xbf16, #tpu.memory_space<vmem>>, vector<16x384xbf16>,
    %72 = vector.extract_strided_slice %1 {offsets = [0, 200], sizes = [16, 384], strides = [1, 1]} : vector<16x584xbf16> to vector<16x384xbf16>
    %c560 = arith.constant 560 : index
    %c0_38 = arith.constant 0 : index
    %73 = vector.load %arg21[%c560, %c0_38] : memref<576x384xbf16, #tpu.memory_space<vmem>>, vector<16x384xbf16>
    tpu.vector_store %arg21[%c560, %c0_38], %72 {strides = array<i32>} : memref<576x384xbf16, #tpu.memory_space<vmem>>, vector<16x384xbf16>,
    %c0_39 = arith.constant 0 : index
    %c0_40 = arith.constant 0 : index
    %74 = vector.load %arg6[%c0_39, %c0_40] : memref<16x576xbf16, #tpu.memory_space<vmem>>, vector<16x576xbf16>
    %c0_41 = arith.constant 0 : index
    %c0_42 = arith.constant 0 : index
    %75 = vector.load %arg21[%c0_41, %c0_42] : memref<576x384xbf16, #tpu.memory_space<vmem>>, vector<576x384xbf16>
    %cst = arith.constant dense<0.000000e+00> : vector<16x384xf32>
    %76 = tpu.matmul %74, %75, %cst {dimension_numbers = #tpu.dot_dimension_numbers<[1], [0], [0], [1], [0, 0, 1, 1], [], []>} : vector<16x576xbf16>, vector<576x384xbf16>, vector<16x384xf32> -> vector<16x384xf32>
    %c0_43 = arith.constant 0 : index
    %c0_44 = arith.constant 0 : index
    %77 = vector.load %arg11[%c0_43, %c0_44] : memref<16x1xf32, #tpu.memory_space<vmem>>, vector<16x1xf32>
    %78 = vector.broadcast %77 : vector<16x1xf32> to vector<16x384xf32>
    %79 = arith.addf %76, %78 : vector<16x384xf32>
    %cst_45 = arith.constant 0.000000e+00 : f32
    %80 = vector.broadcast %cst_45 : f32 to vector<16x384xf32>
    %81 = arith.maximumf %79, %80 : vector<16x384xf32>
    %c0_46 = arith.constant 0 : index
    %c0_47 = arith.constant 0 : index
    %c0_48 = arith.constant 0 : index
    %82 = vector.load %arg16[%c0_46, %c0_47, %c0_48] : memref<1x16x384xf32, #tpu.memory_space<vmem>>, vector<1x16x384xf32>
    %83 = vector.shape_cast %82 : vector<1x16x384xf32> to vector<16x384xf32>
    %84 = vector.shape_cast %81 : vector<16x384xf32> to vector<1x16x384xf32>
    tpu.vector_store %arg16[%c0_46, %c0_47, %c0_48], %84 {strides = array<i32>} : memref<1x16x384xf32, #tpu.memory_space<vmem>>, vector<1x16x384xf32>,
    %c0_49 = arith.constant 0 : index
    %c0_50 = arith.constant 0 : index
    %c0_51 = arith.constant 0 : index
    %85 = vector.load %arg2[%c0_49, %c0_50, %c0_51] : memref<1x16x914xbf16, #tpu.memory_space<vmem>>, vector<1x16x914xbf16>
    %86 = vector.shape_cast %85 : vector<1x16x914xbf16> to vector<16x914xbf16>
    %87 = vector.extract_strided_slice %86 {offsets = [0, 186], sizes = [16, 480], strides = [1, 1]} : vector<16x914xbf16> to vector<16x480xbf16>
    %c0_52 = arith.constant 0 : index
    %c0_53 = arith.constant 0 : index
    %88 = vector.load %arg22[%c0_52, %c0_53] : memref<576x480xbf16, #tpu.memory_space<vmem>>, vector<16x480xbf16>
    tpu.vector_store %arg22[%c0_52, %c0_53], %87 {strides = array<i32>} : memref<576x480xbf16, #tpu.memory_space<vmem>>, vector<16x480xbf16>,
    %89 = vector.extract_strided_slice %86 {offsets = [0, 187], sizes = [16, 480], strides = [1, 1]} : vector<16x914xbf16> to vector<16x480xbf16>
    %c16_54 = arith.constant 16 : index
    %c0_55 = arith.constant 0 : index
    %90 = vector.load %arg22[%c16_54, %c0_55] : memref<576x480xbf16, #tpu.memory_space<vmem>>, vector<16x480xbf16>
    tpu.vector_store %arg22[%c16_54, %c0_55], %89 {strides = array<i32>} : memref<576x480xbf16, #tpu.memory_space<vmem>>, vector<16x480xbf16>,
    %91 = vector.extract_strided_slice %86 {offsets = [0, 188], sizes = [16, 480], strides = [1, 1]} : vector<16x914xbf16> to vector<16x480xbf16>
    %c32_56 = arith.constant 32 : index
    %c0_57 = arith.constant 0 : index
    %92 = vector.load %arg22[%c32_56, %c0_57] : memref<576x480xbf16, #tpu.memory_space<vmem>>, vector<16x480xbf16>
    tpu.vector_store %arg22[%c32_56, %c0_57], %91 {strides = array<i32>} : memref<576x480xbf16, #tpu.memory_space<vmem>>, vector<16x480xbf16>,
    %93 = vector.extract_strided_slice %86 {offsets = [0, 216], sizes = [16, 480], strides = [1, 1]} : vector<16x914xbf16> to vector<16x480xbf16>
    %c48_58 = arith.constant 48 : index
    %c0_59 = arith.constant 0 : index
    %94 = vector.load %arg22[%c48_58, %c0_59] : memref<576x480xbf16, #tpu.memory_space<vmem>>, vector<16x480xbf16>
    tpu.vector_store %arg22[%c48_58, %c0_59], %93 {strides = array<i32>} : memref<576x480xbf16, #tpu.memory_space<vmem>>, vector<16x480xbf16>,
    %95 = vector.extract_strided_slice %86 {offsets = [0, 217], sizes = [16, 480], strides = [1, 1]} : vector<16x914xbf16> to vector<16x480xbf16>
    %c64_60 = arith.constant 64 : index
    %c0_61 = arith.constant 0 : index
    %96 = vector.load %arg22[%c64_60, %c0_61] : memref<576x480xbf16, #tpu.memory_space<vmem>>, vector<16x480xbf16>
    tpu.vector_store %arg22[%c64_60, %c0_61], %95 {strides = array<i32>} : memref<576x480xbf16, #tpu.memory_space<vmem>>, vector<16x480xbf16>,
    %97 = vector.extract_strided_slice %86 {offsets = [0, 218], sizes = [16, 480], strides = [1, 1]} : vector<16x914xbf16> to vector<16x480xbf16>
    %c80_62 = arith.constant 80 : index
    %c0_63 = arith.constant 0 : index
    %98 = vector.load %arg22[%c80_62, %c0_63] : memref<576x480xbf16, #tpu.memory_space<vmem>>, vector<16x480xbf16>
    tpu.vector_store %arg22[%c80_62, %c0_63], %97 {strides = array<i32>} : memref<576x480xbf16, #tpu.memory_space<vmem>>, vector<16x480xbf16>,
    %99 = vector.extract_strided_slice %86 {offsets = [0, 246], sizes = [16, 480], strides = [1, 1]} : vector<16x914xbf16> to vector<16x480xbf16>
    %c96_64 = arith.constant 96 : index
    %c0_65 = arith.constant 0 : index
    %100 = vector.load %arg22[%c96_64, %c0_65] : memref<576x480xbf16, #tpu.memory_space<vmem>>, vector<16x480xbf16>
    tpu.vector_store %arg22[%c96_64, %c0_65], %99 {strides = array<i32>} : memref<576x480xbf16, #tpu.memory_space<vmem>>, vector<16x480xbf16>,
    %101 = vector.extract_strided_slice %86 {offsets = [0, 247], sizes = [16, 480], strides = [1, 1]} : vector<16x914xbf16> to vector<16x480xbf16>
    %c112_66 = arith.constant 112 : index
    %c0_67 = arith.constant 0 : index
    %102 = vector.load %arg22[%c112_66, %c0_67] : memref<576x480xbf16, #tpu.memory_space<vmem>>, vector<16x480xbf16>
    tpu.vector_store %arg22[%c112_66, %c0_67], %101 {strides = array<i32>} : memref<576x480xbf16, #tpu.memory_space<vmem>>, vector<16x480xbf16>,
    %103 = vector.extract_strided_slice %86 {offsets = [0, 248], sizes = [16, 480], strides = [1, 1]} : vector<16x914xbf16> to vector<16x480xbf16>
    %c128_68 = arith.constant 128 : index
    %c0_69 = arith.constant 0 : index
    %104 = vector.load %arg22[%c128_68, %c0_69] : memref<576x480xbf16, #tpu.memory_space<vmem>>, vector<16x480xbf16>
    tpu.vector_store %arg22[%c128_68, %c0_69], %103 {strides = array<i32>} : memref<576x480xbf16, #tpu.memory_space<vmem>>, vector<16x480xbf16>,
    %105 = vector.extract_strided_slice %86 {offsets = [0, 124], sizes = [16, 480], strides = [1, 1]} : vector<16x914xbf16> to vector<16x480xbf16>
    %c144_70 = arith.constant 144 : index
    %c0_71 = arith.constant 0 : index
    %106 = vector.load %arg22[%c144_70, %c0_71] : memref<576x480xbf16, #tpu.memory_space<vmem>>, vector<16x480xbf16>
    tpu.vector_store %arg22[%c144_70, %c0_71], %105 {strides = array<i32>} : memref<576x480xbf16, #tpu.memory_space<vmem>>, vector<16x480xbf16>,
    %107 = vector.extract_strided_slice %86 {offsets = [0, 127], sizes = [16, 480], strides = [1, 1]} : vector<16x914xbf16> to vector<16x480xbf16>
    %c160_72 = arith.constant 160 : index
    %c0_73 = arith.constant 0 : index
    %108 = vector.load %arg22[%c160_72, %c0_73] : memref<576x480xbf16, #tpu.memory_space<vmem>>, vector<16x480xbf16>
    tpu.vector_store %arg22[%c160_72, %c0_73], %107 {strides = array<i32>} : memref<576x480xbf16, #tpu.memory_space<vmem>>, vector<16x480xbf16>,
    %109 = vector.extract_strided_slice %86 {offsets = [0, 130], sizes = [16, 480], strides = [1, 1]} : vector<16x914xbf16> to vector<16x480xbf16>
    %c176_74 = arith.constant 176 : index
    %c0_75 = arith.constant 0 : index
    %110 = vector.load %arg22[%c176_74, %c0_75] : memref<576x480xbf16, #tpu.memory_space<vmem>>, vector<16x480xbf16>
    tpu.vector_store %arg22[%c176_74, %c0_75], %109 {strides = array<i32>} : memref<576x480xbf16, #tpu.memory_space<vmem>>, vector<16x480xbf16>,
    %111 = vector.extract_strided_slice %86 {offsets = [0, 214], sizes = [16, 480], strides = [1, 1]} : vector<16x914xbf16> to vector<16x480xbf16>
    %c192_76 = arith.constant 192 : index
    %c0_77 = arith.constant 0 : index
    %112 = vector.load %arg22[%c192_76, %c0_77] : memref<576x480xbf16, #tpu.memory_space<vmem>>, vector<16x480xbf16>
    tpu.vector_store %arg22[%c192_76, %c0_77], %111 {strides = array<i32>} : memref<576x480xbf16, #tpu.memory_space<vmem>>, vector<16x480xbf16>,
    %113 = vector.extract_strided_slice %86 {offsets = [0, 217], sizes = [16, 480], strides = [1, 1]} : vector<16x914xbf16> to vector<16x480xbf16>
    %c208_78 = arith.constant 208 : index
    %c0_79 = arith.constant 0 : index
    %114 = vector.load %arg22[%c208_78, %c0_79] : memref<576x480xbf16, #tpu.memory_space<vmem>>, vector<16x480xbf16>
    tpu.vector_store %arg22[%c208_78, %c0_79], %113 {strides = array<i32>} : memref<576x480xbf16, #tpu.memory_space<vmem>>, vector<16x480xbf16>,
    %115 = vector.extract_strided_slice %86 {offsets = [0, 220], sizes = [16, 480], strides = [1, 1]} : vector<16x914xbf16> to vector<16x480xbf16>
    %c224_80 = arith.constant 224 : index
    %c0_81 = arith.constant 0 : index
    %116 = vector.load %arg22[%c224_80, %c0_81] : memref<576x480xbf16, #tpu.memory_space<vmem>>, vector<16x480xbf16>
    tpu.vector_store %arg22[%c224_80, %c0_81], %115 {strides = array<i32>} : memref<576x480xbf16, #tpu.memory_space<vmem>>, vector<16x480xbf16>,
    %117 = vector.extract_strided_slice %86 {offsets = [0, 304], sizes = [16, 480], strides = [1, 1]} : vector<16x914xbf16> to vector<16x480xbf16>
    %c240_82 = arith.constant 240 : index
    %c0_83 = arith.constant 0 : index
    %118 = vector.load %arg22[%c240_82, %c0_83] : memref<576x480xbf16, #tpu.memory_space<vmem>>, vector<16x480xbf16>
    tpu.vector_store %arg22[%c240_82, %c0_83], %117 {strides = array<i32>} : memref<576x480xbf16, #tpu.memory_space<vmem>>, vector<16x480xbf16>,
    %119 = vector.extract_strided_slice %86 {offsets = [0, 307], sizes = [16, 480], strides = [1, 1]} : vector<16x914xbf16> to vector<16x480xbf16>
    %c256_84 = arith.constant 256 : index
    %c0_85 = arith.constant 0 : index
    %120 = vector.load %arg22[%c256_84, %c0_85] : memref<576x480xbf16, #tpu.memory_space<vmem>>, vector<16x480xbf16>
    tpu.vector_store %arg22[%c256_84, %c0_85], %119 {strides = array<i32>} : memref<576x480xbf16, #tpu.memory_space<vmem>>, vector<16x480xbf16>,
    %121 = vector.extract_strided_slice %86 {offsets = [0, 310], sizes = [16, 480], strides = [1, 1]} : vector<16x914xbf16> to vector<16x480xbf16>
    %c272_86 = arith.constant 272 : index
    %c0_87 = arith.constant 0 : index
    %122 = vector.load %arg22[%c272_86, %c0_87] : memref<576x480xbf16, #tpu.memory_space<vmem>>, vector<16x480xbf16>
    tpu.vector_store %arg22[%c272_86, %c0_87], %121 {strides = array<i32>} : memref<576x480xbf16, #tpu.memory_space<vmem>>, vector<16x480xbf16>,
    %123 = vector.extract_strided_slice %86 {offsets = [0, 62], sizes = [16, 480], strides = [1, 1]} : vector<16x914xbf16> to vector<16x480xbf16>
    %c288_88 = arith.constant 288 : index
    %c0_89 = arith.constant 0 : index
    %124 = vector.load %arg22[%c288_88, %c0_89] : memref<576x480xbf16, #tpu.memory_space<vmem>>, vector<16x480xbf16>
    tpu.vector_store %arg22[%c288_88, %c0_89], %123 {strides = array<i32>} : memref<576x480xbf16, #tpu.memory_space<vmem>>, vector<16x480xbf16>,
    %125 = vector.extract_strided_slice %86 {offsets = [0, 67], sizes = [16, 480], strides = [1, 1]} : vector<16x914xbf16> to vector<16x480xbf16>
    %c304_90 = arith.constant 304 : index
    %c0_91 = arith.constant 0 : index
    %126 = vector.load %arg22[%c304_90, %c0_91] : memref<576x480xbf16, #tpu.memory_space<vmem>>, vector<16x480xbf16>
    tpu.vector_store %arg22[%c304_90, %c0_91], %125 {strides = array<i32>} : memref<576x480xbf16, #tpu.memory_space<vmem>>, vector<16x480xbf16>,
    %127 = vector.extract_strided_slice %86 {offsets = [0, 72], sizes = [16, 480], strides = [1, 1]} : vector<16x914xbf16> to vector<16x480xbf16>
    %c320_92 = arith.constant 320 : index
    %c0_93 = arith.constant 0 : index
    %128 = vector.load %arg22[%c320_92, %c0_93] : memref<576x480xbf16, #tpu.memory_space<vmem>>, vector<16x480xbf16>
    tpu.vector_store %arg22[%c320_92, %c0_93], %127 {strides = array<i32>} : memref<576x480xbf16, #tpu.memory_space<vmem>>, vector<16x480xbf16>,
    %129 = vector.extract_strided_slice %86 {offsets = [0, 212], sizes = [16, 480], strides = [1, 1]} : vector<16x914xbf16> to vector<16x480xbf16>
    %c336_94 = arith.constant 336 : index
    %c0_95 = arith.constant 0 : index
    %130 = vector.load %arg22[%c336_94, %c0_95] : memref<576x480xbf16, #tpu.memory_space<vmem>>, vector<16x480xbf16>
    tpu.vector_store %arg22[%c336_94, %c0_95], %129 {strides = array<i32>} : memref<576x480xbf16, #tpu.memory_space<vmem>>, vector<16x480xbf16>,
    %131 = vector.extract_strided_slice %86 {offsets = [0, 217], sizes = [16, 480], strides = [1, 1]} : vector<16x914xbf16> to vector<16x480xbf16>
    %c352_96 = arith.constant 352 : index
    %c0_97 = arith.constant 0 : index
    %132 = vector.load %arg22[%c352_96, %c0_97] : memref<576x480xbf16, #tpu.memory_space<vmem>>, vector<16x480xbf16>
    tpu.vector_store %arg22[%c352_96, %c0_97], %131 {strides = array<i32>} : memref<576x480xbf16, #tpu.memory_space<vmem>>, vector<16x480xbf16>,
    %133 = vector.extract_strided_slice %86 {offsets = [0, 222], sizes = [16, 480], strides = [1, 1]} : vector<16x914xbf16> to vector<16x480xbf16>
    %c368_98 = arith.constant 368 : index
    %c0_99 = arith.constant 0 : index
    %134 = vector.load %arg22[%c368_98, %c0_99] : memref<576x480xbf16, #tpu.memory_space<vmem>>, vector<16x480xbf16>
    tpu.vector_store %arg22[%c368_98, %c0_99], %133 {strides = array<i32>} : memref<576x480xbf16, #tpu.memory_space<vmem>>, vector<16x480xbf16>,
    %135 = vector.extract_strided_slice %86 {offsets = [0, 362], sizes = [16, 480], strides = [1, 1]} : vector<16x914xbf16> to vector<16x480xbf16>
    %c384_100 = arith.constant 384 : index
    %c0_101 = arith.constant 0 : index
    %136 = vector.load %arg22[%c384_100, %c0_101] : memref<576x480xbf16, #tpu.memory_space<vmem>>, vector<16x480xbf16>
    tpu.vector_store %arg22[%c384_100, %c0_101], %135 {strides = array<i32>} : memref<576x480xbf16, #tpu.memory_space<vmem>>, vector<16x480xbf16>,
    %137 = vector.extract_strided_slice %86 {offsets = [0, 367], sizes = [16, 480], strides = [1, 1]} : vector<16x914xbf16> to vector<16x480xbf16>
    %c400_102 = arith.constant 400 : index
    %c0_103 = arith.constant 0 : index
    %138 = vector.load %arg22[%c400_102, %c0_103] : memref<576x480xbf16, #tpu.memory_space<vmem>>, vector<16x480xbf16>
    tpu.vector_store %arg22[%c400_102, %c0_103], %137 {strides = array<i32>} : memref<576x480xbf16, #tpu.memory_space<vmem>>, vector<16x480xbf16>,
    %139 = vector.extract_strided_slice %86 {offsets = [0, 372], sizes = [16, 480], strides = [1, 1]} : vector<16x914xbf16> to vector<16x480xbf16>
    %c416_104 = arith.constant 416 : index
    %c0_105 = arith.constant 0 : index
    %140 = vector.load %arg22[%c416_104, %c0_105] : memref<576x480xbf16, #tpu.memory_space<vmem>>, vector<16x480xbf16>
    tpu.vector_store %arg22[%c416_104, %c0_105], %139 {strides = array<i32>} : memref<576x480xbf16, #tpu.memory_space<vmem>>, vector<16x480xbf16>,
    %141 = vector.extract_strided_slice %86 {offsets = [0, 0], sizes = [16, 480], strides = [1, 1]} : vector<16x914xbf16> to vector<16x480xbf16>
    %c432_106 = arith.constant 432 : index
    %c0_107 = arith.constant 0 : index
    %142 = vector.load %arg22[%c432_106, %c0_107] : memref<576x480xbf16, #tpu.memory_space<vmem>>, vector<16x480xbf16>
    tpu.vector_store %arg22[%c432_106, %c0_107], %141 {strides = array<i32>} : memref<576x480xbf16, #tpu.memory_space<vmem>>, vector<16x480xbf16>,
    %143 = vector.extract_strided_slice %86 {offsets = [0, 7], sizes = [16, 480], strides = [1, 1]} : vector<16x914xbf16> to vector<16x480xbf16>
    %c448_108 = arith.constant 448 : index
    %c0_109 = arith.constant 0 : index
    %144 = vector.load %arg22[%c448_108, %c0_109] : memref<576x480xbf16, #tpu.memory_space<vmem>>, vector<16x480xbf16>
    tpu.vector_store %arg22[%c448_108, %c0_109], %143 {strides = array<i32>} : memref<576x480xbf16, #tpu.memory_space<vmem>>, vector<16x480xbf16>,
    %145 = vector.extract_strided_slice %86 {offsets = [0, 14], sizes = [16, 480], strides = [1, 1]} : vector<16x914xbf16> to vector<16x480xbf16>
    %c464_110 = arith.constant 464 : index
    %c0_111 = arith.constant 0 : index
    %146 = vector.load %arg22[%c464_110, %c0_111] : memref<576x480xbf16, #tpu.memory_space<vmem>>, vector<16x480xbf16>
    tpu.vector_store %arg22[%c464_110, %c0_111], %145 {strides = array<i32>} : memref<576x480xbf16, #tpu.memory_space<vmem>>, vector<16x480xbf16>,
    %147 = vector.extract_strided_slice %86 {offsets = [0, 210], sizes = [16, 480], strides = [1, 1]} : vector<16x914xbf16> to vector<16x480xbf16>
    %c480_112 = arith.constant 480 : index
    %c0_113 = arith.constant 0 : index
    %148 = vector.load %arg22[%c480_112, %c0_113] : memref<576x480xbf16, #tpu.memory_space<vmem>>, vector<16x480xbf16>
    tpu.vector_store %arg22[%c480_112, %c0_113], %147 {strides = array<i32>} : memref<576x480xbf16, #tpu.memory_space<vmem>>, vector<16x480xbf16>,
    %149 = vector.extract_strided_slice %86 {offsets = [0, 217], sizes = [16, 480], strides = [1, 1]} : vector<16x914xbf16> to vector<16x480xbf16>
    %c496_114 = arith.constant 496 : index
    %c0_115 = arith.constant 0 : index
    %150 = vector.load %arg22[%c496_114, %c0_115] : memref<576x480xbf16, #tpu.memory_space<vmem>>, vector<16x480xbf16>
    tpu.vector_store %arg22[%c496_114, %c0_115], %149 {strides = array<i32>} : memref<576x480xbf16, #tpu.memory_space<vmem>>, vector<16x480xbf16>,
    %151 = vector.extract_strided_slice %86 {offsets = [0, 224], sizes = [16, 480], strides = [1, 1]} : vector<16x914xbf16> to vector<16x480xbf16>
    %c512_116 = arith.constant 512 : index
    %c0_117 = arith.constant 0 : index
    %152 = vector.load %arg22[%c512_116, %c0_117] : memref<576x480xbf16, #tpu.memory_space<vmem>>, vector<16x480xbf16>
    tpu.vector_store %arg22[%c512_116, %c0_117], %151 {strides = array<i32>} : memref<576x480xbf16, #tpu.memory_space<vmem>>, vector<16x480xbf16>,
    %153 = vector.extract_strided_slice %86 {offsets = [0, 420], sizes = [16, 480], strides = [1, 1]} : vector<16x914xbf16> to vector<16x480xbf16>
    %c528_118 = arith.constant 528 : index
    %c0_119 = arith.constant 0 : index
    %154 = vector.load %arg22[%c528_118, %c0_119] : memref<576x480xbf16, #tpu.memory_space<vmem>>, vector<16x480xbf16>
    tpu.vector_store %arg22[%c528_118, %c0_119], %153 {strides = array<i32>} : memref<576x480xbf16, #tpu.memory_space<vmem>>, vector<16x480xbf16>,
    %155 = vector.extract_strided_slice %86 {offsets = [0, 427], sizes = [16, 480], strides = [1, 1]} : vector<16x914xbf16> to vector<16x480xbf16>
    %c544_120 = arith.constant 544 : index
    %c0_121 = arith.constant 0 : index
    %156 = vector.load %arg22[%c544_120, %c0_121] : memref<576x480xbf16, #tpu.memory_space<vmem>>, vector<16x480xbf16>
    tpu.vector_store %arg22[%c544_120, %c0_121], %155 {strides = array<i32>} : memref<576x480xbf16, #tpu.memory_space<vmem>>, vector<16x480xbf16>,
    %157 = vector.extract_strided_slice %86 {offsets = [0, 434], sizes = [16, 480], strides = [1, 1]} : vector<16x914xbf16> to vector<16x480xbf16>
    %c560_122 = arith.constant 560 : index
    %c0_123 = arith.constant 0 : index
    %158 = vector.load %arg22[%c560_122, %c0_123] : memref<576x480xbf16, #tpu.memory_space<vmem>>, vector<16x480xbf16>
    tpu.vector_store %arg22[%c560_122, %c0_123], %157 {strides = array<i32>} : memref<576x480xbf16, #tpu.memory_space<vmem>>, vector<16x480xbf16>,
    %c0_124 = arith.constant 0 : index
    %c0_125 = arith.constant 0 : index
    %159 = vector.load %arg7[%c0_124, %c0_125] : memref<16x576xbf16, #tpu.memory_space<vmem>>, vector<16x576xbf16>
    %c0_126 = arith.constant 0 : index
    %c0_127 = arith.constant 0 : index
    %160 = vector.load %arg22[%c0_126, %c0_127] : memref<576x480xbf16, #tpu.memory_space<vmem>>, vector<576x480xbf16>
    %cst_128 = arith.constant dense<0.000000e+00> : vector<16x480xf32>
    %161 = tpu.matmul %159, %160, %cst_128 {dimension_numbers = #tpu.dot_dimension_numbers<[1], [0], [0], [1], [0, 0, 1, 1], [], []>} : vector<16x576xbf16>, vector<576x480xbf16>, vector<16x480xf32> -> vector<16x480xf32>
    %c0_129 = arith.constant 0 : index
    %c0_130 = arith.constant 0 : index
    %162 = vector.load %arg12[%c0_129, %c0_130] : memref<16x1xf32, #tpu.memory_space<vmem>>, vector<16x1xf32>
    %163 = vector.broadcast %162 : vector<16x1xf32> to vector<16x480xf32>
    %164 = arith.addf %161, %163 : vector<16x480xf32>
    %cst_131 = arith.constant 0.000000e+00 : f32
    %165 = vector.broadcast %cst_131 : f32 to vector<16x480xf32>
    %166 = arith.maximumf %164, %165 : vector<16x480xf32>
    %c0_132 = arith.constant 0 : index
    %c0_133 = arith.constant 0 : index
    %c0_134 = arith.constant 0 : index
    %167 = vector.load %arg17[%c0_132, %c0_133, %c0_134] : memref<1x16x480xf32, #tpu.memory_space<vmem>>, vector<1x16x480xf32>
    %168 = vector.shape_cast %167 : vector<1x16x480xf32> to vector<16x480xf32>
    %169 = vector.shape_cast %166 : vector<16x480xf32> to vector<1x16x480xf32>
    tpu.vector_store %arg17[%c0_132, %c0_133, %c0_134], %169 {strides = array<i32>} : memref<1x16x480xf32, #tpu.memory_space<vmem>>, vector<1x16x480xf32>,
    %c0_135 = arith.constant 0 : index
    %c0_136 = arith.constant 0 : index
    %c0_137 = arith.constant 0 : index
    %170 = vector.load %arg3[%c0_135, %c0_136, %c0_137] : memref<1x16x584xbf16, #tpu.memory_space<vmem>>, vector<1x16x584xbf16>
    %171 = vector.shape_cast %170 : vector<1x16x584xbf16> to vector<16x584xbf16>
    %172 = vector.extract_strided_slice %171 {offsets = [0, 75], sizes = [16, 384], strides = [1, 1]} : vector<16x584xbf16> to vector<16x384xbf16>
    %c0_138 = arith.constant 0 : index
    %c0_139 = arith.constant 0 : index
    %173 = vector.load %arg23[%c0_138, %c0_139] : memref<576x384xbf16, #tpu.memory_space<vmem>>, vector<16x384xbf16>
    tpu.vector_store %arg23[%c0_138, %c0_139], %172 {strides = array<i32>} : memref<576x384xbf16, #tpu.memory_space<vmem>>, vector<16x384xbf16>,
    %174 = vector.extract_strided_slice %171 {offsets = [0, 76], sizes = [16, 384], strides = [1, 1]} : vector<16x584xbf16> to vector<16x384xbf16>
    %c16_140 = arith.constant 16 : index
    %c0_141 = arith.constant 0 : index
    %175 = vector.load %arg23[%c16_140, %c0_141] : memref<576x384xbf16, #tpu.memory_space<vmem>>, vector<16x384xbf16>
    tpu.vector_store %arg23[%c16_140, %c0_141], %174 {strides = array<i32>} : memref<576x384xbf16, #tpu.memory_space<vmem>>, vector<16x384xbf16>,
    %176 = vector.extract_strided_slice %171 {offsets = [0, 77], sizes = [16, 384], strides = [1, 1]} : vector<16x584xbf16> to vector<16x384xbf16>
    %c32_142 = arith.constant 32 : index
    %c0_143 = arith.constant 0 : index
    %177 = vector.load %arg23[%c32_142, %c0_143] : memref<576x384xbf16, #tpu.memory_space<vmem>>, vector<16x384xbf16>
    tpu.vector_store %arg23[%c32_142, %c0_143], %176 {strides = array<i32>} : memref<576x384xbf16, #tpu.memory_space<vmem>>, vector<16x384xbf16>,
    %178 = vector.extract_strided_slice %171 {offsets = [0, 99], sizes = [16, 384], strides = [1, 1]} : vector<16x584xbf16> to vector<16x384xbf16>
    %c48_144 = arith.constant 48 : index
    %c0_145 = arith.constant 0 : index
    %179 = vector.load %arg23[%c48_144, %c0_145] : memref<576x384xbf16, #tpu.memory_space<vmem>>, vector<16x384xbf16>
    tpu.vector_store %arg23[%c48_144, %c0_145], %178 {strides = array<i32>} : memref<576x384xbf16, #tpu.memory_space<vmem>>, vector<16x384xbf16>,
    %180 = vector.extract_strided_slice %171 {offsets = [0, 100], sizes = [16, 384], strides = [1, 1]} : vector<16x584xbf16> to vector<16x384xbf16>
    %c64_146 = arith.constant 64 : index
    %c0_147 = arith.constant 0 : index
    %181 = vector.load %arg23[%c64_146, %c0_147] : memref<576x384xbf16, #tpu.memory_space<vmem>>, vector<16x384xbf16>
    tpu.vector_store %arg23[%c64_146, %c0_147], %180 {strides = array<i32>} : memref<576x384xbf16, #tpu.memory_space<vmem>>, vector<16x384xbf16>,
    %182 = vector.extract_strided_slice %171 {offsets = [0, 101], sizes = [16, 384], strides = [1, 1]} : vector<16x584xbf16> to vector<16x384xbf16>
    %c80_148 = arith.constant 80 : index
    %c0_149 = arith.constant 0 : index
    %183 = vector.load %arg23[%c80_148, %c0_149] : memref<576x384xbf16, #tpu.memory_space<vmem>>, vector<16x384xbf16>
    tpu.vector_store %arg23[%c80_148, %c0_149], %182 {strides = array<i32>} : memref<576x384xbf16, #tpu.memory_space<vmem>>, vector<16x384xbf16>,
    %184 = vector.extract_strided_slice %171 {offsets = [0, 123], sizes = [16, 384], strides = [1, 1]} : vector<16x584xbf16> to vector<16x384xbf16>
    %c96_150 = arith.constant 96 : index
    %c0_151 = arith.constant 0 : index
    %185 = vector.load %arg23[%c96_150, %c0_151] : memref<576x384xbf16, #tpu.memory_space<vmem>>, vector<16x384xbf16>
    tpu.vector_store %arg23[%c96_150, %c0_151], %184 {strides = array<i32>} : memref<576x384xbf16, #tpu.memory_space<vmem>>, vector<16x384xbf16>,
    %186 = vector.extract_strided_slice %171 {offsets = [0, 124], sizes = [16, 384], strides = [1, 1]} : vector<16x584xbf16> to vector<16x384xbf16>
    %c112_152 = arith.constant 112 : index
    %c0_153 = arith.constant 0 : index
    %187 = vector.load %arg23[%c112_152, %c0_153] : memref<576x384xbf16, #tpu.memory_space<vmem>>, vector<16x384xbf16>
    tpu.vector_store %arg23[%c112_152, %c0_153], %186 {strides = array<i32>} : memref<576x384xbf16, #tpu.memory_space<vmem>>, vector<16x384xbf16>,
    %188 = vector.extract_strided_slice %171 {offsets = [0, 125], sizes = [16, 384], strides = [1, 1]} : vector<16x584xbf16> to vector<16x384xbf16>
    %c128_154 = arith.constant 128 : index
    %c0_155 = arith.constant 0 : index
    %189 = vector.load %arg23[%c128_154, %c0_155] : memref<576x384xbf16, #tpu.memory_space<vmem>>, vector<16x384xbf16>
    tpu.vector_store %arg23[%c128_154, %c0_155], %188 {strides = array<i32>} : memref<576x384xbf16, #tpu.memory_space<vmem>>, vector<16x384xbf16>,
    %190 = vector.extract_strided_slice %171 {offsets = [0, 50], sizes = [16, 384], strides = [1, 1]} : vector<16x584xbf16> to vector<16x384xbf16>
    %c144_156 = arith.constant 144 : index
    %c0_157 = arith.constant 0 : index
    %191 = vector.load %arg23[%c144_156, %c0_157] : memref<576x384xbf16, #tpu.memory_space<vmem>>, vector<16x384xbf16>
    tpu.vector_store %arg23[%c144_156, %c0_157], %190 {strides = array<i32>} : memref<576x384xbf16, #tpu.memory_space<vmem>>, vector<16x384xbf16>,
    %192 = vector.extract_strided_slice %171 {offsets = [0, 52], sizes = [16, 384], strides = [1, 1]} : vector<16x584xbf16> to vector<16x384xbf16>
    %c160_158 = arith.constant 160 : index
    %c0_159 = arith.constant 0 : index
    %193 = vector.load %arg23[%c160_158, %c0_159] : memref<576x384xbf16, #tpu.memory_space<vmem>>, vector<16x384xbf16>
    tpu.vector_store %arg23[%c160_158, %c0_159], %192 {strides = array<i32>} : memref<576x384xbf16, #tpu.memory_space<vmem>>, vector<16x384xbf16>,
    %194 = vector.extract_strided_slice %171 {offsets = [0, 54], sizes = [16, 384], strides = [1, 1]} : vector<16x584xbf16> to vector<16x384xbf16>
    %c176_160 = arith.constant 176 : index
    %c0_161 = arith.constant 0 : index
    %195 = vector.load %arg23[%c176_160, %c0_161] : memref<576x384xbf16, #tpu.memory_space<vmem>>, vector<16x384xbf16>
    tpu.vector_store %arg23[%c176_160, %c0_161], %194 {strides = array<i32>} : memref<576x384xbf16, #tpu.memory_space<vmem>>, vector<16x384xbf16>,
    %196 = vector.extract_strided_slice %171 {offsets = [0, 98], sizes = [16, 384], strides = [1, 1]} : vector<16x584xbf16> to vector<16x384xbf16>
    %c192_162 = arith.constant 192 : index
    %c0_163 = arith.constant 0 : index
    %197 = vector.load %arg23[%c192_162, %c0_163] : memref<576x384xbf16, #tpu.memory_space<vmem>>, vector<16x384xbf16>
    tpu.vector_store %arg23[%c192_162, %c0_163], %196 {strides = array<i32>} : memref<576x384xbf16, #tpu.memory_space<vmem>>, vector<16x384xbf16>,
    %198 = vector.extract_strided_slice %171 {offsets = [0, 100], sizes = [16, 384], strides = [1, 1]} : vector<16x584xbf16> to vector<16x384xbf16>
    %c208_164 = arith.constant 208 : index
    %c0_165 = arith.constant 0 : index
    %199 = vector.load %arg23[%c208_164, %c0_165] : memref<576x384xbf16, #tpu.memory_space<vmem>>, vector<16x384xbf16>
    tpu.vector_store %arg23[%c208_164, %c0_165], %198 {strides = array<i32>} : memref<576x384xbf16, #tpu.memory_space<vmem>>, vector<16x384xbf16>,
    %200 = vector.extract_strided_slice %171 {offsets = [0, 102], sizes = [16, 384], strides = [1, 1]} : vector<16x584xbf16> to vector<16x384xbf16>
    %c224_166 = arith.constant 224 : index
    %c0_167 = arith.constant 0 : index
    %201 = vector.load %arg23[%c224_166, %c0_167] : memref<576x384xbf16, #tpu.memory_space<vmem>>, vector<16x384xbf16>
    tpu.vector_store %arg23[%c224_166, %c0_167], %200 {strides = array<i32>} : memref<576x384xbf16, #tpu.memory_space<vmem>>, vector<16x384xbf16>,
    %202 = vector.extract_strided_slice %171 {offsets = [0, 146], sizes = [16, 384], strides = [1, 1]} : vector<16x584xbf16> to vector<16x384xbf16>
    %c240_168 = arith.constant 240 : index
    %c0_169 = arith.constant 0 : index
    %203 = vector.load %arg23[%c240_168, %c0_169] : memref<576x384xbf16, #tpu.memory_space<vmem>>, vector<16x384xbf16>
    tpu.vector_store %arg23[%c240_168, %c0_169], %202 {strides = array<i32>} : memref<576x384xbf16, #tpu.memory_space<vmem>>, vector<16x384xbf16>,
    %204 = vector.extract_strided_slice %171 {offsets = [0, 148], sizes = [16, 384], strides = [1, 1]} : vector<16x584xbf16> to vector<16x384xbf16>
    %c256_170 = arith.constant 256 : index
    %c0_171 = arith.constant 0 : index
    %205 = vector.load %arg23[%c256_170, %c0_171] : memref<576x384xbf16, #tpu.memory_space<vmem>>, vector<16x384xbf16>
    tpu.vector_store %arg23[%c256_170, %c0_171], %204 {strides = array<i32>} : memref<576x384xbf16, #tpu.memory_space<vmem>>, vector<16x384xbf16>,
    %206 = vector.extract_strided_slice %171 {offsets = [0, 150], sizes = [16, 384], strides = [1, 1]} : vector<16x584xbf16> to vector<16x384xbf16>
    %c272_172 = arith.constant 272 : index
    %c0_173 = arith.constant 0 : index
    %207 = vector.load %arg23[%c272_172, %c0_173] : memref<576x384xbf16, #tpu.memory_space<vmem>>, vector<16x384xbf16>
    tpu.vector_store %arg23[%c272_172, %c0_173], %206 {strides = array<i32>} : memref<576x384xbf16, #tpu.memory_space<vmem>>, vector<16x384xbf16>,
    %208 = vector.extract_strided_slice %171 {offsets = [0, 25], sizes = [16, 384], strides = [1, 1]} : vector<16x584xbf16> to vector<16x384xbf16>
    %c288_174 = arith.constant 288 : index
    %c0_175 = arith.constant 0 : index
    %209 = vector.load %arg23[%c288_174, %c0_175] : memref<576x384xbf16, #tpu.memory_space<vmem>>, vector<16x384xbf16>
    tpu.vector_store %arg23[%c288_174, %c0_175], %208 {strides = array<i32>} : memref<576x384xbf16, #tpu.memory_space<vmem>>, vector<16x384xbf16>,
    %210 = vector.extract_strided_slice %171 {offsets = [0, 28], sizes = [16, 384], strides = [1, 1]} : vector<16x584xbf16> to vector<16x384xbf16>
    %c304_176 = arith.constant 304 : index
    %c0_177 = arith.constant 0 : index
    %211 = vector.load %arg23[%c304_176, %c0_177] : memref<576x384xbf16, #tpu.memory_space<vmem>>, vector<16x384xbf16>
    tpu.vector_store %arg23[%c304_176, %c0_177], %210 {strides = array<i32>} : memref<576x384xbf16, #tpu.memory_space<vmem>>, vector<16x384xbf16>,
    %212 = vector.extract_strided_slice %171 {offsets = [0, 31], sizes = [16, 384], strides = [1, 1]} : vector<16x584xbf16> to vector<16x384xbf16>
    %c320_178 = arith.constant 320 : index
    %c0_179 = arith.constant 0 : index
    %213 = vector.load %arg23[%c320_178, %c0_179] : memref<576x384xbf16, #tpu.memory_space<vmem>>, vector<16x384xbf16>
    tpu.vector_store %arg23[%c320_178, %c0_179], %212 {strides = array<i32>} : memref<576x384xbf16, #tpu.memory_space<vmem>>, vector<16x384xbf16>,
    %214 = vector.extract_strided_slice %171 {offsets = [0, 97], sizes = [16, 384], strides = [1, 1]} : vector<16x584xbf16> to vector<16x384xbf16>
    %c336_180 = arith.constant 336 : index
    %c0_181 = arith.constant 0 : index
    %215 = vector.load %arg23[%c336_180, %c0_181] : memref<576x384xbf16, #tpu.memory_space<vmem>>, vector<16x384xbf16>
    tpu.vector_store %arg23[%c336_180, %c0_181], %214 {strides = array<i32>} : memref<576x384xbf16, #tpu.memory_space<vmem>>, vector<16x384xbf16>,
    %216 = vector.extract_strided_slice %171 {offsets = [0, 100], sizes = [16, 384], strides = [1, 1]} : vector<16x584xbf16> to vector<16x384xbf16>
    %c352_182 = arith.constant 352 : index
    %c0_183 = arith.constant 0 : index
    %217 = vector.load %arg23[%c352_182, %c0_183] : memref<576x384xbf16, #tpu.memory_space<vmem>>, vector<16x384xbf16>
    tpu.vector_store %arg23[%c352_182, %c0_183], %216 {strides = array<i32>} : memref<576x384xbf16, #tpu.memory_space<vmem>>, vector<16x384xbf16>,
    %218 = vector.extract_strided_slice %171 {offsets = [0, 103], sizes = [16, 384], strides = [1, 1]} : vector<16x584xbf16> to vector<16x384xbf16>
    %c368_184 = arith.constant 368 : index
    %c0_185 = arith.constant 0 : index
    %219 = vector.load %arg23[%c368_184, %c0_185] : memref<576x384xbf16, #tpu.memory_space<vmem>>, vector<16x384xbf16>
    tpu.vector_store %arg23[%c368_184, %c0_185], %218 {strides = array<i32>} : memref<576x384xbf16, #tpu.memory_space<vmem>>, vector<16x384xbf16>,
    %220 = vector.extract_strided_slice %171 {offsets = [0, 169], sizes = [16, 384], strides = [1, 1]} : vector<16x584xbf16> to vector<16x384xbf16>
    %c384_186 = arith.constant 384 : index
    %c0_187 = arith.constant 0 : index
    %221 = vector.load %arg23[%c384_186, %c0_187] : memref<576x384xbf16, #tpu.memory_space<vmem>>, vector<16x384xbf16>
    tpu.vector_store %arg23[%c384_186, %c0_187], %220 {strides = array<i32>} : memref<576x384xbf16, #tpu.memory_space<vmem>>, vector<16x384xbf16>,
    %222 = vector.extract_strided_slice %171 {offsets = [0, 172], sizes = [16, 384], strides = [1, 1]} : vector<16x584xbf16> to vector<16x384xbf16>
    %c400_188 = arith.constant 400 : index
    %c0_189 = arith.constant 0 : index
    %223 = vector.load %arg23[%c400_188, %c0_189] : memref<576x384xbf16, #tpu.memory_space<vmem>>, vector<16x384xbf16>
    tpu.vector_store %arg23[%c400_188, %c0_189], %222 {strides = array<i32>} : memref<576x384xbf16, #tpu.memory_space<vmem>>, vector<16x384xbf16>,
    %224 = vector.extract_strided_slice %171 {offsets = [0, 175], sizes = [16, 384], strides = [1, 1]} : vector<16x584xbf16> to vector<16x384xbf16>
    %c416_190 = arith.constant 416 : index
    %c0_191 = arith.constant 0 : index
    %225 = vector.load %arg23[%c416_190, %c0_191] : memref<576x384xbf16, #tpu.memory_space<vmem>>, vector<16x384xbf16>
    tpu.vector_store %arg23[%c416_190, %c0_191], %224 {strides = array<i32>} : memref<576x384xbf16, #tpu.memory_space<vmem>>, vector<16x384xbf16>,
    %226 = vector.extract_strided_slice %171 {offsets = [0, 0], sizes = [16, 384], strides = [1, 1]} : vector<16x584xbf16> to vector<16x384xbf16>
    %c432_192 = arith.constant 432 : index
    %c0_193 = arith.constant 0 : index
    %227 = vector.load %arg23[%c432_192, %c0_193] : memref<576x384xbf16, #tpu.memory_space<vmem>>, vector<16x384xbf16>
    tpu.vector_store %arg23[%c432_192, %c0_193], %226 {strides = array<i32>} : memref<576x384xbf16, #tpu.memory_space<vmem>>, vector<16x384xbf16>,
    %228 = vector.extract_strided_slice %171 {offsets = [0, 4], sizes = [16, 384], strides = [1, 1]} : vector<16x584xbf16> to vector<16x384xbf16>
    %c448_194 = arith.constant 448 : index
    %c0_195 = arith.constant 0 : index
    %229 = vector.load %arg23[%c448_194, %c0_195] : memref<576x384xbf16, #tpu.memory_space<vmem>>, vector<16x384xbf16>
    tpu.vector_store %arg23[%c448_194, %c0_195], %228 {strides = array<i32>} : memref<576x384xbf16, #tpu.memory_space<vmem>>, vector<16x384xbf16>,
    %230 = vector.extract_strided_slice %171 {offsets = [0, 8], sizes = [16, 384], strides = [1, 1]} : vector<16x584xbf16> to vector<16x384xbf16>
    %c464_196 = arith.constant 464 : index
    %c0_197 = arith.constant 0 : index
    %231 = vector.load %arg23[%c464_196, %c0_197] : memref<576x384xbf16, #tpu.memory_space<vmem>>, vector<16x384xbf16>
    tpu.vector_store %arg23[%c464_196, %c0_197], %230 {strides = array<i32>} : memref<576x384xbf16, #tpu.memory_space<vmem>>, vector<16x384xbf16>,
    %232 = vector.extract_strided_slice %171 {offsets = [0, 96], sizes = [16, 384], strides = [1, 1]} : vector<16x584xbf16> to vector<16x384xbf16>
    %c480_198 = arith.constant 480 : index
    %c0_199 = arith.constant 0 : index
    %233 = vector.load %arg23[%c480_198, %c0_199] : memref<576x384xbf16, #tpu.memory_space<vmem>>, vector<16x384xbf16>
    tpu.vector_store %arg23[%c480_198, %c0_199], %232 {strides = array<i32>} : memref<576x384xbf16, #tpu.memory_space<vmem>>, vector<16x384xbf16>,
    %234 = vector.extract_strided_slice %171 {offsets = [0, 100], sizes = [16, 384], strides = [1, 1]} : vector<16x584xbf16> to vector<16x384xbf16>
    %c496_200 = arith.constant 496 : index
    %c0_201 = arith.constant 0 : index
    %235 = vector.load %arg23[%c496_200, %c0_201] : memref<576x384xbf16, #tpu.memory_space<vmem>>, vector<16x384xbf16>
    tpu.vector_store %arg23[%c496_200, %c0_201], %234 {strides = array<i32>} : memref<576x384xbf16, #tpu.memory_space<vmem>>, vector<16x384xbf16>,
    %236 = vector.extract_strided_slice %171 {offsets = [0, 104], sizes = [16, 384], strides = [1, 1]} : vector<16x584xbf16> to vector<16x384xbf16>
    %c512_202 = arith.constant 512 : index
    %c0_203 = arith.constant 0 : index
    %237 = vector.load %arg23[%c512_202, %c0_203] : memref<576x384xbf16, #tpu.memory_space<vmem>>, vector<16x384xbf16>
    tpu.vector_store %arg23[%c512_202, %c0_203], %236 {strides = array<i32>} : memref<576x384xbf16, #tpu.memory_space<vmem>>, vector<16x384xbf16>,
    %238 = vector.extract_strided_slice %171 {offsets = [0, 192], sizes = [16, 384], strides = [1, 1]} : vector<16x584xbf16> to vector<16x384xbf16>
    %c528_204 = arith.constant 528 : index
    %c0_205 = arith.constant 0 : index
    %239 = vector.load %arg23[%c528_204, %c0_205] : memref<576x384xbf16, #tpu.memory_space<vmem>>, vector<16x384xbf16>
    tpu.vector_store %arg23[%c528_204, %c0_205], %238 {strides = array<i32>} : memref<576x384xbf16, #tpu.memory_space<vmem>>, vector<16x384xbf16>,
    %240 = vector.extract_strided_slice %171 {offsets = [0, 196], sizes = [16, 384], strides = [1, 1]} : vector<16x584xbf16> to vector<16x384xbf16>
    %c544_206 = arith.constant 544 : index
    %c0_207 = arith.constant 0 : index
    %241 = vector.load %arg23[%c544_206, %c0_207] : memref<576x384xbf16, #tpu.memory_space<vmem>>, vector<16x384xbf16>
    tpu.vector_store %arg23[%c544_206, %c0_207], %240 {strides = array<i32>} : memref<576x384xbf16, #tpu.memory_space<vmem>>, vector<16x384xbf16>,
    %242 = vector.extract_strided_slice %171 {offsets = [0, 200], sizes = [16, 384], strides = [1, 1]} : vector<16x584xbf16> to vector<16x384xbf16>
    %c560_208 = arith.constant 560 : index
    %c0_209 = arith.constant 0 : index
    %243 = vector.load %arg23[%c560_208, %c0_209] : memref<576x384xbf16, #tpu.memory_space<vmem>>, vector<16x384xbf16>
    tpu.vector_store %arg23[%c560_208, %c0_209], %242 {strides = array<i32>} : memref<576x384xbf16, #tpu.memory_space<vmem>>, vector<16x384xbf16>,
    %c0_210 = arith.constant 0 : index
    %c0_211 = arith.constant 0 : index
    %244 = vector.load %arg8[%c0_210, %c0_211] : memref<32x576xbf16, #tpu.memory_space<vmem>>, vector<32x576xbf16>
    %c0_212 = arith.constant 0 : index
    %c0_213 = arith.constant 0 : index
    %245 = vector.load %arg23[%c0_212, %c0_213] : memref<576x384xbf16, #tpu.memory_space<vmem>>, vector<576x384xbf16>
    %cst_214 = arith.constant dense<0.000000e+00> : vector<32x384xf32>
    %246 = tpu.matmul %244, %245, %cst_214 {dimension_numbers = #tpu.dot_dimension_numbers<[1], [0], [0], [1], [0, 0, 1, 1], [], []>} : vector<32x576xbf16>, vector<576x384xbf16>, vector<32x384xf32> -> vector<32x384xf32>
    %c0_215 = arith.constant 0 : index
    %c0_216 = arith.constant 0 : index
    %247 = vector.load %arg13[%c0_215, %c0_216] : memref<32x1xf32, #tpu.memory_space<vmem>>, vector<32x1xf32>
    %248 = vector.broadcast %247 : vector<32x1xf32> to vector<32x384xf32>
    %249 = arith.addf %246, %248 : vector<32x384xf32>
    %cst_217 = arith.constant 0.000000e+00 : f32
    %250 = vector.broadcast %cst_217 : f32 to vector<32x384xf32>
    %251 = arith.maximumf %249, %250 : vector<32x384xf32>
    %c0_218 = arith.constant 0 : index
    %c0_219 = arith.constant 0 : index
    %c0_220 = arith.constant 0 : index
    %252 = vector.load %arg18[%c0_218, %c0_219, %c0_220] : memref<1x32x384xf32, #tpu.memory_space<vmem>>, vector<1x32x384xf32>
    %253 = vector.shape_cast %252 : vector<1x32x384xf32> to vector<32x384xf32>
    %254 = vector.shape_cast %251 : vector<32x384xf32> to vector<1x32x384xf32>
    tpu.vector_store %arg18[%c0_218, %c0_219, %c0_220], %254 {strides = array<i32>} : memref<1x32x384xf32, #tpu.memory_space<vmem>>, vector<1x32x384xf32>,
    %c0_221 = arith.constant 0 : index
    %c0_222 = arith.constant 0 : index
    %c0_223 = arith.constant 0 : index
    %255 = vector.load %arg4[%c0_221, %c0_222, %c0_223] : memref<1x16x498xbf16, #tpu.memory_space<vmem>>, vector<1x16x498xbf16>
    %256 = vector.shape_cast %255 : vector<1x16x498xbf16> to vector<16x498xbf16>
    %257 = vector.extract_strided_slice %256 {offsets = [0, 138], sizes = [16, 176], strides = [1, 1]} : vector<16x498xbf16> to vector<16x176xbf16>
    %c0_224 = arith.constant 0 : index
    %c0_225 = arith.constant 0 : index
    %258 = vector.load %arg24[%c0_224, %c0_225] : memref<576x176xbf16, #tpu.memory_space<vmem>>, vector<16x176xbf16>
    tpu.vector_store %arg24[%c0_224, %c0_225], %257 {strides = array<i32>} : memref<576x176xbf16, #tpu.memory_space<vmem>>, vector<16x176xbf16>,
    %259 = vector.extract_strided_slice %256 {offsets = [0, 139], sizes = [16, 176], strides = [1, 1]} : vector<16x498xbf16> to vector<16x176xbf16>
    %c16_226 = arith.constant 16 : index
    %c0_227 = arith.constant 0 : index
    %260 = vector.load %arg24[%c16_226, %c0_227] : memref<576x176xbf16, #tpu.memory_space<vmem>>, vector<16x176xbf16>
    tpu.vector_store %arg24[%c16_226, %c0_227], %259 {strides = array<i32>} : memref<576x176xbf16, #tpu.memory_space<vmem>>, vector<16x176xbf16>,
    %261 = vector.extract_strided_slice %256 {offsets = [0, 140], sizes = [16, 176], strides = [1, 1]} : vector<16x498xbf16> to vector<16x176xbf16>
    %c32_228 = arith.constant 32 : index
    %c0_229 = arith.constant 0 : index
    %262 = vector.load %arg24[%c32_228, %c0_229] : memref<576x176xbf16, #tpu.memory_space<vmem>>, vector<16x176xbf16>
    tpu.vector_store %arg24[%c32_228, %c0_229], %261 {strides = array<i32>} : memref<576x176xbf16, #tpu.memory_space<vmem>>, vector<16x176xbf16>,
    %263 = vector.extract_strided_slice %256 {offsets = [0, 160], sizes = [16, 176], strides = [1, 1]} : vector<16x498xbf16> to vector<16x176xbf16>
    %c48_230 = arith.constant 48 : index
    %c0_231 = arith.constant 0 : index
    %264 = vector.load %arg24[%c48_230, %c0_231] : memref<576x176xbf16, #tpu.memory_space<vmem>>, vector<16x176xbf16>
    tpu.vector_store %arg24[%c48_230, %c0_231], %263 {strides = array<i32>} : memref<576x176xbf16, #tpu.memory_space<vmem>>, vector<16x176xbf16>,
    %265 = vector.extract_strided_slice %256 {offsets = [0, 161], sizes = [16, 176], strides = [1, 1]} : vector<16x498xbf16> to vector<16x176xbf16>
    %c64_232 = arith.constant 64 : index
    %c0_233 = arith.constant 0 : index
    %266 = vector.load %arg24[%c64_232, %c0_233] : memref<576x176xbf16, #tpu.memory_space<vmem>>, vector<16x176xbf16>
    tpu.vector_store %arg24[%c64_232, %c0_233], %265 {strides = array<i32>} : memref<576x176xbf16, #tpu.memory_space<vmem>>, vector<16x176xbf16>,
    %267 = vector.extract_strided_slice %256 {offsets = [0, 162], sizes = [16, 176], strides = [1, 1]} : vector<16x498xbf16> to vector<16x176xbf16>
    %c80_234 = arith.constant 80 : index
    %c0_235 = arith.constant 0 : index
    %268 = vector.load %arg24[%c80_234, %c0_235] : memref<576x176xbf16, #tpu.memory_space<vmem>>, vector<16x176xbf16>
    tpu.vector_store %arg24[%c80_234, %c0_235], %267 {strides = array<i32>} : memref<576x176xbf16, #tpu.memory_space<vmem>>, vector<16x176xbf16>,
    %269 = vector.extract_strided_slice %256 {offsets = [0, 182], sizes = [16, 176], strides = [1, 1]} : vector<16x498xbf16> to vector<16x176xbf16>
    %c96_236 = arith.constant 96 : index
    %c0_237 = arith.constant 0 : index
    %270 = vector.load %arg24[%c96_236, %c0_237] : memref<576x176xbf16, #tpu.memory_space<vmem>>, vector<16x176xbf16>
    tpu.vector_store %arg24[%c96_236, %c0_237], %269 {strides = array<i32>} : memref<576x176xbf16, #tpu.memory_space<vmem>>, vector<16x176xbf16>,
    %271 = vector.extract_strided_slice %256 {offsets = [0, 183], sizes = [16, 176], strides = [1, 1]} : vector<16x498xbf16> to vector<16x176xbf16>
    %c112_238 = arith.constant 112 : index
    %c0_239 = arith.constant 0 : index
    %272 = vector.load %arg24[%c112_238, %c0_239] : memref<576x176xbf16, #tpu.memory_space<vmem>>, vector<16x176xbf16>
    tpu.vector_store %arg24[%c112_238, %c0_239], %271 {strides = array<i32>} : memref<576x176xbf16, #tpu.memory_space<vmem>>, vector<16x176xbf16>,
    %273 = vector.extract_strided_slice %256 {offsets = [0, 184], sizes = [16, 176], strides = [1, 1]} : vector<16x498xbf16> to vector<16x176xbf16>
    %c128_240 = arith.constant 128 : index
    %c0_241 = arith.constant 0 : index
    %274 = vector.load %arg24[%c128_240, %c0_241] : memref<576x176xbf16, #tpu.memory_space<vmem>>, vector<16x176xbf16>
    tpu.vector_store %arg24[%c128_240, %c0_241], %273 {strides = array<i32>} : memref<576x176xbf16, #tpu.memory_space<vmem>>, vector<16x176xbf16>,
    %275 = vector.extract_strided_slice %256 {offsets = [0, 92], sizes = [16, 176], strides = [1, 1]} : vector<16x498xbf16> to vector<16x176xbf16>
    %c144_242 = arith.constant 144 : index
    %c0_243 = arith.constant 0 : index
    %276 = vector.load %arg24[%c144_242, %c0_243] : memref<576x176xbf16, #tpu.memory_space<vmem>>, vector<16x176xbf16>
    tpu.vector_store %arg24[%c144_242, %c0_243], %275 {strides = array<i32>} : memref<576x176xbf16, #tpu.memory_space<vmem>>, vector<16x176xbf16>,
    %277 = vector.extract_strided_slice %256 {offsets = [0, 95], sizes = [16, 176], strides = [1, 1]} : vector<16x498xbf16> to vector<16x176xbf16>
    %c160_244 = arith.constant 160 : index
    %c0_245 = arith.constant 0 : index
    %278 = vector.load %arg24[%c160_244, %c0_245] : memref<576x176xbf16, #tpu.memory_space<vmem>>, vector<16x176xbf16>
    tpu.vector_store %arg24[%c160_244, %c0_245], %277 {strides = array<i32>} : memref<576x176xbf16, #tpu.memory_space<vmem>>, vector<16x176xbf16>,
    %279 = vector.extract_strided_slice %256 {offsets = [0, 98], sizes = [16, 176], strides = [1, 1]} : vector<16x498xbf16> to vector<16x176xbf16>
    %c176_246 = arith.constant 176 : index
    %c0_247 = arith.constant 0 : index
    %280 = vector.load %arg24[%c176_246, %c0_247] : memref<576x176xbf16, #tpu.memory_space<vmem>>, vector<16x176xbf16>
    tpu.vector_store %arg24[%c176_246, %c0_247], %279 {strides = array<i32>} : memref<576x176xbf16, #tpu.memory_space<vmem>>, vector<16x176xbf16>,
    %281 = vector.extract_strided_slice %256 {offsets = [0, 158], sizes = [16, 176], strides = [1, 1]} : vector<16x498xbf16> to vector<16x176xbf16>
    %c192_248 = arith.constant 192 : index
    %c0_249 = arith.constant 0 : index
    %282 = vector.load %arg24[%c192_248, %c0_249] : memref<576x176xbf16, #tpu.memory_space<vmem>>, vector<16x176xbf16>
    tpu.vector_store %arg24[%c192_248, %c0_249], %281 {strides = array<i32>} : memref<576x176xbf16, #tpu.memory_space<vmem>>, vector<16x176xbf16>,
    %283 = vector.extract_strided_slice %256 {offsets = [0, 161], sizes = [16, 176], strides = [1, 1]} : vector<16x498xbf16> to vector<16x176xbf16>
    %c208_250 = arith.constant 208 : index
    %c0_251 = arith.constant 0 : index
    %284 = vector.load %arg24[%c208_250, %c0_251] : memref<576x176xbf16, #tpu.memory_space<vmem>>, vector<16x176xbf16>
    tpu.vector_store %arg24[%c208_250, %c0_251], %283 {strides = array<i32>} : memref<576x176xbf16, #tpu.memory_space<vmem>>, vector<16x176xbf16>,
    %285 = vector.extract_strided_slice %256 {offsets = [0, 164], sizes = [16, 176], strides = [1, 1]} : vector<16x498xbf16> to vector<16x176xbf16>
    %c224_252 = arith.constant 224 : index
    %c0_253 = arith.constant 0 : index
    %286 = vector.load %arg24[%c224_252, %c0_253] : memref<576x176xbf16, #tpu.memory_space<vmem>>, vector<16x176xbf16>
    tpu.vector_store %arg24[%c224_252, %c0_253], %285 {strides = array<i32>} : memref<576x176xbf16, #tpu.memory_space<vmem>>, vector<16x176xbf16>,
    %287 = vector.extract_strided_slice %256 {offsets = [0, 224], sizes = [16, 176], strides = [1, 1]} : vector<16x498xbf16> to vector<16x176xbf16>
    %c240_254 = arith.constant 240 : index
    %c0_255 = arith.constant 0 : index
    %288 = vector.load %arg24[%c240_254, %c0_255] : memref<576x176xbf16, #tpu.memory_space<vmem>>, vector<16x176xbf16>
    tpu.vector_store %arg24[%c240_254, %c0_255], %287 {strides = array<i32>} : memref<576x176xbf16, #tpu.memory_space<vmem>>, vector<16x176xbf16>,
    %289 = vector.extract_strided_slice %256 {offsets = [0, 227], sizes = [16, 176], strides = [1, 1]} : vector<16x498xbf16> to vector<16x176xbf16>
    %c256_256 = arith.constant 256 : index
    %c0_257 = arith.constant 0 : index
    %290 = vector.load %arg24[%c256_256, %c0_257] : memref<576x176xbf16, #tpu.memory_space<vmem>>, vector<16x176xbf16>
    tpu.vector_store %arg24[%c256_256, %c0_257], %289 {strides = array<i32>} : memref<576x176xbf16, #tpu.memory_space<vmem>>, vector<16x176xbf16>,
    %291 = vector.extract_strided_slice %256 {offsets = [0, 230], sizes = [16, 176], strides = [1, 1]} : vector<16x498xbf16> to vector<16x176xbf16>
    %c272_258 = arith.constant 272 : index
    %c0_259 = arith.constant 0 : index
    %292 = vector.load %arg24[%c272_258, %c0_259] : memref<576x176xbf16, #tpu.memory_space<vmem>>, vector<16x176xbf16>
    tpu.vector_store %arg24[%c272_258, %c0_259], %291 {strides = array<i32>} : memref<576x176xbf16, #tpu.memory_space<vmem>>, vector<16x176xbf16>,
    %293 = vector.extract_strided_slice %256 {offsets = [0, 46], sizes = [16, 176], strides = [1, 1]} : vector<16x498xbf16> to vector<16x176xbf16>
    %c288_260 = arith.constant 288 : index
    %c0_261 = arith.constant 0 : index
    %294 = vector.load %arg24[%c288_260, %c0_261] : memref<576x176xbf16, #tpu.memory_space<vmem>>, vector<16x176xbf16>
    tpu.vector_store %arg24[%c288_260, %c0_261], %293 {strides = array<i32>} : memref<576x176xbf16, #tpu.memory_space<vmem>>, vector<16x176xbf16>,
    %295 = vector.extract_strided_slice %256 {offsets = [0, 51], sizes = [16, 176], strides = [1, 1]} : vector<16x498xbf16> to vector<16x176xbf16>
    %c304_262 = arith.constant 304 : index
    %c0_263 = arith.constant 0 : index
    %296 = vector.load %arg24[%c304_262, %c0_263] : memref<576x176xbf16, #tpu.memory_space<vmem>>, vector<16x176xbf16>
    tpu.vector_store %arg24[%c304_262, %c0_263], %295 {strides = array<i32>} : memref<576x176xbf16, #tpu.memory_space<vmem>>, vector<16x176xbf16>,
    %297 = vector.extract_strided_slice %256 {offsets = [0, 56], sizes = [16, 176], strides = [1, 1]} : vector<16x498xbf16> to vector<16x176xbf16>
    %c320_264 = arith.constant 320 : index
    %c0_265 = arith.constant 0 : index
    %298 = vector.load %arg24[%c320_264, %c0_265] : memref<576x176xbf16, #tpu.memory_space<vmem>>, vector<16x176xbf16>
    tpu.vector_store %arg24[%c320_264, %c0_265], %297 {strides = array<i32>} : memref<576x176xbf16, #tpu.memory_space<vmem>>, vector<16x176xbf16>,
    %299 = vector.extract_strided_slice %256 {offsets = [0, 156], sizes = [16, 176], strides = [1, 1]} : vector<16x498xbf16> to vector<16x176xbf16>
    %c336_266 = arith.constant 336 : index
    %c0_267 = arith.constant 0 : index
    %300 = vector.load %arg24[%c336_266, %c0_267] : memref<576x176xbf16, #tpu.memory_space<vmem>>, vector<16x176xbf16>
    tpu.vector_store %arg24[%c336_266, %c0_267], %299 {strides = array<i32>} : memref<576x176xbf16, #tpu.memory_space<vmem>>, vector<16x176xbf16>,
    %301 = vector.extract_strided_slice %256 {offsets = [0, 161], sizes = [16, 176], strides = [1, 1]} : vector<16x498xbf16> to vector<16x176xbf16>
    %c352_268 = arith.constant 352 : index
    %c0_269 = arith.constant 0 : index
    %302 = vector.load %arg24[%c352_268, %c0_269] : memref<576x176xbf16, #tpu.memory_space<vmem>>, vector<16x176xbf16>
    tpu.vector_store %arg24[%c352_268, %c0_269], %301 {strides = array<i32>} : memref<576x176xbf16, #tpu.memory_space<vmem>>, vector<16x176xbf16>,
    %303 = vector.extract_strided_slice %256 {offsets = [0, 166], sizes = [16, 176], strides = [1, 1]} : vector<16x498xbf16> to vector<16x176xbf16>
    %c368_270 = arith.constant 368 : index
    %c0_271 = arith.constant 0 : index
    %304 = vector.load %arg24[%c368_270, %c0_271] : memref<576x176xbf16, #tpu.memory_space<vmem>>, vector<16x176xbf16>
    tpu.vector_store %arg24[%c368_270, %c0_271], %303 {strides = array<i32>} : memref<576x176xbf16, #tpu.memory_space<vmem>>, vector<16x176xbf16>,
    %305 = vector.extract_strided_slice %256 {offsets = [0, 266], sizes = [16, 176], strides = [1, 1]} : vector<16x498xbf16> to vector<16x176xbf16>
    %c384_272 = arith.constant 384 : index
    %c0_273 = arith.constant 0 : index
    %306 = vector.load %arg24[%c384_272, %c0_273] : memref<576x176xbf16, #tpu.memory_space<vmem>>, vector<16x176xbf16>
    tpu.vector_store %arg24[%c384_272, %c0_273], %305 {strides = array<i32>} : memref<576x176xbf16, #tpu.memory_space<vmem>>, vector<16x176xbf16>,
    %307 = vector.extract_strided_slice %256 {offsets = [0, 271], sizes = [16, 176], strides = [1, 1]} : vector<16x498xbf16> to vector<16x176xbf16>
    %c400_274 = arith.constant 400 : index
    %c0_275 = arith.constant 0 : index
    %308 = vector.load %arg24[%c400_274, %c0_275] : memref<576x176xbf16, #tpu.memory_space<vmem>>, vector<16x176xbf16>
    tpu.vector_store %arg24[%c400_274, %c0_275], %307 {strides = array<i32>} : memref<576x176xbf16, #tpu.memory_space<vmem>>, vector<16x176xbf16>,
    %309 = vector.extract_strided_slice %256 {offsets = [0, 276], sizes = [16, 176], strides = [1, 1]} : vector<16x498xbf16> to vector<16x176xbf16>
    %c416_276 = arith.constant 416 : index
    %c0_277 = arith.constant 0 : index
    %310 = vector.load %arg24[%c416_276, %c0_277] : memref<576x176xbf16, #tpu.memory_space<vmem>>, vector<16x176xbf16>
    tpu.vector_store %arg24[%c416_276, %c0_277], %309 {strides = array<i32>} : memref<576x176xbf16, #tpu.memory_space<vmem>>, vector<16x176xbf16>,
    %311 = vector.extract_strided_slice %256 {offsets = [0, 0], sizes = [16, 176], strides = [1, 1]} : vector<16x498xbf16> to vector<16x176xbf16>
    %c432_278 = arith.constant 432 : index
    %c0_279 = arith.constant 0 : index
    %312 = vector.load %arg24[%c432_278, %c0_279] : memref<576x176xbf16, #tpu.memory_space<vmem>>, vector<16x176xbf16>
    tpu.vector_store %arg24[%c432_278, %c0_279], %311 {strides = array<i32>} : memref<576x176xbf16, #tpu.memory_space<vmem>>, vector<16x176xbf16>,
    %313 = vector.extract_strided_slice %256 {offsets = [0, 7], sizes = [16, 176], strides = [1, 1]} : vector<16x498xbf16> to vector<16x176xbf16>
    %c448_280 = arith.constant 448 : index
    %c0_281 = arith.constant 0 : index
    %314 = vector.load %arg24[%c448_280, %c0_281] : memref<576x176xbf16, #tpu.memory_space<vmem>>, vector<16x176xbf16>
    tpu.vector_store %arg24[%c448_280, %c0_281], %313 {strides = array<i32>} : memref<576x176xbf16, #tpu.memory_space<vmem>>, vector<16x176xbf16>,
    %315 = vector.extract_strided_slice %256 {offsets = [0, 14], sizes = [16, 176], strides = [1, 1]} : vector<16x498xbf16> to vector<16x176xbf16>
    %c464_282 = arith.constant 464 : index
    %c0_283 = arith.constant 0 : index
    %316 = vector.load %arg24[%c464_282, %c0_283] : memref<576x176xbf16, #tpu.memory_space<vmem>>, vector<16x176xbf16>
    tpu.vector_store %arg24[%c464_282, %c0_283], %315 {strides = array<i32>} : memref<576x176xbf16, #tpu.memory_space<vmem>>, vector<16x176xbf16>,
    %317 = vector.extract_strided_slice %256 {offsets = [0, 154], sizes = [16, 176], strides = [1, 1]} : vector<16x498xbf16> to vector<16x176xbf16>
    %c480_284 = arith.constant 480 : index
    %c0_285 = arith.constant 0 : index
    %318 = vector.load %arg24[%c480_284, %c0_285] : memref<576x176xbf16, #tpu.memory_space<vmem>>, vector<16x176xbf16>
    tpu.vector_store %arg24[%c480_284, %c0_285], %317 {strides = array<i32>} : memref<576x176xbf16, #tpu.memory_space<vmem>>, vector<16x176xbf16>,
    %319 = vector.extract_strided_slice %256 {offsets = [0, 161], sizes = [16, 176], strides = [1, 1]} : vector<16x498xbf16> to vector<16x176xbf16>
    %c496_286 = arith.constant 496 : index
    %c0_287 = arith.constant 0 : index
    %320 = vector.load %arg24[%c496_286, %c0_287] : memref<576x176xbf16, #tpu.memory_space<vmem>>, vector<16x176xbf16>
    tpu.vector_store %arg24[%c496_286, %c0_287], %319 {strides = array<i32>} : memref<576x176xbf16, #tpu.memory_space<vmem>>, vector<16x176xbf16>,
    %321 = vector.extract_strided_slice %256 {offsets = [0, 168], sizes = [16, 176], strides = [1, 1]} : vector<16x498xbf16> to vector<16x176xbf16>
    %c512_288 = arith.constant 512 : index
    %c0_289 = arith.constant 0 : index
    %322 = vector.load %arg24[%c512_288, %c0_289] : memref<576x176xbf16, #tpu.memory_space<vmem>>, vector<16x176xbf16>
    tpu.vector_store %arg24[%c512_288, %c0_289], %321 {strides = array<i32>} : memref<576x176xbf16, #tpu.memory_space<vmem>>, vector<16x176xbf16>,
    %323 = vector.extract_strided_slice %256 {offsets = [0, 308], sizes = [16, 176], strides = [1, 1]} : vector<16x498xbf16> to vector<16x176xbf16>
    %c528_290 = arith.constant 528 : index
    %c0_291 = arith.constant 0 : index
    %324 = vector.load %arg24[%c528_290, %c0_291] : memref<576x176xbf16, #tpu.memory_space<vmem>>, vector<16x176xbf16>
    tpu.vector_store %arg24[%c528_290, %c0_291], %323 {strides = array<i32>} : memref<576x176xbf16, #tpu.memory_space<vmem>>, vector<16x176xbf16>,
    %325 = vector.extract_strided_slice %256 {offsets = [0, 315], sizes = [16, 176], strides = [1, 1]} : vector<16x498xbf16> to vector<16x176xbf16>
    %c544_292 = arith.constant 544 : index
    %c0_293 = arith.constant 0 : index
    %326 = vector.load %arg24[%c544_292, %c0_293] : memref<576x176xbf16, #tpu.memory_space<vmem>>, vector<16x176xbf16>
    tpu.vector_store %arg24[%c544_292, %c0_293], %325 {strides = array<i32>} : memref<576x176xbf16, #tpu.memory_space<vmem>>, vector<16x176xbf16>,
    %327 = vector.extract_strided_slice %256 {offsets = [0, 322], sizes = [16, 176], strides = [1, 1]} : vector<16x498xbf16> to vector<16x176xbf16>
    %c560_294 = arith.constant 560 : index
    %c0_295 = arith.constant 0 : index
    %328 = vector.load %arg24[%c560_294, %c0_295] : memref<576x176xbf16, #tpu.memory_space<vmem>>, vector<16x176xbf16>
    tpu.vector_store %arg24[%c560_294, %c0_295], %327 {strides = array<i32>} : memref<576x176xbf16, #tpu.memory_space<vmem>>, vector<16x176xbf16>,
    %c0_296 = arith.constant 0 : index
    %c0_297 = arith.constant 0 : index
    %329 = vector.load %arg9[%c0_296, %c0_297] : memref<32x576xbf16, #tpu.memory_space<vmem>>, vector<32x576xbf16>
    %c0_298 = arith.constant 0 : index
    %c0_299 = arith.constant 0 : index
    %330 = vector.load %arg24[%c0_298, %c0_299] : memref<576x176xbf16, #tpu.memory_space<vmem>>, vector<576x176xbf16>
    %cst_300 = arith.constant dense<0.000000e+00> : vector<32x176xf32>
    %331 = tpu.matmul %329, %330, %cst_300 {dimension_numbers = #tpu.dot_dimension_numbers<[1], [0], [0], [1], [0, 0, 1, 1], [], []>} : vector<32x576xbf16>, vector<576x176xbf16>, vector<32x176xf32> -> vector<32x176xf32>
    %c0_301 = arith.constant 0 : index
    %c0_302 = arith.constant 0 : index
    %332 = vector.load %arg14[%c0_301, %c0_302] : memref<32x1xf32, #tpu.memory_space<vmem>>, vector<32x1xf32>
    %333 = vector.broadcast %332 : vector<32x1xf32> to vector<32x176xf32>
    %334 = arith.addf %331, %333 : vector<32x176xf32>
    %cst_303 = arith.constant 0.000000e+00 : f32
    %335 = vector.broadcast %cst_303 : f32 to vector<32x176xf32>
    %336 = arith.maximumf %334, %335 : vector<32x176xf32>
    %c0_304 = arith.constant 0 : index
    %c0_305 = arith.constant 0 : index
    %c0_306 = arith.constant 0 : index
    %337 = vector.load %arg19[%c0_304, %c0_305, %c0_306] : memref<1x32x176xf32, #tpu.memory_space<vmem>>, vector<1x32x176xf32>
    %338 = vector.shape_cast %337 : vector<1x32x176xf32> to vector<32x176xf32>
    %339 = vector.shape_cast %336 : vector<32x176xf32> to vector<1x32x176xf32>
    tpu.vector_store %arg19[%c0_304, %c0_305, %c0_306], %339 {strides = array<i32>} : memref<1x32x176xf32, #tpu.memory_space<vmem>>, vector<1x32x176xf32>,
    %c0_307 = arith.constant 0 : index
    %c0_308 = arith.constant 0 : index
    %c0_309 = arith.constant 0 : index
    %340 = vector.load %arg5[%c0_307, %c0_308, %c0_309] : memref<1x16x264xbf16, #tpu.memory_space<vmem>>, vector<1x16x264xbf16>
    %341 = vector.shape_cast %340 : vector<1x16x264xbf16> to vector<16x264xbf16>
    %342 = vector.extract_strided_slice %341 {offsets = [0, 51], sizes = [16, 128], strides = [1, 1]} : vector<16x264xbf16> to vector<16x128xbf16>
    %c0_310 = arith.constant 0 : index
    %c0_311 = arith.constant 0 : index
    %343 = vector.load %arg25[%c0_310, %c0_311] : memref<576x128xbf16, #tpu.memory_space<vmem>>, vector<16x128xbf16>
    tpu.vector_store %arg25[%c0_310, %c0_311], %342 {strides = array<i32>} : memref<576x128xbf16, #tpu.memory_space<vmem>>, vector<16x128xbf16>,
    %344 = vector.extract_strided_slice %341 {offsets = [0, 52], sizes = [16, 128], strides = [1, 1]} : vector<16x264xbf16> to vector<16x128xbf16>
    %c16_312 = arith.constant 16 : index
    %c0_313 = arith.constant 0 : index
    %345 = vector.load %arg25[%c16_312, %c0_313] : memref<576x128xbf16, #tpu.memory_space<vmem>>, vector<16x128xbf16>
    tpu.vector_store %arg25[%c16_312, %c0_313], %344 {strides = array<i32>} : memref<576x128xbf16, #tpu.memory_space<vmem>>, vector<16x128xbf16>,
    %346 = vector.extract_strided_slice %341 {offsets = [0, 53], sizes = [16, 128], strides = [1, 1]} : vector<16x264xbf16> to vector<16x128xbf16>
    %c32_314 = arith.constant 32 : index
    %c0_315 = arith.constant 0 : index
    %347 = vector.load %arg25[%c32_314, %c0_315] : memref<576x128xbf16, #tpu.memory_space<vmem>>, vector<16x128xbf16>
    tpu.vector_store %arg25[%c32_314, %c0_315], %346 {strides = array<i32>} : memref<576x128xbf16, #tpu.memory_space<vmem>>, vector<16x128xbf16>,
    %348 = vector.extract_strided_slice %341 {offsets = [0, 67], sizes = [16, 128], strides = [1, 1]} : vector<16x264xbf16> to vector<16x128xbf16>
    %c48_316 = arith.constant 48 : index
    %c0_317 = arith.constant 0 : index
    %349 = vector.load %arg25[%c48_316, %c0_317] : memref<576x128xbf16, #tpu.memory_space<vmem>>, vector<16x128xbf16>
    tpu.vector_store %arg25[%c48_316, %c0_317], %348 {strides = array<i32>} : memref<576x128xbf16, #tpu.memory_space<vmem>>, vector<16x128xbf16>,
    %350 = vector.extract_strided_slice %341 {offsets = [0, 68], sizes = [16, 128], strides = [1, 1]} : vector<16x264xbf16> to vector<16x128xbf16>
    %c64_318 = arith.constant 64 : index
    %c0_319 = arith.constant 0 : index
    %351 = vector.load %arg25[%c64_318, %c0_319] : memref<576x128xbf16, #tpu.memory_space<vmem>>, vector<16x128xbf16>
    tpu.vector_store %arg25[%c64_318, %c0_319], %350 {strides = array<i32>} : memref<576x128xbf16, #tpu.memory_space<vmem>>, vector<16x128xbf16>,
    %352 = vector.extract_strided_slice %341 {offsets = [0, 69], sizes = [16, 128], strides = [1, 1]} : vector<16x264xbf16> to vector<16x128xbf16>
    %c80_320 = arith.constant 80 : index
    %c0_321 = arith.constant 0 : index
    %353 = vector.load %arg25[%c80_320, %c0_321] : memref<576x128xbf16, #tpu.memory_space<vmem>>, vector<16x128xbf16>
    tpu.vector_store %arg25[%c80_320, %c0_321], %352 {strides = array<i32>} : memref<576x128xbf16, #tpu.memory_space<vmem>>, vector<16x128xbf16>,
    %354 = vector.extract_strided_slice %341 {offsets = [0, 83], sizes = [16, 128], strides = [1, 1]} : vector<16x264xbf16> to vector<16x128xbf16>
    %c96_322 = arith.constant 96 : index
    %c0_323 = arith.constant 0 : index
    %355 = vector.load %arg25[%c96_322, %c0_323] : memref<576x128xbf16, #tpu.memory_space<vmem>>, vector<16x128xbf16>
    tpu.vector_store %arg25[%c96_322, %c0_323], %354 {strides = array<i32>} : memref<576x128xbf16, #tpu.memory_space<vmem>>, vector<16x128xbf16>,
    %356 = vector.extract_strided_slice %341 {offsets = [0, 84], sizes = [16, 128], strides = [1, 1]} : vector<16x264xbf16> to vector<16x128xbf16>
    %c112_324 = arith.constant 112 : index
    %c0_325 = arith.constant 0 : index
    %357 = vector.load %arg25[%c112_324, %c0_325] : memref<576x128xbf16, #tpu.memory_space<vmem>>, vector<16x128xbf16>
    tpu.vector_store %arg25[%c112_324, %c0_325], %356 {strides = array<i32>} : memref<576x128xbf16, #tpu.memory_space<vmem>>, vector<16x128xbf16>,
    %358 = vector.extract_strided_slice %341 {offsets = [0, 85], sizes = [16, 128], strides = [1, 1]} : vector<16x264xbf16> to vector<16x128xbf16>
    %c128_326 = arith.constant 128 : index
    %c0_327 = arith.constant 0 : index
    %359 = vector.load %arg25[%c128_326, %c0_327] : memref<576x128xbf16, #tpu.memory_space<vmem>>, vector<16x128xbf16>
    tpu.vector_store %arg25[%c128_326, %c0_327], %358 {strides = array<i32>} : memref<576x128xbf16, #tpu.memory_space<vmem>>, vector<16x128xbf16>,
    %360 = vector.extract_strided_slice %341 {offsets = [0, 34], sizes = [16, 128], strides = [1, 1]} : vector<16x264xbf16> to vector<16x128xbf16>
    %c144_328 = arith.constant 144 : index
    %c0_329 = arith.constant 0 : index
    %361 = vector.load %arg25[%c144_328, %c0_329] : memref<576x128xbf16, #tpu.memory_space<vmem>>, vector<16x128xbf16>
    tpu.vector_store %arg25[%c144_328, %c0_329], %360 {strides = array<i32>} : memref<576x128xbf16, #tpu.memory_space<vmem>>, vector<16x128xbf16>,
    %362 = vector.extract_strided_slice %341 {offsets = [0, 36], sizes = [16, 128], strides = [1, 1]} : vector<16x264xbf16> to vector<16x128xbf16>
    %c160_330 = arith.constant 160 : index
    %c0_331 = arith.constant 0 : index
    %363 = vector.load %arg25[%c160_330, %c0_331] : memref<576x128xbf16, #tpu.memory_space<vmem>>, vector<16x128xbf16>
    tpu.vector_store %arg25[%c160_330, %c0_331], %362 {strides = array<i32>} : memref<576x128xbf16, #tpu.memory_space<vmem>>, vector<16x128xbf16>,
    %364 = vector.extract_strided_slice %341 {offsets = [0, 38], sizes = [16, 128], strides = [1, 1]} : vector<16x264xbf16> to vector<16x128xbf16>
    %c176_332 = arith.constant 176 : index
    %c0_333 = arith.constant 0 : index
    %365 = vector.load %arg25[%c176_332, %c0_333] : memref<576x128xbf16, #tpu.memory_space<vmem>>, vector<16x128xbf16>
    tpu.vector_store %arg25[%c176_332, %c0_333], %364 {strides = array<i32>} : memref<576x128xbf16, #tpu.memory_space<vmem>>, vector<16x128xbf16>,
    %366 = vector.extract_strided_slice %341 {offsets = [0, 66], sizes = [16, 128], strides = [1, 1]} : vector<16x264xbf16> to vector<16x128xbf16>
    %c192_334 = arith.constant 192 : index
    %c0_335 = arith.constant 0 : index
    %367 = vector.load %arg25[%c192_334, %c0_335] : memref<576x128xbf16, #tpu.memory_space<vmem>>, vector<16x128xbf16>
    tpu.vector_store %arg25[%c192_334, %c0_335], %366 {strides = array<i32>} : memref<576x128xbf16, #tpu.memory_space<vmem>>, vector<16x128xbf16>,
    %368 = vector.extract_strided_slice %341 {offsets = [0, 68], sizes = [16, 128], strides = [1, 1]} : vector<16x264xbf16> to vector<16x128xbf16>
    %c208_336 = arith.constant 208 : index
    %c0_337 = arith.constant 0 : index
    %369 = vector.load %arg25[%c208_336, %c0_337] : memref<576x128xbf16, #tpu.memory_space<vmem>>, vector<16x128xbf16>
    tpu.vector_store %arg25[%c208_336, %c0_337], %368 {strides = array<i32>} : memref<576x128xbf16, #tpu.memory_space<vmem>>, vector<16x128xbf16>,
    %370 = vector.extract_strided_slice %341 {offsets = [0, 70], sizes = [16, 128], strides = [1, 1]} : vector<16x264xbf16> to vector<16x128xbf16>
    %c224_338 = arith.constant 224 : index
    %c0_339 = arith.constant 0 : index
    %371 = vector.load %arg25[%c224_338, %c0_339] : memref<576x128xbf16, #tpu.memory_space<vmem>>, vector<16x128xbf16>
    tpu.vector_store %arg25[%c224_338, %c0_339], %370 {strides = array<i32>} : memref<576x128xbf16, #tpu.memory_space<vmem>>, vector<16x128xbf16>,
    %372 = vector.extract_strided_slice %341 {offsets = [0, 98], sizes = [16, 128], strides = [1, 1]} : vector<16x264xbf16> to vector<16x128xbf16>
    %c240_340 = arith.constant 240 : index
    %c0_341 = arith.constant 0 : index
    %373 = vector.load %arg25[%c240_340, %c0_341] : memref<576x128xbf16, #tpu.memory_space<vmem>>, vector<16x128xbf16>
    tpu.vector_store %arg25[%c240_340, %c0_341], %372 {strides = array<i32>} : memref<576x128xbf16, #tpu.memory_space<vmem>>, vector<16x128xbf16>,
    %374 = vector.extract_strided_slice %341 {offsets = [0, 100], sizes = [16, 128], strides = [1, 1]} : vector<16x264xbf16> to vector<16x128xbf16>
    %c256_342 = arith.constant 256 : index
    %c0_343 = arith.constant 0 : index
    %375 = vector.load %arg25[%c256_342, %c0_343] : memref<576x128xbf16, #tpu.memory_space<vmem>>, vector<16x128xbf16>
    tpu.vector_store %arg25[%c256_342, %c0_343], %374 {strides = array<i32>} : memref<576x128xbf16, #tpu.memory_space<vmem>>, vector<16x128xbf16>,
    %376 = vector.extract_strided_slice %341 {offsets = [0, 102], sizes = [16, 128], strides = [1, 1]} : vector<16x264xbf16> to vector<16x128xbf16>
    %c272_344 = arith.constant 272 : index
    %c0_345 = arith.constant 0 : index
    %377 = vector.load %arg25[%c272_344, %c0_345] : memref<576x128xbf16, #tpu.memory_space<vmem>>, vector<16x128xbf16>
    tpu.vector_store %arg25[%c272_344, %c0_345], %376 {strides = array<i32>} : memref<576x128xbf16, #tpu.memory_space<vmem>>, vector<16x128xbf16>,
    %378 = vector.extract_strided_slice %341 {offsets = [0, 17], sizes = [16, 128], strides = [1, 1]} : vector<16x264xbf16> to vector<16x128xbf16>
    %c288_346 = arith.constant 288 : index
    %c0_347 = arith.constant 0 : index
    %379 = vector.load %arg25[%c288_346, %c0_347] : memref<576x128xbf16, #tpu.memory_space<vmem>>, vector<16x128xbf16>
    tpu.vector_store %arg25[%c288_346, %c0_347], %378 {strides = array<i32>} : memref<576x128xbf16, #tpu.memory_space<vmem>>, vector<16x128xbf16>,
    %380 = vector.extract_strided_slice %341 {offsets = [0, 20], sizes = [16, 128], strides = [1, 1]} : vector<16x264xbf16> to vector<16x128xbf16>
    %c304_348 = arith.constant 304 : index
    %c0_349 = arith.constant 0 : index
    %381 = vector.load %arg25[%c304_348, %c0_349] : memref<576x128xbf16, #tpu.memory_space<vmem>>, vector<16x128xbf16>
    tpu.vector_store %arg25[%c304_348, %c0_349], %380 {strides = array<i32>} : memref<576x128xbf16, #tpu.memory_space<vmem>>, vector<16x128xbf16>,
    %382 = vector.extract_strided_slice %341 {offsets = [0, 23], sizes = [16, 128], strides = [1, 1]} : vector<16x264xbf16> to vector<16x128xbf16>
    %c320_350 = arith.constant 320 : index
    %c0_351 = arith.constant 0 : index
    %383 = vector.load %arg25[%c320_350, %c0_351] : memref<576x128xbf16, #tpu.memory_space<vmem>>, vector<16x128xbf16>
    tpu.vector_store %arg25[%c320_350, %c0_351], %382 {strides = array<i32>} : memref<576x128xbf16, #tpu.memory_space<vmem>>, vector<16x128xbf16>,
    %384 = vector.extract_strided_slice %341 {offsets = [0, 65], sizes = [16, 128], strides = [1, 1]} : vector<16x264xbf16> to vector<16x128xbf16>
    %c336_352 = arith.constant 336 : index
    %c0_353 = arith.constant 0 : index
    %385 = vector.load %arg25[%c336_352, %c0_353] : memref<576x128xbf16, #tpu.memory_space<vmem>>, vector<16x128xbf16>
    tpu.vector_store %arg25[%c336_352, %c0_353], %384 {strides = array<i32>} : memref<576x128xbf16, #tpu.memory_space<vmem>>, vector<16x128xbf16>,
    %386 = vector.extract_strided_slice %341 {offsets = [0, 68], sizes = [16, 128], strides = [1, 1]} : vector<16x264xbf16> to vector<16x128xbf16>
    %c352_354 = arith.constant 352 : index
    %c0_355 = arith.constant 0 : index
    %387 = vector.load %arg25[%c352_354, %c0_355] : memref<576x128xbf16, #tpu.memory_space<vmem>>, vector<16x128xbf16>
    tpu.vector_store %arg25[%c352_354, %c0_355], %386 {strides = array<i32>} : memref<576x128xbf16, #tpu.memory_space<vmem>>, vector<16x128xbf16>,
    %388 = vector.extract_strided_slice %341 {offsets = [0, 71], sizes = [16, 128], strides = [1, 1]} : vector<16x264xbf16> to vector<16x128xbf16>
    %c368_356 = arith.constant 368 : index
    %c0_357 = arith.constant 0 : index
    %389 = vector.load %arg25[%c368_356, %c0_357] : memref<576x128xbf16, #tpu.memory_space<vmem>>, vector<16x128xbf16>
    tpu.vector_store %arg25[%c368_356, %c0_357], %388 {strides = array<i32>} : memref<576x128xbf16, #tpu.memory_space<vmem>>, vector<16x128xbf16>,
    %390 = vector.extract_strided_slice %341 {offsets = [0, 113], sizes = [16, 128], strides = [1, 1]} : vector<16x264xbf16> to vector<16x128xbf16>
    %c384_358 = arith.constant 384 : index
    %c0_359 = arith.constant 0 : index
    %391 = vector.load %arg25[%c384_358, %c0_359] : memref<576x128xbf16, #tpu.memory_space<vmem>>, vector<16x128xbf16>
    tpu.vector_store %arg25[%c384_358, %c0_359], %390 {strides = array<i32>} : memref<576x128xbf16, #tpu.memory_space<vmem>>, vector<16x128xbf16>,
    %392 = vector.extract_strided_slice %341 {offsets = [0, 116], sizes = [16, 128], strides = [1, 1]} : vector<16x264xbf16> to vector<16x128xbf16>
    %c400_360 = arith.constant 400 : index
    %c0_361 = arith.constant 0 : index
    %393 = vector.load %arg25[%c400_360, %c0_361] : memref<576x128xbf16, #tpu.memory_space<vmem>>, vector<16x128xbf16>
    tpu.vector_store %arg25[%c400_360, %c0_361], %392 {strides = array<i32>} : memref<576x128xbf16, #tpu.memory_space<vmem>>, vector<16x128xbf16>,
    %394 = vector.extract_strided_slice %341 {offsets = [0, 119], sizes = [16, 128], strides = [1, 1]} : vector<16x264xbf16> to vector<16x128xbf16>
    %c416_362 = arith.constant 416 : index
    %c0_363 = arith.constant 0 : index
    %395 = vector.load %arg25[%c416_362, %c0_363] : memref<576x128xbf16, #tpu.memory_space<vmem>>, vector<16x128xbf16>
    tpu.vector_store %arg25[%c416_362, %c0_363], %394 {strides = array<i32>} : memref<576x128xbf16, #tpu.memory_space<vmem>>, vector<16x128xbf16>,
    %396 = vector.extract_strided_slice %341 {offsets = [0, 0], sizes = [16, 128], strides = [1, 1]} : vector<16x264xbf16> to vector<16x128xbf16>
    %c432_364 = arith.constant 432 : index
    %c0_365 = arith.constant 0 : index
    %397 = vector.load %arg25[%c432_364, %c0_365] : memref<576x128xbf16, #tpu.memory_space<vmem>>, vector<16x128xbf16>
    tpu.vector_store %arg25[%c432_364, %c0_365], %396 {strides = array<i32>} : memref<576x128xbf16, #tpu.memory_space<vmem>>, vector<16x128xbf16>,
    %398 = vector.extract_strided_slice %341 {offsets = [0, 4], sizes = [16, 128], strides = [1, 1]} : vector<16x264xbf16> to vector<16x128xbf16>
    %c448_366 = arith.constant 448 : index
    %c0_367 = arith.constant 0 : index
    %399 = vector.load %arg25[%c448_366, %c0_367] : memref<576x128xbf16, #tpu.memory_space<vmem>>, vector<16x128xbf16>
    tpu.vector_store %arg25[%c448_366, %c0_367], %398 {strides = array<i32>} : memref<576x128xbf16, #tpu.memory_space<vmem>>, vector<16x128xbf16>,
    %400 = vector.extract_strided_slice %341 {offsets = [0, 8], sizes = [16, 128], strides = [1, 1]} : vector<16x264xbf16> to vector<16x128xbf16>
    %c464_368 = arith.constant 464 : index
    %c0_369 = arith.constant 0 : index
    %401 = vector.load %arg25[%c464_368, %c0_369] : memref<576x128xbf16, #tpu.memory_space<vmem>>, vector<16x128xbf16>
    tpu.vector_store %arg25[%c464_368, %c0_369], %400 {strides = array<i32>} : memref<576x128xbf16, #tpu.memory_space<vmem>>, vector<16x128xbf16>,
    %402 = vector.extract_strided_slice %341 {offsets = [0, 64], sizes = [16, 128], strides = [1, 1]} : vector<16x264xbf16> to vector<16x128xbf16>
    %c480_370 = arith.constant 480 : index
    %c0_371 = arith.constant 0 : index
    %403 = vector.load %arg25[%c480_370, %c0_371] : memref<576x128xbf16, #tpu.memory_space<vmem>>, vector<16x128xbf16>
    tpu.vector_store %arg25[%c480_370, %c0_371], %402 {strides = array<i32>} : memref<576x128xbf16, #tpu.memory_space<vmem>>, vector<16x128xbf16>,
    %404 = vector.extract_strided_slice %341 {offsets = [0, 68], sizes = [16, 128], strides = [1, 1]} : vector<16x264xbf16> to vector<16x128xbf16>
    %c496_372 = arith.constant 496 : index
    %c0_373 = arith.constant 0 : index
    %405 = vector.load %arg25[%c496_372, %c0_373] : memref<576x128xbf16, #tpu.memory_space<vmem>>, vector<16x128xbf16>
    tpu.vector_store %arg25[%c496_372, %c0_373], %404 {strides = array<i32>} : memref<576x128xbf16, #tpu.memory_space<vmem>>, vector<16x128xbf16>,
    %406 = vector.extract_strided_slice %341 {offsets = [0, 72], sizes = [16, 128], strides = [1, 1]} : vector<16x264xbf16> to vector<16x128xbf16>
    %c512_374 = arith.constant 512 : index
    %c0_375 = arith.constant 0 : index
    %407 = vector.load %arg25[%c512_374, %c0_375] : memref<576x128xbf16, #tpu.memory_space<vmem>>, vector<16x128xbf16>
    tpu.vector_store %arg25[%c512_374, %c0_375], %406 {strides = array<i32>} : memref<576x128xbf16, #tpu.memory_space<vmem>>, vector<16x128xbf16>,
    %408 = vector.extract_strided_slice %341 {offsets = [0, 128], sizes = [16, 128], strides = [1, 1]} : vector<16x264xbf16> to vector<16x128xbf16>
    %c528_376 = arith.constant 528 : index
    %c0_377 = arith.constant 0 : index
    %409 = vector.load %arg25[%c528_376, %c0_377] : memref<576x128xbf16, #tpu.memory_space<vmem>>, vector<16x128xbf16>
    tpu.vector_store %arg25[%c528_376, %c0_377], %408 {strides = array<i32>} : memref<576x128xbf16, #tpu.memory_space<vmem>>, vector<16x128xbf16>,
    %410 = vector.extract_strided_slice %341 {offsets = [0, 132], sizes = [16, 128], strides = [1, 1]} : vector<16x264xbf16> to vector<16x128xbf16>
    %c544_378 = arith.constant 544 : index
    %c0_379 = arith.constant 0 : index
    %411 = vector.load %arg25[%c544_378, %c0_379] : memref<576x128xbf16, #tpu.memory_space<vmem>>, vector<16x128xbf16>
    tpu.vector_store %arg25[%c544_378, %c0_379], %410 {strides = array<i32>} : memref<576x128xbf16, #tpu.memory_space<vmem>>, vector<16x128xbf16>,
    %412 = vector.extract_strided_slice %341 {offsets = [0, 136], sizes = [16, 128], strides = [1, 1]} : vector<16x264xbf16> to vector<16x128xbf16>
    %c560_380 = arith.constant 560 : index
    %c0_381 = arith.constant 0 : index
    %413 = vector.load %arg25[%c560_380, %c0_381] : memref<576x128xbf16, #tpu.memory_space<vmem>>, vector<16x128xbf16>
    tpu.vector_store %arg25[%c560_380, %c0_381], %412 {strides = array<i32>} : memref<576x128xbf16, #tpu.memory_space<vmem>>, vector<16x128xbf16>,
    %c0_382 = arith.constant 0 : index
    %c0_383 = arith.constant 0 : index
    %414 = vector.load %arg10[%c0_382, %c0_383] : memref<32x576xbf16, #tpu.memory_space<vmem>>, vector<32x576xbf16>
    %c0_384 = arith.constant 0 : index
    %c0_385 = arith.constant 0 : index
    %415 = vector.load %arg25[%c0_384, %c0_385] : memref<576x128xbf16, #tpu.memory_space<vmem>>, vector<576x128xbf16>
    %cst_386 = arith.constant dense<0.000000e+00> : vector<32x128xf32>
    %416 = tpu.matmul %414, %415, %cst_386 {dimension_numbers = #tpu.dot_dimension_numbers<[1], [0], [0], [1], [0, 0, 1, 1], [], []>} : vector<32x576xbf16>, vector<576x128xbf16>, vector<32x128xf32> -> vector<32x128xf32>
    %c0_387 = arith.constant 0 : index
    %c0_388 = arith.constant 0 : index
    %417 = vector.load %arg15[%c0_387, %c0_388] : memref<32x1xf32, #tpu.memory_space<vmem>>, vector<32x1xf32>
    %418 = vector.broadcast %417 : vector<32x1xf32> to vector<32x128xf32>
    %419 = arith.addf %416, %418 : vector<32x128xf32>
    %cst_389 = arith.constant 0.000000e+00 : f32
    %420 = vector.broadcast %cst_389 : f32 to vector<32x128xf32>
    %421 = arith.maximumf %419, %420 : vector<32x128xf32>
    %c0_390 = arith.constant 0 : index
    %c0_391 = arith.constant 0 : index
    %c0_392 = arith.constant 0 : index
    %422 = vector.load %arg20[%c0_390, %c0_391, %c0_392] : memref<1x32x128xf32, #tpu.memory_space<vmem>>, vector<1x32x128xf32>
    %423 = vector.shape_cast %422 : vector<1x32x128xf32> to vector<32x128xf32>
    %424 = vector.shape_cast %421 : vector<32x128xf32> to vector<1x32x128xf32>
    tpu.vector_store %arg20[%c0_390, %c0_391, %c0_392], %424 {strides = array<i32>} : memref<1x32x128xf32, #tpu.memory_space<vmem>>, vector<1x32x128xf32>,
    return
  }
  func.func @transform_0(%arg0: i32) -> (i32, i32, i32) {
    %c0_i32 = arith.constant 0 : i32
    %c0_i32_0 = arith.constant 0 : i32
    %c0_i32_1 = arith.constant 0 : i32
    return %arg0, %c0_i32, %c0_i32_0 : i32, i32, i32
  }
  func.func @transform_1(%arg0: i32) -> (i32, i32, i32) {
    %c0_i32 = arith.constant 0 : i32
    %c0_i32_0 = arith.constant 0 : i32
    %c0_i32_1 = arith.constant 0 : i32
    return %arg0, %c0_i32, %c0_i32_0 : i32, i32, i32
  }
  func.func @transform_2(%arg0: i32) -> (i32, i32, i32) {
    %c0_i32 = arith.constant 0 : i32
    %c0_i32_0 = arith.constant 0 : i32
    %c0_i32_1 = arith.constant 0 : i32
    return %arg0, %c0_i32, %c0_i32_0 : i32, i32, i32
  }
  func.func @transform_3(%arg0: i32) -> (i32, i32, i32) {
    %c0_i32 = arith.constant 0 : i32
    %c0_i32_0 = arith.constant 0 : i32
    %c0_i32_1 = arith.constant 0 : i32
    return %arg0, %c0_i32, %c0_i32_0 : i32, i32, i32
  }
  func.func @transform_4(%arg0: i32) -> (i32, i32, i32) {
    %c0_i32 = arith.constant 0 : i32
    %c0_i32_0 = arith.constant 0 : i32
    %c0_i32_1 = arith.constant 0 : i32
    return %arg0, %c0_i32, %c0_i32_0 : i32, i32, i32
  }
  func.func @transform_5(%arg0: i32) -> (i32, i32) {
    %c0_i32 = arith.constant 0 : i32
    %c0_i32_0 = arith.constant 0 : i32
    %c0_i32_1 = arith.constant 0 : i32
    return %c0_i32, %c0_i32_0 : i32, i32
  }
  func.func @transform_6(%arg0: i32) -> (i32, i32) {
    %c0_i32 = arith.constant 0 : i32
    %c0_i32_0 = arith.constant 0 : i32
    %c0_i32_1 = arith.constant 0 : i32
    return %c0_i32, %c0_i32_0 : i32, i32
  }
  func.func @transform_7(%arg0: i32) -> (i32, i32) {
    %c0_i32 = arith.constant 0 : i32
    %c0_i32_0 = arith.constant 0 : i32
    %c0_i32_1 = arith.constant 0 : i32
    return %c0_i32, %c0_i32_0 : i32, i32
  }
  func.func @transform_8(%arg0: i32) -> (i32, i32) {
    %c0_i32 = arith.constant 0 : i32
    %c0_i32_0 = arith.constant 0 : i32
    %c0_i32_1 = arith.constant 0 : i32
    return %c0_i32, %c0_i32_0 : i32, i32
  }
  func.func @transform_9(%arg0: i32) -> (i32, i32) {
    %c0_i32 = arith.constant 0 : i32
    %c0_i32_0 = arith.constant 0 : i32
    %c0_i32_1 = arith.constant 0 : i32
    return %c0_i32, %c0_i32_0 : i32, i32
  }
  func.func @transform_10(%arg0: i32) -> (i32, i32) {
    %c0_i32 = arith.constant 0 : i32
    %c0_i32_0 = arith.constant 0 : i32
    %c0_i32_1 = arith.constant 0 : i32
    return %c0_i32, %c0_i32_0 : i32, i32
  }
  func.func @transform_11(%arg0: i32) -> (i32, i32) {
    %c0_i32 = arith.constant 0 : i32
    %c0_i32_0 = arith.constant 0 : i32
    %c0_i32_1 = arith.constant 0 : i32
    return %c0_i32, %c0_i32_0 : i32, i32
  }
  func.func @transform_12(%arg0: i32) -> (i32, i32) {
    %c0_i32 = arith.constant 0 : i32
    %c0_i32_0 = arith.constant 0 : i32
    %c0_i32_1 = arith.constant 0 : i32
    return %c0_i32, %c0_i32_0 : i32, i32
  }
  func.func @transform_13(%arg0: i32) -> (i32, i32) {
    %c0_i32 = arith.constant 0 : i32
    %c0_i32_0 = arith.constant 0 : i32
    %c0_i32_1 = arith.constant 0 : i32
    return %c0_i32, %c0_i32_0 : i32, i32
  }
  func.func @transform_14(%arg0: i32) -> (i32, i32) {
    %c0_i32 = arith.constant 0 : i32
    %c0_i32_0 = arith.constant 0 : i32
    %c0_i32_1 = arith.constant 0 : i32
    return %c0_i32, %c0_i32_0 : i32, i32
  }
  func.func @transform_15(%arg0: i32) -> (i32, i32, i32) {
    %c0_i32 = arith.constant 0 : i32
    %c0_i32_0 = arith.constant 0 : i32
    %c0_i32_1 = arith.constant 0 : i32
    return %arg0, %c0_i32, %c0_i32_0 : i32, i32, i32
  }
  func.func @transform_16(%arg0: i32) -> (i32, i32, i32) {
    %c0_i32 = arith.constant 0 : i32
    %c0_i32_0 = arith.constant 0 : i32
    %c0_i32_1 = arith.constant 0 : i32
    return %arg0, %c0_i32, %c0_i32_0 : i32, i32, i32
  }
  func.func @transform_17(%arg0: i32) -> (i32, i32, i32) {
    %c0_i32 = arith.constant 0 : i32
    %c0_i32_0 = arith.constant 0 : i32
    %c0_i32_1 = arith.constant 0 : i32
    return %arg0, %c0_i32, %c0_i32_0 : i32, i32, i32
  }
  func.func @transform_18(%arg0: i32) -> (i32, i32, i32) {
    %c0_i32 = arith.constant 0 : i32
    %c0_i32_0 = arith.constant 0 : i32
    %c0_i32_1 = arith.constant 0 : i32
    return %arg0, %c0_i32, %c0_i32_0 : i32, i32, i32
  }
  func.func @transform_19(%arg0: i32) -> (i32, i32, i32) {
    %c0_i32 = arith.constant 0 : i32
    %c0_i32_0 = arith.constant 0 : i32
    %c0_i32_1 = arith.constant 0 : i32
    return %arg0, %c0_i32, %c0_i32_0 : i32, i32, i32
  }
}

</mosaic_0001>

<llo_original>
// kernel: tpu_custom_call.1
$region0: #{tpu_custom_call.1}
  #allocation0 [shape = 'u32[]', space=smem, size = 0x4, offset = 0x4, fixed_abs, tag = 'smem constant byte address 0x4 - core index']
  #allocation1 [shape = 'u32[72,128]{1,0:T(1,128)}', space=vmem, size = 0x9000, scoped, tag = 'internal scratch']
  #allocation2 [shape = 'bf16[576,384]{1,0:T(8,128)(2,1)}', space=vmem, size = 0x6c000, scoped, tag = 'scratch operand']
  #allocation3 [shape = 'bf16[576,480]{1,0:T(8,128)(2,1)}', space=vmem, size = 0x90000, scoped, tag = 'scratch operand']
  #allocation4 [shape = 'bf16[576,384]{1,0:T(8,128)(2,1)}', space=vmem, size = 0x6c000, scoped, tag = 'scratch operand']
  #allocation5 [shape = 'bf16[576,176]{1,0:T(8,128)(2,1)}', space=vmem, size = 0x48000, scoped, tag = 'scratch operand']
  #allocation6 [shape = 'bf16[576,128]{1,0:T(8,128)(2,1)}', space=vmem, size = 0x24000, scoped, tag = 'scratch operand']
  %s0 = inlined_call_operand.hbm [shape: bf16[2,16,584], index: 0, kind: input, shape index: {}]
  %s1 = inlined_call_operand.hbm [shape: bf16[2,16,914], index: 1, kind: input, shape index: {}]
  %s2 = inlined_call_operand.hbm [shape: bf16[2,16,584], index: 2, kind: input, shape index: {}]
  %s3 = inlined_call_operand.vmem [shape: bf16[2,16,498], index: 3, kind: input, shape index: {}]
  %s4 = inlined_call_operand.hbm [shape: bf16[2,16,264], index: 4, kind: input, shape index: {}]
  %s5 = inlined_call_operand.hbm [shape: bf16[16,576], index: 5, kind: input, shape index: {}]
  %s6 = inlined_call_operand.hbm [shape: bf16[16,576], index: 6, kind: input, shape index: {}]
  %s7 = inlined_call_operand.hbm [shape: bf16[32,576], index: 7, kind: input, shape index: {}]
  %s8 = inlined_call_operand.hbm [shape: bf16[32,576], index: 8, kind: input, shape index: {}]
  %s9 = inlined_call_operand.hbm [shape: bf16[32,576], index: 9, kind: input, shape index: {}]
  %s10 = inlined_call_operand.vmem [shape: f32[16,1], index: 10, kind: input, shape index: {}]
  %s11 = inlined_call_operand.vmem [shape: f32[16,1], index: 11, kind: input, shape index: {}]
  %s12 = inlined_call_operand.vmem [shape: f32[32,1], index: 12, kind: input, shape index: {}]
  %s13 = inlined_call_operand.vmem [shape: f32[32,1], index: 13, kind: input, shape index: {}]
  %s14 = inlined_call_operand.vmem [shape: f32[32,1], index: 14, kind: input, shape index: {}]
  %s15 = inlined_call_operand.hbm [shape: f32[2,16,384], index: 15, kind: output, shape index: {0}]
  %s16 = inlined_call_operand.hbm [shape: f32[2,16,480], index: 16, kind: output, shape index: {1}]
  %s17 = inlined_call_operand.hbm [shape: f32[2,32,384], index: 17, kind: output, shape index: {2}]
  %s18 = inlined_call_operand.hbm [shape: f32[2,32,176], index: 18, kind: output, shape index: {3}]
  %s19 = inlined_call_operand.hbm [shape: f32[2,32,128], index: 19, kind: output, shape index: {4}]
  %20 = xla_tuple %s15, %s16, %s17, %s18, %s19
  %s21 = sld [smem:[#allocation0]]
  $region161: #{tpu_custom_call.1} parent=0
    _
  %s23 = ssub.s32 1, %s21
  %s24 = scalar_select 0, %s23, %s21
  $region1: #{tpu_custom_call.1} parent=0
    #allocation7 [shape = 'u8[40960]{0}', space=vmem, size = 0xa000, scoped, tag = 'input window, operand 0']
    #allocation8 [shape = 's32[2]{0}', space=sflag, size = 0x8, scoped, tag = 'scoped memory for tpu_custom_call.1']
    #allocation9 [shape = 's32[2]{0}', space=sflag, size = 0x8, scoped, tag = 'scoped memory for tpu_custom_call.1']
    #allocation10 [shape = 'u8[65536]{0}', space=vmem, size = 0x10000, scoped, tag = 'input window, operand 1']
    #allocation11 [shape = 's32[2]{0}', space=sflag, size = 0x8, scoped, tag = 'scoped memory for tpu_custom_call.1']
    #allocation12 [shape = 'u8[40960]{0}', space=vmem, size = 0xa000, scoped, tag = 'input window, operand 2']
    #allocation13 [shape = 'u8[24576]{0}', space=vmem, size = 0x6000, scoped, tag = 'input window, operand 4']
    #allocation14 [shape = 's32[2]{0}', space=sflag, size = 0x8, scoped, tag = 'scoped memory for tpu_custom_call.1']
    #allocation15 [shape = 'u8[20480]{0}', space=vmem, size = 0x5000, scoped, tag = 'input window, operand 5, single buffered']
    #allocation16 [shape = 'u8[20480]{0}', space=vmem, size = 0x5000, scoped, tag = 'input window, operand 6, single buffered']
    #allocation17 [shape = 's32[1]{0}', space=sflag, size = 0x4, scoped, tag = 'scoped memory for tpu_custom_call.1']
    #allocation18 [shape = 'u8[40960]{0}', space=vmem, size = 0xa000, scoped, tag = 'input window, operand 7, single buffered']
    #allocation19 [shape = 'u8[40960]{0}', space=vmem, size = 0xa000, scoped, tag = 'input window, operand 8, single buffered']
    #allocation20 [shape = 's32[1]{0}', space=sflag, size = 0x4, scoped, tag = 'scoped memory for tpu_custom_call.1']
    #allocation21 [shape = 'u8[40960]{0}', space=vmem, size = 0xa000, scoped, tag = 'input window, operand 9, single buffered']
    #allocation22 [shape = 'u8[49152]{0}', space=vmem, size = 0xc000, scoped, tag = 'output window, operand 0']
    #allocation23 [shape = 'u8[65536]{0}', space=vmem, size = 0x10000, scoped, tag = 'output window, operand 1']
    #allocation24 [shape = 's32[2]{0}', space=sflag, size = 0x8, scoped, tag = 'scoped memory for tpu_custom_call.1']
    #allocation25 [shape = 'u8[98304]{0}', space=vmem, size = 0x18000, scoped, tag = 'output window, operand 2']
    #allocation26 [shape = 'u8[65536]{0}', space=vmem, size = 0x10000, scoped, tag = 'output window, operand 3']
    #allocation27 [shape = 's32[2]{0}', space=sflag, size = 0x8, scoped, tag = 'scoped memory for tpu_custom_call.1']
    #allocation28 [shape = 'u8[32768]{0}', space=vmem, size = 0x8000, scoped, tag = 'output window, operand 4']
    %25 = vsyncpa [#allocation8], 0
    %s26 = scalar_lea.sflag [#allocation8], 1
    %27 = vsyncpa %s26, 0
    %28 = vsyncpa [#allocation11], 0
    %s29 = scalar_lea.sflag [#allocation11], 1
    %30 = vsyncpa %s29, 0
    %31 = vsyncpa [#allocation14], 0
    %s32 = scalar_lea.sflag [#allocation14], 1
    %33 = vsyncpa %s32, 0
    %34 = vsyncpa [#allocation17], 0
    %35 = vsyncpa [#allocation20], 0
    %36 = vsyncpa [#allocation9], 0
    %s37 = scalar_lea.sflag [#allocation9], 1
    %38 = vsyncpa %s37, 0
    %39 = vsyncpa [#allocation24], 0
    %s40 = scalar_lea.sflag [#allocation24], 1
    %41 = vsyncpa %s40, 0
    %42 = vsyncpa [#allocation27], 0
    %s43 = scalar_lea.sflag [#allocation27], 1
    %44 = vsyncpa %s43, 0
    loop: start=0, step=1, limit=4
    $region2: #{tpu_custom_call.1} parent=1 // loop_pre_header
      _
    $region3: #{tpu_custom_call.1} parent=1 // loop_header
      %s46 = sphi 0, %s50
      %p47 = scmp.ge.s32.totalorder %s46, 4
      %s56 = sphi 0, %s58
      %s59 = sphi 0, %s56
      %s60 = sphi 0, %s59
      %s76 = sphi 0, %s60
      %s82 = sphi 0, %s84
      %s85 = sphi 0, %s82
      %s86 = sphi 0, %s85
      %s102 = sphi 0, %s86
      %s108 = sphi 0, %s110
      %s111 = sphi 0, %s108
      %s112 = sphi 0, %s111
      %s128 = sphi 0, %s112
      %s134 = sphi 0, %s136
      %s137 = sphi 0, %s134
      %s138 = sphi 0, %s137
      %s154 = sphi 0, %s138
      %s160 = sphi 0, %s162
      %s163 = sphi 0, %s160
      %s164 = sphi 0, %s163
      %s180 = sphi 0, %s164
      %s184 = sphi 0, %s184
      %s186 = sphi 0, %s184
      %s187 = sphi 0, %s186
      %s201 = sphi 0, %s187
      %s205 = sphi 0, %s205
      %s207 = sphi 0, %s205
      %s208 = sphi 0, %s207
      %s222 = sphi 0, %s208
      %s226 = sphi 0, %s226
      %s228 = sphi 0, %s226
      %s229 = sphi 0, %s228
      %s243 = sphi 0, %s229
      %s247 = sphi 0, %s247
      %s249 = sphi 0, %s247
      %s250 = sphi 0, %s249
      %s264 = sphi 0, %s250
      %s268 = sphi 0, %s268
      %s270 = sphi 0, %s268
      %s271 = sphi 0, %s270
      %s285 = sphi 0, %s271
      %s289 = sphi 0, %s289
      %s291 = sphi 0, %s289
      %s292 = sphi 0, %s291
      %s306 = sphi 0, %s292
      %s310 = sphi 0, %s310
      %s312 = sphi 0, %s310
      %s313 = sphi 0, %s312
      %s327 = sphi 0, %s313
      %s331 = sphi 0, %s331
      %s333 = sphi 0, %s331
      %s334 = sphi 0, %s333
      %s348 = sphi 0, %s334
      %s352 = sphi 0, %s352
      %s354 = sphi 0, %s352
      %s355 = sphi 0, %s354
      %s369 = sphi 0, %s355
      %s373 = sphi 0, %s373
      %s375 = sphi 0, %s373
      %s376 = sphi 0, %s375
      %s390 = sphi 0, %s376
      %s396 = sphi 0, %s398
      %s399 = sphi 0, %s396
      %s400 = sphi 0, %s399
      %s416 = sphi 0, %s400
      %s422 = sphi 0, %s424
      %s425 = sphi 0, %s422
      %s426 = sphi 0, %s425
      %s442 = sphi 0, %s426
      %s448 = sphi 0, %s450
      %s451 = sphi 0, %s448
      %s452 = sphi 0, %s451
      %s468 = sphi 0, %s452
      %s474 = sphi 0, %s476
      %s477 = sphi 0, %s474
      %s478 = sphi 0, %s477
      %s494 = sphi 0, %s478
      %s500 = sphi 0, %s502
      %s503 = sphi 0, %s500
      %s504 = sphi 0, %s503
      %s520 = sphi 0, %s504
    $region4: #{tpu_custom_call.1} parent=1 // loop_header_branch
      %49 = sbr.rel (%p47) target = $region8
    $region5: #{tpu_custom_call.1} parent=1 // loop_body
      %s51 = ssub.s32 %s46, 1
      %s52 = ssub.s32 %s46, 2
      %s53 = sadd.s32 %s46, 1
      %s54 = ssub.s32 %s46, %s53
      %p55 = scmp.eq.s32.totalorder %s54, 0
      %s57 = sadd.s32 %s56, 1
      %s58 = scalar_select %p55, %s56, %s57
      %p61 = pneg %p55
      %p62 = scmp.eq.s32.totalorder %s46, 1
      %p63 = por %p61, %p62
      %p64 = scmp.ne.s32.totalorder %s56, %s59
      %p65 = scmp.eq.s32.totalorder %s46, 0
      %p66 = por %p64, %p65
      %p67 = scmp.ne.s32.totalorder %s56, %s59
      %p68 = scmp.eq.s32.totalorder %s51, 1
      %p69 = por %p67, %p68
      %p70 = scmp.ne.s32.totalorder %s59, %s60
      %p71 = scmp.eq.s32.totalorder %s51, 0
      %p72 = por %p70, %p71
      %p73 = scmp.ne.s32.totalorder %s59, %s60
      %p74 = scmp.eq.s32.totalorder %s52, 1
      %p75 = por %p73, %p74
      %p77 = scmp.ne.s32.totalorder %s60, %s76
      %p78 = scmp.eq.s32.totalorder %s52, 0
      %p79 = por %p77, %p78
      %s80 = ssub.s32 %s46, %s53
      %p81 = scmp.eq.s32.totalorder %s80, 0
      %s83 = sadd.s32 %s82, 1
      %s84 = scalar_select %p81, %s82, %s83
      %p87 = pneg %p81
      %p88 = scmp.eq.s32.totalorder %s46, 1
      %p89 = por %p87, %p88
      %p90 = scmp.ne.s32.totalorder %s82, %s85
      %p91 = scmp.eq.s32.totalorder %s46, 0
      %p92 = por %p90, %p91
      %p93 = scmp.ne.s32.totalorder %s82, %s85
      %p94 = scmp.eq.s32.totalorder %s51, 1
      %p95 = por %p93, %p94
      %p96 = scmp.ne.s32.totalorder %s85, %s86
      %p97 = scmp.eq.s32.totalorder %s51, 0
      %p98 = por %p96, %p97
      %p99 = scmp.ne.s32.totalorder %s85, %s86
      %p100 = scmp.eq.s32.totalorder %s52, 1
      %p101 = por %p99, %p100
      %p103 = scmp.ne.s32.totalorder %s86, %s102
      %p104 = scmp.eq.s32.totalorder %s52, 0
      %p105 = por %p103, %p104
      %s106 = ssub.s32 %s46, %s53
      %p107 = scmp.eq.s32.totalorder %s106, 0
      %s109 = sadd.s32 %s108, 1
      %s110 = scalar_select %p107, %s108, %s109
      %p113 = pneg %p107
      %p114 = scmp.eq.s32.totalorder %s46, 1
      %p115 = por %p113, %p114
      %p116 = scmp.ne.s32.totalorder %s108, %s111
      %p117 = scmp.eq.s32.totalorder %s46, 0
      %p118 = por %p116, %p117
      %p119 = scmp.ne.s32.totalorder %s108, %s111
      %p120 = scmp.eq.s32.totalorder %s51, 1
      %p121 = por %p119, %p120
      %p122 = scmp.ne.s32.totalorder %s111, %s112
      %p123 = scmp.eq.s32.totalorder %s51, 0
      %p124 = por %p122, %p123
      %p125 = scmp.ne.s32.totalorder %s111, %s112
      %p126 = scmp.eq.s32.totalorder %s52, 1
      %p127 = por %p125, %p126
      %p129 = scmp.ne.s32.totalorder %s112, %s128
      %p130 = scmp.eq.s32.totalorder %s52, 0
      %p131 = por %p129, %p130
      %s132 = ssub.s32 %s46, %s53
      %p133 = scmp.eq.s32.totalorder %s132, 0
      %s135 = sadd.s32 %s134, 1
      %s136 = scalar_select %p133, %s134, %s135
      %p139 = pneg %p133
      %p140 = scmp.eq.s32.totalorder %s46, 1
      %p141 = por %p139, %p140
      %p142 = scmp.ne.s32.totalorder %s134, %s137
      %p143 = scmp.eq.s32.totalorder %s46, 0
      %p144 = por %p142, %p143
      %p145 = scmp.ne.s32.totalorder %s134, %s137
      %p146 = scmp.eq.s32.totalorder %s51, 1
      %p147 = por %p145, %p146
      %p148 = scmp.ne.s32.totalorder %s137, %s138
      %p149 = scmp.eq.s32.totalorder %s51, 0
      %p150 = por %p148, %p149
      %p151 = scmp.ne.s32.totalorder %s137, %s138
      %p152 = scmp.eq.s32.totalorder %s52, 1
      %p153 = por %p151, %p152
      %p155 = scmp.ne.s32.totalorder %s138, %s154
      %p156 = scmp.eq.s32.totalorder %s52, 0
      %p157 = por %p155, %p156
      %s158 = ssub.s32 %s46, %s53
      %p159 = scmp.eq.s32.totalorder %s158, 0
      %s161 = sadd.s32 %s160, 1
      %s162 = scalar_select %p159, %s160, %s161
      %p165 = pneg %p159
      %p166 = scmp.eq.s32.totalorder %s46, 1
      %p167 = por %p165, %p166
      %p168 = scmp.ne.s32.totalorder %s160, %s163
      %p169 = scmp.eq.s32.totalorder %s46, 0
      %p170 = por %p168, %p169
      %p171 = scmp.ne.s32.totalorder %s160, %s163
      %p172 = scmp.eq.s32.totalorder %s51, 1
      %p173 = por %p171, %p172
      %p174 = scmp.ne.s32.totalorder %s163, %s164
      %p175 = scmp.eq.s32.totalorder %s51, 0
      %p176 = por %p174, %p175
      %p177 = scmp.ne.s32.totalorder %s163, %s164
      %p178 = scmp.eq.s32.totalorder %s52, 1
      %p179 = por %p177, %p178
      %p181 = scmp.ne.s32.totalorder %s164, %s180
      %p182 = scmp.eq.s32.totalorder %s52, 0
      %p183 = por %p181, %p182
      %s185 = sadd.s32 %s184, 1
      %p188 = scmp.eq.s32.totalorder %s46, 1
      %p189 = scmp.ne.s32.totalorder %s184, %s186
      %p190 = scmp.eq.s32.totalorder %s46, 0
      %p191 = por %p189, %p190
      %p192 = scmp.ne.s32.totalorder %s184, %s186
      %p193 = scmp.eq.s32.totalorder %s51, 1
      %p194 = por %p192, %p193
      %p195 = scmp.ne.s32.totalorder %s186, %s187
      %p196 = scmp.eq.s32.totalorder %s51, 0
      %p197 = por %p195, %p196
      %p198 = scmp.ne.s32.totalorder %s186, %s187
      %p199 = scmp.eq.s32.totalorder %s52, 1
      %p200 = por %p198, %p199
      %p202 = scmp.ne.s32.totalorder %s187, %s201
      %p203 = scmp.eq.s32.totalorder %s52, 0
      %p204 = por %p202, %p203
      %s206 = sadd.s32 %s205, 1
      %p209 = scmp.eq.s32.totalorder %s46, 1
      %p210 = scmp.ne.s32.totalorder %s205, %s207
      %p211 = scmp.eq.s32.totalorder %s46, 0
      %p212 = por %p210, %p211
      %p213 = scmp.ne.s32.totalorder %s205, %s207
      %p214 = scmp.eq.s32.totalorder %s51, 1
      %p215 = por %p213, %p214
      %p216 = scmp.ne.s32.totalorder %s207, %s208
      %p217 = scmp.eq.s32.totalorder %s51, 0
      %p218 = por %p216, %p217
      %p219 = scmp.ne.s32.totalorder %s207, %s208
      %p220 = scmp.eq.s32.totalorder %s52, 1
      %p221 = por %p219, %p220
      %p223 = scmp.ne.s32.totalorder %s208, %s222
      %p224 = scmp.eq.s32.totalorder %s52, 0
      %p225 = por %p223, %p224
      %s227 = sadd.s32 %s226, 1
      %p230 = scmp.eq.s32.totalorder %s46, 1
      %p231 = scmp.ne.s32.totalorder %s226, %s228
      %p232 = scmp.eq.s32.totalorder %s46, 0
      %p233 = por %p231, %p232
      %p234 = scmp.ne.s32.totalorder %s226, %s228
      %p235 = scmp.eq.s32.totalorder %s51, 1
      %p236 = por %p234, %p235
      %p237 = scmp.ne.s32.totalorder %s228, %s229
      %p238 = scmp.eq.s32.totalorder %s51, 0
      %p239 = por %p237, %p238
      %p240 = scmp.ne.s32.totalorder %s228, %s229
      %p241 = scmp.eq.s32.totalorder %s52, 1
      %p242 = por %p240, %p241
      %p244 = scmp.ne.s32.totalorder %s229, %s243
      %p245 = scmp.eq.s32.totalorder %s52, 0
      %p246 = por %p244, %p245
      %s248 = sadd.s32 %s247, 1
      %p251 = scmp.eq.s32.totalorder %s46, 1
      %p252 = scmp.ne.s32.totalorder %s247, %s249
      %p253 = scmp.eq.s32.totalorder %s46, 0
      %p254 = por %p252, %p253
      %p255 = scmp.ne.s32.totalorder %s247, %s249
      %p256 = scmp.eq.s32.totalorder %s51, 1
      %p257 = por %p255, %p256
      %p258 = scmp.ne.s32.totalorder %s249, %s250
      %p259 = scmp.eq.s32.totalorder %s51, 0
      %p260 = por %p258, %p259
      %p261 = scmp.ne.s32.totalorder %s249, %s250
      %p262 = scmp.eq.s32.totalorder %s52, 1
      %p263 = por %p261, %p262
      %p265 = scmp.ne.s32.totalorder %s250, %s264
      %p266 = scmp.eq.s32.totalorder %s52, 0
      %p267 = por %p265, %p266
      %s269 = sadd.s32 %s268, 1
      %p272 = scmp.eq.s32.totalorder %s46, 1
      %p273 = scmp.ne.s32.totalorder %s268, %s270
      %p274 = scmp.eq.s32.totalorder %s46, 0
      %p275 = por %p273, %p274
      %p276 = scmp.ne.s32.totalorder %s268, %s270
      %p277 = scmp.eq.s32.totalorder %s51, 1
      %p278 = por %p276, %p277
      %p279 = scmp.ne.s32.totalorder %s270, %s271
      %p280 = scmp.eq.s32.totalorder %s51, 0
      %p281 = por %p279, %p280
      %p282 = scmp.ne.s32.totalorder %s270, %s271
      %p283 = scmp.eq.s32.totalorder %s52, 1
      %p284 = por %p282, %p283
      %p286 = scmp.ne.s32.totalorder %s271, %s285
      %p287 = scmp.eq.s32.totalorder %s52, 0
      %p288 = por %p286, %p287
      %s290 = sadd.s32 %s289, 1
      %p293 = scmp.eq.s32.totalorder %s46, 1
      %p294 = scmp.ne.s32.totalorder %s289, %s291
      %p295 = scmp.eq.s32.totalorder %s46, 0
      %p296 = por %p294, %p295
      %p297 = scmp.ne.s32.totalorder %s289, %s291
      %p298 = scmp.eq.s32.totalorder %s51, 1
      %p299 = por %p297, %p298
      %p300 = scmp.ne.s32.totalorder %s291, %s292
      %p301 = scmp.eq.s32.totalorder %s51, 0
      %p302 = por %p300, %p301
      %p303 = scmp.ne.s32.totalorder %s291, %s292
      %p304 = scmp.eq.s32.totalorder %s52, 1
      %p305 = por %p303, %p304
      %p307 = scmp.ne.s32.totalorder %s292, %s306
      %p308 = scmp.eq.s32.totalorder %s52, 0
      %p309 = por %p307, %p308
      %s311 = sadd.s32 %s310, 1
      %p314 = scmp.eq.s32.totalorder %s46, 1
      %p315 = scmp.ne.s32.totalorder %s310, %s312
      %p316 = scmp.eq.s32.totalorder %s46, 0
      %p317 = por %p315, %p316
      %p318 = scmp.ne.s32.totalorder %s310, %s312
      %p319 = scmp.eq.s32.totalorder %s51, 1
      %p320 = por %p318, %p319
      %p321 = scmp.ne.s32.totalorder %s312, %s313
      %p322 = scmp.eq.s32.totalorder %s51, 0
      %p323 = por %p321, %p322
      %p324 = scmp.ne.s32.totalorder %s312, %s313
      %p325 = scmp.eq.s32.totalorder %s52, 1
      %p326 = por %p324, %p325
      %p328 = scmp.ne.s32.totalorder %s313, %s327
      %p329 = scmp.eq.s32.totalorder %s52, 0
      %p330 = por %p328, %p329
      %s332 = sadd.s32 %s331, 1
      %p335 = scmp.eq.s32.totalorder %s46, 1
      %p336 = scmp.ne.s32.totalorder %s331, %s333
      %p337 = scmp.eq.s32.totalorder %s46, 0
      %p338 = por %p336, %p337
      %p339 = scmp.ne.s32.totalorder %s331, %s333
      %p340 = scmp.eq.s32.totalorder %s51, 1
      %p341 = por %p339, %p340
      %p342 = scmp.ne.s32.totalorder %s333, %s334
      %p343 = scmp.eq.s32.totalorder %s51, 0
      %p344 = por %p342, %p343
      %p345 = scmp.ne.s32.totalorder %s333, %s334
      %p346 = scmp.eq.s32.totalorder %s52, 1
      %p347 = por %p345, %p346
      %p349 = scmp.ne.s32.totalorder %s334, %s348
      %p350 = scmp.eq.s32.totalorder %s52, 0
      %p351 = por %p349, %p350
      %s353 = sadd.s32 %s352, 1
      %p356 = scmp.eq.s32.totalorder %s46, 1
      %p357 = scmp.ne.s32.totalorder %s352, %s354
      %p358 = scmp.eq.s32.totalorder %s46, 0
      %p359 = por %p357, %p358
      %p360 = scmp.ne.s32.totalorder %s352, %s354
      %p361 = scmp.eq.s32.totalorder %s51, 1
      %p362 = por %p360, %p361
      %p363 = scmp.ne.s32.totalorder %s354, %s355
      %p364 = scmp.eq.s32.totalorder %s51, 0
      %p365 = por %p363, %p364
      %p366 = scmp.ne.s32.totalorder %s354, %s355
      %p367 = scmp.eq.s32.totalorder %s52, 1
      %p368 = por %p366, %p367
      %p370 = scmp.ne.s32.totalorder %s355, %s369
      %p371 = scmp.eq.s32.totalorder %s52, 0
      %p372 = por %p370, %p371
      %s374 = sadd.s32 %s373, 1
      %p377 = scmp.eq.s32.totalorder %s46, 1
      %p378 = scmp.ne.s32.totalorder %s373, %s375
      %p379 = scmp.eq.s32.totalorder %s46, 0
      %p380 = por %p378, %p379
      %p381 = scmp.ne.s32.totalorder %s373, %s375
      %p382 = scmp.eq.s32.totalorder %s51, 1
      %p383 = por %p381, %p382
      %p384 = scmp.ne.s32.totalorder %s375, %s376
      %p385 = scmp.eq.s32.totalorder %s51, 0
      %p386 = por %p384, %p385
      %p387 = scmp.ne.s32.totalorder %s375, %s376
      %p388 = scmp.eq.s32.totalorder %s52, 1
      %p389 = por %p387, %p388
      %p391 = scmp.ne.s32.totalorder %s376, %s390
      %p392 = scmp.eq.s32.totalorder %s52, 0
      %p393 = por %p391, %p392
      %s394 = ssub.s32 %s46, %s53
      %p395 = scmp.eq.s32.totalorder %s394, 0
      %s397 = sadd.s32 %s396, 1
      %s398 = scalar_select %p395, %s396, %s397
      %p401 = pneg %p395
      %p402 = scmp.eq.s32.totalorder %s46, 1
      %p403 = por %p401, %p402
      %p404 = scmp.ne.s32.totalorder %s396, %s399
      %p405 = scmp.eq.s32.totalorder %s46, 0
      %p406 = por %p404, %p405
      %p407 = scmp.ne.s32.totalorder %s396, %s399
      %p408 = scmp.eq.s32.totalorder %s51, 1
      %p409 = por %p407, %p408
      %p410 = scmp.ne.s32.totalorder %s399, %s400
      %p411 = scmp.eq.s32.totalorder %s51, 0
      %p412 = por %p410, %p411
      %p413 = scmp.ne.s32.totalorder %s399, %s400
      %p414 = scmp.eq.s32.totalorder %s52, 1
      %p415 = por %p413, %p414
      %p417 = scmp.ne.s32.totalorder %s400, %s416
      %p418 = scmp.eq.s32.totalorder %s52, 0
      %p419 = por %p417, %p418
      %s420 = ssub.s32 %s46, %s53
      %p421 = scmp.eq.s32.totalorder %s420, 0
      %s423 = sadd.s32 %s422, 1
      %s424 = scalar_select %p421, %s422, %s423
      %p427 = pneg %p421
      %p428 = scmp.eq.s32.totalorder %s46, 1
      %p429 = por %p427, %p428
      %p430 = scmp.ne.s32.totalorder %s422, %s425
      %p431 = scmp.eq.s32.totalorder %s46, 0
      %p432 = por %p430, %p431
      %p433 = scmp.ne.s32.totalorder %s422, %s425
      %p434 = scmp.eq.s32.totalorder %s51, 1
      %p435 = por %p433, %p434
      %p436 = scmp.ne.s32.totalorder %s425, %s426
      %p437 = scmp.eq.s32.totalorder %s51, 0
      %p438 = por %p436, %p437
      %p439 = scmp.ne.s32.totalorder %s425, %s426
      %p440 = scmp.eq.s32.totalorder %s52, 1
      %p441 = por %p439, %p440
      %p443 = scmp.ne.s32.totalorder %s426, %s442
      %p444 = scmp.eq.s32.totalorder %s52, 0
      %p445 = por %p443, %p444
      %s446 = ssub.s32 %s46, %s53
      %p447 = scmp.eq.s32.totalorder %s446, 0
      %s449 = sadd.s32 %s448, 1
      %s450 = scalar_select %p447, %s448, %s449
      %p453 = pneg %p447
      %p454 = scmp.eq.s32.totalorder %s46, 1
      %p455 = por %p453, %p454
      %p456 = scmp.ne.s32.totalorder %s448, %s451
      %p457 = scmp.eq.s32.totalorder %s46, 0
      %p458 = por %p456, %p457
      %p459 = scmp.ne.s32.totalorder %s448, %s451
      %p460 = scmp.eq.s32.totalorder %s51, 1
      %p461 = por %p459, %p460
      %p462 = scmp.ne.s32.totalorder %s451, %s452
      %p463 = scmp.eq.s32.totalorder %s51, 0
      %p464 = por %p462, %p463
      %p465 = scmp.ne.s32.totalorder %s451, %s452
      %p466 = scmp.eq.s32.totalorder %s52, 1
      %p467 = por %p465, %p466
      %p469 = scmp.ne.s32.totalorder %s452, %s468
      %p470 = scmp.eq.s32.totalorder %s52, 0
      %p471 = por %p469, %p470
      %s472 = ssub.s32 %s46, %s53
      %p473 = scmp.eq.s32.totalorder %s472, 0
      %s475 = sadd.s32 %s474, 1
      %s476 = scalar_select %p473, %s474, %s475
      %p479 = pneg %p473
      %p480 = scmp.eq.s32.totalorder %s46, 1
      %p481 = por %p479, %p480
      %p482 = scmp.ne.s32.totalorder %s474, %s477
      %p483 = scmp.eq.s32.totalorder %s46, 0
      %p484 = por %p482, %p483
      %p485 = scmp.ne.s32.totalorder %s474, %s477
      %p486 = scmp.eq.s32.totalorder %s51, 1
      %p487 = por %p485, %p486
      %p488 = scmp.ne.s32.totalorder %s477, %s478
      %p489 = scmp.eq.s32.totalorder %s51, 0
      %p490 = por %p488, %p489
      %p491 = scmp.ne.s32.totalorder %s477, %s478
      %p492 = scmp.eq.s32.totalorder %s52, 1
      %p493 = por %p491, %p492
      %p495 = scmp.ne.s32.totalorder %s478, %s494
      %p496 = scmp.eq.s32.totalorder %s52, 0
      %p497 = por %p495, %p496
      %s498 = ssub.s32 %s46, %s53
      %p499 = scmp.eq.s32.totalorder %s498, 0
      %s501 = sadd.s32 %s500, 1
      %s502 = scalar_select %p499, %s500, %s501
      %p505 = pneg %p499
      %p506 = scmp.eq.s32.totalorder %s46, 1
      %p507 = por %p505, %p506
      %p508 = scmp.ne.s32.totalorder %s500, %s503
      %p509 = scmp.eq.s32.totalorder %s46, 0
      %p510 = por %p508, %p509
      %p511 = scmp.ne.s32.totalorder %s500, %s503
      %p512 = scmp.eq.s32.totalorder %s51, 1
      %p513 = por %p511, %p512
      %p514 = scmp.ne.s32.totalorder %s503, %s504
      %p515 = scmp.eq.s32.totalorder %s51, 0
      %p516 = por %p514, %p515
      %p517 = scmp.ne.s32.totalorder %s503, %s504
      %p518 = scmp.eq.s32.totalorder %s52, 1
      %p519 = por %p517, %p518
      %p521 = scmp.ne.s32.totalorder %s504, %s520
      %p522 = scmp.eq.s32.totalorder %s52, 0
      %p523 = por %p521, %p522
      %p524 = scmp.le.s32.totalorder 1, %s46
      %p525 = scmp.lt.s32.totalorder %s46, 3
      %p526 = pnand %p524, %p525
      %p527 = pneg %p526
      // Predicated region
      $region9: #{tpu_custom_call.1} parent=5 // pred_check
        _
      $region10: #{tpu_custom_call.1} parent=5 // pred_check_branch
        %529 = sbr.rel (%p526) target = $region12
      $region11: #{tpu_custom_call.1} parent=5 // pred_region
        %s530 = ssub.s32 %s46, 1
        // Predicated region
        $region13: #{tpu_custom_call.1} parent=11 // pred_check
          %p531 = pneg %p197
        $region14: #{tpu_custom_call.1} parent=11 // pred_check_branch
          %533 = sbr.rel (%p531) target = $region16
        $region15: #{tpu_custom_call.1} parent=11 // pred_region
          %535 = vsyncadd [#allocation14], 0
          %s536 = sshll.u32 %s5, 4
          %s537 = int_to_ptr.hbm [resolvable:$true] %s536
          %s538 = sshll.u32 [#allocation15], 4
          %s539 = int_to_ptr.vmem [resolvable:$true] %s538
          %544 = dma.hbm_to_vmem [thread:$0]  %s537, 640, %s539, [#allocation14], 320, 320, 20
        $region16: #{tpu_custom_call.1} parent=11 // pred_fallthru
          _
        // Predicated region
        $region17: #{tpu_custom_call.1} parent=11 // pred_check
          %p545 = pneg %p218
        $region18: #{tpu_custom_call.1} parent=11 // pred_check_branch
          %547 = sbr.rel (%p545) target = $region20
        $region19: #{tpu_custom_call.1} parent=11 // pred_region
          %549 = vsyncadd [#allocation17], 0
          %s550 = sshll.u32 %s6, 4
          %s551 = int_to_ptr.hbm [resolvable:$true] %s550
          %s552 = sshll.u32 [#allocation16], 4
          %s553 = int_to_ptr.vmem [resolvable:$true] %s552
          %558 = dma.hbm_to_vmem [thread:$0]  %s551, 640, %s553, [#allocation17], 320, 320, 20
        $region20: #{tpu_custom_call.1} parent=11 // pred_fallthru
          _
        // Predicated region
        $region21: #{tpu_custom_call.1} parent=11 // pred_check
          %p559 = pneg %p239
        $region22: #{tpu_custom_call.1} parent=11 // pred_check_branch
          %561 = sbr.rel (%p559) target = $region24
        $region23: #{tpu_custom_call.1} parent=11 // pred_region
          %563 = vsyncadd [#allocation17], 0
          %s564 = sshll.u32 %s7, 4
          %s565 = int_to_ptr.hbm [resolvable:$true] %s564
          %s566 = sshll.u32 [#allocation18], 4
          %s567 = int_to_ptr.vmem [resolvable:$true] %s566
          %572 = dma.hbm_to_vmem [thread:$0]  %s565, 1280, %s567, [#allocation17], 320, 320, 20
        $region24: #{tpu_custom_call.1} parent=11 // pred_fallthru
          _
        // Predicated region
        $region25: #{tpu_custom_call.1} parent=11 // pred_check
          %p573 = pneg %p260
        $region26: #{tpu_custom_call.1} parent=11 // pred_check_branch
          %575 = sbr.rel (%p573) target = $region28
        $region27: #{tpu_custom_call.1} parent=11 // pred_region
          %577 = vsyncadd [#allocation20], 0
          %s578 = sshll.u32 %s8, 4
          %s579 = int_to_ptr.hbm [resolvable:$true] %s578
          %s580 = sshll.u32 [#allocation19], 4
          %s581 = int_to_ptr.vmem [resolvable:$true] %s580
          %586 = dma.hbm_to_vmem [thread:$0]  %s579, 1280, %s581, [#allocation20], 320, 320, 20
        $region28: #{tpu_custom_call.1} parent=11 // pred_fallthru
          _
        // Predicated region
        $region29: #{tpu_custom_call.1} parent=11 // pred_check
          %p587 = pneg %p281
        $region30: #{tpu_custom_call.1} parent=11 // pred_check_branch
          %589 = sbr.rel (%p587) target = $region32
        $region31: #{tpu_custom_call.1} parent=11 // pred_region
          %591 = vsyncadd [#allocation20], 0
          %s592 = sshll.u32 %s9, 4
          %s593 = int_to_ptr.hbm [resolvable:$true] %s592
          %s594 = sshll.u32 [#allocation21], 4
          %s595 = int_to_ptr.vmem [resolvable:$true] %s594
          %600 = dma.hbm_to_vmem [thread:$0]  %s593, 1280, %s595, [#allocation20], 320, 320, 20
        $region32: #{tpu_custom_call.1} parent=11 // pred_fallthru
          _
        // Predicated region
        $region33: #{tpu_custom_call.1} parent=11 // pred_check
          %p601 = pneg %p302
        $region34: #{tpu_custom_call.1} parent=11 // pred_check_branch
          %603 = sbr.rel (%p601) target = $region36
        $region35: #{tpu_custom_call.1} parent=11 // pred_region
          _
        $region36: #{tpu_custom_call.1} parent=11 // pred_fallthru
          _
        // Predicated region
        $region37: #{tpu_custom_call.1} parent=11 // pred_check
          %p604 = pneg %p323
        $region38: #{tpu_custom_call.1} parent=11 // pred_check_branch
          %606 = sbr.rel (%p604) target = $region40
        $region39: #{tpu_custom_call.1} parent=11 // pred_region
          _
        $region40: #{tpu_custom_call.1} parent=11 // pred_fallthru
          _
        // Predicated region
        $region41: #{tpu_custom_call.1} parent=11 // pred_check
          %p607 = pneg %p344
        $region42: #{tpu_custom_call.1} parent=11 // pred_check_branch
          %609 = sbr.rel (%p607) target = $region44
        $region43: #{tpu_custom_call.1} parent=11 // pred_region
          _
        $region44: #{tpu_custom_call.1} parent=11 // pred_fallthru
          _
        // Predicated region
        $region45: #{tpu_custom_call.1} parent=11 // pred_check
          %p610 = pneg %p365
        $region46: #{tpu_custom_call.1} parent=11 // pred_check_branch
          %612 = sbr.rel (%p610) target = $region48
        $region47: #{tpu_custom_call.1} parent=11 // pred_region
          _
        $region48: #{tpu_custom_call.1} parent=11 // pred_fallthru
          _
        // Predicated region
        $region49: #{tpu_custom_call.1} parent=11 // pred_check
          %p613 = pneg %p386
        $region50: #{tpu_custom_call.1} parent=11 // pred_check_branch
          %615 = sbr.rel (%p613) target = $region52
        $region51: #{tpu_custom_call.1} parent=11 // pred_region
          _
        $region52: #{tpu_custom_call.1} parent=11 // pred_fallthru
          _
      $region12: #{tpu_custom_call.1} parent=5 // pred_fallthru
        _
      %p616 = scmp.lt.s32.totalorder %s46, 2
      // Predicated region
      $region53: #{tpu_custom_call.1} parent=5 // pred_check
        %p617 = pneg %p616
      $region54: #{tpu_custom_call.1} parent=5 // pred_check_branch
        %619 = sbr.rel (%p617) target = $region56
      $region55: #{tpu_custom_call.1} parent=5 // pred_region
        // Predicated region
        $region57: #{tpu_custom_call.1} parent=55 // pred_check
          %p620 = pneg %p66
        $region58: #{tpu_custom_call.1} parent=55 // pred_check_branch
          %622 = sbr.rel (%p620) target = $region60
        $region59: #{tpu_custom_call.1} parent=55 // pred_region
          %s623 = sand.u32 %s56, 1
          %s624 = scalar_lea.sflag [#allocation8], %s623
          %s625 = sand.u32 %s56, 1
          %s626 = smul.addr %s625, 40
          %s627 = scalar_lea.vmem [#allocation7], %s626
          %629 = vsyncadd %s624, 0
          %s630 = smul.addr %s46, 10
          %s631 = smul.addr %s630, 4
          %s632 = scalar_lea.hbm %s0, %s631
          %s633 = sshll.u32 %s632, 4
          %s634 = int_to_ptr.hbm [resolvable:$true] %s633
          %s635 = sshll.u32 %s627, 4
          %s636 = int_to_ptr.vmem [resolvable:$true] %s635
          %641 = dma.hbm_to_vmem [thread:$0]  %s634, 640, %s636, %s624, 320, 320, 20
        $region60: #{tpu_custom_call.1} parent=55 // pred_fallthru
          _
        // Predicated region
        $region61: #{tpu_custom_call.1} parent=55 // pred_check
          %p642 = pneg %p92
        $region62: #{tpu_custom_call.1} parent=55 // pred_check_branch
          %644 = sbr.rel (%p642) target = $region64
        $region63: #{tpu_custom_call.1} parent=55 // pred_region
          %s645 = sand.u32 %s46, 1
          %s646 = scalar_lea.sflag [#allocation11], %s645
          %s647 = sand.u32 %s82, 1
          %s648 = smul.addr %s647, 64
          %s649 = scalar_lea.vmem [#allocation10], %s648
          %651 = vsyncadd %s646, 0
          %s652 = smul.addr %s46, 16
          %s653 = smul.addr %s652, 4
          %s654 = scalar_lea.hbm %s1, %s653
          %s655 = sshll.u32 %s654, 4
          %s656 = int_to_ptr.hbm [resolvable:$true] %s655
          %s657 = sshll.u32 %s649, 4
          %s658 = int_to_ptr.vmem [resolvable:$true] %s657
          %663 = dma.hbm_to_vmem [thread:$0]  %s656, 1024, %s658, %s646, 512, 512, 32
        $region64: #{tpu_custom_call.1} parent=55 // pred_fallthru
          _
        // Predicated region
        $region65: #{tpu_custom_call.1} parent=55 // pred_check
          %p664 = pneg %p118
        $region66: #{tpu_custom_call.1} parent=55 // pred_check_branch
          %666 = sbr.rel (%p664) target = $region68
        $region67: #{tpu_custom_call.1} parent=55 // pred_region
          %s667 = sand.u32 %s46, 1
          %s668 = scalar_lea.sflag [#allocation11], %s667
          %s669 = sand.u32 %s108, 1
          %s670 = smul.addr %s669, 40
          %s671 = scalar_lea.vmem [#allocation12], %s670
          %673 = vsyncadd %s668, 0
          %s674 = smul.addr %s46, 10
          %s675 = smul.addr %s674, 4
          %s676 = scalar_lea.hbm %s2, %s675
          %s677 = sshll.u32 %s676, 4
          %s678 = int_to_ptr.hbm [resolvable:$true] %s677
          %s679 = sshll.u32 %s671, 4
          %s680 = int_to_ptr.vmem [resolvable:$true] %s679
          %685 = dma.hbm_to_vmem [thread:$0]  %s678, 640, %s680, %s668, 320, 320, 20
        $region68: #{tpu_custom_call.1} parent=55 // pred_fallthru
          _
        // Predicated region
        $region69: #{tpu_custom_call.1} parent=55 // pred_check
          %p686 = pneg %p144
        $region70: #{tpu_custom_call.1} parent=55 // pred_check_branch
          %688 = sbr.rel (%p686) target = $region72
        $region71: #{tpu_custom_call.1} parent=55 // pred_region
          %p689 = scmp.lt.s32.totalorder %s46, 1
          %s690 = scalar_select %p689, %s46, 1
          %s691 = smul.addr %s690, 8
          %s692 = smul.addr %s691, 4
          %s693 = scalar_lea.vmem %s3, %s692
        $region72: #{tpu_custom_call.1} parent=55 // pred_fallthru
          _
        // Predicated region
        $region73: #{tpu_custom_call.1} parent=55 // pred_check
          %p694 = pneg %p170
        $region74: #{tpu_custom_call.1} parent=55 // pred_check_branch
          %696 = sbr.rel (%p694) target = $region76
        $region75: #{tpu_custom_call.1} parent=55 // pred_region
          %s697 = sand.u32 %s46, 1
          %s698 = scalar_lea.sflag [#allocation14], %s697
          %s699 = sand.u32 %s160, 1
          %s700 = smul.addr %s699, 24
          %s701 = scalar_lea.vmem [#allocation13], %s700
          %703 = vsyncadd %s698, 0
          %s704 = smul.addr %s46, 6
          %s705 = smul.addr %s704, 4
          %s706 = scalar_lea.hbm %s4, %s705
          %s707 = sshll.u32 %s706, 4
          %s708 = int_to_ptr.hbm [resolvable:$true] %s707
          %s709 = sshll.u32 %s701, 4
          %s710 = int_to_ptr.vmem [resolvable:$true] %s709
          %715 = dma.hbm_to_vmem [thread:$0]  %s708, 384, %s710, %s698, 192, 192, 12
        $region76: #{tpu_custom_call.1} parent=55 // pred_fallthru
          _
      $region56: #{tpu_custom_call.1} parent=5 // pred_fallthru
        _
      %p716 = scmp.le.s32.totalorder 1, %s46
      %p717 = scmp.lt.s32.totalorder %s46, 3
      %p718 = pnand %p716, %p717
      %p719 = pneg %p718
      // Predicated region
      $region77: #{tpu_custom_call.1} parent=5 // pred_check
        _
      $region78: #{tpu_custom_call.1} parent=5 // pred_check_branch
        %721 = sbr.rel (%p718) target = $region80
      $region79: #{tpu_custom_call.1} parent=5 // pred_region
        %s722 = ssub.s32 %s46, 1
        %s723 = sand.u32 %s59, 1
        %s724 = scalar_lea.sflag [#allocation8], %s723
        %s725 = sand.u32 %s59, 1
        %s726 = smul.addr %s725, 40
        %s727 = scalar_lea.vmem [#allocation7], %s726
        // Predicated region
        $region81: #{tpu_custom_call.1} parent=79 // pred_check
          %p728 = pneg %p72
        $region82: #{tpu_custom_call.1} parent=79 // pred_check_branch
          %730 = sbr.rel (%p728) target = $region84
        $region83: #{tpu_custom_call.1} parent=79 // pred_region
          %732 = dma.done %s724, 640
        $region84: #{tpu_custom_call.1} parent=79 // pred_fallthru
          _
        %s733 = sand.u32 %s51, 1
        %s734 = scalar_lea.sflag [#allocation11], %s733
        %s735 = sand.u32 %s85, 1
        %s736 = smul.addr %s735, 64
        %s737 = scalar_lea.vmem [#allocation10], %s736
        // Predicated region
        $region85: #{tpu_custom_call.1} parent=79 // pred_check
          %p738 = pneg %p98
        $region86: #{tpu_custom_call.1} parent=79 // pred_check_branch
          %740 = sbr.rel (%p738) target = $region88
        $region87: #{tpu_custom_call.1} parent=79 // pred_region
          %742 = dma.done %s734, 1024
        $region88: #{tpu_custom_call.1} parent=79 // pred_fallthru
          _
        %s743 = sand.u32 %s51, 1
        %s744 = scalar_lea.sflag [#allocation11], %s743
        %s745 = sand.u32 %s111, 1
        %s746 = smul.addr %s745, 40
        %s747 = scalar_lea.vmem [#allocation12], %s746
        // Predicated region
        $region89: #{tpu_custom_call.1} parent=79 // pred_check
          %p748 = pneg %p124
        $region90: #{tpu_custom_call.1} parent=79 // pred_check_branch
          %750 = sbr.rel (%p748) target = $region92
        $region91: #{tpu_custom_call.1} parent=79 // pred_region
          %752 = dma.done %s744, 640
        $region92: #{tpu_custom_call.1} parent=79 // pred_fallthru
          _
        %s753 = sand.u32 %s51, 1
        %s754 = scalar_lea.sflag [#allocation14], %s753
        %s755 = sand.u32 %s163, 1
        %s756 = smul.addr %s755, 24
        %s757 = scalar_lea.vmem [#allocation13], %s756
        // Predicated region
        $region93: #{tpu_custom_call.1} parent=79 // pred_check
          %p758 = pneg %p176
        $region94: #{tpu_custom_call.1} parent=79 // pred_check_branch
          %760 = sbr.rel (%p758) target = $region96
        $region95: #{tpu_custom_call.1} parent=79 // pred_region
          %762 = dma.done %s754, 384
        $region96: #{tpu_custom_call.1} parent=79 // pred_fallthru
          _
        // Predicated region
        $region97: #{tpu_custom_call.1} parent=79 // pred_check
          %p763 = pneg %p197
        $region98: #{tpu_custom_call.1} parent=79 // pred_check_branch
          %765 = sbr.rel (%p763) target = $region100
        $region99: #{tpu_custom_call.1} parent=79 // pred_region
          %767 = dma.done [#allocation14], 640
        $region100: #{tpu_custom_call.1} parent=79 // pred_fallthru
          _
        // Predicated region
        $region101: #{tpu_custom_call.1} parent=79 // pred_check
          %p768 = pneg %p218
        $region102: #{tpu_custom_call.1} parent=79 // pred_check_branch
          %770 = sbr.rel (%p768) target = $region104
        $region103: #{tpu_custom_call.1} parent=79 // pred_region
          %772 = dma.done [#allocation17], 640
        $region104: #{tpu_custom_call.1} parent=79 // pred_fallthru
          _
        // Predicated region
        $region105: #{tpu_custom_call.1} parent=79 // pred_check
          %p773 = pneg %p239
        $region106: #{tpu_custom_call.1} parent=79 // pred_check_branch
          %775 = sbr.rel (%p773) target = $region108
        $region107: #{tpu_custom_call.1} parent=79 // pred_region
          %777 = dma.done [#allocation17], 1280
        $region108: #{tpu_custom_call.1} parent=79 // pred_fallthru
          _
        // Predicated region
        $region109: #{tpu_custom_call.1} parent=79 // pred_check
          %p778 = pneg %p260
        $region110: #{tpu_custom_call.1} parent=79 // pred_check_branch
          %780 = sbr.rel (%p778) target = $region112
        $region111: #{tpu_custom_call.1} parent=79 // pred_region
          %782 = dma.done [#allocation20], 1280
        $region112: #{tpu_custom_call.1} parent=79 // pred_fallthru
          _
        // Predicated region
        $region113: #{tpu_custom_call.1} parent=79 // pred_check
          %p783 = pneg %p281
        $region114: #{tpu_custom_call.1} parent=79 // pred_check_branch
          %785 = sbr.rel (%p783) target = $region116
        $region115: #{tpu_custom_call.1} parent=79 // pred_region
          %787 = dma.done [#allocation20], 1280
        $region116: #{tpu_custom_call.1} parent=79 // pred_fallthru
          _
        %s788 = sand.u32 %s59, 1
        %s789 = scalar_lea.sflag [#allocation8], %s788
        %s790 = sand.u32 %s59, 1
        %s791 = smul.addr %s790, 40
        %s792 = scalar_lea.vmem [#allocation7], %s791
        %p793 = pneg %p72
        %p794 = pneg %p69
        %s795 = sand.u32 %s51, 1
        %s796 = scalar_lea.sflag [#allocation11], %s795
        %s797 = sand.u32 %s85, 1
        %s798 = smul.addr %s797, 64
        %s799 = scalar_lea.vmem [#allocation10], %s798
        %p800 = pneg %p98
        %p801 = pneg %p95
        %s802 = sand.u32 %s51, 1
        %s803 = scalar_lea.sflag [#allocation11], %s802
        %s804 = sand.u32 %s111, 1
        %s805 = smul.addr %s804, 40
        %s806 = scalar_lea.vmem [#allocation12], %s805
        %p807 = pneg %p124
        %p808 = pneg %p121
        %p809 = scmp.lt.s32.totalorder %s51, 1
        %s810 = scalar_select %p809, %s51, 1
        %s811 = smul.addr %s810, 8
        %s812 = smul.addr %s811, 4
        %s813 = scalar_lea.vmem %s3, %s812
        %p814 = pneg %p150
        %p815 = pneg %p147
        %s816 = sand.u32 %s51, 1
        %s817 = scalar_lea.sflag [#allocation14], %s816
        %s818 = sand.u32 %s163, 1
        %s819 = smul.addr %s818, 24
        %s820 = scalar_lea.vmem [#allocation13], %s819
        %p821 = pneg %p176
        %p822 = pneg %p173
        %p823 = pneg %p197
        %p824 = pneg %p194
        %p825 = pneg %p218
        %p826 = pneg %p215
        %p827 = pneg %p239
        %p828 = pneg %p236
        %p829 = pneg %p260
        %p830 = pneg %p257
        %p831 = pneg %p281
        %p832 = pneg %p278
        %p833 = pneg %p302
        %p834 = pneg %p299
        %p835 = pneg %p323
        %p836 = pneg %p320
        %p837 = pneg %p344
        %p838 = pneg %p341
        %p839 = pneg %p365
        %p840 = pneg %p362
        %p841 = pneg %p386
        %p842 = pneg %p383
        %p843 = pneg %p412
        %p844 = pneg %p409
        %s845 = sand.u32 %s399, 1
        %s846 = scalar_lea.sflag [#allocation9], %s845
        %s847 = sand.u32 %s399, 1
        %s848 = smul.addr %s847, 48
        %s849 = scalar_lea.vmem [#allocation22], %s848
        %p850 = pneg %p438
        %p851 = pneg %p435
        %s852 = sand.u32 %s51, 1
        %s853 = scalar_lea.sflag [#allocation24], %s852
        %s854 = sand.u32 %s425, 1
        %s855 = smul.addr %s854, 64
        %s856 = scalar_lea.vmem [#allocation23], %s855
        %p857 = pneg %p464
        %p858 = pneg %p461
        %s859 = sand.u32 %s51, 1
        %s860 = scalar_lea.sflag [#allocation24], %s859
        %s861 = sand.u32 %s451, 1
        %s862 = smul.addr %s861, 96
        %s863 = scalar_lea.vmem [#allocation25], %s862
        %p864 = pneg %p490
        %p865 = pneg %p487
        %s866 = sand.u32 %s51, 1
        %s867 = scalar_lea.sflag [#allocation27], %s866
        %s868 = sand.u32 %s477, 1
        %s869 = smul.addr %s868, 64
        %s870 = scalar_lea.vmem [#allocation26], %s869
        %p871 = pneg %p516
        %p872 = pneg %p513
        %s873 = sand.u32 %s51, 1
        %s874 = scalar_lea.sflag [#allocation27], %s873
        %s875 = sand.u32 %s503, 1
        %s876 = smul.addr %s875, 32
        %s877 = scalar_lea.vmem [#allocation28], %s876
        %p878 = scmp.lt.s32.totalorder %s51, 1
        %s879 = scalar_select %p878, %s51, 1
        %s880 = smul.addr %s879, 8
        %s881 = smul.addr %s880, 4
        %s882 = scalar_lea.vmem %s3, %s881
        %v884 = vld [vmem:[%s727] sm:$0xff]
        %v885 = vld [vmem:[%s727 + $0x8] sm:$0xff]
        %v886 = vld [vmem:[%s727 + $0x10] sm:$0xf]
        %v887 = vld [vmem:[%s727 + $0x14] sm:$0xff]
        %v888 = vld [vmem:[%s727 + $0x1c] sm:$0xff]
        %v889 = vld [vmem:[%s727 + $0x24] sm:$0xf]
        %894 = vrot.lane.b32.xlu0 %v884, 53
        %v895 = vpop.permute.xlu0 %894
        %896 = vrot.lane.b32.xlu0 %v885, 53
        %v897 = vpop.permute.xlu0 %896
        %898 = vrot.lane.b32.xlu0 %v887, 53
        %v899 = vpop.permute.xlu0 %898
        %900 = vrot.lane.b32.xlu0 %v888, 53
        %v901 = vpop.permute.xlu0 %900
        %v902 = vrot.slane %v895, 4
        %v903 = vrot.slane %v897, 4
        %v904 = vrot.slane %v899, 4
        %v905 = vrot.slane %v901, 4
        %vm906 = vcmask 1043456
        %v907 = vsel %vm906, %v902, %v903
        %vm908 = vcmask 433152
        %v909 = vsel %vm908, %v895, %v907
        %v910 = vsel %vm908, %v897, %v903
        %v911 = vsel %vm906, %v904, %v905
        %v912 = vsel %vm908, %v899, %v911
        %v913 = vsel %vm908, %v901, %v905
        %918 = vst [vmem:[#allocation2] sm:$0xff] %v909
        %919 = vst [vmem:[#allocation2 + $0x8] sm:$0xf] %v910
        %920 = vst [vmem:[#allocation2 + $0xc] sm:$0xff] %v912
        %921 = vst [vmem:[#allocation2 + $0x14] sm:$0xf] %v913
        %922 = vrot.lane.b32.xlu0 %v884, 52
        %v923 = vpop.permute.xlu0 %922
        %924 = vrot.lane.b32.xlu0 %v885, 52
        %v925 = vpop.permute.xlu0 %924
        %926 = vrot.lane.b32.xlu0 %v887, 52
        %v927 = vpop.permute.xlu0 %926
        %928 = vrot.lane.b32.xlu0 %v888, 52
        %v929 = vpop.permute.xlu0 %928
        %v930 = vrot.slane %v923, 4
        %v931 = vrot.slane %v925, 4
        %v932 = vrot.slane %v927, 4
        %v933 = vrot.slane %v929, 4
        %v934 = vsel %vm906, %v930, %v931
        %vm935 = vcmask 424960
        %v936 = vsel %vm935, %v923, %v934
        %v937 = vsel %vm935, %v925, %v931
        %v938 = vsel %vm906, %v932, %v933
        %v939 = vsel %vm935, %v927, %v938
        %v940 = vsel %vm935, %v929, %v933
        %945 = vst [vmem:[#allocation2 + $0x18] sm:$0xff] %v936
        %946 = vst [vmem:[#allocation2 + $0x20] sm:$0xf] %v937
        %947 = vst [vmem:[#allocation2 + $0x24] sm:$0xff] %v939
        %948 = vst [vmem:[#allocation2 + $0x2c] sm:$0xf] %v940
        %949 = vrot.lane.b32.xlu0 %v884, 51
        %v950 = vpop.permute.xlu0 %949
        %951 = vrot.lane.b32.xlu0 %v885, 51
        %v952 = vpop.permute.xlu0 %951
        %953 = vrot.lane.b32.xlu0 %v887, 51
        %v954 = vpop.permute.xlu0 %953
        %955 = vrot.lane.b32.xlu0 %v888, 51
        %v956 = vpop.permute.xlu0 %955
        %v957 = vrot.slane %v950, 4
        %v958 = vrot.slane %v952, 4
        %v959 = vrot.slane %v954, 4
        %v960 = vrot.slane %v956, 4
        %v961 = vsel %vm906, %v957, %v958
        %vm962 = vcmask 416768
        %v963 = vsel %vm962, %v950, %v961
        %v964 = vsel %vm962, %v952, %v958
        %v965 = vsel %vm906, %v959, %v960
        %v966 = vsel %vm962, %v954, %v965
        %v967 = vsel %vm962, %v956, %v960
        %972 = vst [vmem:[#allocation2 + $0x30] sm:$0xff] %v963
        %973 = vst [vmem:[#allocation2 + $0x38] sm:$0xf] %v964
        %974 = vst [vmem:[#allocation2 + $0x3c] sm:$0xff] %v966
        %975 = vst [vmem:[#allocation2 + $0x44] sm:$0xf] %v967
        %976 = vrot.lane.b32.xlu0 %v884, 29
        %v977 = vpop.permute.xlu0 %976
        %978 = vrot.lane.b32.xlu0 %v885, 29
        %v979 = vpop.permute.xlu0 %978
        %980 = vrot.lane.b32.xlu0 %v887, 29
        %v981 = vpop.permute.xlu0 %980
        %982 = vrot.lane.b32.xlu0 %v888, 29
        %v983 = vpop.permute.xlu0 %982
        %v984 = vrot.slane %v977, 4
        %v985 = vrot.slane %v979, 4
        %v986 = vrot.slane %v981, 4
        %v987 = vrot.slane %v983, 4
        %v988 = vsel %vm906, %v984, %v985
        %vm989 = vcmask 236544
        %v990 = vsel %vm989, %v977, %v988
        %v991 = vsel %vm989, %v979, %v985
        %v992 = vsel %vm906, %v986, %v987
        %v993 = vsel %vm989, %v981, %v992
        %v994 = vsel %vm989, %v983, %v987
        %999 = vst [vmem:[#allocation2 + $0x48] sm:$0xff] %v990
        %1000 = vst [vmem:[#allocation2 + $0x50] sm:$0xf] %v991
        %1001 = vst [vmem:[#allocation2 + $0x54] sm:$0xff] %v993
        %1002 = vst [vmem:[#allocation2 + $0x5c] sm:$0xf] %v994
        %1003 = vrot.lane.b32.xlu0 %v884, 28
        %v1004 = vpop.permute.xlu0 %1003
        %1005 = vrot.lane.b32.xlu0 %v885, 28
        %v1006 = vpop.permute.xlu0 %1005
        %1007 = vrot.lane.b32.xlu0 %v887, 28
        %v1008 = vpop.permute.xlu0 %1007
        %1009 = vrot.lane.b32.xlu0 %v888, 28
        %v1010 = vpop.permute.xlu0 %1009
        %v1011 = vrot.slane %v1004, 4
        %v1012 = vrot.slane %v1006, 4
        %v1013 = vrot.slane %v1008, 4
        %v1014 = vrot.slane %v1010, 4
        %v1015 = vsel %vm906, %v1011, %v1012
        %vm1016 = vcmask 228352
        %v1017 = vsel %vm1016, %v1004, %v1015
        %v1018 = vsel %vm1016, %v1006, %v1012
        %v1019 = vsel %vm906, %v1013, %v1014
        %v1020 = vsel %vm1016, %v1008, %v1019
        %v1021 = vsel %vm1016, %v1010, %v1014
        %1026 = vst [vmem:[#allocation2 + $0x60] sm:$0xff] %v1017
        %1027 = vst [vmem:[#allocation2 + $0x68] sm:$0xf] %v1018
        %1028 = vst [vmem:[#allocation2 + $0x6c] sm:$0xff] %v1020
        %1029 = vst [vmem:[#allocation2 + $0x74] sm:$0xf] %v1021
        %1030 = vrot.lane.b32.xlu0 %v884, 27
        %v1031 = vpop.permute.xlu0 %1030
        %1032 = vrot.lane.b32.xlu0 %v885, 27
        %v1033 = vpop.permute.xlu0 %1032
        %1034 = vrot.lane.b32.xlu0 %v887, 27
        %v1035 = vpop.permute.xlu0 %1034
        %1036 = vrot.lane.b32.xlu0 %v888, 27
        %v1037 = vpop.permute.xlu0 %1036
        %v1038 = vrot.slane %v1031, 4
        %v1039 = vrot.slane %v1033, 4
        %v1040 = vrot.slane %v1035, 4
        %v1041 = vrot.slane %v1037, 4
        %v1042 = vsel %vm906, %v1038, %v1039
        %vm1043 = vcmask 220160
        %v1044 = vsel %vm1043, %v1031, %v1042
        %v1045 = vsel %vm1043, %v1033, %v1039
        %v1046 = vsel %vm906, %v1040, %v1041
        %v1047 = vsel %vm1043, %v1035, %v1046
        %v1048 = vsel %vm1043, %v1037, %v1041
        %1053 = vst [vmem:[#allocation2 + $0x78] sm:$0xff] %v1044
        %1054 = vst [vmem:[#allocation2 + $0x80] sm:$0xf] %v1045
        %1055 = vst [vmem:[#allocation2 + $0x84] sm:$0xff] %v1047
        %1056 = vst [vmem:[#allocation2 + $0x8c] sm:$0xf] %v1048
        %1057 = vrot.lane.b32.xlu0 %v884, 5
        %v1058 = vpop.permute.xlu0 %1057
        %1059 = vrot.lane.b32.xlu0 %v885, 5
        %v1060 = vpop.permute.xlu0 %1059
        %1061 = vrot.lane.b32.xlu0 %v887, 5
        %v1062 = vpop.permute.xlu0 %1061
        %1063 = vrot.lane.b32.xlu0 %v888, 5
        %v1064 = vpop.permute.xlu0 %1063
        %v1065 = vrot.slane %v1058, 4
        %v1066 = vrot.slane %v1060, 4
        %v1067 = vrot.slane %v1062, 4
        %v1068 = vrot.slane %v1064, 4
        %v1069 = vsel %vm906, %v1065, %v1066
        %vm1070 = vcmask 39936
        %v1071 = vsel %vm1070, %v1058, %v1069
        %v1072 = vsel %vm1070, %v1060, %v1066
        %v1073 = vsel %vm906, %v1067, %v1068
        %v1074 = vsel %vm1070, %v1062, %v1073
        %v1075 = vsel %vm1070, %v1064, %v1068
        %1080 = vst [vmem:[#allocation2 + $0x90] sm:$0xff] %v1071
        %1081 = vst [vmem:[#allocation2 + $0x98] sm:$0xf] %v1072
        %1082 = vst [vmem:[#allocation2 + $0x9c] sm:$0xff] %v1074
        %1083 = vst [vmem:[#allocation2 + $0xa4] sm:$0xf] %v1075
        %1084 = vrot.lane.b32.xlu0 %v884, 4
        %v1085 = vpop.permute.xlu0 %1084
        %1086 = vrot.lane.b32.xlu0 %v885, 4
        %v1087 = vpop.permute.xlu0 %1086
        %1088 = vrot.lane.b32.xlu0 %v887, 4
        %v1089 = vpop.permute.xlu0 %1088
        %1090 = vrot.lane.b32.xlu0 %v888, 4
        %v1091 = vpop.permute.xlu0 %1090
        %v1092 = vrot.slane %v1085, 4
        %v1093 = vrot.slane %v1087, 4
        %v1094 = vrot.slane %v1089, 4
        %v1095 = vrot.slane %v1091, 4
        %v1096 = vsel %vm906, %v1092, %v1093
        %vm1097 = vcmask 31744
        %v1098 = vsel %vm1097, %v1085, %v1096
        %v1099 = vsel %vm1097, %v1087, %v1093
        %v1100 = vsel %vm906, %v1094, %v1095
        %v1101 = vsel %vm1097, %v1089, %v1100
        %v1102 = vsel %vm1097, %v1091, %v1095
        %1107 = vst [vmem:[#allocation2 + $0xa8] sm:$0xff] %v1098
        %1108 = vst [vmem:[#allocation2 + $0xb0] sm:$0xf] %v1099
        %1109 = vst [vmem:[#allocation2 + $0xb4] sm:$0xff] %v1101
        %1110 = vst [vmem:[#allocation2 + $0xbc] sm:$0xf] %v1102
        %1111 = vrot.lane.b32.xlu0 %v884, 3
        %v1112 = vpop.permute.xlu0 %1111
        %1113 = vrot.lane.b32.xlu0 %v885, 3
        %v1114 = vpop.permute.xlu0 %1113
        %1115 = vrot.lane.b32.xlu0 %v887, 3
        %v1116 = vpop.permute.xlu0 %1115
        %1117 = vrot.lane.b32.xlu0 %v888, 3
        %v1118 = vpop.permute.xlu0 %1117
        %v1119 = vrot.slane %v1112, 4
        %v1120 = vrot.slane %v1114, 4
        %v1121 = vrot.slane %v1116, 4
        %v1122 = vrot.slane %v1118, 4
        %v1123 = vsel %vm906, %v1119, %v1120
        %vm1124 = vcmask 23552
        %v1125 = vsel %vm1124, %v1112, %v1123
        %v1126 = vsel %vm1124, %v1114, %v1120
        %v1127 = vsel %vm906, %v1121, %v1122
        %v1128 = vsel %vm1124, %v1116, %v1127
        %v1129 = vsel %vm1124, %v1118, %v1122
        %1134 = vst [vmem:[#allocation2 + $0xc0] sm:$0xff] %v1125
        %1135 = vst [vmem:[#allocation2 + $0xc8] sm:$0xf] %v1126
        %1136 = vst [vmem:[#allocation2 + $0xcc] sm:$0xff] %v1128
        %1137 = vst [vmem:[#allocation2 + $0xd4] sm:$0xf] %v1129
        %1138 = vrot.lane.b32.xlu0 %v884, 78
        %v1139 = vpop.permute.xlu0 %1138
        %1140 = vrot.lane.b32.xlu0 %v885, 78
        %v1141 = vpop.permute.xlu0 %1140
        %1142 = vrot.lane.b32.xlu0 %v887, 78
        %v1143 = vpop.permute.xlu0 %1142
        %1144 = vrot.lane.b32.xlu0 %v888, 78
        %v1145 = vpop.permute.xlu0 %1144
        %v1146 = vrot.slane %v1139, 4
        %v1147 = vrot.slane %v1141, 4
        %v1148 = vrot.slane %v1143, 4
        %v1149 = vrot.slane %v1145, 4
        %v1150 = vsel %vm906, %v1146, %v1147
        %vm1151 = vcmask 637952
        %v1152 = vsel %vm1151, %v1139, %v1150
        %v1153 = vsel %vm1151, %v1141, %v1147
        %v1154 = vsel %vm906, %v1148, %v1149
        %v1155 = vsel %vm1151, %v1143, %v1154
        %v1156 = vsel %vm1151, %v1145, %v1149
        %1161 = vst [vmem:[#allocation2 + $0xd8] sm:$0xff] %v1152
        %1162 = vst [vmem:[#allocation2 + $0xe0] sm:$0xf] %v1153
        %1163 = vst [vmem:[#allocation2 + $0xe4] sm:$0xff] %v1155
        %1164 = vst [vmem:[#allocation2 + $0xec] sm:$0xf] %v1156
        %1165 = vrot.lane.b32.xlu0 %v884, 76
        %v1166 = vpop.permute.xlu0 %1165
        %1167 = vrot.lane.b32.xlu0 %v885, 76
        %v1168 = vpop.permute.xlu0 %1167
        %1169 = vrot.lane.b32.xlu0 %v887, 76
        %v1170 = vpop.permute.xlu0 %1169
        %1171 = vrot.lane.b32.xlu0 %v888, 76
        %v1172 = vpop.permute.xlu0 %1171
        %v1173 = vrot.slane %v1166, 4
        %v1174 = vrot.slane %v1168, 4
        %v1175 = vrot.slane %v1170, 4
        %v1176 = vrot.slane %v1172, 4
        %v1177 = vsel %vm906, %v1173, %v1174
        %vm1178 = vcmask 621568
        %v1179 = vsel %vm1178, %v1166, %v1177
        %v1180 = vsel %vm1178, %v1168, %v1174
        %v1181 = vsel %vm906, %v1175, %v1176
        %v1182 = vsel %vm1178, %v1170, %v1181
        %v1183 = vsel %vm1178, %v1172, %v1176
        %1188 = vst [vmem:[#allocation2 + $0xf0] sm:$0xff] %v1179
        %1189 = vst [vmem:[#allocation2 + $0xf8] sm:$0xf] %v1180
        %1190 = vst [vmem:[#allocation2 + $0xfc] sm:$0xff] %v1182
        %1191 = vst [vmem:[#allocation2 + $0x104] sm:$0xf] %v1183
        %1192 = vrot.lane.b32.xlu0 %v884, 74
        %v1193 = vpop.permute.xlu0 %1192
        %1194 = vrot.lane.b32.xlu0 %v885, 74
        %v1195 = vpop.permute.xlu0 %1194
        %1196 = vrot.lane.b32.xlu0 %v887, 74
        %v1197 = vpop.permute.xlu0 %1196
        %1198 = vrot.lane.b32.xlu0 %v888, 74
        %v1199 = vpop.permute.xlu0 %1198
        %v1200 = vrot.slane %v1193, 4
        %v1201 = vrot.slane %v1195, 4
        %v1202 = vrot.slane %v1197, 4
        %v1203 = vrot.slane %v1199, 4
        %v1204 = vsel %vm906, %v1200, %v1201
        %vm1205 = vcmask 605184
        %v1206 = vsel %vm1205, %v1193, %v1204
        %v1207 = vsel %vm1205, %v1195, %v1201
        %v1208 = vsel %vm906, %v1202, %v1203
        %v1209 = vsel %vm1205, %v1197, %v1208
        %v1210 = vsel %vm1205, %v1199, %v1203
        %1215 = vst [vmem:[#allocation2 + $0x108] sm:$0xff] %v1206
        %1216 = vst [vmem:[#allocation2 + $0x110] sm:$0xf] %v1207
        %1217 = vst [vmem:[#allocation2 + $0x114] sm:$0xff] %v1209
        %1218 = vst [vmem:[#allocation2 + $0x11c] sm:$0xf] %v1210
        %1219 = vrot.lane.b32.xlu0 %v884, 30
        %v1220 = vpop.permute.xlu0 %1219
        %1221 = vrot.lane.b32.xlu0 %v885, 30
        %v1222 = vpop.permute.xlu0 %1221
        %1223 = vrot.lane.b32.xlu0 %v887, 30
        %v1224 = vpop.permute.xlu0 %1223
        %1225 = vrot.lane.b32.xlu0 %v888, 30
        %v1226 = vpop.permute.xlu0 %1225
        %v1227 = vrot.slane %v1220, 4
        %v1228 = vrot.slane %v1222, 4
        %v1229 = vrot.slane %v1224, 4
        %v1230 = vrot.slane %v1226, 4
        %v1231 = vsel %vm906, %v1227, %v1228
        %vm1232 = vcmask 244736
        %v1233 = vsel %vm1232, %v1220, %v1231
        %v1234 = vsel %vm1232, %v1222, %v1228
        %v1235 = vsel %vm906, %v1229, %v1230
        %v1236 = vsel %vm1232, %v1224, %v1235
        %v1237 = vsel %vm1232, %v1226, %v1230
        %1242 = vst [vmem:[#allocation2 + $0x120] sm:$0xff] %v1233
        %1243 = vst [vmem:[#allocation2 + $0x128] sm:$0xf] %v1234
        %1244 = vst [vmem:[#allocation2 + $0x12c] sm:$0xff] %v1236
        %1245 = vst [vmem:[#allocation2 + $0x134] sm:$0xf] %v1237
        %1246 = vst [vmem:[#allocation2 + $0x138] sm:$0xff] %v1017
        %1247 = vst [vmem:[#allocation2 + $0x140] sm:$0xf] %v1018
        %1248 = vst [vmem:[#allocation2 + $0x144] sm:$0xff] %v1020
        %1249 = vst [vmem:[#allocation2 + $0x14c] sm:$0xf] %v1021
        %1250 = vrot.lane.b32.xlu0 %v884, 26
        %v1251 = vpop.permute.xlu0 %1250
        %1252 = vrot.lane.b32.xlu0 %v885, 26
        %v1253 = vpop.permute.xlu0 %1252
        %1254 = vrot.lane.b32.xlu0 %v887, 26
        %v1255 = vpop.permute.xlu0 %1254
        %1256 = vrot.lane.b32.xlu0 %v888, 26
        %v1257 = vpop.permute.xlu0 %1256
        %v1258 = vrot.slane %v1251, 4
        %v1259 = vrot.slane %v1253, 4
        %v1260 = vrot.slane %v1255, 4
        %v1261 = vrot.slane %v1257, 4
        %v1262 = vsel %vm906, %v1258, %v1259
        %vm1263 = vcmask 211968
        %v1264 = vsel %vm1263, %v1251, %v1262
        %v1265 = vsel %vm1263, %v1253, %v1259
        %v1266 = vsel %vm906, %v1260, %v1261
        %v1267 = vsel %vm1263, %v1255, %v1266
        %v1268 = vsel %vm1263, %v1257, %v1261
        %1273 = vst [vmem:[#allocation2 + $0x150] sm:$0xff] %v1264
        %1274 = vst [vmem:[#allocation2 + $0x158] sm:$0xf] %v1265
        %1275 = vst [vmem:[#allocation2 + $0x15c] sm:$0xff] %v1267
        %1276 = vst [vmem:[#allocation2 + $0x164] sm:$0xf] %v1268
        %1279 = vrot.lane.b32.xlu0 %v884, 110
        %v1280 = vpop.permute.xlu0 %1279
        %1281 = vrot.lane.b32.xlu0 %v885, 110
        %v1282 = vpop.permute.xlu0 %1281
        %1283 = vrot.lane.b32.xlu0 %v886, 110
        %v1284 = vpop.permute.xlu0 %1283
        %1285 = vrot.lane.b32.xlu0 %v887, 110
        %v1286 = vpop.permute.xlu0 %1285
        %1287 = vrot.lane.b32.xlu0 %v888, 110
        %v1288 = vpop.permute.xlu0 %1287
        %1289 = vrot.lane.b32.xlu0 %v889, 110
        %v1290 = vpop.permute.xlu0 %1289
        %v1291 = vrot.slane %v1280, 4
        %v1292 = vrot.slane %v1282, 4
        %v1293 = vrot.slane %v1286, 4
        %v1294 = vrot.slane %v1288, 4
        %v1295 = vsel %vm906, %v1291, %v1292
        %vm1296 = vcmask 900096
        %v1297 = vsel %vm1296, %v1295, %v1282
        %v1298 = vsel %vm1296, %v1292, %v1284
        %v1299 = vsel %vm906, %v1293, %v1294
        %v1300 = vsel %vm1296, %v1299, %v1288
        %v1301 = vsel %vm1296, %v1294, %v1290
        %1306 = vst [vmem:[#allocation2 + $0x168] sm:$0xff] %v1297
        %1307 = vst [vmem:[#allocation2 + $0x170] sm:$0xf] %v1298
        %1308 = vst [vmem:[#allocation2 + $0x174] sm:$0xff] %v1300
        %1309 = vst [vmem:[#allocation2 + $0x17c] sm:$0xf] %v1301
        %1310 = vrot.lane.b32.xlu0 %v884, 108
        %v1311 = vpop.permute.xlu0 %1310
        %1312 = vrot.lane.b32.xlu0 %v885, 108
        %v1313 = vpop.permute.xlu0 %1312
        %1314 = vrot.lane.b32.xlu0 %v886, 108
        %v1315 = vpop.permute.xlu0 %1314
        %1316 = vrot.lane.b32.xlu0 %v887, 108
        %v1317 = vpop.permute.xlu0 %1316
        %1318 = vrot.lane.b32.xlu0 %v888, 108
        %v1319 = vpop.permute.xlu0 %1318
        %1320 = vrot.lane.b32.xlu0 %v889, 108
        %v1321 = vpop.permute.xlu0 %1320
        %v1322 = vrot.slane %v1311, 4
        %v1323 = vrot.slane %v1313, 4
        %v1324 = vrot.slane %v1317, 4
        %v1325 = vrot.slane %v1319, 4
        %v1326 = vsel %vm906, %v1322, %v1323
        %vm1327 = vcmask 883712
        %v1328 = vsel %vm1327, %v1326, %v1313
        %v1329 = vsel %vm1327, %v1323, %v1315
        %v1330 = vsel %vm906, %v1324, %v1325
        %v1331 = vsel %vm1327, %v1330, %v1319
        %v1332 = vsel %vm1327, %v1325, %v1321
        %1337 = vst [vmem:[#allocation2 + $0x180] sm:$0xff] %v1328
        %1338 = vst [vmem:[#allocation2 + $0x188] sm:$0xf] %v1329
        %1339 = vst [vmem:[#allocation2 + $0x18c] sm:$0xff] %v1331
        %1340 = vst [vmem:[#allocation2 + $0x194] sm:$0xf] %v1332
        %1341 = vrot.lane.b32.xlu0 %v884, 106
        %v1342 = vpop.permute.xlu0 %1341
        %1343 = vrot.lane.b32.xlu0 %v885, 106
        %v1344 = vpop.permute.xlu0 %1343
        %1345 = vrot.lane.b32.xlu0 %v886, 106
        %v1346 = vpop.permute.xlu0 %1345
        %1347 = vrot.lane.b32.xlu0 %v887, 106
        %v1348 = vpop.permute.xlu0 %1347
        %1349 = vrot.lane.b32.xlu0 %v888, 106
        %v1350 = vpop.permute.xlu0 %1349
        %1351 = vrot.lane.b32.xlu0 %v889, 106
        %v1352 = vpop.permute.xlu0 %1351
        %v1353 = vrot.slane %v1342, 4
        %v1354 = vrot.slane %v1344, 4
        %v1355 = vrot.slane %v1348, 4
        %v1356 = vrot.slane %v1350, 4
        %v1357 = vsel %vm906, %v1353, %v1354
        %vm1358 = vcmask 867328
        %v1359 = vsel %vm1358, %v1357, %v1344
        %v1360 = vsel %vm1358, %v1354, %v1346
        %v1361 = vsel %vm906, %v1355, %v1356
        %v1362 = vsel %vm1358, %v1361, %v1350
        %v1363 = vsel %vm1358, %v1356, %v1352
        %1368 = vst [vmem:[#allocation2 + $0x198] sm:$0xff] %v1359
        %1369 = vst [vmem:[#allocation2 + $0x1a0] sm:$0xf] %v1360
        %1370 = vst [vmem:[#allocation2 + $0x1a4] sm:$0xff] %v1362
        %1371 = vst [vmem:[#allocation2 + $0x1ac] sm:$0xf] %v1363
        %1372 = vrot.lane.b32.xlu0 %v884, 103
        %v1373 = vpop.permute.xlu0 %1372
        %1374 = vrot.lane.b32.xlu0 %v885, 103
        %v1375 = vpop.permute.xlu0 %1374
        %1376 = vrot.lane.b32.xlu0 %v887, 103
        %v1377 = vpop.permute.xlu0 %1376
        %1378 = vrot.lane.b32.xlu0 %v888, 103
        %v1379 = vpop.permute.xlu0 %1378
        %v1380 = vrot.slane %v1373, 4
        %v1381 = vrot.slane %v1375, 4
        %v1382 = vrot.slane %v1377, 4
        %v1383 = vrot.slane %v1379, 4
        %v1384 = vsel %vm906, %v1380, %v1381
        %vm1385 = vcmask 842752
        %v1386 = vsel %vm1385, %v1373, %v1384
        %v1387 = vsel %vm1385, %v1375, %v1381
        %v1388 = vsel %vm906, %v1382, %v1383
        %v1389 = vsel %vm1385, %v1377, %v1388
        %v1390 = vsel %vm1385, %v1379, %v1383
        %1395 = vst [vmem:[#allocation2 + $0x1b0] sm:$0xff] %v1386
        %1396 = vst [vmem:[#allocation2 + $0x1b8] sm:$0xf] %v1387
        %1397 = vst [vmem:[#allocation2 + $0x1bc] sm:$0xff] %v1389
        %1398 = vst [vmem:[#allocation2 + $0x1c4] sm:$0xf] %v1390
        %1399 = vrot.lane.b32.xlu0 %v884, 100
        %v1400 = vpop.permute.xlu0 %1399
        %1401 = vrot.lane.b32.xlu0 %v885, 100
        %v1402 = vpop.permute.xlu0 %1401
        %1403 = vrot.lane.b32.xlu0 %v887, 100
        %v1404 = vpop.permute.xlu0 %1403
        %1405 = vrot.lane.b32.xlu0 %v888, 100
        %v1406 = vpop.permute.xlu0 %1405
        %v1407 = vrot.slane %v1400, 4
        %v1408 = vrot.slane %v1402, 4
        %v1409 = vrot.slane %v1404, 4
        %v1410 = vrot.slane %v1406, 4
        %v1411 = vsel %vm906, %v1407, %v1408
        %vm1412 = vcmask 818176
        %v1413 = vsel %vm1412, %v1400, %v1411
        %v1414 = vsel %vm1412, %v1402, %v1408
        %v1415 = vsel %vm906, %v1409, %v1410
        %v1416 = vsel %vm1412, %v1404, %v1415
        %v1417 = vsel %vm1412, %v1406, %v1410
        %1422 = vst [vmem:[#allocation2 + $0x1c8] sm:$0xff] %v1413
        %1423 = vst [vmem:[#allocation2 + $0x1d0] sm:$0xf] %v1414
        %1424 = vst [vmem:[#allocation2 + $0x1d4] sm:$0xff] %v1416
        %1425 = vst [vmem:[#allocation2 + $0x1dc] sm:$0xf] %v1417
        %1426 = vrot.lane.b32.xlu0 %v884, 97
        %v1427 = vpop.permute.xlu0 %1426
        %1428 = vrot.lane.b32.xlu0 %v885, 97
        %v1429 = vpop.permute.xlu0 %1428
        %1430 = vrot.lane.b32.xlu0 %v887, 97
        %v1431 = vpop.permute.xlu0 %1430
        %1432 = vrot.lane.b32.xlu0 %v888, 97
        %v1433 = vpop.permute.xlu0 %1432
        %v1434 = vrot.slane %v1427, 4
        %v1435 = vrot.slane %v1429, 4
        %v1436 = vrot.slane %v1431, 4
        %v1437 = vrot.slane %v1433, 4
        %v1438 = vsel %vm906, %v1434, %v1435
        %vm1439 = vcmask 793600
        %v1440 = vsel %vm1439, %v1427, %v1438
        %v1441 = vsel %vm1439, %v1429, %v1435
        %v1442 = vsel %vm906, %v1436, %v1437
        %v1443 = vsel %vm1439, %v1431, %v1442
        %v1444 = vsel %vm1439, %v1433, %v1437
        %1449 = vst [vmem:[#allocation2 + $0x1e0] sm:$0xff] %v1440
        %1450 = vst [vmem:[#allocation2 + $0x1e8] sm:$0xf] %v1441
        %1451 = vst [vmem:[#allocation2 + $0x1ec] sm:$0xff] %v1443
        %1452 = vst [vmem:[#allocation2 + $0x1f4] sm:$0xf] %v1444
        %1453 = vrot.lane.b32.xlu0 %v884, 31
        %v1454 = vpop.permute.xlu0 %1453
        %1455 = vrot.lane.b32.xlu0 %v885, 31
        %v1456 = vpop.permute.xlu0 %1455
        %1457 = vrot.lane.b32.xlu0 %v887, 31
        %v1458 = vpop.permute.xlu0 %1457
        %1459 = vrot.lane.b32.xlu0 %v888, 31
        %v1460 = vpop.permute.xlu0 %1459
        %v1461 = vrot.slane %v1454, 4
        %v1462 = vrot.slane %v1456, 4
        %v1463 = vrot.slane %v1458, 4
        %v1464 = vrot.slane %v1460, 4
        %v1465 = vsel %vm906, %v1461, %v1462
        %vm1466 = vcmask 252928
        %v1467 = vsel %vm1466, %v1454, %v1465
        %v1468 = vsel %vm1466, %v1456, %v1462
        %v1469 = vsel %vm906, %v1463, %v1464
        %v1470 = vsel %vm1466, %v1458, %v1469
        %v1471 = vsel %vm1466, %v1460, %v1464
        %1476 = vst [vmem:[#allocation2 + $0x1f8] sm:$0xff] %v1467
        %1477 = vst [vmem:[#allocation2 + $0x200] sm:$0xf] %v1468
        %1478 = vst [vmem:[#allocation2 + $0x204] sm:$0xff] %v1470
        %1479 = vst [vmem:[#allocation2 + $0x20c] sm:$0xf] %v1471
        %1480 = vst [vmem:[#allocation2 + $0x210] sm:$0xff] %v1017
        %1481 = vst [vmem:[#allocation2 + $0x218] sm:$0xf] %v1018
        %1482 = vst [vmem:[#allocation2 + $0x21c] sm:$0xff] %v1020
        %1483 = vst [vmem:[#allocation2 + $0x224] sm:$0xf] %v1021
        %1484 = vrot.lane.b32.xlu0 %v884, 25
        %v1485 = vpop.permute.xlu0 %1484
        %1486 = vrot.lane.b32.xlu0 %v885, 25
        %v1487 = vpop.permute.xlu0 %1486
        %1488 = vrot.lane.b32.xlu0 %v887, 25
        %v1489 = vpop.permute.xlu0 %1488
        %1490 = vrot.lane.b32.xlu0 %v888, 25
        %v1491 = vpop.permute.xlu0 %1490
        %v1492 = vrot.slane %v1485, 4
        %v1493 = vrot.slane %v1487, 4
        %v1494 = vrot.slane %v1489, 4
        %v1495 = vrot.slane %v1491, 4
        %v1496 = vsel %vm906, %v1492, %v1493
        %vm1497 = vcmask 203776
        %v1498 = vsel %vm1497, %v1485, %v1496
        %v1499 = vsel %vm1497, %v1487, %v1493
        %v1500 = vsel %vm906, %v1494, %v1495
        %v1501 = vsel %vm1497, %v1489, %v1500
        %v1502 = vsel %vm1497, %v1491, %v1495
        %1507 = vst [vmem:[#allocation2 + $0x228] sm:$0xff] %v1498
        %1508 = vst [vmem:[#allocation2 + $0x230] sm:$0xf] %v1499
        %1509 = vst [vmem:[#allocation2 + $0x234] sm:$0xff] %v1501
        %1510 = vst [vmem:[#allocation2 + $0x23c] sm:$0xf] %v1502
        %1511 = vrot.lane.b32.xlu0 %v884, 87
        %v1512 = vpop.permute.xlu0 %1511
        %1513 = vrot.lane.b32.xlu0 %v885, 87
        %v1514 = vpop.permute.xlu0 %1513
        %1515 = vrot.lane.b32.xlu0 %v886, 87
        %v1516 = vpop.permute.xlu0 %1515
        %1517 = vrot.lane.b32.xlu0 %v887, 87
        %v1518 = vpop.permute.xlu0 %1517
        %1519 = vrot.lane.b32.xlu0 %v888, 87
        %v1520 = vpop.permute.xlu0 %1519
        %1521 = vrot.lane.b32.xlu0 %v889, 87
        %v1522 = vpop.permute.xlu0 %1521
        %v1523 = vrot.slane %v1512, 4
        %v1524 = vrot.slane %v1514, 4
        %v1525 = vrot.slane %v1518, 4
        %v1526 = vrot.slane %v1520, 4
        %v1527 = vsel %vm906, %v1523, %v1524
        %vm1528 = vcmask 711680
        %v1529 = vsel %vm1528, %v1527, %v1514
        %v1530 = vsel %vm1528, %v1524, %v1516
        %v1531 = vsel %vm906, %v1525, %v1526
        %v1532 = vsel %vm1528, %v1531, %v1520
        %v1533 = vsel %vm1528, %v1526, %v1522
        %1538 = vst [vmem:[#allocation2 + $0x240] sm:$0xff] %v1529
        %1539 = vst [vmem:[#allocation2 + $0x248] sm:$0xf] %v1530
        %1540 = vst [vmem:[#allocation2 + $0x24c] sm:$0xff] %v1532
        %1541 = vst [vmem:[#allocation2 + $0x254] sm:$0xf] %v1533
        %1542 = vrot.lane.b32.xlu0 %v884, 84
        %v1543 = vpop.permute.xlu0 %1542
        %1544 = vrot.lane.b32.xlu0 %v885, 84
        %v1545 = vpop.permute.xlu0 %1544
        %1546 = vrot.lane.b32.xlu0 %v886, 84
        %v1547 = vpop.permute.xlu0 %1546
        %1548 = vrot.lane.b32.xlu0 %v887, 84
        %v1549 = vpop.permute.xlu0 %1548
        %1550 = vrot.lane.b32.xlu0 %v888, 84
        %v1551 = vpop.permute.xlu0 %1550
        %1552 = vrot.lane.b32.xlu0 %v889, 84
        %v1553 = vpop.permute.xlu0 %1552
        %v1554 = vrot.slane %v1543, 4
        %v1555 = vrot.slane %v1545, 4
        %v1556 = vrot.slane %v1549, 4
        %v1557 = vrot.slane %v1551, 4
        %v1558 = vsel %vm906, %v1554, %v1555
        %vm1559 = vcmask 687104
        %v1560 = vsel %vm1559, %v1558, %v1545
        %v1561 = vsel %vm1559, %v1555, %v1547
        %v1562 = vsel %vm906, %v1556, %v1557
        %v1563 = vsel %vm1559, %v1562, %v1551
        %v1564 = vsel %vm1559, %v1557, %v1553
        %1569 = vst [vmem:[#allocation2 + $0x258] sm:$0xff] %v1560
        %1570 = vst [vmem:[#allocation2 + $0x260] sm:$0xf] %v1561
        %1571 = vst [vmem:[#allocation2 + $0x264] sm:$0xff] %v1563
        %1572 = vst [vmem:[#allocation2 + $0x26c] sm:$0xf] %v1564
        %1573 = vrot.lane.b32.xlu0 %v884, 81
        %v1574 = vpop.permute.xlu0 %1573
        %1575 = vrot.lane.b32.xlu0 %v885, 81
        %v1576 = vpop.permute.xlu0 %1575
        %1577 = vrot.lane.b32.xlu0 %v886, 81
        %v1578 = vpop.permute.xlu0 %1577
        %1579 = vrot.lane.b32.xlu0 %v887, 81
        %v1580 = vpop.permute.xlu0 %1579
        %1581 = vrot.lane.b32.xlu0 %v888, 81
        %v1582 = vpop.permute.xlu0 %1581
        %1583 = vrot.lane.b32.xlu0 %v889, 81
        %v1584 = vpop.permute.xlu0 %1583
        %v1585 = vrot.slane %v1574, 4
        %v1586 = vrot.slane %v1576, 4
        %v1587 = vrot.slane %v1580, 4
        %v1588 = vrot.slane %v1582, 4
        %v1589 = vsel %vm906, %v1585, %v1586
        %vm1590 = vcmask 662528
        %v1591 = vsel %vm1590, %v1589, %v1576
        %v1592 = vsel %vm1590, %v1586, %v1578
        %v1593 = vsel %vm906, %v1587, %v1588
        %v1594 = vsel %vm1590, %v1593, %v1582
        %v1595 = vsel %vm1590, %v1588, %v1584
        %1600 = vst [vmem:[#allocation2 + $0x270] sm:$0xff] %v1591
        %1601 = vst [vmem:[#allocation2 + $0x278] sm:$0xf] %v1592
        %1602 = vst [vmem:[#allocation2 + $0x27c] sm:$0xff] %v1594
        %1603 = vst [vmem:[#allocation2 + $0x284] sm:$0xf] %v1595
        %1604 = vst [vmem:[#allocation2 + $0x288] sm:$0xff] %v884
        %1605 = vst [vmem:[#allocation2 + $0x290] sm:$0xf] %v885
        %1606 = vst [vmem:[#allocation2 + $0x294] sm:$0xff] %v887
        %1607 = vst [vmem:[#allocation2 + $0x29c] sm:$0xf] %v888
        %1608 = vrot.lane.b32.xlu0 %v884, 124
        %v1609 = vpop.permute.xlu0 %1608
        %1610 = vrot.lane.b32.xlu0 %v885, 124
        %v1611 = vpop.permute.xlu0 %1610
        %1612 = vrot.lane.b32.xlu0 %v887, 124
        %v1613 = vpop.permute.xlu0 %1612
        %1614 = vrot.lane.b32.xlu0 %v888, 124
        %v1615 = vpop.permute.xlu0 %1614
        %v1616 = vrot.slane %v1609, 4
        %v1617 = vrot.slane %v1611, 4
        %v1618 = vrot.slane %v1613, 4
        %v1619 = vrot.slane %v1615, 4
        %v1620 = vsel %vm906, %v1616, %v1617
        %vm1621 = vcmask 1014784
        %v1622 = vsel %vm1621, %v1609, %v1620
        %v1623 = vsel %vm1621, %v1611, %v1617
        %v1624 = vsel %vm906, %v1618, %v1619
        %v1625 = vsel %vm1621, %v1613, %v1624
        %v1626 = vsel %vm1621, %v1615, %v1619
        %1631 = vst [vmem:[#allocation2 + $0x2a0] sm:$0xff] %v1622
        %1632 = vst [vmem:[#allocation2 + $0x2a8] sm:$0xf] %v1623
        %1633 = vst [vmem:[#allocation2 + $0x2ac] sm:$0xff] %v1625
        %1634 = vst [vmem:[#allocation2 + $0x2b4] sm:$0xf] %v1626
        %1635 = vrot.lane.b32.xlu0 %v884, 120
        %v1636 = vpop.permute.xlu0 %1635
        %1637 = vrot.lane.b32.xlu0 %v885, 120
        %v1638 = vpop.permute.xlu0 %1637
        %1639 = vrot.lane.b32.xlu0 %v887, 120
        %v1640 = vpop.permute.xlu0 %1639
        %1641 = vrot.lane.b32.xlu0 %v888, 120
        %v1642 = vpop.permute.xlu0 %1641
        %v1643 = vrot.slane %v1636, 4
        %v1644 = vrot.slane %v1638, 4
        %v1645 = vrot.slane %v1640, 4
        %v1646 = vrot.slane %v1642, 4
        %v1647 = vsel %vm906, %v1643, %v1644
        %vm1648 = vcmask 982016
        %v1649 = vsel %vm1648, %v1636, %v1647
        %v1650 = vsel %vm1648, %v1638, %v1644
        %v1651 = vsel %vm906, %v1645, %v1646
        %v1652 = vsel %vm1648, %v1640, %v1651
        %v1653 = vsel %vm1648, %v1642, %v1646
        %1658 = vst [vmem:[#allocation2 + $0x2b8] sm:$0xff] %v1649
        %1659 = vst [vmem:[#allocation2 + $0x2c0] sm:$0xf] %v1650
        %1660 = vst [vmem:[#allocation2 + $0x2c4] sm:$0xff] %v1652
        %1661 = vst [vmem:[#allocation2 + $0x2cc] sm:$0xf] %v1653
        %1662 = vrot.lane.b32.xlu0 %v884, 32
        %v1663 = vpop.permute.xlu0 %1662
        %1664 = vrot.lane.b32.xlu0 %v885, 32
        %v1665 = vpop.permute.xlu0 %1664
        %1666 = vrot.lane.b32.xlu0 %v887, 32
        %v1667 = vpop.permute.xlu0 %1666
        %1668 = vrot.lane.b32.xlu0 %v888, 32
        %v1669 = vpop.permute.xlu0 %1668
        %v1670 = vrot.slane %v1663, 4
        %v1671 = vrot.slane %v1665, 4
        %v1672 = vrot.slane %v1667, 4
        %v1673 = vrot.slane %v1669, 4
        %v1674 = vsel %vm906, %v1670, %v1671
        %vm1675 = vcmask 261120
        %v1676 = vsel %vm1675, %v1663, %v1674
        %v1677 = vsel %vm1675, %v1665, %v1671
        %v1678 = vsel %vm906, %v1672, %v1673
        %v1679 = vsel %vm1675, %v1667, %v1678
        %v1680 = vsel %vm1675, %v1669, %v1673
        %1685 = vst [vmem:[#allocation2 + $0x2d0] sm:$0xff] %v1676
        %1686 = vst [vmem:[#allocation2 + $0x2d8] sm:$0xf] %v1677
        %1687 = vst [vmem:[#allocation2 + $0x2dc] sm:$0xff] %v1679
        %1688 = vst [vmem:[#allocation2 + $0x2e4] sm:$0xf] %v1680
        %1689 = vst [vmem:[#allocation2 + $0x2e8] sm:$0xff] %v1017
        %1690 = vst [vmem:[#allocation2 + $0x2f0] sm:$0xf] %v1018
        %1691 = vst [vmem:[#allocation2 + $0x2f4] sm:$0xff] %v1020
        %1692 = vst [vmem:[#allocation2 + $0x2fc] sm:$0xf] %v1021
        %1693 = vrot.lane.b32.xlu0 %v884, 24
        %v1694 = vpop.permute.xlu0 %1693
        %1695 = vrot.lane.b32.xlu0 %v885, 24
        %v1696 = vpop.permute.xlu0 %1695
        %1697 = vrot.lane.b32.xlu0 %v887, 24
        %v1698 = vpop.permute.xlu0 %1697
        %1699 = vrot.lane.b32.xlu0 %v888, 24
        %v1700 = vpop.permute.xlu0 %1699
        %v1701 = vrot.slane %v1694, 4
        %v1702 = vrot.slane %v1696, 4
        %v1703 = vrot.slane %v1698, 4
        %v1704 = vrot.slane %v1700, 4
        %v1705 = vsel %vm906, %v1701, %v1702
        %vm1706 = vcmask 195584
        %v1707 = vsel %vm1706, %v1694, %v1705
        %v1708 = vsel %vm1706, %v1696, %v1702
        %v1709 = vsel %vm906, %v1703, %v1704
        %v1710 = vsel %vm1706, %v1698, %v1709
        %v1711 = vsel %vm1706, %v1700, %v1704
        %1716 = vst [vmem:[#allocation2 + $0x300] sm:$0xff] %v1707
        %1717 = vst [vmem:[#allocation2 + $0x308] sm:$0xf] %v1708
        %1718 = vst [vmem:[#allocation2 + $0x30c] sm:$0xff] %v1710
        %1719 = vst [vmem:[#allocation2 + $0x314] sm:$0xf] %v1711
        %1720 = vrot.lane.b32.xlu0 %v884, 64
        %v1721 = vpop.permute.xlu0 %1720
        %1722 = vrot.lane.b32.xlu0 %v885, 64
        %v1723 = vpop.permute.xlu0 %1722
        %1724 = vrot.lane.b32.xlu0 %v886, 64
        %v1725 = vpop.permute.xlu0 %1724
        %1726 = vrot.lane.b32.xlu0 %v887, 64
        %v1727 = vpop.permute.xlu0 %1726
        %1728 = vrot.lane.b32.xlu0 %v888, 64
        %v1729 = vpop.permute.xlu0 %1728
        %1730 = vrot.lane.b32.xlu0 %v889, 64
        %v1731 = vpop.permute.xlu0 %1730
        %v1732 = vrot.slane %v1721, 4
        %v1733 = vrot.slane %v1723, 4
        %v1734 = vrot.slane %v1727, 4
        %v1735 = vrot.slane %v1729, 4
        %v1736 = vsel %vm906, %v1732, %v1733
        %vm1737 = vcmask 523264
        %v1738 = vsel %vm1737, %v1736, %v1723
        %v1739 = vsel %vm1737, %v1733, %v1725
        %v1740 = vsel %vm906, %v1734, %v1735
        %v1741 = vsel %vm1737, %v1740, %v1729
        %v1742 = vsel %vm1737, %v1735, %v1731
        %1747 = vst [vmem:[#allocation2 + $0x318] sm:$0xff] %v1738
        %1748 = vst [vmem:[#allocation2 + $0x320] sm:$0xf] %v1739
        %1749 = vst [vmem:[#allocation2 + $0x324] sm:$0xff] %v1741
        %1750 = vst [vmem:[#allocation2 + $0x32c] sm:$0xf] %v1742
        %1751 = vrot.lane.b32.xlu0 %v884, 60
        %v1752 = vpop.permute.xlu0 %1751
        %1753 = vrot.lane.b32.xlu0 %v885, 60
        %v1754 = vpop.permute.xlu0 %1753
        %1755 = vrot.lane.b32.xlu0 %v886, 60
        %v1756 = vpop.permute.xlu0 %1755
        %1757 = vrot.lane.b32.xlu0 %v887, 60
        %v1758 = vpop.permute.xlu0 %1757
        %1759 = vrot.lane.b32.xlu0 %v888, 60
        %v1760 = vpop.permute.xlu0 %1759
        %1761 = vrot.lane.b32.xlu0 %v889, 60
        %v1762 = vpop.permute.xlu0 %1761
        %v1763 = vrot.slane %v1752, 4
        %v1764 = vrot.slane %v1754, 4
        %v1765 = vrot.slane %v1758, 4
        %v1766 = vrot.slane %v1760, 4
        %v1767 = vsel %vm906, %v1763, %v1764
        %vm1768 = vcmask 490496
        %v1769 = vsel %vm1768, %v1767, %v1754
        %v1770 = vsel %vm1768, %v1764, %v1756
        %v1771 = vsel %vm906, %v1765, %v1766
        %v1772 = vsel %vm1768, %v1771, %v1760
        %v1773 = vsel %vm1768, %v1766, %v1762
        %1778 = vst [vmem:[#allocation2 + $0x330] sm:$0xff] %v1769
        %1779 = vst [vmem:[#allocation2 + $0x338] sm:$0xf] %v1770
        %1780 = vst [vmem:[#allocation2 + $0x33c] sm:$0xff] %v1772
        %1781 = vst [vmem:[#allocation2 + $0x344] sm:$0xf] %v1773
        %1782 = vrot.lane.b32.xlu0 %v884, 56
        %v1783 = vpop.permute.xlu0 %1782
        %1784 = vrot.lane.b32.xlu0 %v885, 56
        %v1785 = vpop.permute.xlu0 %1784
        %1786 = vrot.lane.b32.xlu0 %v886, 56
        %v1787 = vpop.permute.xlu0 %1786
        %1788 = vrot.lane.b32.xlu0 %v887, 56
        %v1789 = vpop.permute.xlu0 %1788
        %1790 = vrot.lane.b32.xlu0 %v888, 56
        %v1791 = vpop.permute.xlu0 %1790
        %1792 = vrot.lane.b32.xlu0 %v889, 56
        %v1793 = vpop.permute.xlu0 %1792
        %v1794 = vrot.slane %v1783, 4
        %v1795 = vrot.slane %v1785, 4
        %v1796 = vrot.slane %v1789, 4
        %v1797 = vrot.slane %v1791, 4
        %v1798 = vsel %vm906, %v1794, %v1795
        %vm1799 = vcmask 457728
        %v1800 = vsel %vm1799, %v1798, %v1785
        %v1801 = vsel %vm1799, %v1795, %v1787
        %v1802 = vsel %vm906, %v1796, %v1797
        %v1803 = vsel %vm1799, %v1802, %v1791
        %v1804 = vsel %vm1799, %v1797, %v1793
        %1809 = vst [vmem:[#allocation2 + $0x348] sm:$0xff] %v1800
        %1810 = vst [vmem:[#allocation2 + $0x350] sm:$0xf] %v1801
        %1811 = vst [vmem:[#allocation2 + $0x354] sm:$0xff] %v1803
        %1812 = vst [vmem:[#allocation2 + $0x35c] sm:$0xf] %v1804
        %v1813 = vld [vmem:[#allocation15] sm:$0xff]
        %v1814 = vld [vmem:[#allocation15 + $0x8] sm:$0xff]
        %v1815 = vld [vmem:[#allocation15 + $0x10] sm:$0xf]
        %v1816 = vld [vmem:[#allocation15 + $0x14] sm:$0xff]
        %v1817 = vld [vmem:[#allocation15 + $0x1c] sm:$0xff]
        %v1818 = vld [vmem:[#allocation15 + $0x24] sm:$0xf]
        %v1819 = vld [vmem:[#allocation2] sm:$0xff]
        %v1820 = vld [vmem:[#allocation2 + $0x8] sm:$0xf]
        %v1821 = vld [vmem:[#allocation2 + $0xc] sm:$0xff]
        %v1822 = vld [vmem:[#allocation2 + $0x14] sm:$0xf]
        %v1823 = vld [vmem:[#allocation2 + $0x18] sm:$0xff]
        %v1824 = vld [vmem:[#allocation2 + $0x20] sm:$0xf]
        %v1825 = vld [vmem:[#allocation2 + $0x24] sm:$0xff]
        %v1826 = vld [vmem:[#allocation2 + $0x2c] sm:$0xf]
        %v1827 = vld [vmem:[#allocation2 + $0x30] sm:$0xff]
        %v1828 = vld [vmem:[#allocation2 + $0x38] sm:$0xf]
        %v1829 = vld [vmem:[#allocation2 + $0x3c] sm:$0xff]
        %v1830 = vld [vmem:[#allocation2 + $0x44] sm:$0xf]
        %v1831 = vld [vmem:[#allocation2 + $0x48] sm:$0xff]
        %v1832 = vld [vmem:[#allocation2 + $0x50] sm:$0xf]
        %v1833 = vld [vmem:[#allocation2 + $0x54] sm:$0xff]
        %v1834 = vld [vmem:[#allocation2 + $0x5c] sm:$0xf]
        %v1835 = vld [vmem:[#allocation2 + $0x60] sm:$0xff]
        %v1836 = vld [vmem:[#allocation2 + $0x68] sm:$0xf]
        %v1837 = vld [vmem:[#allocation2 + $0x6c] sm:$0xff]
        %v1838 = vld [vmem:[#allocation2 + $0x74] sm:$0xf]
        %v1839 = vld [vmem:[#allocation2 + $0x78] sm:$0xff]
        %v1840 = vld [vmem:[#allocation2 + $0x80] sm:$0xf]
        %v1841 = vld [vmem:[#allocation2 + $0x84] sm:$0xff]
        %v1842 = vld [vmem:[#allocation2 + $0x8c] sm:$0xf]
        %v1843 = vld [vmem:[#allocation2 + $0x90] sm:$0xff]
        %v1844 = vld [vmem:[#allocation2 + $0x98] sm:$0xf]
        %v1845 = vld [vmem:[#allocation2 + $0x9c] sm:$0xff]
        %v1846 = vld [vmem:[#allocation2 + $0xa4] sm:$0xf]
        %v1847 = vld [vmem:[#allocation2 + $0xa8] sm:$0xff]
        %v1848 = vld [vmem:[#allocation2 + $0xb0] sm:$0xf]
        %v1849 = vld [vmem:[#allocation2 + $0xb4] sm:$0xff]
        %v1850 = vld [vmem:[#allocation2 + $0xbc] sm:$0xf]
        %v1851 = vld [vmem:[#allocation2 + $0xc0] sm:$0xff]
        %v1852 = vld [vmem:[#allocation2 + $0xc8] sm:$0xf]
        %v1853 = vld [vmem:[#allocation2 + $0xcc] sm:$0xff]
        %v1854 = vld [vmem:[#allocation2 + $0xd4] sm:$0xf]
        %v1855 = vld [vmem:[#allocation2 + $0xd8] sm:$0xff]
        %v1856 = vld [vmem:[#allocation2 + $0xe0] sm:$0xf]
        %v1857 = vld [vmem:[#allocation2 + $0xe4] sm:$0xff]
        %v1858 = vld [vmem:[#allocation2 + $0xec] sm:$0xf]
        %v1859 = vld [vmem:[#allocation2 + $0xf0] sm:$0xff]
        %v1860 = vld [vmem:[#allocation2 + $0xf8] sm:$0xf]
        %v1861 = vld [vmem:[#allocation2 + $0xfc] sm:$0xff]
        %v1862 = vld [vmem:[#allocation2 + $0x104] sm:$0xf]
        %v1863 = vld [vmem:[#allocation2 + $0x108] sm:$0xff]
        %v1864 = vld [vmem:[#allocation2 + $0x110] sm:$0xf]
        %v1865 = vld [vmem:[#allocation2 + $0x114] sm:$0xff]
        %v1866 = vld [vmem:[#allocation2 + $0x11c] sm:$0xf]
        %v1867 = vld [vmem:[#allocation2 + $0x120] sm:$0xff]
        %v1868 = vld [vmem:[#allocation2 + $0x128] sm:$0xf]
        %v1869 = vld [vmem:[#allocation2 + $0x12c] sm:$0xff]
        %v1870 = vld [vmem:[#allocation2 + $0x134] sm:$0xf]
        %v1871 = vld [vmem:[#allocation2 + $0x138] sm:$0xff]
        %v1872 = vld [vmem:[#allocation2 + $0x140] sm:$0xf]
        %v1873 = vld [vmem:[#allocation2 + $0x144] sm:$0xff]
        %v1874 = vld [vmem:[#allocation2 + $0x14c] sm:$0xf]
        %v1875 = vld [vmem:[#allocation2 + $0x150] sm:$0xff]
        %v1876 = vld [vmem:[#allocation2 + $0x158] sm:$0xf]
        %v1877 = vld [vmem:[#allocation2 + $0x15c] sm:$0xff]
        %v1878 = vld [vmem:[#allocation2 + $0x164] sm:$0xf]
        %v1879 = vld [vmem:[#allocation2 + $0x168] sm:$0xff]
        %v1880 = vld [vmem:[#allocation2 + $0x170] sm:$0xf]
        %v1881 = vld [vmem:[#allocation2 + $0x174] sm:$0xff]
        %v1882 = vld [vmem:[#allocation2 + $0x17c] sm:$0xf]
        %v1883 = vld [vmem:[#allocation2 + $0x180] sm:$0xff]
        %v1884 = vld [vmem:[#allocation2 + $0x188] sm:$0xf]
        %v1885 = vld [vmem:[#allocation2 + $0x18c] sm:$0xff]
        %v1886 = vld [vmem:[#allocation2 + $0x194] sm:$0xf]
        %v1887 = vld [vmem:[#allocation2 + $0x198] sm:$0xff]
        %v1888 = vld [vmem:[#allocation2 + $0x1a0] sm:$0xf]
        %v1889 = vld [vmem:[#allocation2 + $0x1a4] sm:$0xff]
        %v1890 = vld [vmem:[#allocation2 + $0x1ac] sm:$0xf]
        %v1891 = vld [vmem:[#allocation2 + $0x1b0] sm:$0xff]
        %v1892 = vld [vmem:[#allocation2 + $0x1b8] sm:$0xf]
        %v1893 = vld [vmem:[#allocation2 + $0x1bc] sm:$0xff]
        %v1894 = vld [vmem:[#allocation2 + $0x1c4] sm:$0xf]
        %v1895 = vld [vmem:[#allocation2 + $0x1c8] sm:$0xff]
        %v1896 = vld [vmem:[#allocation2 + $0x1d0] sm:$0xf]
        %v1897 = vld [vmem:[#allocation2 + $0x1d4] sm:$0xff]
        %v1898 = vld [vmem:[#allocation2 + $0x1dc] sm:$0xf]
        %v1899 = vld [vmem:[#allocation2 + $0x1e0] sm:$0xff]
        %v1900 = vld [vmem:[#allocation2 + $0x1e8] sm:$0xf]
        %v1901 = vld [vmem:[#allocation2 + $0x1ec] sm:$0xff]
        %v1902 = vld [vmem:[#allocation2 + $0x1f4] sm:$0xf]
        %v1903 = vld [vmem:[#allocation2 + $0x1f8] sm:$0xff]
        %v1904 = vld [vmem:[#allocation2 + $0x200] sm:$0xf]
        %v1905 = vld [vmem:[#allocation2 + $0x204] sm:$0xff]
        %v1906 = vld [vmem:[#allocation2 + $0x20c] sm:$0xf]
        %v1907 = vld [vmem:[#allocation2 + $0x210] sm:$0xff]
        %v1908 = vld [vmem:[#allocation2 + $0x218] sm:$0xf]
        %v1909 = vld [vmem:[#allocation2 + $0x21c] sm:$0xff]
        %v1910 = vld [vmem:[#allocation2 + $0x224] sm:$0xf]
        %v1911 = vld [vmem:[#allocation2 + $0x228] sm:$0xff]
        %v1912 = vld [vmem:[#allocation2 + $0x230] sm:$0xf]
        %v1913 = vld [vmem:[#allocation2 + $0x234] sm:$0xff]
        %v1914 = vld [vmem:[#allocation2 + $0x23c] sm:$0xf]
        %v1915 = vld [vmem:[#allocation2 + $0x240] sm:$0xff]
        %v1916 = vld [vmem:[#allocation2 + $0x248] sm:$0xf]
        %v1917 = vld [vmem:[#allocation2 + $0x24c] sm:$0xff]
        %v1918 = vld [vmem:[#allocation2 + $0x254] sm:$0xf]
        %v1919 = vld [vmem:[#allocation2 + $0x258] sm:$0xff]
        %v1920 = vld [vmem:[#allocation2 + $0x260] sm:$0xf]
        %v1921 = vld [vmem:[#allocation2 + $0x264] sm:$0xff]
        %v1922 = vld [vmem:[#allocation2 + $0x26c] sm:$0xf]
        %v1923 = vld [vmem:[#allocation2 + $0x270] sm:$0xff]
        %v1924 = vld [vmem:[#allocation2 + $0x278] sm:$0xf]
        %v1925 = vld [vmem:[#allocation2 + $0x27c] sm:$0xff]
        %v1926 = vld [vmem:[#allocation2 + $0x284] sm:$0xf]
        %v1927 = vld [vmem:[#allocation2 + $0x288] sm:$0xff]
        %v1928 = vld [vmem:[#allocation2 + $0x290] sm:$0xf]
        %v1929 = vld [vmem:[#allocation2 + $0x294] sm:$0xff]
        %v1930 = vld [vmem:[#allocation2 + $0x29c] sm:$0xf]
        %v1931 = vld [vmem:[#allocation2 + $0x2a0] sm:$0xff]
        %v1932 = vld [vmem:[#allocation2 + $0x2a8] sm:$0xf]
        %v1933 = vld [vmem:[#allocation2 + $0x2ac] sm:$0xff]
        %v1934 = vld [vmem:[#allocation2 + $0x2b4] sm:$0xf]
        %v1935 = vld [vmem:[#allocation2 + $0x2b8] sm:$0xff]
        %v1936 = vld [vmem:[#allocation2 + $0x2c0] sm:$0xf]
        %v1937 = vld [vmem:[#allocation2 + $0x2c4] sm:$0xff]
        %v1938 = vld [vmem:[#allocation2 + $0x2cc] sm:$0xf]
        %v1939 = vld [vmem:[#allocation2 + $0x2d0] sm:$0xff]
        %v1940 = vld [vmem:[#allocation2 + $0x2d8] sm:$0xf]
        %v1941 = vld [vmem:[#allocation2 + $0x2dc] sm:$0xff]
        %v1942 = vld [vmem:[#allocation2 + $0x2e4] sm:$0xf]
        %v1943 = vld [vmem:[#allocation2 + $0x2e8] sm:$0xff]
        %v1944 = vld [vmem:[#allocation2 + $0x2f0] sm:$0xf]
        %v1945 = vld [vmem:[#allocation2 + $0x2f4] sm:$0xff]
        %v1946 = vld [vmem:[#allocation2 + $0x2fc] sm:$0xf]
        %v1947 = vld [vmem:[#allocation2 + $0x300] sm:$0xff]
        %v1948 = vld [vmem:[#allocation2 + $0x308] sm:$0xf]
        %v1949 = vld [vmem:[#allocation2 + $0x30c] sm:$0xff]
        %v1950 = vld [vmem:[#allocation2 + $0x314] sm:$0xf]
        %v1951 = vld [vmem:[#allocation2 + $0x318] sm:$0xff]
        %v1952 = vld [vmem:[#allocation2 + $0x320] sm:$0xf]
        %v1953 = vld [vmem:[#allocation2 + $0x324] sm:$0xff]
        %v1954 = vld [vmem:[#allocation2 + $0x32c] sm:$0xf]
        %v1955 = vld [vmem:[#allocation2 + $0x330] sm:$0xff]
        %v1956 = vld [vmem:[#allocation2 + $0x338] sm:$0xf]
        %v1957 = vld [vmem:[#allocation2 + $0x33c] sm:$0xff]
        %v1958 = vld [vmem:[#allocation2 + $0x344] sm:$0xf]
        %v1959 = vld [vmem:[#allocation2 + $0x348] sm:$0xff]
        %v1960 = vld [vmem:[#allocation2 + $0x350] sm:$0xf]
        %v1961 = vld [vmem:[#allocation2 + $0x354] sm:$0xff]
        %v1962 = vld [vmem:[#allocation2 + $0x35c] sm:$0xf]
        %v1963 = vld [vmem:[%s10] sm:$0xff]
        %v1964 = vld [vmem:[%s10 + $0x8] sm:$0xff]
        %1966 = vset.pattern.permute.xlu0 0
        %1967 = vperm.xlu0 %1966, %v1963
        %v1968 = vpop.permute.xlu0 %1967
        %1971 = vset.pattern.permute.xlu0 0
        %1972 = vperm.xlu0 %1971, %v1964
        %v1973 = vpop.permute.xlu0 %1972
        %v1981 = vunpack.c.l.b16 %v1813
        %v1982 = vunpack.c.h.b16 %v1813
        %v1983 = vunpack.c.l.b16 %v1814
        %v1984 = vunpack.c.h.b16 %v1814
        %v1985 = vunpack.c.l.b16 %v1815
        %v1986 = vunpack.c.l.b16 %v1816
        %v1987 = vunpack.c.h.b16 %v1816
        %v1988 = vunpack.c.l.b16 %v1817
        %v1989 = vunpack.c.h.b16 %v1817
        %v1990 = vunpack.c.l.b16 %v1818
        %v1991 = vpack.c.b16 %v1986, %v1981
        %v1992 = vpack.c.b16 %v1987, %v1982
        %v1993 = vpack.c.b16 %v1988, %v1983
        %v1994 = vpack.c.b16 %v1989, %v1984
        %v1995 = vpack.c.b16 %v1990, %v1985
        %v2144 = vunpack.c.l.b16 %v1819
        %v2145 = vunpack.c.h.b16 %v1819
        %v2146 = vunpack.c.l.b16 %v1820
        %v2147 = vunpack.c.l.b16 %v1821
        %v2148 = vunpack.c.h.b16 %v1821
        %v2149 = vunpack.c.l.b16 %v1822
        %v2150 = vunpack.c.l.b16 %v1823
        %v2151 = vunpack.c.h.b16 %v1823
        %v2152 = vunpack.c.l.b16 %v1824
        %v2153 = vunpack.c.l.b16 %v1825
        %v2154 = vunpack.c.h.b16 %v1825
        %v2155 = vunpack.c.l.b16 %v1826
        %v2156 = vunpack.c.l.b16 %v1827
        %v2157 = vunpack.c.h.b16 %v1827
        %v2158 = vunpack.c.l.b16 %v1828
        %v2159 = vunpack.c.l.b16 %v1829
        %v2160 = vunpack.c.h.b16 %v1829
        %v2161 = vunpack.c.l.b16 %v1830
        %v2162 = vunpack.c.l.b16 %v1831
        %v2163 = vunpack.c.h.b16 %v1831
        %v2164 = vunpack.c.l.b16 %v1832
        %v2165 = vunpack.c.l.b16 %v1833
        %v2166 = vunpack.c.h.b16 %v1833
        %v2167 = vunpack.c.l.b16 %v1834
        %v2168 = vunpack.c.l.b16 %v1835
        %v2169 = vunpack.c.h.b16 %v1835
        %v2170 = vunpack.c.l.b16 %v1836
        %v2171 = vunpack.c.l.b16 %v1837
        %v2172 = vunpack.c.h.b16 %v1837
        %v2173 = vunpack.c.l.b16 %v1838
        %v2174 = vunpack.c.l.b16 %v1839
        %v2175 = vunpack.c.h.b16 %v1839
        %v2176 = vunpack.c.l.b16 %v1840
        %v2177 = vunpack.c.l.b16 %v1841
        %v2178 = vunpack.c.h.b16 %v1841
        %v2179 = vunpack.c.l.b16 %v1842
        %v2180 = vunpack.c.l.b16 %v1843
        %v2181 = vunpack.c.h.b16 %v1843
        %v2182 = vunpack.c.l.b16 %v1844
        %v2183 = vunpack.c.l.b16 %v1845
        %v2184 = vunpack.c.h.b16 %v1845
        %v2185 = vunpack.c.l.b16 %v1846
        %v2186 = vunpack.c.l.b16 %v1847
        %v2187 = vunpack.c.h.b16 %v1847
        %v2188 = vunpack.c.l.b16 %v1848
        %v2189 = vunpack.c.l.b16 %v1849
        %v2190 = vunpack.c.h.b16 %v1849
        %v2191 = vunpack.c.l.b16 %v1850
        %v2192 = vunpack.c.l.b16 %v1851
        %v2193 = vunpack.c.h.b16 %v1851
        %v2194 = vunpack.c.l.b16 %v1852
        %v2195 = vunpack.c.l.b16 %v1853
        %v2196 = vunpack.c.h.b16 %v1853
        %v2197 = vunpack.c.l.b16 %v1854
        %v2198 = vunpack.c.l.b16 %v1855
        %v2199 = vunpack.c.h.b16 %v1855
        %v2200 = vunpack.c.l.b16 %v1856
        %v2201 = vunpack.c.l.b16 %v1857
        %v2202 = vunpack.c.h.b16 %v1857
        %v2203 = vunpack.c.l.b16 %v1858
        %v2204 = vunpack.c.l.b16 %v1859
        %v2205 = vunpack.c.h.b16 %v1859
        %v2206 = vunpack.c.l.b16 %v1860
        %v2207 = vunpack.c.l.b16 %v1861
        %v2208 = vunpack.c.h.b16 %v1861
        %v2209 = vunpack.c.l.b16 %v1862
        %v2210 = vunpack.c.l.b16 %v1863
        %v2211 = vunpack.c.h.b16 %v1863
        %v2212 = vunpack.c.l.b16 %v1864
        %v2213 = vunpack.c.l.b16 %v1865
        %v2214 = vunpack.c.h.b16 %v1865
        %v2215 = vunpack.c.l.b16 %v1866
        %v2216 = vunpack.c.l.b16 %v1867
        %v2217 = vunpack.c.h.b16 %v1867
        %v2218 = vunpack.c.l.b16 %v1868
        %v2219 = vunpack.c.l.b16 %v1869
        %v2220 = vunpack.c.h.b16 %v1869
        %v2221 = vunpack.c.l.b16 %v1870
        %v2222 = vunpack.c.l.b16 %v1871
        %v2223 = vunpack.c.h.b16 %v1871
        %v2224 = vunpack.c.l.b16 %v1872
        %v2225 = vunpack.c.l.b16 %v1873
        %v2226 = vunpack.c.h.b16 %v1873
        %v2227 = vunpack.c.l.b16 %v1874
        %v2228 = vunpack.c.l.b16 %v1875
        %v2229 = vunpack.c.h.b16 %v1875
        %v2230 = vunpack.c.l.b16 %v1876
        %v2231 = vunpack.c.l.b16 %v1877
        %v2232 = vunpack.c.h.b16 %v1877
        %v2233 = vunpack.c.l.b16 %v1878
        %v2234 = vunpack.c.l.b16 %v1879
        %v2235 = vunpack.c.h.b16 %v1879
        %v2236 = vunpack.c.l.b16 %v1880
        %v2237 = vunpack.c.l.b16 %v1881
        %v2238 = vunpack.c.h.b16 %v1881
        %v2239 = vunpack.c.l.b16 %v1882
        %v2240 = vunpack.c.l.b16 %v1883
        %v2241 = vunpack.c.h.b16 %v1883
        %v2242 = vunpack.c.l.b16 %v1884
        %v2243 = vunpack.c.l.b16 %v1885
        %v2244 = vunpack.c.h.b16 %v1885
        %v2245 = vunpack.c.l.b16 %v1886
        %v2246 = vunpack.c.l.b16 %v1887
        %v2247 = vunpack.c.h.b16 %v1887
        %v2248 = vunpack.c.l.b16 %v1888
        %v2249 = vunpack.c.l.b16 %v1889
        %v2250 = vunpack.c.h.b16 %v1889
        %v2251 = vunpack.c.l.b16 %v1890
        %v2252 = vunpack.c.l.b16 %v1891
        %v2253 = vunpack.c.h.b16 %v1891
        %v2254 = vunpack.c.l.b16 %v1892
        %v2255 = vunpack.c.l.b16 %v1893
        %v2256 = vunpack.c.h.b16 %v1893
        %v2257 = vunpack.c.l.b16 %v1894
        %v2258 = vunpack.c.l.b16 %v1895
        %v2259 = vunpack.c.h.b16 %v1895
        %v2260 = vunpack.c.l.b16 %v1896
        %v2261 = vunpack.c.l.b16 %v1897
        %v2262 = vunpack.c.h.b16 %v1897
        %v2263 = vunpack.c.l.b16 %v1898
        %v2264 = vunpack.c.l.b16 %v1899
        %v2265 = vunpack.c.h.b16 %v1899
        %v2266 = vunpack.c.l.b16 %v1900
        %v2267 = vunpack.c.l.b16 %v1901
        %v2268 = vunpack.c.h.b16 %v1901
        %v2269 = vunpack.c.l.b16 %v1902
        %v2270 = vunpack.c.l.b16 %v1903
        %v2271 = vunpack.c.h.b16 %v1903
        %v2272 = vunpack.c.l.b16 %v1904
        %v2273 = vunpack.c.l.b16 %v1905
        %v2274 = vunpack.c.h.b16 %v1905
        %v2275 = vunpack.c.l.b16 %v1906
        %v2276 = vunpack.c.l.b16 %v1907
        %v2277 = vunpack.c.h.b16 %v1907
        %v2278 = vunpack.c.l.b16 %v1908
        %v2279 = vunpack.c.l.b16 %v1909
        %v2280 = vunpack.c.h.b16 %v1909
        %v2281 = vunpack.c.l.b16 %v1910
        %v2282 = vunpack.c.l.b16 %v1911
        %v2283 = vunpack.c.h.b16 %v1911
        %v2284 = vunpack.c.l.b16 %v1912
        %v2285 = vunpack.c.l.b16 %v1913
        %v2286 = vunpack.c.h.b16 %v1913
        %v2287 = vunpack.c.l.b16 %v1914
        %v2288 = vunpack.c.l.b16 %v1915
        %v2289 = vunpack.c.h.b16 %v1915
        %v2290 = vunpack.c.l.b16 %v1916
        %v2291 = vunpack.c.l.b16 %v1917
        %v2292 = vunpack.c.h.b16 %v1917
        %v2293 = vunpack.c.l.b16 %v1918
        %v2294 = vunpack.c.l.b16 %v1919
        %v2295 = vunpack.c.h.b16 %v1919
        %v2296 = vunpack.c.l.b16 %v1920
        %v2297 = vunpack.c.l.b16 %v1921
        %v2298 = vunpack.c.h.b16 %v1921
        %v2299 = vunpack.c.l.b16 %v1922
        %v2300 = vunpack.c.l.b16 %v1923
        %v2301 = vunpack.c.h.b16 %v1923
        %v2302 = vunpack.c.l.b16 %v1924
        %v2303 = vunpack.c.l.b16 %v1925
        %v2304 = vunpack.c.h.b16 %v1925
        %v2305 = vunpack.c.l.b16 %v1926
        %v2306 = vunpack.c.l.b16 %v1927
        %v2307 = vunpack.c.h.b16 %v1927
        %v2308 = vunpack.c.l.b16 %v1928
        %v2309 = vunpack.c.l.b16 %v1929
        %v2310 = vunpack.c.h.b16 %v1929
        %v2311 = vunpack.c.l.b16 %v1930
        %v2312 = vunpack.c.l.b16 %v1931
        %v2313 = vunpack.c.h.b16 %v1931
        %v2314 = vunpack.c.l.b16 %v1932
        %v2315 = vunpack.c.l.b16 %v1933
        %v2316 = vunpack.c.h.b16 %v1933
        %v2317 = vunpack.c.l.b16 %v1934
        %v2318 = vunpack.c.l.b16 %v1935
        %v2319 = vunpack.c.h.b16 %v1935
        %v2320 = vunpack.c.l.b16 %v1936
        %v2321 = vunpack.c.l.b16 %v1937
        %v2322 = vunpack.c.h.b16 %v1937
        %v2323 = vunpack.c.l.b16 %v1938
        %v2324 = vunpack.c.l.b16 %v1939
        %v2325 = vunpack.c.h.b16 %v1939
        %v2326 = vunpack.c.l.b16 %v1940
        %v2327 = vunpack.c.l.b16 %v1941
        %v2328 = vunpack.c.h.b16 %v1941
        %v2329 = vunpack.c.l.b16 %v1942
        %v2330 = vunpack.c.l.b16 %v1943
        %v2331 = vunpack.c.h.b16 %v1943
        %v2332 = vunpack.c.l.b16 %v1944
        %v2333 = vunpack.c.l.b16 %v1945
        %v2334 = vunpack.c.h.b16 %v1945
        %v2335 = vunpack.c.l.b16 %v1946
        %v2336 = vunpack.c.l.b16 %v1947
        %v2337 = vunpack.c.h.b16 %v1947
        %v2338 = vunpack.c.l.b16 %v1948
        %v2339 = vunpack.c.l.b16 %v1949
        %v2340 = vunpack.c.h.b16 %v1949
        %v2341 = vunpack.c.l.b16 %v1950
        %v2342 = vunpack.c.l.b16 %v1951
        %v2343 = vunpack.c.h.b16 %v1951
        %v2344 = vunpack.c.l.b16 %v1952
        %v2345 = vunpack.c.l.b16 %v1953
        %v2346 = vunpack.c.h.b16 %v1953
        %v2347 = vunpack.c.l.b16 %v1954
        %v2348 = vunpack.c.l.b16 %v1955
        %v2349 = vunpack.c.h.b16 %v1955
        %v2350 = vunpack.c.l.b16 %v1956
        %v2351 = vunpack.c.l.b16 %v1957
        %v2352 = vunpack.c.h.b16 %v1957
        %v2353 = vunpack.c.l.b16 %v1958
        %v2354 = vunpack.c.l.b16 %v1959
        %v2355 = vunpack.c.h.b16 %v1959
        %v2356 = vunpack.c.l.b16 %v1960
        %v2357 = vunpack.c.l.b16 %v1961
        %v2358 = vunpack.c.h.b16 %v1961
        %v2359 = vunpack.c.l.b16 %v1962
        %v2360 = vpack.c.b16 %v2147, %v2144
        %v2361 = vpack.c.b16 %v2148, %v2145
        %v2362 = vpack.c.b16 %v2149, %v2146
        %v2363 = vpack.c.b16 %v2153, %v2150
        %v2364 = vpack.c.b16 %v2154, %v2151
        %v2365 = vpack.c.b16 %v2155, %v2152
        %v2366 = vpack.c.b16 %v2159, %v2156
        %v2367 = vpack.c.b16 %v2160, %v2157
        %v2368 = vpack.c.b16 %v2161, %v2158
        %v2369 = vpack.c.b16 %v2165, %v2162
        %v2370 = vpack.c.b16 %v2166, %v2163
        %v2371 = vpack.c.b16 %v2167, %v2164
        %v2372 = vpack.c.b16 %v2171, %v2168
        %v2373 = vpack.c.b16 %v2172, %v2169
        %v2374 = vpack.c.b16 %v2173, %v2170
        %v2375 = vpack.c.b16 %v2177, %v2174
        %v2376 = vpack.c.b16 %v2178, %v2175
        %v2377 = vpack.c.b16 %v2179, %v2176
        %v2378 = vpack.c.b16 %v2183, %v2180
        %v2379 = vpack.c.b16 %v2184, %v2181
        %v2380 = vpack.c.b16 %v2185, %v2182
        %v2381 = vpack.c.b16 %v2189, %v2186
        %v2382 = vpack.c.b16 %v2190, %v2187
        %v2383 = vpack.c.b16 %v2191, %v2188
        %v2384 = vpack.c.b16 %v2195, %v2192
        %v2385 = vpack.c.b16 %v2196, %v2193
        %v2386 = vpack.c.b16 %v2197, %v2194
        %v2387 = vpack.c.b16 %v2201, %v2198
        %v2388 = vpack.c.b16 %v2202, %v2199
        %v2389 = vpack.c.b16 %v2203, %v2200
        %v2390 = vpack.c.b16 %v2207, %v2204
        %v2391 = vpack.c.b16 %v2208, %v2205
        %v2392 = vpack.c.b16 %v2209, %v2206
        %v2393 = vpack.c.b16 %v2213, %v2210
        %v2394 = vpack.c.b16 %v2214, %v2211
        %v2395 = vpack.c.b16 %v2215, %v2212
        %v2396 = vpack.c.b16 %v2219, %v2216
        %v2397 = vpack.c.b16 %v2220, %v2217
        %v2398 = vpack.c.b16 %v2221, %v2218
        %v2399 = vpack.c.b16 %v2225, %v2222
        %v2400 = vpack.c.b16 %v2226, %v2223
        %v2401 = vpack.c.b16 %v2227, %v2224
        %v2402 = vpack.c.b16 %v2231, %v2228
        %v2403 = vpack.c.b16 %v2232, %v2229
        %v2404 = vpack.c.b16 %v2233, %v2230
        %v2405 = vpack.c.b16 %v2237, %v2234
        %v2406 = vpack.c.b16 %v2238, %v2235
        %v2407 = vpack.c.b16 %v2239, %v2236
        %v2408 = vpack.c.b16 %v2243, %v2240
        %v2409 = vpack.c.b16 %v2244, %v2241
        %v2410 = vpack.c.b16 %v2245, %v2242
        %v2411 = vpack.c.b16 %v2249, %v2246
        %v2412 = vpack.c.b16 %v2250, %v2247
        %v2413 = vpack.c.b16 %v2251, %v2248
        %v2414 = vpack.c.b16 %v2255, %v2252
        %v2415 = vpack.c.b16 %v2256, %v2253
        %v2416 = vpack.c.b16 %v2257, %v2254
        %v2417 = vpack.c.b16 %v2261, %v2258
        %v2418 = vpack.c.b16 %v2262, %v2259
        %v2419 = vpack.c.b16 %v2263, %v2260
        %v2420 = vpack.c.b16 %v2267, %v2264
        %v2421 = vpack.c.b16 %v2268, %v2265
        %v2422 = vpack.c.b16 %v2269, %v2266
        %v2423 = vpack.c.b16 %v2273, %v2270
        %v2424 = vpack.c.b16 %v2274, %v2271
        %v2425 = vpack.c.b16 %v2275, %v2272
        %v2426 = vpack.c.b16 %v2279, %v2276
        %v2427 = vpack.c.b16 %v2280, %v2277
        %v2428 = vpack.c.b16 %v2281, %v2278
        %v2429 = vpack.c.b16 %v2285, %v2282
        %v2430 = vpack.c.b16 %v2286, %v2283
        %v2431 = vpack.c.b16 %v2287, %v2284
        %v2432 = vpack.c.b16 %v2291, %v2288
        %v2433 = vpack.c.b16 %v2292, %v2289
        %v2434 = vpack.c.b16 %v2293, %v2290
        %v2435 = vpack.c.b16 %v2297, %v2294
        %v2436 = vpack.c.b16 %v2298, %v2295
        %v2437 = vpack.c.b16 %v2299, %v2296
        %v2438 = vpack.c.b16 %v2303, %v2300
        %v2439 = vpack.c.b16 %v2304, %v2301
        %v2440 = vpack.c.b16 %v2305, %v2302
        %v2441 = vpack.c.b16 %v2309, %v2306
        %v2442 = vpack.c.b16 %v2310, %v2307
        %v2443 = vpack.c.b16 %v2311, %v2308
        %v2444 = vpack.c.b16 %v2315, %v2312
        %v2445 = vpack.c.b16 %v2316, %v2313
        %v2446 = vpack.c.b16 %v2317, %v2314
        %v2447 = vpack.c.b16 %v2321, %v2318
        %v2448 = vpack.c.b16 %v2322, %v2319
        %v2449 = vpack.c.b16 %v2323, %v2320
        %v2450 = vpack.c.b16 %v2327, %v2324
        %v2451 = vpack.c.b16 %v2328, %v2325
        %v2452 = vpack.c.b16 %v2329, %v2326
        %v2453 = vpack.c.b16 %v2333, %v2330
        %v2454 = vpack.c.b16 %v2334, %v2331
        %v2455 = vpack.c.b16 %v2335, %v2332
        %v2456 = vpack.c.b16 %v2339, %v2336
        %v2457 = vpack.c.b16 %v2340, %v2337
        %v2458 = vpack.c.b16 %v2341, %v2338
        %v2459 = vpack.c.b16 %v2345, %v2342
        %v2460 = vpack.c.b16 %v2346, %v2343
        %v2461 = vpack.c.b16 %v2347, %v2344
        %v2462 = vpack.c.b16 %v2351, %v2348
        %v2463 = vpack.c.b16 %v2352, %v2349
        %v2464 = vpack.c.b16 %v2353, %v2350
        %v2465 = vpack.c.b16 %v2357, %v2354
        %v2466 = vpack.c.b16 %v2358, %v2355
        %v2467 = vpack.c.b16 %v2359, %v2356
        %vm2576 = vcmask 523264
        %v2578 = vsel %vm2576, %v1995, 0
        %2580 = vmatpush.bf16.msra.mxu0 %v2381
        %2581 = vmatpush.bf16.msra.mxu0 %v2378
        %2582 = vmatpush.bf16.msra.mxu0 %v2375
        %2583 = vmatpush.bf16.msra.mxu0 %v2372
        %2584 = vmatpush.bf16.msra.mxu0 %v2369
        %2585 = vmatpush.bf16.msra.mxu0 %v2366
        %2586 = vmatpush.bf16.msra.mxu0 %v2363
        %2587 = vmatpush.bf16.msra.mxu0 %v2360
        %2588 = vmatmul.bf16.gmra.mxu0 %v1991
        %v2589 = vpop.f32.mrf.mxu0
        %v2590 = vadd.f32 %v1968, %v2589
        %v2591 = vpop.f32.mrf.mxu0
        %v2592 = vadd.f32 %v1973, %v2591
        %2593 = vdwg.mxu0
        %2594 = vmatpush.bf16.msra.mxu0 %v2405
        %2595 = vmatpush.bf16.msra.mxu0 %v2402
        %2596 = vmatpush.bf16.msra.mxu0 %v2399
        %2597 = vmatpush.bf16.msra.mxu0 %v2396
        %2598 = vmatpush.bf16.msra.mxu0 %v2393
        %2599 = vmatpush.bf16.msra.mxu0 %v2390
        %2600 = vmatpush.bf16.msra.mxu0 %v2387
        %2601 = vmatpush.bf16.msra.mxu0 %v2384
        %2602 = vmatmul.bf16.gmra.mxu0 %v1992
        %v2603 = vpop.f32.mrf.mxu0
        %v2604 = vadd.f32 %v2590, %v2603
        %v2605 = vpop.f32.mrf.mxu0
        %v2606 = vadd.f32 %v2592, %v2605
        %2607 = vdwg.mxu0
        %2608 = vmatpush.bf16.msra.mxu0 %v2429
        %2609 = vmatpush.bf16.msra.mxu0 %v2426
        %2610 = vmatpush.bf16.msra.mxu0 %v2423
        %2611 = vmatpush.bf16.msra.mxu0 %v2420
        %2612 = vmatpush.bf16.msra.mxu0 %v2417
        %2613 = vmatpush.bf16.msra.mxu0 %v2414
        %2614 = vmatpush.bf16.msra.mxu0 %v2411
        %2615 = vmatpush.bf16.msra.mxu0 %v2408
        %2616 = vmatmul.bf16.gmra.mxu0 %v1993
        %v2617 = vpop.f32.mrf.mxu0
        %v2618 = vadd.f32 %v2604, %v2617
        %v2619 = vpop.f32.mrf.mxu0
        %v2620 = vadd.f32 %v2606, %v2619
        %2621 = vdwg.mxu0
        %2622 = vmatpush.bf16.msra.mxu0 %v2453
        %2623 = vmatpush.bf16.msra.mxu0 %v2450
        %2624 = vmatpush.bf16.msra.mxu0 %v2447
        %2625 = vmatpush.bf16.msra.mxu0 %v2444
        %2626 = vmatpush.bf16.msra.mxu0 %v2441
        %2627 = vmatpush.bf16.msra.mxu0 %v2438
        %2628 = vmatpush.bf16.msra.mxu0 %v2435
        %2629 = vmatpush.bf16.msra.mxu0 %v2432
        %2630 = vmatmul.bf16.gmra.mxu0 %v1994
        %v2631 = vpop.f32.mrf.mxu0
        %v2632 = vadd.f32 %v2618, %v2631
        %v2633 = vpop.f32.mrf.mxu0
        %v2634 = vadd.f32 %v2620, %v2633
        %2635 = vdwg.mxu0
        %2636 = vmatpush.bf16.msra.mxu0 0
        %2637 = vmatpush.bf16.msra.mxu0 0
        %2638 = vmatpush.bf16.msra.mxu0 0
        %2639 = vmatpush.bf16.msra.mxu0 0
        %2640 = vmatpush.bf16.msra.mxu0 %v2465
        %2641 = vmatpush.bf16.msra.mxu0 %v2462
        %2642 = vmatpush.bf16.msra.mxu0 %v2459
        %2643 = vmatpush.bf16.msra.mxu0 %v2456
        %2644 = vmatmul.bf16.gmra.mxu0 %v2578
        %v2645 = vpop.f32.mrf.mxu0
        %v2646 = vadd.f32 %v2632, %v2645
        %v2647 = vpop.f32.mrf.mxu0
        %v2648 = vadd.f32 %v2634, %v2647
        %2649 = vdwg.mxu0
        %2650 = vmatpush.bf16.msra.mxu0 %v2382
        %2651 = vmatpush.bf16.msra.mxu0 %v2379
        %2652 = vmatpush.bf16.msra.mxu0 %v2376
        %2653 = vmatpush.bf16.msra.mxu0 %v2373
        %2654 = vmatpush.bf16.msra.mxu0 %v2370
        %2655 = vmatpush.bf16.msra.mxu0 %v2367
        %2656 = vmatpush.bf16.msra.mxu0 %v2364
        %2657 = vmatpush.bf16.msra.mxu0 %v2361
        %2658 = vmatmul.bf16.gmra.mxu0 %v1991
        %v2659 = vpop.f32.mrf.mxu0
        %v2660 = vadd.f32 %v1968, %v2659
        %v2661 = vpop.f32.mrf.mxu0
        %v2662 = vadd.f32 %v1973, %v2661
        %2663 = vdwg.mxu0
        %2664 = vmatpush.bf16.msra.mxu0 %v2406
        %2665 = vmatpush.bf16.msra.mxu0 %v2403
        %2666 = vmatpush.bf16.msra.mxu0 %v2400
        %2667 = vmatpush.bf16.msra.mxu0 %v2397
        %2668 = vmatpush.bf16.msra.mxu0 %v2394
        %2669 = vmatpush.bf16.msra.mxu0 %v2391
        %2670 = vmatpush.bf16.msra.mxu0 %v2388
        %2671 = vmatpush.bf16.msra.mxu0 %v2385
        %2672 = vmatmul.bf16.gmra.mxu0 %v1992
        %v2673 = vpop.f32.mrf.mxu0
        %v2674 = vadd.f32 %v2660, %v2673
        %v2675 = vpop.f32.mrf.mxu0
        %v2676 = vadd.f32 %v2662, %v2675
        %2677 = vdwg.mxu0
        %2678 = vmatpush.bf16.msra.mxu0 %v2430
        %2679 = vmatpush.bf16.msra.mxu0 %v2427
        %2680 = vmatpush.bf16.msra.mxu0 %v2424
        %2681 = vmatpush.bf16.msra.mxu0 %v2421
        %2682 = vmatpush.bf16.msra.mxu0 %v2418
        %2683 = vmatpush.bf16.msra.mxu0 %v2415
        %2684 = vmatpush.bf16.msra.mxu0 %v2412
        %2685 = vmatpush.bf16.msra.mxu0 %v2409
        %2686 = vmatmul.bf16.gmra.mxu0 %v1993
        %v2687 = vpop.f32.mrf.mxu0
        %v2688 = vadd.f32 %v2674, %v2687
        %v2689 = vpop.f32.mrf.mxu0
        %v2690 = vadd.f32 %v2676, %v2689
        %2691 = vdwg.mxu0
        %2692 = vmatpush.bf16.msra.mxu0 %v2454
        %2693 = vmatpush.bf16.msra.mxu0 %v2451
        %2694 = vmatpush.bf16.msra.mxu0 %v2448
        %2695 = vmatpush.bf16.msra.mxu0 %v2445
        %2696 = vmatpush.bf16.msra.mxu0 %v2442
        %2697 = vmatpush.bf16.msra.mxu0 %v2439
        %2698 = vmatpush.bf16.msra.mxu0 %v2436
        %2699 = vmatpush.bf16.msra.mxu0 %v2433
        %2700 = vmatmul.bf16.gmra.mxu0 %v1994
        %v2701 = vpop.f32.mrf.mxu0
        %v2702 = vadd.f32 %v2688, %v2701
        %v2703 = vpop.f32.mrf.mxu0
        %v2704 = vadd.f32 %v2690, %v2703
        %2705 = vdwg.mxu0
        %2706 = vmatpush.bf16.msra.mxu0 0
        %2707 = vmatpush.bf16.msra.mxu0 0
        %2708 = vmatpush.bf16.msra.mxu0 0
        %2709 = vmatpush.bf16.msra.mxu0 0
        %2710 = vmatpush.bf16.msra.mxu0 %v2466
        %2711 = vmatpush.bf16.msra.mxu0 %v2463
        %2712 = vmatpush.bf16.msra.mxu0 %v2460
        %2713 = vmatpush.bf16.msra.mxu0 %v2457
        %2714 = vmatmul.bf16.gmra.mxu0 %v2578
        %v2715 = vpop.f32.mrf.mxu0
        %v2716 = vadd.f32 %v2702, %v2715
        %v2717 = vpop.f32.mrf.mxu0
        %v2718 = vadd.f32 %v2704, %v2717
        %2719 = vdwg.mxu0
        %2720 = vmatpush.bf16.msra.mxu0 %v2383
        %2721 = vmatpush.bf16.msra.mxu0 %v2380
        %2722 = vmatpush.bf16.msra.mxu0 %v2377
        %2723 = vmatpush.bf16.msra.mxu0 %v2374
        %2724 = vmatpush.bf16.msra.mxu0 %v2371
        %2725 = vmatpush.bf16.msra.mxu0 %v2368
        %2726 = vmatpush.bf16.msra.mxu0 %v2365
        %2727 = vmatpush.bf16.msra.mxu0 %v2362
        %2728 = vmatmul.bf16.gmra.mxu0 %v1991
        %v2729 = vpop.f32.mrf.mxu0
        %v2730 = vadd.f32 %v1968, %v2729
        %v2731 = vpop.f32.mrf.mxu0
        %v2732 = vadd.f32 %v1973, %v2731
        %2733 = vdwg.mxu0
        %2734 = vmatpush.bf16.msra.mxu0 %v2407
        %2735 = vmatpush.bf16.msra.mxu0 %v2404
        %2736 = vmatpush.bf16.msra.mxu0 %v2401
        %2737 = vmatpush.bf16.msra.mxu0 %v2398
        %2738 = vmatpush.bf16.msra.mxu0 %v2395
        %2739 = vmatpush.bf16.msra.mxu0 %v2392
        %2740 = vmatpush.bf16.msra.mxu0 %v2389
        %2741 = vmatpush.bf16.msra.mxu0 %v2386
        %2742 = vmatmul.bf16.gmra.mxu0 %v1992
        %v2743 = vpop.f32.mrf.mxu0
        %v2744 = vadd.f32 %v2730, %v2743
        %v2745 = vpop.f32.mrf.mxu0
        %v2746 = vadd.f32 %v2732, %v2745
        %2747 = vdwg.mxu0
        %2748 = vmatpush.bf16.msra.mxu0 %v2431
        %2749 = vmatpush.bf16.msra.mxu0 %v2428
        %2750 = vmatpush.bf16.msra.mxu0 %v2425
        %2751 = vmatpush.bf16.msra.mxu0 %v2422
        %2752 = vmatpush.bf16.msra.mxu0 %v2419
        %2753 = vmatpush.bf16.msra.mxu0 %v2416
        %2754 = vmatpush.bf16.msra.mxu0 %v2413
        %2755 = vmatpush.bf16.msra.mxu0 %v2410
        %2756 = vmatmul.bf16.gmra.mxu0 %v1993
        %v2757 = vpop.f32.mrf.mxu0
        %v2758 = vadd.f32 %v2744, %v2757
        %v2759 = vpop.f32.mrf.mxu0
        %v2760 = vadd.f32 %v2746, %v2759
        %2761 = vdwg.mxu0
        %2762 = vmatpush.bf16.msra.mxu0 %v2455
        %2763 = vmatpush.bf16.msra.mxu0 %v2452
        %2764 = vmatpush.bf16.msra.mxu0 %v2449
        %2765 = vmatpush.bf16.msra.mxu0 %v2446
        %2766 = vmatpush.bf16.msra.mxu0 %v2443
        %2767 = vmatpush.bf16.msra.mxu0 %v2440
        %2768 = vmatpush.bf16.msra.mxu0 %v2437
        %2769 = vmatpush.bf16.msra.mxu0 %v2434
        %2770 = vmatmul.bf16.gmra.mxu0 %v1994
        %v2771 = vpop.f32.mrf.mxu0
        %v2772 = vadd.f32 %v2758, %v2771
        %v2773 = vpop.f32.mrf.mxu0
        %v2774 = vadd.f32 %v2760, %v2773
        %2775 = vdwg.mxu0
        %2776 = vmatpush.bf16.msra.mxu0 0
        %2777 = vmatpush.bf16.msra.mxu0 0
        %2778 = vmatpush.bf16.msra.mxu0 0
        %2779 = vmatpush.bf16.msra.mxu0 0
        %2780 = vmatpush.bf16.msra.mxu0 %v2467
        %2781 = vmatpush.bf16.msra.mxu0 %v2464
        %2782 = vmatpush.bf16.msra.mxu0 %v2461
        %2783 = vmatpush.bf16.msra.mxu0 %v2458
        %2784 = vmatmul.bf16.gmra.mxu0 %v2578
        %v2785 = vpop.f32.mrf.mxu0
        %v2786 = vadd.f32 %v2772, %v2785
        %v2787 = vpop.f32.mrf.mxu0
        %v2788 = vadd.f32 %v2774, %v2787
        %2789 = vdwg.mxu0
        %v2790 = vmax.f32 %v2646, 0.0
        %v2791 = vmax.f32 %v2716, 0.0
        %v2792 = vmax.f32 %v2786, 0.0
        %v2793 = vmax.f32 %v2648, 0.0
        %v2794 = vmax.f32 %v2718, 0.0
        %v2795 = vmax.f32 %v2788, 0.0
        %2796 = vst [vmem:[%s849] sm:$0xff] %v2790
        %2797 = vst [vmem:[%s849 + $0x8] sm:$0xff] %v2791
        %2798 = vst [vmem:[%s849 + $0x10] sm:$0xff] %v2792
        %2799 = vst [vmem:[%s849 + $0x18] sm:$0xff] %v2793
        %2800 = vst [vmem:[%s849 + $0x20] sm:$0xff] %v2794
        %2801 = vst [vmem:[%s849 + $0x28] sm:$0xff] %v2795
        %v2802 = vld [vmem:[%s737] sm:$0xff]
        %v2803 = vld [vmem:[%s737 + $0x8] sm:$0xff]
        %v2804 = vld [vmem:[%s737 + $0x10] sm:$0xff]
        %v2805 = vld [vmem:[%s737 + $0x18] sm:$0xff]
        %v2806 = vld [vmem:[%s737 + $0x20] sm:$0xff]
        %v2807 = vld [vmem:[%s737 + $0x28] sm:$0xff]
        %v2808 = vld [vmem:[%s737 + $0x30] sm:$0xff]
        %v2809 = vld [vmem:[%s737 + $0x38] sm:$0xff]
        %2816 = vrot.lane.b32.xlu0 %v2802, 70
        %v2817 = vpop.permute.xlu0 %2816
        %2818 = vrot.lane.b32.xlu0 %v2803, 70
        %v2819 = vpop.permute.xlu0 %2818
        %2820 = vrot.lane.b32.xlu0 %v2804, 70
        %v2821 = vpop.permute.xlu0 %2820
        %2822 = vrot.lane.b32.xlu0 %v2806, 70
        %v2823 = vpop.permute.xlu0 %2822
        %2824 = vrot.lane.b32.xlu0 %v2807, 70
        %v2825 = vpop.permute.xlu0 %2824
        %2826 = vrot.lane.b32.xlu0 %v2808, 70
        %v2827 = vpop.permute.xlu0 %2826
        %v2828 = vrot.slane %v2817, 4
        %v2829 = vrot.slane %v2819, 4
        %v2830 = vrot.slane %v2821, 4
        %v2831 = vrot.slane %v2823, 4
        %v2832 = vrot.slane %v2825, 4
        %v2833 = vrot.slane %v2827, 4
        %v2834 = vsel %vm906, %v2828, %v2829
        %vm2835 = vcmask 572416
        %v2836 = vsel %vm2835, %v2834, %v2819
        %v2837 = vsel %vm906, %v2829, %v2830
        %v2838 = vsel %vm2835, %v2837, %v2821
        %v2839 = vsel %vm906, %v2831, %v2832
        %v2840 = vsel %vm2835, %v2839, %v2825
        %v2841 = vsel %vm906, %v2832, %v2833
        %v2842 = vsel %vm2835, %v2841, %v2827
        %2847 = vst [vmem:[#allocation3] sm:$0xff] %v2836
        %vm2848 = vcmask 1043456
        %vm2849 = vcmask 785412
        %vm2850 = vmor %vm2849, %vm2848
        %2851 = vst.msk [vmem:[#allocation3 + $0x8] sm:$0xff] %vm2850, %v2838
        %2852 = vst [vmem:[#allocation3 + $0x10] sm:$0xff] %v2840
        %2853 = vst.msk [vmem:[#allocation3 + $0x18] sm:$0xff] %vm2850, %v2842
        %2854 = vrot.lane.b32.xlu0 %v2802, 69
        %v2855 = vpop.permute.xlu0 %2854
        %2856 = vrot.lane.b32.xlu0 %v2803, 69
        %v2857 = vpop.permute.xlu0 %2856
        %2858 = vrot.lane.b32.xlu0 %v2804, 69
        %v2859 = vpop.permute.xlu0 %2858
        %2860 = vrot.lane.b32.xlu0 %v2806, 69
        %v2861 = vpop.permute.xlu0 %2860
        %2862 = vrot.lane.b32.xlu0 %v2807, 69
        %v2863 = vpop.permute.xlu0 %2862
        %2864 = vrot.lane.b32.xlu0 %v2808, 69
        %v2865 = vpop.permute.xlu0 %2864
        %v2866 = vrot.slane %v2855, 4
        %v2867 = vrot.slane %v2857, 4
        %v2868 = vrot.slane %v2859, 4
        %v2869 = vrot.slane %v2861, 4
        %v2870 = vrot.slane %v2863, 4
        %v2871 = vrot.slane %v2865, 4
        %v2872 = vsel %vm906, %v2866, %v2867
        %vm2873 = vcmask 564224
        %v2874 = vsel %vm2873, %v2872, %v2857
        %v2875 = vsel %vm906, %v2867, %v2868
        %v2876 = vsel %vm2873, %v2875, %v2859
        %v2877 = vsel %vm906, %v2869, %v2870
        %v2878 = vsel %vm2873, %v2877, %v2863
        %v2879 = vsel %vm906, %v2870, %v2871
        %v2880 = vsel %vm2873, %v2879, %v2865
        %2885 = vst [vmem:[#allocation3 + $0x20] sm:$0xff] %v2874
        %2886 = vst.msk [vmem:[#allocation3 + $0x28] sm:$0xff] %vm2850, %v2876
        %2887 = vst [vmem:[#allocation3 + $0x30] sm:$0xff] %v2878
        %2888 = vst.msk [vmem:[#allocation3 + $0x38] sm:$0xff] %vm2850, %v2880
        %2889 = vrot.lane.b32.xlu0 %v2802, 68
        %v2890 = vpop.permute.xlu0 %2889
        %2891 = vrot.lane.b32.xlu0 %v2803, 68
        %v2892 = vpop.permute.xlu0 %2891
        %2893 = vrot.lane.b32.xlu0 %v2804, 68
        %v2894 = vpop.permute.xlu0 %2893
        %2895 = vrot.lane.b32.xlu0 %v2806, 68
        %v2896 = vpop.permute.xlu0 %2895
        %2897 = vrot.lane.b32.xlu0 %v2807, 68
        %v2898 = vpop.permute.xlu0 %2897
        %2899 = vrot.lane.b32.xlu0 %v2808, 68
        %v2900 = vpop.permute.xlu0 %2899
        %v2901 = vrot.slane %v2890, 4
        %v2902 = vrot.slane %v2892, 4
        %v2903 = vrot.slane %v2894, 4
        %v2904 = vrot.slane %v2896, 4
        %v2905 = vrot.slane %v2898, 4
        %v2906 = vrot.slane %v2900, 4
        %v2907 = vsel %vm906, %v2901, %v2902
        %vm2908 = vcmask 556032
        %v2909 = vsel %vm2908, %v2907, %v2892
        %v2910 = vsel %vm906, %v2902, %v2903
        %v2911 = vsel %vm2908, %v2910, %v2894
        %v2912 = vsel %vm906, %v2904, %v2905
        %v2913 = vsel %vm2908, %v2912, %v2898
        %v2914 = vsel %vm906, %v2905, %v2906
        %v2915 = vsel %vm2908, %v2914, %v2900
        %2920 = vst [vmem:[#allocation3 + $0x40] sm:$0xff] %v2909
        %2921 = vst.msk [vmem:[#allocation3 + $0x48] sm:$0xff] %vm2850, %v2911
        %2922 = vst [vmem:[#allocation3 + $0x50] sm:$0xff] %v2913
        %2923 = vst.msk [vmem:[#allocation3 + $0x58] sm:$0xff] %vm2850, %v2915
        %2924 = vrot.lane.b32.xlu0 %v2802, 40
        %v2925 = vpop.permute.xlu0 %2924
        %2926 = vrot.lane.b32.xlu0 %v2803, 40
        %v2927 = vpop.permute.xlu0 %2926
        %2928 = vrot.lane.b32.xlu0 %v2804, 40
        %v2929 = vpop.permute.xlu0 %2928
        %2930 = vrot.lane.b32.xlu0 %v2806, 40
        %v2931 = vpop.permute.xlu0 %2930
        %2932 = vrot.lane.b32.xlu0 %v2807, 40
        %v2933 = vpop.permute.xlu0 %2932
        %2934 = vrot.lane.b32.xlu0 %v2808, 40
        %v2935 = vpop.permute.xlu0 %2934
        %v2936 = vrot.slane %v2925, 4
        %v2937 = vrot.slane %v2927, 4
        %v2938 = vrot.slane %v2929, 4
        %v2939 = vrot.slane %v2931, 4
        %v2940 = vrot.slane %v2933, 4
        %v2941 = vrot.slane %v2935, 4
        %v2942 = vsel %vm906, %v2936, %v2937
        %vm2943 = vcmask 326656
        %v2944 = vsel %vm2943, %v2942, %v2927
        %v2945 = vsel %vm906, %v2937, %v2938
        %v2946 = vsel %vm2943, %v2945, %v2929
        %v2947 = vsel %vm906, %v2939, %v2940
        %v2948 = vsel %vm2943, %v2947, %v2933
        %v2949 = vsel %vm906, %v2940, %v2941
        %v2950 = vsel %vm2943, %v2949, %v2935
        %2955 = vst [vmem:[#allocation3 + $0x60] sm:$0xff] %v2944
        %2956 = vst.msk [vmem:[#allocation3 + $0x68] sm:$0xff] %vm2850, %v2946
        %2957 = vst [vmem:[#allocation3 + $0x70] sm:$0xff] %v2948
        %2958 = vst.msk [vmem:[#allocation3 + $0x78] sm:$0xff] %vm2850, %v2950
        %2959 = vrot.lane.b32.xlu0 %v2802, 39
        %v2960 = vpop.permute.xlu0 %2959
        %2961 = vrot.lane.b32.xlu0 %v2803, 39
        %v2962 = vpop.permute.xlu0 %2961
        %2963 = vrot.lane.b32.xlu0 %v2804, 39
        %v2964 = vpop.permute.xlu0 %2963
        %2965 = vrot.lane.b32.xlu0 %v2806, 39
        %v2966 = vpop.permute.xlu0 %2965
        %2967 = vrot.lane.b32.xlu0 %v2807, 39
        %v2968 = vpop.permute.xlu0 %2967
        %2969 = vrot.lane.b32.xlu0 %v2808, 39
        %v2970 = vpop.permute.xlu0 %2969
        %v2971 = vrot.slane %v2960, 4
        %v2972 = vrot.slane %v2962, 4
        %v2973 = vrot.slane %v2964, 4
        %v2974 = vrot.slane %v2966, 4
        %v2975 = vrot.slane %v2968, 4
        %v2976 = vrot.slane %v2970, 4
        %v2977 = vsel %vm906, %v2971, %v2972
        %vm2978 = vcmask 318464
        %v2979 = vsel %vm2978, %v2977, %v2962
        %v2980 = vsel %vm906, %v2972, %v2973
        %v2981 = vsel %vm2978, %v2980, %v2964
        %v2982 = vsel %vm906, %v2974, %v2975
        %v2983 = vsel %vm2978, %v2982, %v2968
        %v2984 = vsel %vm906, %v2975, %v2976
        %v2985 = vsel %vm2978, %v2984, %v2970
        %2990 = vst [vmem:[#allocation3 + $0x80] sm:$0xff] %v2979
        %2991 = vst.msk [vmem:[#allocation3 + $0x88] sm:$0xff] %vm2850, %v2981
        %2992 = vst [vmem:[#allocation3 + $0x90] sm:$0xff] %v2983
        %2993 = vst.msk [vmem:[#allocation3 + $0x98] sm:$0xff] %vm2850, %v2985
        %2994 = vrot.lane.b32.xlu0 %v2802, 38
        %v2995 = vpop.permute.xlu0 %2994
        %2996 = vrot.lane.b32.xlu0 %v2803, 38
        %v2997 = vpop.permute.xlu0 %2996
        %2998 = vrot.lane.b32.xlu0 %v2804, 38
        %v2999 = vpop.permute.xlu0 %2998
        %3000 = vrot.lane.b32.xlu0 %v2806, 38
        %v3001 = vpop.permute.xlu0 %3000
        %3002 = vrot.lane.b32.xlu0 %v2807, 38
        %v3003 = vpop.permute.xlu0 %3002
        %3004 = vrot.lane.b32.xlu0 %v2808, 38
        %v3005 = vpop.permute.xlu0 %3004
        %v3006 = vrot.slane %v2995, 4
        %v3007 = vrot.slane %v2997, 4
        %v3008 = vrot.slane %v2999, 4
        %v3009 = vrot.slane %v3001, 4
        %v3010 = vrot.slane %v3003, 4
        %v3011 = vrot.slane %v3005, 4
        %v3012 = vsel %vm906, %v3006, %v3007
        %vm3013 = vcmask 310272
        %v3014 = vsel %vm3013, %v3012, %v2997
        %v3015 = vsel %vm906, %v3007, %v3008
        %v3016 = vsel %vm3013, %v3015, %v2999
        %v3017 = vsel %vm906, %v3009, %v3010
        %v3018 = vsel %vm3013, %v3017, %v3003
        %v3019 = vsel %vm906, %v3010, %v3011
        %v3020 = vsel %vm3013, %v3019, %v3005
        %3025 = vst [vmem:[#allocation3 + $0xa0] sm:$0xff] %v3014
        %3026 = vst.msk [vmem:[#allocation3 + $0xa8] sm:$0xff] %vm2850, %v3016
        %3027 = vst [vmem:[#allocation3 + $0xb0] sm:$0xff] %v3018
        %3028 = vst.msk [vmem:[#allocation3 + $0xb8] sm:$0xff] %vm2850, %v3020
        %3029 = vrot.lane.b32.xlu0 %v2802, 10
        %v3030 = vpop.permute.xlu0 %3029
        %3031 = vrot.lane.b32.xlu0 %v2803, 10
        %v3032 = vpop.permute.xlu0 %3031
        %3033 = vrot.lane.b32.xlu0 %v2804, 10
        %v3034 = vpop.permute.xlu0 %3033
        %3035 = vrot.lane.b32.xlu0 %v2806, 10
        %v3036 = vpop.permute.xlu0 %3035
        %3037 = vrot.lane.b32.xlu0 %v2807, 10
        %v3038 = vpop.permute.xlu0 %3037
        %3039 = vrot.lane.b32.xlu0 %v2808, 10
        %v3040 = vpop.permute.xlu0 %3039
        %v3041 = vrot.slane %v3030, 4
        %v3042 = vrot.slane %v3032, 4
        %v3043 = vrot.slane %v3034, 4
        %v3044 = vrot.slane %v3036, 4
        %v3045 = vrot.slane %v3038, 4
        %v3046 = vrot.slane %v3040, 4
        %v3047 = vsel %vm906, %v3041, %v3042
        %vm3048 = vcmask 80896
        %v3049 = vsel %vm3048, %v3047, %v3032
        %v3050 = vsel %vm906, %v3042, %v3043
        %v3051 = vsel %vm3048, %v3050, %v3034
        %v3052 = vsel %vm906, %v3044, %v3045
        %v3053 = vsel %vm3048, %v3052, %v3038
        %v3054 = vsel %vm906, %v3045, %v3046
        %v3055 = vsel %vm3048, %v3054, %v3040
        %3060 = vst [vmem:[#allocation3 + $0xc0] sm:$0xff] %v3049
        %3061 = vst.msk [vmem:[#allocation3 + $0xc8] sm:$0xff] %vm2850, %v3051
        %3062 = vst [vmem:[#allocation3 + $0xd0] sm:$0xff] %v3053
        %3063 = vst.msk [vmem:[#allocation3 + $0xd8] sm:$0xff] %vm2850, %v3055
        %3064 = vrot.lane.b32.xlu0 %v2802, 9
        %v3065 = vpop.permute.xlu0 %3064
        %3066 = vrot.lane.b32.xlu0 %v2803, 9
        %v3067 = vpop.permute.xlu0 %3066
        %3068 = vrot.lane.b32.xlu0 %v2804, 9
        %v3069 = vpop.permute.xlu0 %3068
        %3070 = vrot.lane.b32.xlu0 %v2806, 9
        %v3071 = vpop.permute.xlu0 %3070
        %3072 = vrot.lane.b32.xlu0 %v2807, 9
        %v3073 = vpop.permute.xlu0 %3072
        %3074 = vrot.lane.b32.xlu0 %v2808, 9
        %v3075 = vpop.permute.xlu0 %3074
        %v3076 = vrot.slane %v3065, 4
        %v3077 = vrot.slane %v3067, 4
        %v3078 = vrot.slane %v3069, 4
        %v3079 = vrot.slane %v3071, 4
        %v3080 = vrot.slane %v3073, 4
        %v3081 = vrot.slane %v3075, 4
        %v3082 = vsel %vm906, %v3076, %v3077
        %vm3083 = vcmask 72704
        %v3084 = vsel %vm3083, %v3082, %v3067
        %v3085 = vsel %vm906, %v3077, %v3078
        %v3086 = vsel %vm3083, %v3085, %v3069
        %v3087 = vsel %vm906, %v3079, %v3080
        %v3088 = vsel %vm3083, %v3087, %v3073
        %v3089 = vsel %vm906, %v3080, %v3081
        %v3090 = vsel %vm3083, %v3089, %v3075
        %3095 = vst [vmem:[#allocation3 + $0xe0] sm:$0xff] %v3084
        %3096 = vst.msk [vmem:[#allocation3 + $0xe8] sm:$0xff] %vm2850, %v3086
        %3097 = vst [vmem:[#allocation3 + $0xf0] sm:$0xff] %v3088
        %3098 = vst.msk [vmem:[#allocation3 + $0xf8] sm:$0xff] %vm2850, %v3090
        %3099 = vrot.lane.b32.xlu0 %v2802, 8
        %v3100 = vpop.permute.xlu0 %3099
        %3101 = vrot.lane.b32.xlu0 %v2803, 8
        %v3102 = vpop.permute.xlu0 %3101
        %3103 = vrot.lane.b32.xlu0 %v2804, 8
        %v3104 = vpop.permute.xlu0 %3103
        %3105 = vrot.lane.b32.xlu0 %v2806, 8
        %v3106 = vpop.permute.xlu0 %3105
        %3107 = vrot.lane.b32.xlu0 %v2807, 8
        %v3108 = vpop.permute.xlu0 %3107
        %3109 = vrot.lane.b32.xlu0 %v2808, 8
        %v3110 = vpop.permute.xlu0 %3109
        %v3111 = vrot.slane %v3100, 4
        %v3112 = vrot.slane %v3102, 4
        %v3113 = vrot.slane %v3104, 4
        %v3114 = vrot.slane %v3106, 4
        %v3115 = vrot.slane %v3108, 4
        %v3116 = vrot.slane %v3110, 4
        %v3117 = vsel %vm906, %v3111, %v3112
        %vm3118 = vcmask 64512
        %v3119 = vsel %vm3118, %v3117, %v3102
        %v3120 = vsel %vm906, %v3112, %v3113
        %v3121 = vsel %vm3118, %v3120, %v3104
        %v3122 = vsel %vm906, %v3114, %v3115
        %v3123 = vsel %vm3118, %v3122, %v3108
        %v3124 = vsel %vm906, %v3115, %v3116
        %v3125 = vsel %vm3118, %v3124, %v3110
        %3130 = vst [vmem:[#allocation3 + $0x100] sm:$0xff] %v3119
        %3131 = vst.msk [vmem:[#allocation3 + $0x108] sm:$0xff] %vm2850, %v3121
        %3132 = vst [vmem:[#allocation3 + $0x110] sm:$0xff] %v3123
        %3133 = vst.msk [vmem:[#allocation3 + $0x118] sm:$0xff] %vm2850, %v3125
        %3134 = vrot.lane.b32.xlu0 %v2802, 4
        %v3135 = vpop.permute.xlu0 %3134
        %3136 = vrot.lane.b32.xlu0 %v2803, 4
        %v3137 = vpop.permute.xlu0 %3136
        %3138 = vrot.lane.b32.xlu0 %v2804, 4
        %v3139 = vpop.permute.xlu0 %3138
        %3140 = vrot.lane.b32.xlu0 %v2806, 4
        %v3141 = vpop.permute.xlu0 %3140
        %3142 = vrot.lane.b32.xlu0 %v2807, 4
        %v3143 = vpop.permute.xlu0 %3142
        %3144 = vrot.lane.b32.xlu0 %v2808, 4
        %v3145 = vpop.permute.xlu0 %3144
        %v3146 = vrot.slane %v3135, 4
        %v3147 = vrot.slane %v3137, 4
        %v3148 = vrot.slane %v3139, 4
        %v3149 = vrot.slane %v3141, 4
        %v3150 = vrot.slane %v3143, 4
        %v3151 = vrot.slane %v3145, 4
        %v3152 = vsel %vm906, %v3146, %v3147
        %v3153 = vsel %vm1097, %v3135, %v3152
        %v3154 = vsel %vm906, %v3147, %v3148
        %v3155 = vsel %vm1097, %v3137, %v3154
        %v3156 = vsel %vm906, %v3149, %v3150
        %v3157 = vsel %vm1097, %v3141, %v3156
        %v3158 = vsel %vm906, %v3150, %v3151
        %v3159 = vsel %vm1097, %v3143, %v3158
        %3164 = vst [vmem:[#allocation3 + $0x120] sm:$0xff] %v3153
        %3165 = vst.msk [vmem:[#allocation3 + $0x128] sm:$0xff] %vm2850, %v3155
        %3166 = vst [vmem:[#allocation3 + $0x130] sm:$0xff] %v3157
        %3167 = vst.msk [vmem:[#allocation3 + $0x138] sm:$0xff] %vm2850, %v3159
        %3168 = vrot.lane.b32.xlu0 %v2802, 1
        %v3169 = vpop.permute.xlu0 %3168
        %3170 = vrot.lane.b32.xlu0 %v2803, 1
        %v3171 = vpop.permute.xlu0 %3170
        %3172 = vrot.lane.b32.xlu0 %v2804, 1
        %v3173 = vpop.permute.xlu0 %3172
        %3174 = vrot.lane.b32.xlu0 %v2806, 1
        %v3175 = vpop.permute.xlu0 %3174
        %3176 = vrot.lane.b32.xlu0 %v2807, 1
        %v3177 = vpop.permute.xlu0 %3176
        %3178 = vrot.lane.b32.xlu0 %v2808, 1
        %v3179 = vpop.permute.xlu0 %3178
        %v3180 = vrot.slane %v3169, 4
        %v3181 = vrot.slane %v3171, 4
        %v3182 = vrot.slane %v3173, 4
        %v3183 = vrot.slane %v3175, 4
        %v3184 = vrot.slane %v3177, 4
        %v3185 = vrot.slane %v3179, 4
        %v3186 = vsel %vm906, %v3180, %v3181
        %vm3187 = vcmask 7168
        %v3188 = vsel %vm3187, %v3169, %v3186
        %v3189 = vsel %vm906, %v3181, %v3182
        %v3190 = vsel %vm3187, %v3171, %v3189
        %v3191 = vsel %vm906, %v3183, %v3184
        %v3192 = vsel %vm3187, %v3175, %v3191
        %v3193 = vsel %vm906, %v3184, %v3185
        %v3194 = vsel %vm3187, %v3177, %v3193
        %3199 = vst [vmem:[#allocation3 + $0x140] sm:$0xff] %v3188
        %3200 = vst.msk [vmem:[#allocation3 + $0x148] sm:$0xff] %vm2850, %v3190
        %3201 = vst [vmem:[#allocation3 + $0x150] sm:$0xff] %v3192
        %3202 = vst.msk [vmem:[#allocation3 + $0x158] sm:$0xff] %vm2850, %v3194
        %3203 = vrot.lane.b32.xlu0 %v2802, 126
        %v3204 = vpop.permute.xlu0 %3203
        %3205 = vrot.lane.b32.xlu0 %v2803, 126
        %v3206 = vpop.permute.xlu0 %3205
        %3207 = vrot.lane.b32.xlu0 %v2804, 126
        %v3208 = vpop.permute.xlu0 %3207
        %3209 = vrot.lane.b32.xlu0 %v2806, 126
        %v3210 = vpop.permute.xlu0 %3209
        %3211 = vrot.lane.b32.xlu0 %v2807, 126
        %v3212 = vpop.permute.xlu0 %3211
        %3213 = vrot.lane.b32.xlu0 %v2808, 126
        %v3214 = vpop.permute.xlu0 %3213
        %v3215 = vrot.slane %v3204, 4
        %v3216 = vrot.slane %v3206, 4
        %v3217 = vrot.slane %v3208, 4
        %v3218 = vrot.slane %v3210, 4
        %v3219 = vrot.slane %v3212, 4
        %v3220 = vrot.slane %v3214, 4
        %v3221 = vsel %vm906, %v3215, %v3216
        %vm3222 = vcmask 1031168
        %v3223 = vsel %vm3222, %v3221, %v3206
        %v3224 = vsel %vm906, %v3216, %v3217
        %v3225 = vsel %vm3222, %v3224, %v3208
        %v3226 = vsel %vm906, %v3218, %v3219
        %v3227 = vsel %vm3222, %v3226, %v3212
        %v3228 = vsel %vm906, %v3219, %v3220
        %v3229 = vsel %vm3222, %v3228, %v3214
        %3234 = vst [vmem:[#allocation3 + $0x160] sm:$0xff] %v3223
        %3235 = vst.msk [vmem:[#allocation3 + $0x168] sm:$0xff] %vm2850, %v3225
        %3236 = vst [vmem:[#allocation3 + $0x170] sm:$0xff] %v3227
        %3237 = vst.msk [vmem:[#allocation3 + $0x178] sm:$0xff] %vm2850, %v3229
        %3238 = vrot.lane.b32.xlu0 %v2802, 42
        %v3239 = vpop.permute.xlu0 %3238
        %3240 = vrot.lane.b32.xlu0 %v2803, 42
        %v3241 = vpop.permute.xlu0 %3240
        %3242 = vrot.lane.b32.xlu0 %v2804, 42
        %v3243 = vpop.permute.xlu0 %3242
        %3244 = vrot.lane.b32.xlu0 %v2806, 42
        %v3245 = vpop.permute.xlu0 %3244
        %3246 = vrot.lane.b32.xlu0 %v2807, 42
        %v3247 = vpop.permute.xlu0 %3246
        %3248 = vrot.lane.b32.xlu0 %v2808, 42
        %v3249 = vpop.permute.xlu0 %3248
        %v3250 = vrot.slane %v3239, 4
        %v3251 = vrot.slane %v3241, 4
        %v3252 = vrot.slane %v3243, 4
        %v3253 = vrot.slane %v3245, 4
        %v3254 = vrot.slane %v3247, 4
        %v3255 = vrot.slane %v3249, 4
        %v3256 = vsel %vm906, %v3250, %v3251
        %vm3257 = vcmask 343040
        %v3258 = vsel %vm3257, %v3256, %v3241
        %v3259 = vsel %vm906, %v3251, %v3252
        %v3260 = vsel %vm3257, %v3259, %v3243
        %v3261 = vsel %vm906, %v3253, %v3254
        %v3262 = vsel %vm3257, %v3261, %v3247
        %v3263 = vsel %vm906, %v3254, %v3255
        %v3264 = vsel %vm3257, %v3263, %v3249
        %3269 = vst [vmem:[#allocation3 + $0x180] sm:$0xff] %v3258
        %3270 = vst.msk [vmem:[#allocation3 + $0x188] sm:$0xff] %vm2850, %v3260
        %3271 = vst [vmem:[#allocation3 + $0x190] sm:$0xff] %v3262
        %3272 = vst.msk [vmem:[#allocation3 + $0x198] sm:$0xff] %vm2850, %v3264
        %3273 = vst [vmem:[#allocation3 + $0x1a0] sm:$0xff] %v2979
        %3274 = vst.msk [vmem:[#allocation3 + $0x1a8] sm:$0xff] %vm2850, %v2981
        %3275 = vst [vmem:[#allocation3 + $0x1b0] sm:$0xff] %v2983
        %3276 = vst.msk [vmem:[#allocation3 + $0x1b8] sm:$0xff] %vm2850, %v2985
        %3277 = vrot.lane.b32.xlu0 %v2802, 36
        %v3278 = vpop.permute.xlu0 %3277
        %3279 = vrot.lane.b32.xlu0 %v2803, 36
        %v3280 = vpop.permute.xlu0 %3279
        %3281 = vrot.lane.b32.xlu0 %v2804, 36
        %v3282 = vpop.permute.xlu0 %3281
        %3283 = vrot.lane.b32.xlu0 %v2806, 36
        %v3284 = vpop.permute.xlu0 %3283
        %3285 = vrot.lane.b32.xlu0 %v2807, 36
        %v3286 = vpop.permute.xlu0 %3285
        %3287 = vrot.lane.b32.xlu0 %v2808, 36
        %v3288 = vpop.permute.xlu0 %3287
        %v3289 = vrot.slane %v3278, 4
        %v3290 = vrot.slane %v3280, 4
        %v3291 = vrot.slane %v3282, 4
        %v3292 = vrot.slane %v3284, 4
        %v3293 = vrot.slane %v3286, 4
        %v3294 = vrot.slane %v3288, 4
        %v3295 = vsel %vm906, %v3289, %v3290
        %vm3296 = vcmask 293888
        %v3297 = vsel %vm3296, %v3295, %v3280
        %v3298 = vsel %vm906, %v3290, %v3291
        %v3299 = vsel %vm3296, %v3298, %v3282
        %v3300 = vsel %vm906, %v3292, %v3293
        %v3301 = vsel %vm3296, %v3300, %v3286
        %v3302 = vsel %vm906, %v3293, %v3294
        %v3303 = vsel %vm3296, %v3302, %v3288
        %3308 = vst [vmem:[#allocation3 + $0x1c0] sm:$0xff] %v3297
        %3309 = vst.msk [vmem:[#allocation3 + $0x1c8] sm:$0xff] %vm2850, %v3299
        %3310 = vst [vmem:[#allocation3 + $0x1d0] sm:$0xff] %v3301
        %3311 = vst.msk [vmem:[#allocation3 + $0x1d8] sm:$0xff] %vm2850, %v3303
        %3314 = vrot.lane.b32.xlu0 %v2803, 80
        %v3315 = vpop.permute.xlu0 %3314
        %3316 = vrot.lane.b32.xlu0 %v2804, 80
        %v3317 = vpop.permute.xlu0 %3316
        %3318 = vrot.lane.b32.xlu0 %v2805, 80
        %v3319 = vpop.permute.xlu0 %3318
        %3320 = vrot.lane.b32.xlu0 %v2807, 80
        %v3321 = vpop.permute.xlu0 %3320
        %3322 = vrot.lane.b32.xlu0 %v2808, 80
        %v3323 = vpop.permute.xlu0 %3322
        %3324 = vrot.lane.b32.xlu0 %v2809, 80
        %v3325 = vpop.permute.xlu0 %3324
        %v3326 = vrot.slane %v3315, 4
        %v3327 = vrot.slane %v3317, 4
        %v3328 = vrot.slane %v3319, 4
        %v3329 = vrot.slane %v3321, 4
        %v3330 = vrot.slane %v3323, 4
        %v3331 = vrot.slane %v3325, 4
        %v3332 = vsel %vm906, %v3326, %v3327
        %vm3333 = vcmask 654336
        %v3334 = vsel %vm3333, %v3315, %v3332
        %v3335 = vsel %vm906, %v3327, %v3328
        %v3336 = vsel %vm3333, %v3317, %v3335
        %v3337 = vsel %vm906, %v3329, %v3330
        %v3338 = vsel %vm3333, %v3321, %v3337
        %v3339 = vsel %vm906, %v3330, %v3331
        %v3340 = vsel %vm3333, %v3323, %v3339
        %3345 = vst [vmem:[#allocation3 + $0x1e0] sm:$0xff] %v3334
        %3346 = vst.msk [vmem:[#allocation3 + $0x1e8] sm:$0xff] %vm2850, %v3336
        %3347 = vst [vmem:[#allocation3 + $0x1f0] sm:$0xff] %v3338
        %3348 = vst.msk [vmem:[#allocation3 + $0x1f8] sm:$0xff] %vm2850, %v3340
        %3349 = vrot.lane.b32.xlu0 %v2803, 77
        %v3350 = vpop.permute.xlu0 %3349
        %3351 = vrot.lane.b32.xlu0 %v2804, 77
        %v3352 = vpop.permute.xlu0 %3351
        %3353 = vrot.lane.b32.xlu0 %v2805, 77
        %v3354 = vpop.permute.xlu0 %3353
        %3355 = vrot.lane.b32.xlu0 %v2807, 77
        %v3356 = vpop.permute.xlu0 %3355
        %3357 = vrot.lane.b32.xlu0 %v2808, 77
        %v3358 = vpop.permute.xlu0 %3357
        %3359 = vrot.lane.b32.xlu0 %v2809, 77
        %v3360 = vpop.permute.xlu0 %3359
        %v3361 = vrot.slane %v3350, 4
        %v3362 = vrot.slane %v3352, 4
        %v3363 = vrot.slane %v3354, 4
        %v3364 = vrot.slane %v3356, 4
        %v3365 = vrot.slane %v3358, 4
        %v3366 = vrot.slane %v3360, 4
        %v3367 = vsel %vm906, %v3361, %v3362
        %vm3368 = vcmask 629760
        %v3369 = vsel %vm3368, %v3350, %v3367
        %v3370 = vsel %vm906, %v3362, %v3363
        %v3371 = vsel %vm3368, %v3352, %v3370
        %v3372 = vsel %vm906, %v3364, %v3365
        %v3373 = vsel %vm3368, %v3356, %v3372
        %v3374 = vsel %vm906, %v3365, %v3366
        %v3375 = vsel %vm3368, %v3358, %v3374
        %3380 = vst [vmem:[#allocation3 + $0x200] sm:$0xff] %v3369
        %3381 = vst.msk [vmem:[#allocation3 + $0x208] sm:$0xff] %vm2850, %v3371
        %3382 = vst [vmem:[#allocation3 + $0x210] sm:$0xff] %v3373
        %3383 = vst.msk [vmem:[#allocation3 + $0x218] sm:$0xff] %vm2850, %v3375
        %3384 = vrot.lane.b32.xlu0 %v2803, 74
        %v3385 = vpop.permute.xlu0 %3384
        %3386 = vrot.lane.b32.xlu0 %v2804, 74
        %v3387 = vpop.permute.xlu0 %3386
        %3388 = vrot.lane.b32.xlu0 %v2805, 74
        %v3389 = vpop.permute.xlu0 %3388
        %3390 = vrot.lane.b32.xlu0 %v2807, 74
        %v3391 = vpop.permute.xlu0 %3390
        %3392 = vrot.lane.b32.xlu0 %v2808, 74
        %v3393 = vpop.permute.xlu0 %3392
        %3394 = vrot.lane.b32.xlu0 %v2809, 74
        %v3395 = vpop.permute.xlu0 %3394
        %v3396 = vrot.slane %v3385, 4
        %v3397 = vrot.slane %v3387, 4
        %v3398 = vrot.slane %v3389, 4
        %v3399 = vrot.slane %v3391, 4
        %v3400 = vrot.slane %v3393, 4
        %v3401 = vrot.slane %v3395, 4
        %v3402 = vsel %vm906, %v3396, %v3397
        %v3403 = vsel %vm1205, %v3385, %v3402
        %v3404 = vsel %vm906, %v3397, %v3398
        %v3405 = vsel %vm1205, %v3387, %v3404
        %v3406 = vsel %vm906, %v3399, %v3400
        %v3407 = vsel %vm1205, %v3391, %v3406
        %v3408 = vsel %vm906, %v3400, %v3401
        %v3409 = vsel %vm1205, %v3393, %v3408
        %3414 = vst [vmem:[#allocation3 + $0x220] sm:$0xff] %v3403
        %3415 = vst.msk [vmem:[#allocation3 + $0x228] sm:$0xff] %vm2850, %v3405
        %3416 = vst [vmem:[#allocation3 + $0x230] sm:$0xff] %v3407
        %3417 = vst.msk [vmem:[#allocation3 + $0x238] sm:$0xff] %vm2850, %v3409
        %3418 = vrot.lane.b32.xlu0 %v2802, 66
        %v3419 = vpop.permute.xlu0 %3418
        %3420 = vrot.lane.b32.xlu0 %v2803, 66
        %v3421 = vpop.permute.xlu0 %3420
        %3422 = vrot.lane.b32.xlu0 %v2804, 66
        %v3423 = vpop.permute.xlu0 %3422
        %3424 = vrot.lane.b32.xlu0 %v2806, 66
        %v3425 = vpop.permute.xlu0 %3424
        %3426 = vrot.lane.b32.xlu0 %v2807, 66
        %v3427 = vpop.permute.xlu0 %3426
        %3428 = vrot.lane.b32.xlu0 %v2808, 66
        %v3429 = vpop.permute.xlu0 %3428
        %v3430 = vrot.slane %v3419, 4
        %v3431 = vrot.slane %v3421, 4
        %v3432 = vrot.slane %v3423, 4
        %v3433 = vrot.slane %v3425, 4
        %v3434 = vrot.slane %v3427, 4
        %v3435 = vrot.slane %v3429, 4
        %v3436 = vsel %vm906, %v3430, %v3431
        %vm3437 = vcmask 539648
        %v3438 = vsel %vm3437, %v3419, %v3436
        %v3439 = vsel %vm906, %v3431, %v3432
        %v3440 = vsel %vm3437, %v3421, %v3439
        %v3441 = vsel %vm906, %v3433, %v3434
        %v3442 = vsel %vm3437, %v3425, %v3441
        %v3443 = vsel %vm906, %v3434, %v3435
        %v3444 = vsel %vm3437, %v3427, %v3443
        %3449 = vst [vmem:[#allocation3 + $0x240] sm:$0xff] %v3438
        %3450 = vst.msk [vmem:[#allocation3 + $0x248] sm:$0xff] %vm2850, %v3440
        %3451 = vst [vmem:[#allocation3 + $0x250] sm:$0xff] %v3442
        %3452 = vst.msk [vmem:[#allocation3 + $0x258] sm:$0xff] %vm2850, %v3444
        %3453 = vrot.lane.b32.xlu0 %v2802, 61
        %v3454 = vpop.permute.xlu0 %3453
        %3455 = vrot.lane.b32.xlu0 %v2803, 61
        %v3456 = vpop.permute.xlu0 %3455
        %3457 = vrot.lane.b32.xlu0 %v2804, 61
        %v3458 = vpop.permute.xlu0 %3457
        %3459 = vrot.lane.b32.xlu0 %v2806, 61
        %v3460 = vpop.permute.xlu0 %3459
        %3461 = vrot.lane.b32.xlu0 %v2807, 61
        %v3462 = vpop.permute.xlu0 %3461
        %3463 = vrot.lane.b32.xlu0 %v2808, 61
        %v3464 = vpop.permute.xlu0 %3463
        %v3465 = vrot.slane %v3454, 4
        %v3466 = vrot.slane %v3456, 4
        %v3467 = vrot.slane %v3458, 4
        %v3468 = vrot.slane %v3460, 4
        %v3469 = vrot.slane %v3462, 4
        %v3470 = vrot.slane %v3464, 4
        %v3471 = vsel %vm906, %v3465, %v3466
        %vm3472 = vcmask 498688
        %v3473 = vsel %vm3472, %v3454, %v3471
        %v3474 = vsel %vm906, %v3466, %v3467
        %v3475 = vsel %vm3472, %v3456, %v3474
        %v3476 = vsel %vm906, %v3468, %v3469
        %v3477 = vsel %vm3472, %v3460, %v3476
        %v3478 = vsel %vm906, %v3469, %v3470
        %v3479 = vsel %vm3472, %v3462, %v3478
        %3484 = vst [vmem:[#allocation3 + $0x260] sm:$0xff] %v3473
        %3485 = vst.msk [vmem:[#allocation3 + $0x268] sm:$0xff] %vm2850, %v3475
        %3486 = vst [vmem:[#allocation3 + $0x270] sm:$0xff] %v3477
        %3487 = vst.msk [vmem:[#allocation3 + $0x278] sm:$0xff] %vm2850, %v3479
        %3488 = vrot.lane.b32.xlu0 %v2802, 56
        %v3489 = vpop.permute.xlu0 %3488
        %3490 = vrot.lane.b32.xlu0 %v2803, 56
        %v3491 = vpop.permute.xlu0 %3490
        %3492 = vrot.lane.b32.xlu0 %v2804, 56
        %v3493 = vpop.permute.xlu0 %3492
        %3494 = vrot.lane.b32.xlu0 %v2806, 56
        %v3495 = vpop.permute.xlu0 %3494
        %3496 = vrot.lane.b32.xlu0 %v2807, 56
        %v3497 = vpop.permute.xlu0 %3496
        %3498 = vrot.lane.b32.xlu0 %v2808, 56
        %v3499 = vpop.permute.xlu0 %3498
        %v3500 = vrot.slane %v3489, 4
        %v3501 = vrot.slane %v3491, 4
        %v3502 = vrot.slane %v3493, 4
        %v3503 = vrot.slane %v3495, 4
        %v3504 = vrot.slane %v3497, 4
        %v3505 = vrot.slane %v3499, 4
        %v3506 = vsel %vm906, %v3500, %v3501
        %v3507 = vsel %vm1799, %v3489, %v3506
        %v3508 = vsel %vm906, %v3501, %v3502
        %v3509 = vsel %vm1799, %v3491, %v3508
        %v3510 = vsel %vm906, %v3503, %v3504
        %v3511 = vsel %vm1799, %v3495, %v3510
        %v3512 = vsel %vm906, %v3504, %v3505
        %v3513 = vsel %vm1799, %v3497, %v3512
        %3518 = vst [vmem:[#allocation3 + $0x280] sm:$0xff] %v3507
        %3519 = vst.msk [vmem:[#allocation3 + $0x288] sm:$0xff] %vm2850, %v3509
        %3520 = vst [vmem:[#allocation3 + $0x290] sm:$0xff] %v3511
        %3521 = vst.msk [vmem:[#allocation3 + $0x298] sm:$0xff] %vm2850, %v3513
        %3522 = vrot.lane.b32.xlu0 %v2802, 44
        %v3523 = vpop.permute.xlu0 %3522
        %3524 = vrot.lane.b32.xlu0 %v2803, 44
        %v3525 = vpop.permute.xlu0 %3524
        %3526 = vrot.lane.b32.xlu0 %v2804, 44
        %v3527 = vpop.permute.xlu0 %3526
        %3528 = vrot.lane.b32.xlu0 %v2806, 44
        %v3529 = vpop.permute.xlu0 %3528
        %3530 = vrot.lane.b32.xlu0 %v2807, 44
        %v3531 = vpop.permute.xlu0 %3530
        %3532 = vrot.lane.b32.xlu0 %v2808, 44
        %v3533 = vpop.permute.xlu0 %3532
        %v3534 = vrot.slane %v3523, 4
        %v3535 = vrot.slane %v3525, 4
        %v3536 = vrot.slane %v3527, 4
        %v3537 = vrot.slane %v3529, 4
        %v3538 = vrot.slane %v3531, 4
        %v3539 = vrot.slane %v3533, 4
        %v3540 = vsel %vm906, %v3534, %v3535
        %vm3541 = vcmask 359424
        %v3542 = vsel %vm3541, %v3540, %v3525
        %v3543 = vsel %vm906, %v3535, %v3536
        %v3544 = vsel %vm3541, %v3543, %v3527
        %v3545 = vsel %vm906, %v3537, %v3538
        %v3546 = vsel %vm3541, %v3545, %v3531
        %v3547 = vsel %vm906, %v3538, %v3539
        %v3548 = vsel %vm3541, %v3547, %v3533
        %3553 = vst [vmem:[#allocation3 + $0x2a0] sm:$0xff] %v3542
        %3554 = vst.msk [vmem:[#allocation3 + $0x2a8] sm:$0xff] %vm2850, %v3544
        %3555 = vst [vmem:[#allocation3 + $0x2b0] sm:$0xff] %v3546
        %3556 = vst.msk [vmem:[#allocation3 + $0x2b8] sm:$0xff] %vm2850, %v3548
        %3557 = vst [vmem:[#allocation3 + $0x2c0] sm:$0xff] %v2979
        %3558 = vst.msk [vmem:[#allocation3 + $0x2c8] sm:$0xff] %vm2850, %v2981
        %3559 = vst [vmem:[#allocation3 + $0x2d0] sm:$0xff] %v2983
        %3560 = vst.msk [vmem:[#allocation3 + $0x2d8] sm:$0xff] %vm2850, %v2985
        %3561 = vrot.lane.b32.xlu0 %v2802, 34
        %v3562 = vpop.permute.xlu0 %3561
        %3563 = vrot.lane.b32.xlu0 %v2803, 34
        %v3564 = vpop.permute.xlu0 %3563
        %3565 = vrot.lane.b32.xlu0 %v2804, 34
        %v3566 = vpop.permute.xlu0 %3565
        %3567 = vrot.lane.b32.xlu0 %v2806, 34
        %v3568 = vpop.permute.xlu0 %3567
        %3569 = vrot.lane.b32.xlu0 %v2807, 34
        %v3570 = vpop.permute.xlu0 %3569
        %3571 = vrot.lane.b32.xlu0 %v2808, 34
        %v3572 = vpop.permute.xlu0 %3571
        %v3573 = vrot.slane %v3562, 4
        %v3574 = vrot.slane %v3564, 4
        %v3575 = vrot.slane %v3566, 4
        %v3576 = vrot.slane %v3568, 4
        %v3577 = vrot.slane %v3570, 4
        %v3578 = vrot.slane %v3572, 4
        %v3579 = vsel %vm906, %v3573, %v3574
        %vm3580 = vcmask 277504
        %v3581 = vsel %vm3580, %v3579, %v3564
        %v3582 = vsel %vm906, %v3574, %v3575
        %v3583 = vsel %vm3580, %v3582, %v3566
        %v3584 = vsel %vm906, %v3576, %v3577
        %v3585 = vsel %vm3580, %v3584, %v3570
        %v3586 = vsel %vm906, %v3577, %v3578
        %v3587 = vsel %vm3580, %v3586, %v3572
        %3592 = vst [vmem:[#allocation3 + $0x2e0] sm:$0xff] %v3581
        %3593 = vst.msk [vmem:[#allocation3 + $0x2e8] sm:$0xff] %vm2850, %v3583
        %3594 = vst [vmem:[#allocation3 + $0x2f0] sm:$0xff] %v3585
        %3595 = vst.msk [vmem:[#allocation3 + $0x2f8] sm:$0xff] %vm2850, %v3587
        %3596 = vrot.lane.b32.xlu0 %v2803, 22
        %v3597 = vpop.permute.xlu0 %3596
        %3598 = vrot.lane.b32.xlu0 %v2804, 22
        %v3599 = vpop.permute.xlu0 %3598
        %3600 = vrot.lane.b32.xlu0 %v2805, 22
        %v3601 = vpop.permute.xlu0 %3600
        %3602 = vrot.lane.b32.xlu0 %v2807, 22
        %v3603 = vpop.permute.xlu0 %3602
        %3604 = vrot.lane.b32.xlu0 %v2808, 22
        %v3605 = vpop.permute.xlu0 %3604
        %3606 = vrot.lane.b32.xlu0 %v2809, 22
        %v3607 = vpop.permute.xlu0 %3606
        %v3608 = vrot.slane %v3597, 4
        %v3609 = vrot.slane %v3599, 4
        %v3610 = vrot.slane %v3601, 4
        %v3611 = vrot.slane %v3603, 4
        %v3612 = vrot.slane %v3605, 4
        %v3613 = vrot.slane %v3607, 4
        %v3614 = vsel %vm906, %v3608, %v3609
        %vm3615 = vcmask 179200
        %v3616 = vsel %vm3615, %v3597, %v3614
        %v3617 = vsel %vm906, %v3609, %v3610
        %v3618 = vsel %vm3615, %v3599, %v3617
        %v3619 = vsel %vm906, %v3611, %v3612
        %v3620 = vsel %vm3615, %v3603, %v3619
        %v3621 = vsel %vm906, %v3612, %v3613
        %v3622 = vsel %vm3615, %v3605, %v3621
        %3627 = vst [vmem:[#allocation3 + $0x300] sm:$0xff] %v3616
        %3628 = vst.msk [vmem:[#allocation3 + $0x308] sm:$0xff] %vm2850, %v3618
        %3629 = vst [vmem:[#allocation3 + $0x310] sm:$0xff] %v3620
        %3630 = vst.msk [vmem:[#allocation3 + $0x318] sm:$0xff] %vm2850, %v3622
        %3631 = vrot.lane.b32.xlu0 %v2803, 17
        %v3632 = vpop.permute.xlu0 %3631
        %3633 = vrot.lane.b32.xlu0 %v2804, 17
        %v3634 = vpop.permute.xlu0 %3633
        %3635 = vrot.lane.b32.xlu0 %v2805, 17
        %v3636 = vpop.permute.xlu0 %3635
        %3637 = vrot.lane.b32.xlu0 %v2807, 17
        %v3638 = vpop.permute.xlu0 %3637
        %3639 = vrot.lane.b32.xlu0 %v2808, 17
        %v3640 = vpop.permute.xlu0 %3639
        %3641 = vrot.lane.b32.xlu0 %v2809, 17
        %v3642 = vpop.permute.xlu0 %3641
        %v3643 = vrot.slane %v3632, 4
        %v3644 = vrot.slane %v3634, 4
        %v3645 = vrot.slane %v3636, 4
        %v3646 = vrot.slane %v3638, 4
        %v3647 = vrot.slane %v3640, 4
        %v3648 = vrot.slane %v3642, 4
        %v3649 = vsel %vm906, %v3643, %v3644
        %vm3650 = vcmask 138240
        %v3651 = vsel %vm3650, %v3632, %v3649
        %v3652 = vsel %vm906, %v3644, %v3645
        %v3653 = vsel %vm3650, %v3634, %v3652
        %v3654 = vsel %vm906, %v3646, %v3647
        %v3655 = vsel %vm3650, %v3638, %v3654
        %v3656 = vsel %vm906, %v3647, %v3648
        %v3657 = vsel %vm3650, %v3640, %v3656
        %3662 = vst [vmem:[#allocation3 + $0x320] sm:$0xff] %v3651
        %3663 = vst.msk [vmem:[#allocation3 + $0x328] sm:$0xff] %vm2850, %v3653
        %3664 = vst [vmem:[#allocation3 + $0x330] sm:$0xff] %v3655
        %3665 = vst.msk [vmem:[#allocation3 + $0x338] sm:$0xff] %vm2850, %v3657
        %3666 = vrot.lane.b32.xlu0 %v2803, 12
        %v3667 = vpop.permute.xlu0 %3666
        %3668 = vrot.lane.b32.xlu0 %v2804, 12
        %v3669 = vpop.permute.xlu0 %3668
        %3670 = vrot.lane.b32.xlu0 %v2805, 12
        %v3671 = vpop.permute.xlu0 %3670
        %3672 = vrot.lane.b32.xlu0 %v2807, 12
        %v3673 = vpop.permute.xlu0 %3672
        %3674 = vrot.lane.b32.xlu0 %v2808, 12
        %v3675 = vpop.permute.xlu0 %3674
        %3676 = vrot.lane.b32.xlu0 %v2809, 12
        %v3677 = vpop.permute.xlu0 %3676
        %v3678 = vrot.slane %v3667, 4
        %v3679 = vrot.slane %v3669, 4
        %v3680 = vrot.slane %v3671, 4
        %v3681 = vrot.slane %v3673, 4
        %v3682 = vrot.slane %v3675, 4
        %v3683 = vrot.slane %v3677, 4
        %v3684 = vsel %vm906, %v3678, %v3679
        %vm3685 = vcmask 97280
        %v3686 = vsel %vm3685, %v3667, %v3684
        %v3687 = vsel %vm906, %v3679, %v3680
        %v3688 = vsel %vm3685, %v3669, %v3687
        %v3689 = vsel %vm906, %v3681, %v3682
        %v3690 = vsel %vm3685, %v3673, %v3689
        %v3691 = vsel %vm906, %v3682, %v3683
        %v3692 = vsel %vm3685, %v3675, %v3691
        %3697 = vst [vmem:[#allocation3 + $0x340] sm:$0xff] %v3686
        %3698 = vst.msk [vmem:[#allocation3 + $0x348] sm:$0xff] %vm2850, %v3688
        %3699 = vst [vmem:[#allocation3 + $0x350] sm:$0xff] %v3690
        %3700 = vst.msk [vmem:[#allocation3 + $0x358] sm:$0xff] %vm2850, %v3692
        %3701 = vst [vmem:[#allocation3 + $0x360] sm:$0xff] %v2802
        %3702 = vst.msk [vmem:[#allocation3 + $0x368] sm:$0xff] %vm2850, %v2803
        %3703 = vst [vmem:[#allocation3 + $0x370] sm:$0xff] %v2806
        %3704 = vst.msk [vmem:[#allocation3 + $0x378] sm:$0xff] %vm2850, %v2807
        %3705 = vrot.lane.b32.xlu0 %v2802, 121
        %v3706 = vpop.permute.xlu0 %3705
        %3707 = vrot.lane.b32.xlu0 %v2803, 121
        %v3708 = vpop.permute.xlu0 %3707
        %3709 = vrot.lane.b32.xlu0 %v2806, 121
        %v3710 = vpop.permute.xlu0 %3709
        %3711 = vrot.lane.b32.xlu0 %v2807, 121
        %v3712 = vpop.permute.xlu0 %3711
        %v3713 = vrot.slane %v3706, 4
        %v3714 = vrot.slane %v3708, 4
        %v3715 = vrot.slane %v3710, 4
        %v3716 = vrot.slane %v3712, 4
        %v3717 = vsel %vm906, %v3713, %v3714
        %vm3718 = vcmask 990208
        %v3719 = vsel %vm3718, %v3706, %v3717
        %v3720 = vsel %vm3718, %v3708, %v3714
        %v3721 = vsel %vm906, %v3715, %v3716
        %v3722 = vsel %vm3718, %v3710, %v3721
        %v3723 = vsel %vm3718, %v3712, %v3716
        %3728 = vst [vmem:[#allocation3 + $0x380] sm:$0xff] %v3719
        %3729 = vst.msk [vmem:[#allocation3 + $0x388] sm:$0xff] %vm2850, %v3720
        %3730 = vst [vmem:[#allocation3 + $0x390] sm:$0xff] %v3722
        %3731 = vst.msk [vmem:[#allocation3 + $0x398] sm:$0xff] %vm2850, %v3723
        %3732 = vrot.lane.b32.xlu0 %v2802, 114
        %v3733 = vpop.permute.xlu0 %3732
        %3734 = vrot.lane.b32.xlu0 %v2803, 114
        %v3735 = vpop.permute.xlu0 %3734
        %3736 = vrot.lane.b32.xlu0 %v2806, 114
        %v3737 = vpop.permute.xlu0 %3736
        %3738 = vrot.lane.b32.xlu0 %v2807, 114
        %v3739 = vpop.permute.xlu0 %3738
        %v3740 = vrot.slane %v3733, 4
        %v3741 = vrot.slane %v3735, 4
        %v3742 = vrot.slane %v3737, 4
        %v3743 = vrot.slane %v3739, 4
        %v3744 = vsel %vm906, %v3740, %v3741
        %vm3745 = vcmask 932864
        %v3746 = vsel %vm3745, %v3733, %v3744
        %v3747 = vsel %vm3745, %v3735, %v3741
        %v3748 = vsel %vm906, %v3742, %v3743
        %v3749 = vsel %vm3745, %v3737, %v3748
        %v3750 = vsel %vm3745, %v3739, %v3743
        %3755 = vst [vmem:[#allocation3 + $0x3a0] sm:$0xff] %v3746
        %3756 = vst.msk [vmem:[#allocation3 + $0x3a8] sm:$0xff] %vm2850, %v3747
        %3757 = vst [vmem:[#allocation3 + $0x3b0] sm:$0xff] %v3749
        %3758 = vst.msk [vmem:[#allocation3 + $0x3b8] sm:$0xff] %vm2850, %v3750
        %3759 = vrot.lane.b32.xlu0 %v2802, 46
        %v3760 = vpop.permute.xlu0 %3759
        %3761 = vrot.lane.b32.xlu0 %v2803, 46
        %v3762 = vpop.permute.xlu0 %3761
        %3763 = vrot.lane.b32.xlu0 %v2804, 46
        %v3764 = vpop.permute.xlu0 %3763
        %3765 = vrot.lane.b32.xlu0 %v2806, 46
        %v3766 = vpop.permute.xlu0 %3765
        %3767 = vrot.lane.b32.xlu0 %v2807, 46
        %v3768 = vpop.permute.xlu0 %3767
        %3769 = vrot.lane.b32.xlu0 %v2808, 46
        %v3770 = vpop.permute.xlu0 %3769
        %v3771 = vrot.slane %v3760, 4
        %v3772 = vrot.slane %v3762, 4
        %v3773 = vrot.slane %v3764, 4
        %v3774 = vrot.slane %v3766, 4
        %v3775 = vrot.slane %v3768, 4
        %v3776 = vrot.slane %v3770, 4
        %v3777 = vsel %vm906, %v3771, %v3772
        %vm3778 = vcmask 375808
        %v3779 = vsel %vm3778, %v3777, %v3762
        %v3780 = vsel %vm906, %v3772, %v3773
        %v3781 = vsel %vm3778, %v3780, %v3764
        %v3782 = vsel %vm906, %v3774, %v3775
        %v3783 = vsel %vm3778, %v3782, %v3768
        %v3784 = vsel %vm906, %v3775, %v3776
        %v3785 = vsel %vm3778, %v3784, %v3770
        %3790 = vst [vmem:[#allocation3 + $0x3c0] sm:$0xff] %v3779
        %3791 = vst.msk [vmem:[#allocation3 + $0x3c8] sm:$0xff] %vm2850, %v3781
        %3792 = vst [vmem:[#allocation3 + $0x3d0] sm:$0xff] %v3783
        %3793 = vst.msk [vmem:[#allocation3 + $0x3d8] sm:$0xff] %vm2850, %v3785
        %3794 = vst [vmem:[#allocation3 + $0x3e0] sm:$0xff] %v2979
        %3795 = vst.msk [vmem:[#allocation3 + $0x3e8] sm:$0xff] %vm2850, %v2981
        %3796 = vst [vmem:[#allocation3 + $0x3f0] sm:$0xff] %v2983
        %3797 = vst.msk [vmem:[#allocation3 + $0x3f8] sm:$0xff] %vm2850, %v2985
        %3798 = vrot.lane.b32.xlu0 %v2802, 32
        %v3799 = vpop.permute.xlu0 %3798
        %3800 = vrot.lane.b32.xlu0 %v2803, 32
        %v3801 = vpop.permute.xlu0 %3800
        %3802 = vrot.lane.b32.xlu0 %v2804, 32
        %v3803 = vpop.permute.xlu0 %3802
        %3804 = vrot.lane.b32.xlu0 %v2806, 32
        %v3805 = vpop.permute.xlu0 %3804
        %3806 = vrot.lane.b32.xlu0 %v2807, 32
        %v3807 = vpop.permute.xlu0 %3806
        %3808 = vrot.lane.b32.xlu0 %v2808, 32
        %v3809 = vpop.permute.xlu0 %3808
        %v3810 = vrot.slane %v3799, 4
        %v3811 = vrot.slane %v3801, 4
        %v3812 = vrot.slane %v3803, 4
        %v3813 = vrot.slane %v3805, 4
        %v3814 = vrot.slane %v3807, 4
        %v3815 = vrot.slane %v3809, 4
        %v3816 = vsel %vm906, %v3810, %v3811
        %v3817 = vsel %vm1675, %v3816, %v3801
        %v3818 = vsel %vm906, %v3811, %v3812
        %v3819 = vsel %vm1675, %v3818, %v3803
        %v3820 = vsel %vm906, %v3813, %v3814
        %v3821 = vsel %vm1675, %v3820, %v3807
        %v3822 = vsel %vm906, %v3814, %v3815
        %v3823 = vsel %vm1675, %v3822, %v3809
        %3828 = vst [vmem:[#allocation3 + $0x400] sm:$0xff] %v3817
        %3829 = vst.msk [vmem:[#allocation3 + $0x408] sm:$0xff] %vm2850, %v3819
        %3830 = vst [vmem:[#allocation3 + $0x410] sm:$0xff] %v3821
        %3831 = vst.msk [vmem:[#allocation3 + $0x418] sm:$0xff] %vm2850, %v3823
        %3832 = vrot.lane.b32.xlu0 %v2803, 92
        %v3833 = vpop.permute.xlu0 %3832
        %3834 = vrot.lane.b32.xlu0 %v2804, 92
        %v3835 = vpop.permute.xlu0 %3834
        %3836 = vrot.lane.b32.xlu0 %v2805, 92
        %v3837 = vpop.permute.xlu0 %3836
        %3838 = vrot.lane.b32.xlu0 %v2807, 92
        %v3839 = vpop.permute.xlu0 %3838
        %3840 = vrot.lane.b32.xlu0 %v2808, 92
        %v3841 = vpop.permute.xlu0 %3840
        %3842 = vrot.lane.b32.xlu0 %v2809, 92
        %v3843 = vpop.permute.xlu0 %3842
        %v3844 = vrot.slane %v3833, 4
        %v3845 = vrot.slane %v3835, 4
        %v3846 = vrot.slane %v3837, 4
        %v3847 = vrot.slane %v3839, 4
        %v3848 = vrot.slane %v3841, 4
        %v3849 = vrot.slane %v3843, 4
        %v3850 = vsel %vm906, %v3844, %v3845
        %vm3851 = vcmask 752640
        %v3852 = vsel %vm3851, %v3850, %v3835
        %v3853 = vsel %vm906, %v3845, %v3846
        %v3854 = vsel %vm3851, %v3853, %v3837
        %v3855 = vsel %vm906, %v3847, %v3848
        %v3856 = vsel %vm3851, %v3855, %v3841
        %v3857 = vsel %vm906, %v3848, %v3849
        %v3858 = vsel %vm3851, %v3857, %v3843
        %3863 = vst [vmem:[#allocation3 + $0x420] sm:$0xff] %v3852
        %3864 = vst.msk [vmem:[#allocation3 + $0x428] sm:$0xff] %vm2850, %v3854
        %3865 = vst [vmem:[#allocation3 + $0x430] sm:$0xff] %v3856
        %3866 = vst.msk [vmem:[#allocation3 + $0x438] sm:$0xff] %vm2850, %v3858
        %3867 = vrot.lane.b32.xlu0 %v2803, 85
        %v3868 = vpop.permute.xlu0 %3867
        %3869 = vrot.lane.b32.xlu0 %v2804, 85
        %v3870 = vpop.permute.xlu0 %3869
        %3871 = vrot.lane.b32.xlu0 %v2805, 85
        %v3872 = vpop.permute.xlu0 %3871
        %3873 = vrot.lane.b32.xlu0 %v2807, 85
        %v3874 = vpop.permute.xlu0 %3873
        %3875 = vrot.lane.b32.xlu0 %v2808, 85
        %v3876 = vpop.permute.xlu0 %3875
        %3877 = vrot.lane.b32.xlu0 %v2809, 85
        %v3878 = vpop.permute.xlu0 %3877
        %v3879 = vrot.slane %v3868, 4
        %v3880 = vrot.slane %v3870, 4
        %v3881 = vrot.slane %v3872, 4
        %v3882 = vrot.slane %v3874, 4
        %v3883 = vrot.slane %v3876, 4
        %v3884 = vrot.slane %v3878, 4
        %v3885 = vsel %vm906, %v3879, %v3880
        %vm3886 = vcmask 695296
        %v3887 = vsel %vm3886, %v3885, %v3870
        %v3888 = vsel %vm906, %v3880, %v3881
        %v3889 = vsel %vm3886, %v3888, %v3872
        %v3890 = vsel %vm906, %v3882, %v3883
        %v3891 = vsel %vm3886, %v3890, %v3876
        %v3892 = vsel %vm906, %v3883, %v3884
        %v3893 = vsel %vm3886, %v3892, %v3878
        %3898 = vst [vmem:[#allocation3 + $0x440] sm:$0xff] %v3887
        %3899 = vst.msk [vmem:[#allocation3 + $0x448] sm:$0xff] %vm2850, %v3889
        %3900 = vst [vmem:[#allocation3 + $0x450] sm:$0xff] %v3891
        %3901 = vst.msk [vmem:[#allocation3 + $0x458] sm:$0xff] %vm2850, %v3893
        %3902 = vrot.lane.b32.xlu0 %v2803, 78
        %v3903 = vpop.permute.xlu0 %3902
        %3904 = vrot.lane.b32.xlu0 %v2804, 78
        %v3905 = vpop.permute.xlu0 %3904
        %3906 = vrot.lane.b32.xlu0 %v2805, 78
        %v3907 = vpop.permute.xlu0 %3906
        %3908 = vrot.lane.b32.xlu0 %v2807, 78
        %v3909 = vpop.permute.xlu0 %3908
        %3910 = vrot.lane.b32.xlu0 %v2808, 78
        %v3911 = vpop.permute.xlu0 %3910
        %3912 = vrot.lane.b32.xlu0 %v2809, 78
        %v3913 = vpop.permute.xlu0 %3912
        %v3914 = vrot.slane %v3903, 4
        %v3915 = vrot.slane %v3905, 4
        %v3916 = vrot.slane %v3907, 4
        %v3917 = vrot.slane %v3909, 4
        %v3918 = vrot.slane %v3911, 4
        %v3919 = vrot.slane %v3913, 4
        %v3920 = vsel %vm906, %v3914, %v3915
        %v3921 = vsel %vm1151, %v3920, %v3905
        %v3922 = vsel %vm906, %v3915, %v3916
        %v3923 = vsel %vm1151, %v3922, %v3907
        %v3924 = vsel %vm906, %v3917, %v3918
        %v3925 = vsel %vm1151, %v3924, %v3911
        %v3926 = vsel %vm906, %v3918, %v3919
        %v3927 = vsel %vm1151, %v3926, %v3913
        %3932 = vst [vmem:[#allocation3 + $0x460] sm:$0xff] %v3921
        %3933 = vst.msk [vmem:[#allocation3 + $0x468] sm:$0xff] %vm2850, %v3923
        %3934 = vst [vmem:[#allocation3 + $0x470] sm:$0xff] %v3925
        %3935 = vst.msk [vmem:[#allocation3 + $0x478] sm:$0xff] %vm2850, %v3927
        %v3936 = vld [vmem:[#allocation16] sm:$0xff]
        %v3937 = vld [vmem:[#allocation16 + $0x8] sm:$0xff]
        %v3938 = vld [vmem:[#allocation16 + $0x10] sm:$0xf]
        %v3939 = vld [vmem:[#allocation16 + $0x14] sm:$0xff]
        %v3940 = vld [vmem:[#allocation16 + $0x1c] sm:$0xff]
        %v3941 = vld [vmem:[#allocation16 + $0x24] sm:$0xf]
        %v3942 = vld [vmem:[#allocation3] sm:$0xff]
        %v3943 = vld [vmem:[#allocation3 + $0x8] sm:$0xff]
        %v3944 = vld [vmem:[#allocation3 + $0x10] sm:$0xff]
        %v3945 = vld [vmem:[#allocation3 + $0x18] sm:$0xff]
        %v3946 = vld [vmem:[#allocation3 + $0x20] sm:$0xff]
        %v3947 = vld [vmem:[#allocation3 + $0x28] sm:$0xff]
        %v3948 = vld [vmem:[#allocation3 + $0x30] sm:$0xff]
        %v3949 = vld [vmem:[#allocation3 + $0x38] sm:$0xff]
        %v3950 = vld [vmem:[#allocation3 + $0x40] sm:$0xff]
        %v3951 = vld [vmem:[#allocation3 + $0x48] sm:$0xff]
        %v3952 = vld [vmem:[#allocation3 + $0x50] sm:$0xff]
        %v3953 = vld [vmem:[#allocation3 + $0x58] sm:$0xff]
        %v3954 = vld [vmem:[#allocation3 + $0x60] sm:$0xff]
        %v3955 = vld [vmem:[#allocation3 + $0x68] sm:$0xff]
        %v3956 = vld [vmem:[#allocation3 + $0x70] sm:$0xff]
        %v3957 = vld [vmem:[#allocation3 + $0x78] sm:$0xff]
        %v3958 = vld [vmem:[#allocation3 + $0x80] sm:$0xff]
        %v3959 = vld [vmem:[#allocation3 + $0x88] sm:$0xff]
        %v3960 = vld [vmem:[#allocation3 + $0x90] sm:$0xff]
        %v3961 = vld [vmem:[#allocation3 + $0x98] sm:$0xff]
        %v3962 = vld [vmem:[#allocation3 + $0xa0] sm:$0xff]
        %v3963 = vld [vmem:[#allocation3 + $0xa8] sm:$0xff]
        %v3964 = vld [vmem:[#allocation3 + $0xb0] sm:$0xff]
        %v3965 = vld [vmem:[#allocation3 + $0xb8] sm:$0xff]
        %v3966 = vld [vmem:[#allocation3 + $0xc0] sm:$0xff]
        %v3967 = vld [vmem:[#allocation3 + $0xc8] sm:$0xff]
        %v3968 = vld [vmem:[#allocation3 + $0xd0] sm:$0xff]
        %v3969 = vld [vmem:[#allocation3 + $0xd8] sm:$0xff]
        %v3970 = vld [vmem:[#allocation3 + $0xe0] sm:$0xff]
        %v3971 = vld [vmem:[#allocation3 + $0xe8] sm:$0xff]
        %v3972 = vld [vmem:[#allocation3 + $0xf0] sm:$0xff]
        %v3973 = vld [vmem:[#allocation3 + $0xf8] sm:$0xff]
        %v3974 = vld [vmem:[#allocation3 + $0x100] sm:$0xff]
        %v3975 = vld [vmem:[#allocation3 + $0x108] sm:$0xff]
        %v3976 = vld [vmem:[#allocation3 + $0x110] sm:$0xff]
        %v3977 = vld [vmem:[#allocation3 + $0x118] sm:$0xff]
        %v3978 = vld [vmem:[#allocation3 + $0x120] sm:$0xff]
        %v3979 = vld [vmem:[#allocation3 + $0x128] sm:$0xff]
        %v3980 = vld [vmem:[#allocation3 + $0x130] sm:$0xff]
        %v3981 = vld [vmem:[#allocation3 + $0x138] sm:$0xff]
        %v3982 = vld [vmem:[#allocation3 + $0x140] sm:$0xff]
        %v3983 = vld [vmem:[#allocation3 + $0x148] sm:$0xff]
        %v3984 = vld [vmem:[#allocation3 + $0x150] sm:$0xff]
        %v3985 = vld [vmem:[#allocation3 + $0x158] sm:$0xff]
        %v3986 = vld [vmem:[#allocation3 + $0x160] sm:$0xff]
        %v3987 = vld [vmem:[#allocation3 + $0x168] sm:$0xff]
        %v3988 = vld [vmem:[#allocation3 + $0x170] sm:$0xff]
        %v3989 = vld [vmem:[#allocation3 + $0x178] sm:$0xff]
        %v3990 = vld [vmem:[#allocation3 + $0x180] sm:$0xff]
        %v3991 = vld [vmem:[#allocation3 + $0x188] sm:$0xff]
        %v3992 = vld [vmem:[#allocation3 + $0x190] sm:$0xff]
        %v3993 = vld [vmem:[#allocation3 + $0x198] sm:$0xff]
        %v3994 = vld [vmem:[#allocation3 + $0x1a0] sm:$0xff]
        %v3995 = vld [vmem:[#allocation3 + $0x1a8] sm:$0xff]
        %v3996 = vld [vmem:[#allocation3 + $0x1b0] sm:$0xff]
        %v3997 = vld [vmem:[#allocation3 + $0x1b8] sm:$0xff]
        %v3998 = vld [vmem:[#allocation3 + $0x1c0] sm:$0xff]
        %v3999 = vld [vmem:[#allocation3 + $0x1c8] sm:$0xff]
        %v4000 = vld [vmem:[#allocation3 + $0x1d0] sm:$0xff]
        %v4001 = vld [vmem:[#allocation3 + $0x1d8] sm:$0xff]
        %v4002 = vld [vmem:[#allocation3 + $0x1e0] sm:$0xff]
        %v4003 = vld [vmem:[#allocation3 + $0x1e8] sm:$0xff]
        %v4004 = vld [vmem:[#allocation3 + $0x1f0] sm:$0xff]
        %v4005 = vld [vmem:[#allocation3 + $0x1f8] sm:$0xff]
        %v4006 = vld [vmem:[#allocation3 + $0x200] sm:$0xff]
        %v4007 = vld [vmem:[#allocation3 + $0x208] sm:$0xff]
        %v4008 = vld [vmem:[#allocation3 + $0x210] sm:$0xff]
        %v4009 = vld [vmem:[#allocation3 + $0x218] sm:$0xff]
        %v4010 = vld [vmem:[#allocation3 + $0x220] sm:$0xff]
        %v4011 = vld [vmem:[#allocation3 + $0x228] sm:$0xff]
        %v4012 = vld [vmem:[#allocation3 + $0x230] sm:$0xff]
        %v4013 = vld [vmem:[#allocation3 + $0x238] sm:$0xff]
        %v4014 = vld [vmem:[#allocation3 + $0x240] sm:$0xff]
        %v4015 = vld [vmem:[#allocation3 + $0x248] sm:$0xff]
        %v4016 = vld [vmem:[#allocation3 + $0x250] sm:$0xff]
        %v4017 = vld [vmem:[#allocation3 + $0x258] sm:$0xff]
        %v4018 = vld [vmem:[#allocation3 + $0x260] sm:$0xff]
        %v4019 = vld [vmem:[#allocation3 + $0x268] sm:$0xff]
        %v4020 = vld [vmem:[#allocation3 + $0x270] sm:$0xff]
        %v4021 = vld [vmem:[#allocation3 + $0x278] sm:$0xff]
        %v4022 = vld [vmem:[#allocation3 + $0x280] sm:$0xff]
        %v4023 = vld [vmem:[#allocation3 + $0x288] sm:$0xff]
        %v4024 = vld [vmem:[#allocation3 + $0x290] sm:$0xff]
        %v4025 = vld [vmem:[#allocation3 + $0x298] sm:$0xff]
        %v4026 = vld [vmem:[#allocation3 + $0x2a0] sm:$0xff]
        %v4027 = vld [vmem:[#allocation3 + $0x2a8] sm:$0xff]
        %v4028 = vld [vmem:[#allocation3 + $0x2b0] sm:$0xff]
        %v4029 = vld [vmem:[#allocation3 + $0x2b8] sm:$0xff]
        %v4030 = vld [vmem:[#allocation3 + $0x2c0] sm:$0xff]
        %v4031 = vld [vmem:[#allocation3 + $0x2c8] sm:$0xff]
        %v4032 = vld [vmem:[#allocation3 + $0x2d0] sm:$0xff]
        %v4033 = vld [vmem:[#allocation3 + $0x2d8] sm:$0xff]
        %v4034 = vld [vmem:[#allocation3 + $0x2e0] sm:$0xff]
        %v4035 = vld [vmem:[#allocation3 + $0x2e8] sm:$0xff]
        %v4036 = vld [vmem:[#allocation3 + $0x2f0] sm:$0xff]
        %v4037 = vld [vmem:[#allocation3 + $0x2f8] sm:$0xff]
        %v4038 = vld [vmem:[#allocation3 + $0x300] sm:$0xff]
        %v4039 = vld [vmem:[#allocation3 + $0x308] sm:$0xff]
        %v4040 = vld [vmem:[#allocation3 + $0x310] sm:$0xff]
        %v4041 = vld [vmem:[#allocation3 + $0x318] sm:$0xff]
        %v4042 = vld [vmem:[#allocation3 + $0x320] sm:$0xff]
        %v4043 = vld [vmem:[#allocation3 + $0x328] sm:$0xff]
        %v4044 = vld [vmem:[#allocation3 + $0x330] sm:$0xff]
        %v4045 = vld [vmem:[#allocation3 + $0x338] sm:$0xff]
        %v4046 = vld [vmem:[#allocation3 + $0x340] sm:$0xff]
        %v4047 = vld [vmem:[#allocation3 + $0x348] sm:$0xff]
        %v4048 = vld [vmem:[#allocation3 + $0x350] sm:$0xff]
        %v4049 = vld [vmem:[#allocation3 + $0x358] sm:$0xff]
        %v4050 = vld [vmem:[#allocation3 + $0x360] sm:$0xff]
        %v4051 = vld [vmem:[#allocation3 + $0x368] sm:$0xff]
        %v4052 = vld [vmem:[#allocation3 + $0x370] sm:$0xff]
        %v4053 = vld [vmem:[#allocation3 + $0x378] sm:$0xff]
        %v4054 = vld [vmem:[#allocation3 + $0x380] sm:$0xff]
        %v4055 = vld [vmem:[#allocation3 + $0x388] sm:$0xff]
        %v4056 = vld [vmem:[#allocation3 + $0x390] sm:$0xff]
        %v4057 = vld [vmem:[#allocation3 + $0x398] sm:$0xff]
        %v4058 = vld [vmem:[#allocation3 + $0x3a0] sm:$0xff]
        %v4059 = vld [vmem:[#allocation3 + $0x3a8] sm:$0xff]
        %v4060 = vld [vmem:[#allocation3 + $0x3b0] sm:$0xff]
        %v4061 = vld [vmem:[#allocation3 + $0x3b8] sm:$0xff]
        %v4062 = vld [vmem:[#allocation3 + $0x3c0] sm:$0xff]
        %v4063 = vld [vmem:[#allocation3 + $0x3c8] sm:$0xff]
        %v4064 = vld [vmem:[#allocation3 + $0x3d0] sm:$0xff]
        %v4065 = vld [vmem:[#allocation3 + $0x3d8] sm:$0xff]
        %v4066 = vld [vmem:[#allocation3 + $0x3e0] sm:$0xff]
        %v4067 = vld [vmem:[#allocation3 + $0x3e8] sm:$0xff]
        %v4068 = vld [vmem:[#allocation3 + $0x3f0] sm:$0xff]
        %v4069 = vld [vmem:[#allocation3 + $0x3f8] sm:$0xff]
        %v4070 = vld [vmem:[#allocation3 + $0x400] sm:$0xff]
        %v4071 = vld [vmem:[#allocation3 + $0x408] sm:$0xff]
        %v4072 = vld [vmem:[#allocation3 + $0x410] sm:$0xff]
        %v4073 = vld [vmem:[#allocation3 + $0x418] sm:$0xff]
        %v4074 = vld [vmem:[#allocation3 + $0x420] sm:$0xff]
        %v4075 = vld [vmem:[#allocation3 + $0x428] sm:$0xff]
        %v4076 = vld [vmem:[#allocation3 + $0x430] sm:$0xff]
        %v4077 = vld [vmem:[#allocation3 + $0x438] sm:$0xff]
        %v4078 = vld [vmem:[#allocation3 + $0x440] sm:$0xff]
        %v4079 = vld [vmem:[#allocation3 + $0x448] sm:$0xff]
        %v4080 = vld [vmem:[#allocation3 + $0x450] sm:$0xff]
        %v4081 = vld [vmem:[#allocation3 + $0x458] sm:$0xff]
        %v4082 = vld [vmem:[#allocation3 + $0x460] sm:$0xff]
        %v4083 = vld [vmem:[#allocation3 + $0x468] sm:$0xff]
        %v4084 = vld [vmem:[#allocation3 + $0x470] sm:$0xff]
        %v4085 = vld [vmem:[#allocation3 + $0x478] sm:$0xff]
        %v4086 = vld [vmem:[%s11] sm:$0xff]
        %v4087 = vld [vmem:[%s11 + $0x8] sm:$0xff]
        %4089 = vset.pattern.permute.xlu0 0
        %4090 = vperm.xlu0 %4089, %v4086
        %v4091 = vpop.permute.xlu0 %4090
        %4094 = vset.pattern.permute.xlu0 0
        %4095 = vperm.xlu0 %4094, %v4087
        %v4096 = vpop.permute.xlu0 %4095
        %v4104 = vunpack.c.l.b16 %v3936
        %v4105 = vunpack.c.h.b16 %v3936
        %v4106 = vunpack.c.l.b16 %v3937
        %v4107 = vunpack.c.h.b16 %v3937
        %v4108 = vunpack.c.l.b16 %v3938
        %v4109 = vunpack.c.l.b16 %v3939
        %v4110 = vunpack.c.h.b16 %v3939
        %v4111 = vunpack.c.l.b16 %v3940
        %v4112 = vunpack.c.h.b16 %v3940
        %v4113 = vunpack.c.l.b16 %v3941
        %v4114 = vpack.c.b16 %v4109, %v4104
        %v4115 = vpack.c.b16 %v4110, %v4105
        %v4116 = vpack.c.b16 %v4111, %v4106
        %v4117 = vpack.c.b16 %v4112, %v4107
        %v4118 = vpack.c.b16 %v4113, %v4108
        %v4267 = vunpack.c.l.b16 %v3942
        %v4268 = vunpack.c.h.b16 %v3942
        %v4269 = vunpack.c.l.b16 %v3943
        %v4270 = vunpack.c.h.b16 %v3943
        %v4271 = vunpack.c.l.b16 %v3944
        %v4272 = vunpack.c.h.b16 %v3944
        %v4273 = vunpack.c.l.b16 %v3945
        %v4274 = vunpack.c.h.b16 %v3945
        %v4275 = vunpack.c.l.b16 %v3946
        %v4276 = vunpack.c.h.b16 %v3946
        %v4277 = vunpack.c.l.b16 %v3947
        %v4278 = vunpack.c.h.b16 %v3947
        %v4279 = vunpack.c.l.b16 %v3948
        %v4280 = vunpack.c.h.b16 %v3948
        %v4281 = vunpack.c.l.b16 %v3949
        %v4282 = vunpack.c.h.b16 %v3949
        %v4283 = vunpack.c.l.b16 %v3950
        %v4284 = vunpack.c.h.b16 %v3950
        %v4285 = vunpack.c.l.b16 %v3951
        %v4286 = vunpack.c.h.b16 %v3951
        %v4287 = vunpack.c.l.b16 %v3952
        %v4288 = vunpack.c.h.b16 %v3952
        %v4289 = vunpack.c.l.b16 %v3953
        %v4290 = vunpack.c.h.b16 %v3953
        %v4291 = vunpack.c.l.b16 %v3954
        %v4292 = vunpack.c.h.b16 %v3954
        %v4293 = vunpack.c.l.b16 %v3955
        %v4294 = vunpack.c.h.b16 %v3955
        %v4295 = vunpack.c.l.b16 %v3956
        %v4296 = vunpack.c.h.b16 %v3956
        %v4297 = vunpack.c.l.b16 %v3957
        %v4298 = vunpack.c.h.b16 %v3957
        %v4299 = vunpack.c.l.b16 %v3958
        %v4300 = vunpack.c.h.b16 %v3958
        %v4301 = vunpack.c.l.b16 %v3959
        %v4302 = vunpack.c.h.b16 %v3959
        %v4303 = vunpack.c.l.b16 %v3960
        %v4304 = vunpack.c.h.b16 %v3960
        %v4305 = vunpack.c.l.b16 %v3961
        %v4306 = vunpack.c.h.b16 %v3961
        %v4307 = vunpack.c.l.b16 %v3962
        %v4308 = vunpack.c.h.b16 %v3962
        %v4309 = vunpack.c.l.b16 %v3963
        %v4310 = vunpack.c.h.b16 %v3963
        %v4311 = vunpack.c.l.b16 %v3964
        %v4312 = vunpack.c.h.b16 %v3964
        %v4313 = vunpack.c.l.b16 %v3965
        %v4314 = vunpack.c.h.b16 %v3965
        %v4315 = vunpack.c.l.b16 %v3966
        %v4316 = vunpack.c.h.b16 %v3966
        %v4317 = vunpack.c.l.b16 %v3967
        %v4318 = vunpack.c.h.b16 %v3967
        %v4319 = vunpack.c.l.b16 %v3968
        %v4320 = vunpack.c.h.b16 %v3968
        %v4321 = vunpack.c.l.b16 %v3969
        %v4322 = vunpack.c.h.b16 %v3969
        %v4323 = vunpack.c.l.b16 %v3970
        %v4324 = vunpack.c.h.b16 %v3970
        %v4325 = vunpack.c.l.b16 %v3971
        %v4326 = vunpack.c.h.b16 %v3971
        %v4327 = vunpack.c.l.b16 %v3972
        %v4328 = vunpack.c.h.b16 %v3972
        %v4329 = vunpack.c.l.b16 %v3973
        %v4330 = vunpack.c.h.b16 %v3973
        %v4331 = vunpack.c.l.b16 %v3974
        %v4332 = vunpack.c.h.b16 %v3974
        %v4333 = vunpack.c.l.b16 %v3975
        %v4334 = vunpack.c.h.b16 %v3975
        %v4335 = vunpack.c.l.b16 %v3976
        %v4336 = vunpack.c.h.b16 %v3976
        %v4337 = vunpack.c.l.b16 %v3977
        %v4338 = vunpack.c.h.b16 %v3977
        %v4339 = vunpack.c.l.b16 %v3978
        %v4340 = vunpack.c.h.b16 %v3978
        %v4341 = vunpack.c.l.b16 %v3979
        %v4342 = vunpack.c.h.b16 %v3979
        %v4343 = vunpack.c.l.b16 %v3980
        %v4344 = vunpack.c.h.b16 %v3980
        %v4345 = vunpack.c.l.b16 %v3981
        %v4346 = vunpack.c.h.b16 %v3981
        %v4347 = vunpack.c.l.b16 %v3982
        %v4348 = vunpack.c.h.b16 %v3982
        %v4349 = vunpack.c.l.b16 %v3983
        %v4350 = vunpack.c.h.b16 %v3983
        %v4351 = vunpack.c.l.b16 %v3984
        %v4352 = vunpack.c.h.b16 %v3984
        %v4353 = vunpack.c.l.b16 %v3985
        %v4354 = vunpack.c.h.b16 %v3985
        %v4355 = vunpack.c.l.b16 %v3986
        %v4356 = vunpack.c.h.b16 %v3986
        %v4357 = vunpack.c.l.b16 %v3987
        %v4358 = vunpack.c.h.b16 %v3987
        %v4359 = vunpack.c.l.b16 %v3988
        %v4360 = vunpack.c.h.b16 %v3988
        %v4361 = vunpack.c.l.b16 %v3989
        %v4362 = vunpack.c.h.b16 %v3989
        %v4363 = vunpack.c.l.b16 %v3990
        %v4364 = vunpack.c.h.b16 %v3990
        %v4365 = vunpack.c.l.b16 %v3991
        %v4366 = vunpack.c.h.b16 %v3991
        %v4367 = vunpack.c.l.b16 %v3992
        %v4368 = vunpack.c.h.b16 %v3992
        %v4369 = vunpack.c.l.b16 %v3993
        %v4370 = vunpack.c.h.b16 %v3993
        %v4371 = vunpack.c.l.b16 %v3994
        %v4372 = vunpack.c.h.b16 %v3994
        %v4373 = vunpack.c.l.b16 %v3995
        %v4374 = vunpack.c.h.b16 %v3995
        %v4375 = vunpack.c.l.b16 %v3996
        %v4376 = vunpack.c.h.b16 %v3996
        %v4377 = vunpack.c.l.b16 %v3997
        %v4378 = vunpack.c.h.b16 %v3997
        %v4379 = vunpack.c.l.b16 %v3998
        %v4380 = vunpack.c.h.b16 %v3998
        %v4381 = vunpack.c.l.b16 %v3999
        %v4382 = vunpack.c.h.b16 %v3999
        %v4383 = vunpack.c.l.b16 %v4000
        %v4384 = vunpack.c.h.b16 %v4000
        %v4385 = vunpack.c.l.b16 %v4001
        %v4386 = vunpack.c.h.b16 %v4001
        %v4387 = vunpack.c.l.b16 %v4002
        %v4388 = vunpack.c.h.b16 %v4002
        %v4389 = vunpack.c.l.b16 %v4003
        %v4390 = vunpack.c.h.b16 %v4003
        %v4391 = vunpack.c.l.b16 %v4004
        %v4392 = vunpack.c.h.b16 %v4004
        %v4393 = vunpack.c.l.b16 %v4005
        %v4394 = vunpack.c.h.b16 %v4005
        %v4395 = vunpack.c.l.b16 %v4006
        %v4396 = vunpack.c.h.b16 %v4006
        %v4397 = vunpack.c.l.b16 %v4007
        %v4398 = vunpack.c.h.b16 %v4007
        %v4399 = vunpack.c.l.b16 %v4008
        %v4400 = vunpack.c.h.b16 %v4008
        %v4401 = vunpack.c.l.b16 %v4009
        %v4402 = vunpack.c.h.b16 %v4009
        %v4403 = vunpack.c.l.b16 %v4010
        %v4404 = vunpack.c.h.b16 %v4010
        %v4405 = vunpack.c.l.b16 %v4011
        %v4406 = vunpack.c.h.b16 %v4011
        %v4407 = vunpack.c.l.b16 %v4012
        %v4408 = vunpack.c.h.b16 %v4012
        %v4409 = vunpack.c.l.b16 %v4013
        %v4410 = vunpack.c.h.b16 %v4013
        %v4411 = vunpack.c.l.b16 %v4014
        %v4412 = vunpack.c.h.b16 %v4014
        %v4413 = vunpack.c.l.b16 %v4015
        %v4414 = vunpack.c.h.b16 %v4015
        %v4415 = vunpack.c.l.b16 %v4016
        %v4416 = vunpack.c.h.b16 %v4016
        %v4417 = vunpack.c.l.b16 %v4017
        %v4418 = vunpack.c.h.b16 %v4017
        %v4419 = vunpack.c.l.b16 %v4018
        %v4420 = vunpack.c.h.b16 %v4018
        %v4421 = vunpack.c.l.b16 %v4019
        %v4422 = vunpack.c.h.b16 %v4019
        %v4423 = vunpack.c.l.b16 %v4020
        %v4424 = vunpack.c.h.b16 %v4020
        %v4425 = vunpack.c.l.b16 %v4021
        %v4426 = vunpack.c.h.b16 %v4021
        %v4427 = vunpack.c.l.b16 %v4022
        %v4428 = vunpack.c.h.b16 %v4022
        %v4429 = vunpack.c.l.b16 %v4023
        %v4430 = vunpack.c.h.b16 %v4023
        %v4431 = vunpack.c.l.b16 %v4024
        %v4432 = vunpack.c.h.b16 %v4024
        %v4433 = vunpack.c.l.b16 %v4025
        %v4434 = vunpack.c.h.b16 %v4025
        %v4435 = vunpack.c.l.b16 %v4026
        %v4436 = vunpack.c.h.b16 %v4026
        %v4437 = vunpack.c.l.b16 %v4027
        %v4438 = vunpack.c.h.b16 %v4027
        %v4439 = vunpack.c.l.b16 %v4028
        %v4440 = vunpack.c.h.b16 %v4028
        %v4441 = vunpack.c.l.b16 %v4029
        %v4442 = vunpack.c.h.b16 %v4029
        %v4443 = vunpack.c.l.b16 %v4030
        %v4444 = vunpack.c.h.b16 %v4030
        %v4445 = vunpack.c.l.b16 %v4031
        %v4446 = vunpack.c.h.b16 %v4031
        %v4447 = vunpack.c.l.b16 %v4032
        %v4448 = vunpack.c.h.b16 %v4032
        %v4449 = vunpack.c.l.b16 %v4033
        %v4450 = vunpack.c.h.b16 %v4033
        %v4451 = vunpack.c.l.b16 %v4034
        %v4452 = vunpack.c.h.b16 %v4034
        %v4453 = vunpack.c.l.b16 %v4035
        %v4454 = vunpack.c.h.b16 %v4035
        %v4455 = vunpack.c.l.b16 %v4036
        %v4456 = vunpack.c.h.b16 %v4036
        %v4457 = vunpack.c.l.b16 %v4037
        %v4458 = vunpack.c.h.b16 %v4037
        %v4459 = vunpack.c.l.b16 %v4038
        %v4460 = vunpack.c.h.b16 %v4038
        %v4461 = vunpack.c.l.b16 %v4039
        %v4462 = vunpack.c.h.b16 %v4039
        %v4463 = vunpack.c.l.b16 %v4040
        %v4464 = vunpack.c.h.b16 %v4040
        %v4465 = vunpack.c.l.b16 %v4041
        %v4466 = vunpack.c.h.b16 %v4041
        %v4467 = vunpack.c.l.b16 %v4042
        %v4468 = vunpack.c.h.b16 %v4042
        %v4469 = vunpack.c.l.b16 %v4043
        %v4470 = vunpack.c.h.b16 %v4043
        %v4471 = vunpack.c.l.b16 %v4044
        %v4472 = vunpack.c.h.b16 %v4044
        %v4473 = vunpack.c.l.b16 %v4045
        %v4474 = vunpack.c.h.b16 %v4045
        %v4475 = vunpack.c.l.b16 %v4046
        %v4476 = vunpack.c.h.b16 %v4046
        %v4477 = vunpack.c.l.b16 %v4047
        %v4478 = vunpack.c.h.b16 %v4047
        %v4479 = vunpack.c.l.b16 %v4048
        %v4480 = vunpack.c.h.b16 %v4048
        %v4481 = vunpack.c.l.b16 %v4049
        %v4482 = vunpack.c.h.b16 %v4049
        %v4483 = vunpack.c.l.b16 %v4050
        %v4484 = vunpack.c.h.b16 %v4050
        %v4485 = vunpack.c.l.b16 %v4051
        %v4486 = vunpack.c.h.b16 %v4051
        %v4487 = vunpack.c.l.b16 %v4052
        %v4488 = vunpack.c.h.b16 %v4052
        %v4489 = vunpack.c.l.b16 %v4053
        %v4490 = vunpack.c.h.b16 %v4053
        %v4491 = vunpack.c.l.b16 %v4054
        %v4492 = vunpack.c.h.b16 %v4054
        %v4493 = vunpack.c.l.b16 %v4055
        %v4494 = vunpack.c.h.b16 %v4055
        %v4495 = vunpack.c.l.b16 %v4056
        %v4496 = vunpack.c.h.b16 %v4056
        %v4497 = vunpack.c.l.b16 %v4057
        %v4498 = vunpack.c.h.b16 %v4057
        %v4499 = vunpack.c.l.b16 %v4058
        %v4500 = vunpack.c.h.b16 %v4058
        %v4501 = vunpack.c.l.b16 %v4059
        %v4502 = vunpack.c.h.b16 %v4059
        %v4503 = vunpack.c.l.b16 %v4060
        %v4504 = vunpack.c.h.b16 %v4060
        %v4505 = vunpack.c.l.b16 %v4061
        %v4506 = vunpack.c.h.b16 %v4061
        %v4507 = vunpack.c.l.b16 %v4062
        %v4508 = vunpack.c.h.b16 %v4062
        %v4509 = vunpack.c.l.b16 %v4063
        %v4510 = vunpack.c.h.b16 %v4063
        %v4511 = vunpack.c.l.b16 %v4064
        %v4512 = vunpack.c.h.b16 %v4064
        %v4513 = vunpack.c.l.b16 %v4065
        %v4514 = vunpack.c.h.b16 %v4065
        %v4515 = vunpack.c.l.b16 %v4066
        %v4516 = vunpack.c.h.b16 %v4066
        %v4517 = vunpack.c.l.b16 %v4067
        %v4518 = vunpack.c.h.b16 %v4067
        %v4519 = vunpack.c.l.b16 %v4068
        %v4520 = vunpack.c.h.b16 %v4068
        %v4521 = vunpack.c.l.b16 %v4069
        %v4522 = vunpack.c.h.b16 %v4069
        %v4523 = vunpack.c.l.b16 %v4070
        %v4524 = vunpack.c.h.b16 %v4070
        %v4525 = vunpack.c.l.b16 %v4071
        %v4526 = vunpack.c.h.b16 %v4071
        %v4527 = vunpack.c.l.b16 %v4072
        %v4528 = vunpack.c.h.b16 %v4072
        %v4529 = vunpack.c.l.b16 %v4073
        %v4530 = vunpack.c.h.b16 %v4073
        %v4531 = vunpack.c.l.b16 %v4074
        %v4532 = vunpack.c.h.b16 %v4074
        %v4533 = vunpack.c.l.b16 %v4075
        %v4534 = vunpack.c.h.b16 %v4075
        %v4535 = vunpack.c.l.b16 %v4076
        %v4536 = vunpack.c.h.b16 %v4076
        %v4537 = vunpack.c.l.b16 %v4077
        %v4538 = vunpack.c.h.b16 %v4077
        %v4539 = vunpack.c.l.b16 %v4078
        %v4540 = vunpack.c.h.b16 %v4078
        %v4541 = vunpack.c.l.b16 %v4079
        %v4542 = vunpack.c.h.b16 %v4079
        %v4543 = vunpack.c.l.b16 %v4080
        %v4544 = vunpack.c.h.b16 %v4080
        %v4545 = vunpack.c.l.b16 %v4081
        %v4546 = vunpack.c.h.b16 %v4081
        %v4547 = vunpack.c.l.b16 %v4082
        %v4548 = vunpack.c.h.b16 %v4082
        %v4549 = vunpack.c.l.b16 %v4083
        %v4550 = vunpack.c.h.b16 %v4083
        %v4551 = vunpack.c.l.b16 %v4084
        %v4552 = vunpack.c.h.b16 %v4084
        %v4553 = vunpack.c.l.b16 %v4085
        %v4554 = vunpack.c.h.b16 %v4085
        %v4555 = vpack.c.b16 %v4271, %v4267
        %v4556 = vpack.c.b16 %v4272, %v4268
        %v4557 = vpack.c.b16 %v4273, %v4269
        %v4558 = vpack.c.b16 %v4274, %v4270
        %v4559 = vpack.c.b16 %v4279, %v4275
        %v4560 = vpack.c.b16 %v4280, %v4276
        %v4561 = vpack.c.b16 %v4281, %v4277
        %v4562 = vpack.c.b16 %v4282, %v4278
        %v4563 = vpack.c.b16 %v4287, %v4283
        %v4564 = vpack.c.b16 %v4288, %v4284
        %v4565 = vpack.c.b16 %v4289, %v4285
        %v4566 = vpack.c.b16 %v4290, %v4286
        %v4567 = vpack.c.b16 %v4295, %v4291
        %v4568 = vpack.c.b16 %v4296, %v4292
        %v4569 = vpack.c.b16 %v4297, %v4293
        %v4570 = vpack.c.b16 %v4298, %v4294
        %v4571 = vpack.c.b16 %v4303, %v4299
        %v4572 = vpack.c.b16 %v4304, %v4300
        %v4573 = vpack.c.b16 %v4305, %v4301
        %v4574 = vpack.c.b16 %v4306, %v4302
        %v4575 = vpack.c.b16 %v4311, %v4307
        %v4576 = vpack.c.b16 %v4312, %v4308
        %v4577 = vpack.c.b16 %v4313, %v4309
        %v4578 = vpack.c.b16 %v4314, %v4310
        %v4579 = vpack.c.b16 %v4319, %v4315
        %v4580 = vpack.c.b16 %v4320, %v4316
        %v4581 = vpack.c.b16 %v4321, %v4317
        %v4582 = vpack.c.b16 %v4322, %v4318
        %v4583 = vpack.c.b16 %v4327, %v4323
        %v4584 = vpack.c.b16 %v4328, %v4324
        %v4585 = vpack.c.b16 %v4329, %v4325
        %v4586 = vpack.c.b16 %v4330, %v4326
        %v4587 = vpack.c.b16 %v4335, %v4331
        %v4588 = vpack.c.b16 %v4336, %v4332
        %v4589 = vpack.c.b16 %v4337, %v4333
        %v4590 = vpack.c.b16 %v4338, %v4334
        %v4591 = vpack.c.b16 %v4343, %v4339
        %v4592 = vpack.c.b16 %v4344, %v4340
        %v4593 = vpack.c.b16 %v4345, %v4341
        %v4594 = vpack.c.b16 %v4346, %v4342
        %v4595 = vpack.c.b16 %v4351, %v4347
        %v4596 = vpack.c.b16 %v4352, %v4348
        %v4597 = vpack.c.b16 %v4353, %v4349
        %v4598 = vpack.c.b16 %v4354, %v4350
        %v4599 = vpack.c.b16 %v4359, %v4355
        %v4600 = vpack.c.b16 %v4360, %v4356
        %v4601 = vpack.c.b16 %v4361, %v4357
        %v4602 = vpack.c.b16 %v4362, %v4358
        %v4603 = vpack.c.b16 %v4367, %v4363
        %v4604 = vpack.c.b16 %v4368, %v4364
        %v4605 = vpack.c.b16 %v4369, %v4365
        %v4606 = vpack.c.b16 %v4370, %v4366
        %v4607 = vpack.c.b16 %v4375, %v4371
        %v4608 = vpack.c.b16 %v4376, %v4372
        %v4609 = vpack.c.b16 %v4377, %v4373
        %v4610 = vpack.c.b16 %v4378, %v4374
        %v4611 = vpack.c.b16 %v4383, %v4379
        %v4612 = vpack.c.b16 %v4384, %v4380
        %v4613 = vpack.c.b16 %v4385, %v4381
        %v4614 = vpack.c.b16 %v4386, %v4382
        %v4615 = vpack.c.b16 %v4391, %v4387
        %v4616 = vpack.c.b16 %v4392, %v4388
        %v4617 = vpack.c.b16 %v4393, %v4389
        %v4618 = vpack.c.b16 %v4394, %v4390
        %v4619 = vpack.c.b16 %v4399, %v4395
        %v4620 = vpack.c.b16 %v4400, %v4396
        %v4621 = vpack.c.b16 %v4401, %v4397
        %v4622 = vpack.c.b16 %v4402, %v4398
        %v4623 = vpack.c.b16 %v4407, %v4403
        %v4624 = vpack.c.b16 %v4408, %v4404
        %v4625 = vpack.c.b16 %v4409, %v4405
        %v4626 = vpack.c.b16 %v4410, %v4406
        %v4627 = vpack.c.b16 %v4415, %v4411
        %v4628 = vpack.c.b16 %v4416, %v4412
        %v4629 = vpack.c.b16 %v4417, %v4413
        %v4630 = vpack.c.b16 %v4418, %v4414
        %v4631 = vpack.c.b16 %v4423, %v4419
        %v4632 = vpack.c.b16 %v4424, %v4420
        %v4633 = vpack.c.b16 %v4425, %v4421
        %v4634 = vpack.c.b16 %v4426, %v4422
        %v4635 = vpack.c.b16 %v4431, %v4427
        %v4636 = vpack.c.b16 %v4432, %v4428
        %v4637 = vpack.c.b16 %v4433, %v4429
        %v4638 = vpack.c.b16 %v4434, %v4430
        %v4639 = vpack.c.b16 %v4439, %v4435
        %v4640 = vpack.c.b16 %v4440, %v4436
        %v4641 = vpack.c.b16 %v4441, %v4437
        %v4642 = vpack.c.b16 %v4442, %v4438
        %v4643 = vpack.c.b16 %v4447, %v4443
        %v4644 = vpack.c.b16 %v4448, %v4444
        %v4645 = vpack.c.b16 %v4449, %v4445
        %v4646 = vpack.c.b16 %v4450, %v4446
        %v4647 = vpack.c.b16 %v4455, %v4451
        %v4648 = vpack.c.b16 %v4456, %v4452
        %v4649 = vpack.c.b16 %v4457, %v4453
        %v4650 = vpack.c.b16 %v4458, %v4454
        %v4651 = vpack.c.b16 %v4463, %v4459
        %v4652 = vpack.c.b16 %v4464, %v4460
        %v4653 = vpack.c.b16 %v4465, %v4461
        %v4654 = vpack.c.b16 %v4466, %v4462
        %v4655 = vpack.c.b16 %v4471, %v4467
        %v4656 = vpack.c.b16 %v4472, %v4468
        %v4657 = vpack.c.b16 %v4473, %v4469
        %v4658 = vpack.c.b16 %v4474, %v4470
        %v4659 = vpack.c.b16 %v4479, %v4475
        %v4660 = vpack.c.b16 %v4480, %v4476
        %v4661 = vpack.c.b16 %v4481, %v4477
        %v4662 = vpack.c.b16 %v4482, %v4478
        %v4663 = vpack.c.b16 %v4487, %v4483
        %v4664 = vpack.c.b16 %v4488, %v4484
        %v4665 = vpack.c.b16 %v4489, %v4485
        %v4666 = vpack.c.b16 %v4490, %v4486
        %v4667 = vpack.c.b16 %v4495, %v4491
        %v4668 = vpack.c.b16 %v4496, %v4492
        %v4669 = vpack.c.b16 %v4497, %v4493
        %v4670 = vpack.c.b16 %v4498, %v4494
        %v4671 = vpack.c.b16 %v4503, %v4499
        %v4672 = vpack.c.b16 %v4504, %v4500
        %v4673 = vpack.c.b16 %v4505, %v4501
        %v4674 = vpack.c.b16 %v4506, %v4502
        %v4675 = vpack.c.b16 %v4511, %v4507
        %v4676 = vpack.c.b16 %v4512, %v4508
        %v4677 = vpack.c.b16 %v4513, %v4509
        %v4678 = vpack.c.b16 %v4514, %v4510
        %v4679 = vpack.c.b16 %v4519, %v4515
        %v4680 = vpack.c.b16 %v4520, %v4516
        %v4681 = vpack.c.b16 %v4521, %v4517
        %v4682 = vpack.c.b16 %v4522, %v4518
        %v4683 = vpack.c.b16 %v4527, %v4523
        %v4684 = vpack.c.b16 %v4528, %v4524
        %v4685 = vpack.c.b16 %v4529, %v4525
        %v4686 = vpack.c.b16 %v4530, %v4526
        %v4687 = vpack.c.b16 %v4535, %v4531
        %v4688 = vpack.c.b16 %v4536, %v4532
        %v4689 = vpack.c.b16 %v4537, %v4533
        %v4690 = vpack.c.b16 %v4538, %v4534
        %v4691 = vpack.c.b16 %v4543, %v4539
        %v4692 = vpack.c.b16 %v4544, %v4540
        %v4693 = vpack.c.b16 %v4545, %v4541
        %v4694 = vpack.c.b16 %v4546, %v4542
        %v4695 = vpack.c.b16 %v4551, %v4547
        %v4696 = vpack.c.b16 %v4552, %v4548
        %v4697 = vpack.c.b16 %v4553, %v4549
        %v4698 = vpack.c.b16 %v4554, %v4550
        %v4844 = vsel %vm2576, %v4118, 0
        %4846 = vmatpush.bf16.msra.mxu0 %v4583
        %4847 = vmatpush.bf16.msra.mxu0 %v4579
        %4848 = vmatpush.bf16.msra.mxu0 %v4575
        %4849 = vmatpush.bf16.msra.mxu0 %v4571
        %4850 = vmatpush.bf16.msra.mxu0 %v4567
        %4851 = vmatpush.bf16.msra.mxu0 %v4563
        %4852 = vmatpush.bf16.msra.mxu0 %v4559
        %4853 = vmatpush.bf16.msra.mxu0 %v4555
        %4854 = vmatmul.bf16.gmra.mxu0 %v4114
        %v4855 = vpop.f32.mrf.mxu0
        %v4856 = vadd.f32 %v4091, %v4855
        %v4857 = vpop.f32.mrf.mxu0
        %v4858 = vadd.f32 %v4096, %v4857
        %4859 = vdwg.mxu0
        %4860 = vmatpush.bf16.msra.mxu0 %v4615
        %4861 = vmatpush.bf16.msra.mxu0 %v4611
        %4862 = vmatpush.bf16.msra.mxu0 %v4607
        %4863 = vmatpush.bf16.msra.mxu0 %v4603
        %4864 = vmatpush.bf16.msra.mxu0 %v4599
        %4865 = vmatpush.bf16.msra.mxu0 %v4595
        %4866 = vmatpush.bf16.msra.mxu0 %v4591
        %4867 = vmatpush.bf16.msra.mxu0 %v4587
        %4868 = vmatmul.bf16.gmra.mxu0 %v4115
        %v4869 = vpop.f32.mrf.mxu0
        %v4870 = vadd.f32 %v4856, %v4869
        %v4871 = vpop.f32.mrf.mxu0
        %v4872 = vadd.f32 %v4858, %v4871
        %4873 = vdwg.mxu0
        %4874 = vmatpush.bf16.msra.mxu0 %v4647
        %4875 = vmatpush.bf16.msra.mxu0 %v4643
        %4876 = vmatpush.bf16.msra.mxu0 %v4639
        %4877 = vmatpush.bf16.msra.mxu0 %v4635
        %4878 = vmatpush.bf16.msra.mxu0 %v4631
        %4879 = vmatpush.bf16.msra.mxu0 %v4627
        %4880 = vmatpush.bf16.msra.mxu0 %v4623
        %4881 = vmatpush.bf16.msra.mxu0 %v4619
        %4882 = vmatmul.bf16.gmra.mxu0 %v4116
        %v4883 = vpop.f32.mrf.mxu0
        %v4884 = vadd.f32 %v4870, %v4883
        %v4885 = vpop.f32.mrf.mxu0
        %v4886 = vadd.f32 %v4872, %v4885
        %4887 = vdwg.mxu0
        %4888 = vmatpush.bf16.msra.mxu0 %v4679
        %4889 = vmatpush.bf16.msra.mxu0 %v4675
        %4890 = vmatpush.bf16.msra.mxu0 %v4671
        %4891 = vmatpush.bf16.msra.mxu0 %v4667
        %4892 = vmatpush.bf16.msra.mxu0 %v4663
        %4893 = vmatpush.bf16.msra.mxu0 %v4659
        %4894 = vmatpush.bf16.msra.mxu0 %v4655
        %4895 = vmatpush.bf16.msra.mxu0 %v4651
        %4896 = vmatmul.bf16.gmra.mxu0 %v4117
        %v4897 = vpop.f32.mrf.mxu0
        %v4898 = vadd.f32 %v4884, %v4897
        %v4899 = vpop.f32.mrf.mxu0
        %v4900 = vadd.f32 %v4886, %v4899
        %4901 = vdwg.mxu0
        %4902 = vmatpush.bf16.msra.mxu0 0
        %4903 = vmatpush.bf16.msra.mxu0 0
        %4904 = vmatpush.bf16.msra.mxu0 0
        %4905 = vmatpush.bf16.msra.mxu0 0
        %4906 = vmatpush.bf16.msra.mxu0 %v4695
        %4907 = vmatpush.bf16.msra.mxu0 %v4691
        %4908 = vmatpush.bf16.msra.mxu0 %v4687
        %4909 = vmatpush.bf16.msra.mxu0 %v4683
        %4910 = vmatmul.bf16.gmra.mxu0 %v4844
        %v4911 = vpop.f32.mrf.mxu0
        %v4912 = vadd.f32 %v4898, %v4911
        %v4913 = vpop.f32.mrf.mxu0
        %v4914 = vadd.f32 %v4900, %v4913
        %4915 = vdwg.mxu0
        %4916 = vmatpush.bf16.msra.mxu0 %v4584
        %4917 = vmatpush.bf16.msra.mxu0 %v4580
        %4918 = vmatpush.bf16.msra.mxu0 %v4576
        %4919 = vmatpush.bf16.msra.mxu0 %v4572
        %4920 = vmatpush.bf16.msra.mxu0 %v4568
        %4921 = vmatpush.bf16.msra.mxu0 %v4564
        %4922 = vmatpush.bf16.msra.mxu0 %v4560
        %4923 = vmatpush.bf16.msra.mxu0 %v4556
        %4924 = vmatmul.bf16.gmra.mxu0 %v4114
        %v4925 = vpop.f32.mrf.mxu0
        %v4926 = vadd.f32 %v4091, %v4925
        %v4927 = vpop.f32.mrf.mxu0
        %v4928 = vadd.f32 %v4096, %v4927
        %4929 = vdwg.mxu0
        %4930 = vmatpush.bf16.msra.mxu0 %v4616
        %4931 = vmatpush.bf16.msra.mxu0 %v4612
        %4932 = vmatpush.bf16.msra.mxu0 %v4608
        %4933 = vmatpush.bf16.msra.mxu0 %v4604
        %4934 = vmatpush.bf16.msra.mxu0 %v4600
        %4935 = vmatpush.bf16.msra.mxu0 %v4596
        %4936 = vmatpush.bf16.msra.mxu0 %v4592
        %4937 = vmatpush.bf16.msra.mxu0 %v4588
        %4938 = vmatmul.bf16.gmra.mxu0 %v4115
        %v4939 = vpop.f32.mrf.mxu0
        %v4940 = vadd.f32 %v4926, %v4939
        %v4941 = vpop.f32.mrf.mxu0
        %v4942 = vadd.f32 %v4928, %v4941
        %4943 = vdwg.mxu0
        %4944 = vmatpush.bf16.msra.mxu0 %v4648
        %4945 = vmatpush.bf16.msra.mxu0 %v4644
        %4946 = vmatpush.bf16.msra.mxu0 %v4640
        %4947 = vmatpush.bf16.msra.mxu0 %v4636
        %4948 = vmatpush.bf16.msra.mxu0 %v4632
        %4949 = vmatpush.bf16.msra.mxu0 %v4628
        %4950 = vmatpush.bf16.msra.mxu0 %v4624
        %4951 = vmatpush.bf16.msra.mxu0 %v4620
        %4952 = vmatmul.bf16.gmra.mxu0 %v4116
        %v4953 = vpop.f32.mrf.mxu0
        %v4954 = vadd.f32 %v4940, %v4953
        %v4955 = vpop.f32.mrf.mxu0
        %v4956 = vadd.f32 %v4942, %v4955
        %4957 = vdwg.mxu0
        %4958 = vmatpush.bf16.msra.mxu0 %v4680
        %4959 = vmatpush.bf16.msra.mxu0 %v4676
        %4960 = vmatpush.bf16.msra.mxu0 %v4672
        %4961 = vmatpush.bf16.msra.mxu0 %v4668
        %4962 = vmatpush.bf16.msra.mxu0 %v4664
        %4963 = vmatpush.bf16.msra.mxu0 %v4660
        %4964 = vmatpush.bf16.msra.mxu0 %v4656
        %4965 = vmatpush.bf16.msra.mxu0 %v4652
        %4966 = vmatmul.bf16.gmra.mxu0 %v4117
        %v4967 = vpop.f32.mrf.mxu0
        %v4968 = vadd.f32 %v4954, %v4967
        %v4969 = vpop.f32.mrf.mxu0
        %v4970 = vadd.f32 %v4956, %v4969
        %4971 = vdwg.mxu0
        %4972 = vmatpush.bf16.msra.mxu0 0
        %4973 = vmatpush.bf16.msra.mxu0 0
        %4974 = vmatpush.bf16.msra.mxu0 0
        %4975 = vmatpush.bf16.msra.mxu0 0
        %4976 = vmatpush.bf16.msra.mxu0 %v4696
        %4977 = vmatpush.bf16.msra.mxu0 %v4692
        %4978 = vmatpush.bf16.msra.mxu0 %v4688
        %4979 = vmatpush.bf16.msra.mxu0 %v4684
        %4980 = vmatmul.bf16.gmra.mxu0 %v4844
        %v4981 = vpop.f32.mrf.mxu0
        %v4982 = vadd.f32 %v4968, %v4981
        %v4983 = vpop.f32.mrf.mxu0
        %v4984 = vadd.f32 %v4970, %v4983
        %4985 = vdwg.mxu0
        %4986 = vmatpush.bf16.msra.mxu0 %v4585
        %4987 = vmatpush.bf16.msra.mxu0 %v4581
        %4988 = vmatpush.bf16.msra.mxu0 %v4577
        %4989 = vmatpush.bf16.msra.mxu0 %v4573
        %4990 = vmatpush.bf16.msra.mxu0 %v4569
        %4991 = vmatpush.bf16.msra.mxu0 %v4565
        %4992 = vmatpush.bf16.msra.mxu0 %v4561
        %4993 = vmatpush.bf16.msra.mxu0 %v4557
        %4994 = vmatmul.bf16.gmra.mxu0 %v4114
        %v4995 = vpop.f32.mrf.mxu0
        %v4996 = vadd.f32 %v4091, %v4995
        %v4997 = vpop.f32.mrf.mxu0
        %v4998 = vadd.f32 %v4096, %v4997
        %4999 = vdwg.mxu0
        %5000 = vmatpush.bf16.msra.mxu0 %v4617
        %5001 = vmatpush.bf16.msra.mxu0 %v4613
        %5002 = vmatpush.bf16.msra.mxu0 %v4609
        %5003 = vmatpush.bf16.msra.mxu0 %v4605
        %5004 = vmatpush.bf16.msra.mxu0 %v4601
        %5005 = vmatpush.bf16.msra.mxu0 %v4597
        %5006 = vmatpush.bf16.msra.mxu0 %v4593
        %5007 = vmatpush.bf16.msra.mxu0 %v4589
        %5008 = vmatmul.bf16.gmra.mxu0 %v4115
        %v5009 = vpop.f32.mrf.mxu0
        %v5010 = vadd.f32 %v4996, %v5009
        %v5011 = vpop.f32.mrf.mxu0
        %v5012 = vadd.f32 %v4998, %v5011
        %5013 = vdwg.mxu0
        %5014 = vmatpush.bf16.msra.mxu0 %v4649
        %5015 = vmatpush.bf16.msra.mxu0 %v4645
        %5016 = vmatpush.bf16.msra.mxu0 %v4641
        %5017 = vmatpush.bf16.msra.mxu0 %v4637
        %5018 = vmatpush.bf16.msra.mxu0 %v4633
        %5019 = vmatpush.bf16.msra.mxu0 %v4629
        %5020 = vmatpush.bf16.msra.mxu0 %v4625
        %5021 = vmatpush.bf16.msra.mxu0 %v4621
        %5022 = vmatmul.bf16.gmra.mxu0 %v4116
        %v5023 = vpop.f32.mrf.mxu0
        %v5024 = vadd.f32 %v5010, %v5023
        %v5025 = vpop.f32.mrf.mxu0
        %v5026 = vadd.f32 %v5012, %v5025
        %5027 = vdwg.mxu0
        %5028 = vmatpush.bf16.msra.mxu0 %v4681
        %5029 = vmatpush.bf16.msra.mxu0 %v4677
        %5030 = vmatpush.bf16.msra.mxu0 %v4673
        %5031 = vmatpush.bf16.msra.mxu0 %v4669
        %5032 = vmatpush.bf16.msra.mxu0 %v4665
        %5033 = vmatpush.bf16.msra.mxu0 %v4661
        %5034 = vmatpush.bf16.msra.mxu0 %v4657
        %5035 = vmatpush.bf16.msra.mxu0 %v4653
        %5036 = vmatmul.bf16.gmra.mxu0 %v4117
        %v5037 = vpop.f32.mrf.mxu0
        %v5038 = vadd.f32 %v5024, %v5037
        %v5039 = vpop.f32.mrf.mxu0
        %v5040 = vadd.f32 %v5026, %v5039
        %5041 = vdwg.mxu0
        %5042 = vmatpush.bf16.msra.mxu0 0
        %5043 = vmatpush.bf16.msra.mxu0 0
        %5044 = vmatpush.bf16.msra.mxu0 0
        %5045 = vmatpush.bf16.msra.mxu0 0
        %5046 = vmatpush.bf16.msra.mxu0 %v4697
        %5047 = vmatpush.bf16.msra.mxu0 %v4693
        %5048 = vmatpush.bf16.msra.mxu0 %v4689
        %5049 = vmatpush.bf16.msra.mxu0 %v4685
        %5050 = vmatmul.bf16.gmra.mxu0 %v4844
        %v5051 = vpop.f32.mrf.mxu0
        %v5052 = vadd.f32 %v5038, %v5051
        %v5053 = vpop.f32.mrf.mxu0
        %v5054 = vadd.f32 %v5040, %v5053
        %5055 = vdwg.mxu0
        %5056 = vmatpush.bf16.msra.mxu0 %v4586
        %5057 = vmatpush.bf16.msra.mxu0 %v4582
        %5058 = vmatpush.bf16.msra.mxu0 %v4578
        %5059 = vmatpush.bf16.msra.mxu0 %v4574
        %5060 = vmatpush.bf16.msra.mxu0 %v4570
        %5061 = vmatpush.bf16.msra.mxu0 %v4566
        %5062 = vmatpush.bf16.msra.mxu0 %v4562
        %5063 = vmatpush.bf16.msra.mxu0 %v4558
        %5064 = vmatmul.bf16.gmra.mxu0 %v4114
        %v5065 = vpop.f32.mrf.mxu0
        %v5066 = vadd.f32 %v4091, %v5065
        %v5067 = vpop.f32.mrf.mxu0
        %v5068 = vadd.f32 %v4096, %v5067
        %5069 = vdwg.mxu0
        %5070 = vmatpush.bf16.msra.mxu0 %v4618
        %5071 = vmatpush.bf16.msra.mxu0 %v4614
        %5072 = vmatpush.bf16.msra.mxu0 %v4610
        %5073 = vmatpush.bf16.msra.mxu0 %v4606
        %5074 = vmatpush.bf16.msra.mxu0 %v4602
        %5075 = vmatpush.bf16.msra.mxu0 %v4598
        %5076 = vmatpush.bf16.msra.mxu0 %v4594
        %5077 = vmatpush.bf16.msra.mxu0 %v4590
        %5078 = vmatmul.bf16.gmra.mxu0 %v4115
        %v5079 = vpop.f32.mrf.mxu0
        %v5080 = vadd.f32 %v5066, %v5079
        %v5081 = vpop.f32.mrf.mxu0
        %v5082 = vadd.f32 %v5068, %v5081
        %5083 = vdwg.mxu0
        %5084 = vmatpush.bf16.msra.mxu0 %v4650
        %5085 = vmatpush.bf16.msra.mxu0 %v4646
        %5086 = vmatpush.bf16.msra.mxu0 %v4642
        %5087 = vmatpush.bf16.msra.mxu0 %v4638
        %5088 = vmatpush.bf16.msra.mxu0 %v4634
        %5089 = vmatpush.bf16.msra.mxu0 %v4630
        %5090 = vmatpush.bf16.msra.mxu0 %v4626
        %5091 = vmatpush.bf16.msra.mxu0 %v4622
        %5092 = vmatmul.bf16.gmra.mxu0 %v4116
        %v5093 = vpop.f32.mrf.mxu0
        %v5094 = vadd.f32 %v5080, %v5093
        %v5095 = vpop.f32.mrf.mxu0
        %v5096 = vadd.f32 %v5082, %v5095
        %5097 = vdwg.mxu0
        %5098 = vmatpush.bf16.msra.mxu0 %v4682
        %5099 = vmatpush.bf16.msra.mxu0 %v4678
        %5100 = vmatpush.bf16.msra.mxu0 %v4674
        %5101 = vmatpush.bf16.msra.mxu0 %v4670
        %5102 = vmatpush.bf16.msra.mxu0 %v4666
        %5103 = vmatpush.bf16.msra.mxu0 %v4662
        %5104 = vmatpush.bf16.msra.mxu0 %v4658
        %5105 = vmatpush.bf16.msra.mxu0 %v4654
        %5106 = vmatmul.bf16.gmra.mxu0 %v4117
        %v5107 = vpop.f32.mrf.mxu0
        %v5108 = vadd.f32 %v5094, %v5107
        %v5109 = vpop.f32.mrf.mxu0
        %v5110 = vadd.f32 %v5096, %v5109
        %5111 = vdwg.mxu0
        %5112 = vmatpush.bf16.msra.mxu0 0
        %5113 = vmatpush.bf16.msra.mxu0 0
        %5114 = vmatpush.bf16.msra.mxu0 0
        %5115 = vmatpush.bf16.msra.mxu0 0
        %5116 = vmatpush.bf16.msra.mxu0 %v4698
        %5117 = vmatpush.bf16.msra.mxu0 %v4694
        %5118 = vmatpush.bf16.msra.mxu0 %v4690
        %5119 = vmatpush.bf16.msra.mxu0 %v4686
        %5120 = vmatmul.bf16.gmra.mxu0 %v4844
        %v5121 = vpop.f32.mrf.mxu0
        %v5122 = vadd.f32 %v5108, %v5121
        %v5123 = vpop.f32.mrf.mxu0
        %v5124 = vadd.f32 %v5110, %v5123
        %5125 = vdwg.mxu0
        %v5126 = vmax.f32 %v4912, 0.0
        %v5127 = vmax.f32 %v4982, 0.0
        %v5128 = vmax.f32 %v5052, 0.0
        %v5129 = vmax.f32 %v5122, 0.0
        %v5130 = vmax.f32 %v4914, 0.0
        %v5131 = vmax.f32 %v4984, 0.0
        %v5132 = vmax.f32 %v5054, 0.0
        %v5133 = vmax.f32 %v5124, 0.0
        %5134 = vst [vmem:[%s856] sm:$0xff] %v5126
        %5135 = vst [vmem:[%s856 + $0x8] sm:$0xff] %v5127
        %5136 = vst [vmem:[%s856 + $0x10] sm:$0xff] %v5128
        %vm5137 = vcmask 785408
        %5138 = vst.msk [vmem:[%s856 + $0x18] sm:$0xff] %vm5137, %v5129
        %5139 = vst [vmem:[%s856 + $0x20] sm:$0xff] %v5130
        %5140 = vst [vmem:[%s856 + $0x28] sm:$0xff] %v5131
        %5141 = vst [vmem:[%s856 + $0x30] sm:$0xff] %v5132
        %5142 = vst.msk [vmem:[%s856 + $0x38] sm:$0xff] %vm5137, %v5133
        %v5143 = vld [vmem:[%s747] sm:$0xff]
        %v5144 = vld [vmem:[%s747 + $0x8] sm:$0xff]
        %v5145 = vld [vmem:[%s747 + $0x10] sm:$0xf]
        %v5146 = vld [vmem:[%s747 + $0x14] sm:$0xff]
        %v5147 = vld [vmem:[%s747 + $0x1c] sm:$0xff]
        %v5148 = vld [vmem:[%s747 + $0x24] sm:$0xf]
        %5153 = vrot.lane.b32.xlu0 %v5143, 53
        %v5154 = vpop.permute.xlu0 %5153
        %5155 = vrot.lane.b32.xlu0 %v5144, 53
        %v5156 = vpop.permute.xlu0 %5155
        %5157 = vrot.lane.b32.xlu0 %v5146, 53
        %v5158 = vpop.permute.xlu0 %5157
        %5159 = vrot.lane.b32.xlu0 %v5147, 53
        %v5160 = vpop.permute.xlu0 %5159
        %v5161 = vrot.slane %v5154, 4
        %v5162 = vrot.slane %v5156, 4
        %v5163 = vrot.slane %v5158, 4
        %v5164 = vrot.slane %v5160, 4
        %v5165 = vsel %vm906, %v5161, %v5162
        %v5166 = vsel %vm908, %v5154, %v5165
        %v5167 = vsel %vm908, %v5156, %v5162
        %v5168 = vsel %vm906, %v5163, %v5164
        %v5169 = vsel %vm908, %v5158, %v5168
        %v5170 = vsel %vm908, %v5160, %v5164
        %5175 = vst [vmem:[#allocation4] sm:$0xff] %v5166
        %5176 = vst [vmem:[#allocation4 + $0x8] sm:$0xf] %v5167
        %5177 = vst [vmem:[#allocation4 + $0xc] sm:$0xff] %v5169
        %5178 = vst [vmem:[#allocation4 + $0x14] sm:$0xf] %v5170
        %5179 = vrot.lane.b32.xlu0 %v5143, 52
        %v5180 = vpop.permute.xlu0 %5179
        %5181 = vrot.lane.b32.xlu0 %v5144, 52
        %v5182 = vpop.permute.xlu0 %5181
        %5183 = vrot.lane.b32.xlu0 %v5146, 52
        %v5184 = vpop.permute.xlu0 %5183
        %5185 = vrot.lane.b32.xlu0 %v5147, 52
        %v5186 = vpop.permute.xlu0 %5185
        %v5187 = vrot.slane %v5180, 4
        %v5188 = vrot.slane %v5182, 4
        %v5189 = vrot.slane %v5184, 4
        %v5190 = vrot.slane %v5186, 4
        %v5191 = vsel %vm906, %v5187, %v5188
        %v5192 = vsel %vm935, %v5180, %v5191
        %v5193 = vsel %vm935, %v5182, %v5188
        %v5194 = vsel %vm906, %v5189, %v5190
        %v5195 = vsel %vm935, %v5184, %v5194
        %v5196 = vsel %vm935, %v5186, %v5190
        %5201 = vst [vmem:[#allocation4 + $0x18] sm:$0xff] %v5192
        %5202 = vst [vmem:[#allocation4 + $0x20] sm:$0xf] %v5193
        %5203 = vst [vmem:[#allocation4 + $0x24] sm:$0xff] %v5195
        %5204 = vst [vmem:[#allocation4 + $0x2c] sm:$0xf] %v5196
        %5205 = vrot.lane.b32.xlu0 %v5143, 51
        %v5206 = vpop.permute.xlu0 %5205
        %5207 = vrot.lane.b32.xlu0 %v5144, 51
        %v5208 = vpop.permute.xlu0 %5207
        %5209 = vrot.lane.b32.xlu0 %v5146, 51
        %v5210 = vpop.permute.xlu0 %5209
        %5211 = vrot.lane.b32.xlu0 %v5147, 51
        %v5212 = vpop.permute.xlu0 %5211
        %v5213 = vrot.slane %v5206, 4
        %v5214 = vrot.slane %v5208, 4
        %v5215 = vrot.slane %v5210, 4
        %v5216 = vrot.slane %v5212, 4
        %v5217 = vsel %vm906, %v5213, %v5214
        %v5218 = vsel %vm962, %v5206, %v5217
        %v5219 = vsel %vm962, %v5208, %v5214
        %v5220 = vsel %vm906, %v5215, %v5216
        %v5221 = vsel %vm962, %v5210, %v5220
        %v5222 = vsel %vm962, %v5212, %v5216
        %5227 = vst [vmem:[#allocation4 + $0x30] sm:$0xff] %v5218
        %5228 = vst [vmem:[#allocation4 + $0x38] sm:$0xf] %v5219
        %5229 = vst [vmem:[#allocation4 + $0x3c] sm:$0xff] %v5221
        %5230 = vst [vmem:[#allocation4 + $0x44] sm:$0xf] %v5222
        %5231 = vrot.lane.b32.xlu0 %v5143, 29
        %v5232 = vpop.permute.xlu0 %5231
        %5233 = vrot.lane.b32.xlu0 %v5144, 29
        %v5234 = vpop.permute.xlu0 %5233
        %5235 = vrot.lane.b32.xlu0 %v5146, 29
        %v5236 = vpop.permute.xlu0 %5235
        %5237 = vrot.lane.b32.xlu0 %v5147, 29
        %v5238 = vpop.permute.xlu0 %5237
        %v5239 = vrot.slane %v5232, 4
        %v5240 = vrot.slane %v5234, 4
        %v5241 = vrot.slane %v5236, 4
        %v5242 = vrot.slane %v5238, 4
        %v5243 = vsel %vm906, %v5239, %v5240
        %v5244 = vsel %vm989, %v5232, %v5243
        %v5245 = vsel %vm989, %v5234, %v5240
        %v5246 = vsel %vm906, %v5241, %v5242
        %v5247 = vsel %vm989, %v5236, %v5246
        %v5248 = vsel %vm989, %v5238, %v5242
        %5253 = vst [vmem:[#allocation4 + $0x48] sm:$0xff] %v5244
        %5254 = vst [vmem:[#allocation4 + $0x50] sm:$0xf] %v5245
        %5255 = vst [vmem:[#allocation4 + $0x54] sm:$0xff] %v5247
        %5256 = vst [vmem:[#allocation4 + $0x5c] sm:$0xf] %v5248
        %5257 = vrot.lane.b32.xlu0 %v5143, 28
        %v5258 = vpop.permute.xlu0 %5257
        %5259 = vrot.lane.b32.xlu0 %v5144, 28
        %v5260 = vpop.permute.xlu0 %5259
        %5261 = vrot.lane.b32.xlu0 %v5146, 28
        %v5262 = vpop.permute.xlu0 %5261
        %5263 = vrot.lane.b32.xlu0 %v5147, 28
        %v5264 = vpop.permute.xlu0 %5263
        %v5265 = vrot.slane %v5258, 4
        %v5266 = vrot.slane %v5260, 4
        %v5267 = vrot.slane %v5262, 4
        %v5268 = vrot.slane %v5264, 4
        %v5269 = vsel %vm906, %v5265, %v5266
        %v5270 = vsel %vm1016, %v5258, %v5269
        %v5271 = vsel %vm1016, %v5260, %v5266
        %v5272 = vsel %vm906, %v5267, %v5268
        %v5273 = vsel %vm1016, %v5262, %v5272
        %v5274 = vsel %vm1016, %v5264, %v5268
        %5279 = vst [vmem:[#allocation4 + $0x60] sm:$0xff] %v5270
        %5280 = vst [vmem:[#allocation4 + $0x68] sm:$0xf] %v5271
        %5281 = vst [vmem:[#allocation4 + $0x6c] sm:$0xff] %v5273
        %5282 = vst [vmem:[#allocation4 + $0x74] sm:$0xf] %v5274
        %5283 = vrot.lane.b32.xlu0 %v5143, 27
        %v5284 = vpop.permute.xlu0 %5283
        %5285 = vrot.lane.b32.xlu0 %v5144, 27
        %v5286 = vpop.permute.xlu0 %5285
        %5287 = vrot.lane.b32.xlu0 %v5146, 27
        %v5288 = vpop.permute.xlu0 %5287
        %5289 = vrot.lane.b32.xlu0 %v5147, 27
        %v5290 = vpop.permute.xlu0 %5289
        %v5291 = vrot.slane %v5284, 4
        %v5292 = vrot.slane %v5286, 4
        %v5293 = vrot.slane %v5288, 4
        %v5294 = vrot.slane %v5290, 4
        %v5295 = vsel %vm906, %v5291, %v5292
        %v5296 = vsel %vm1043, %v5284, %v5295
        %v5297 = vsel %vm1043, %v5286, %v5292
        %v5298 = vsel %vm906, %v5293, %v5294
        %v5299 = vsel %vm1043, %v5288, %v5298
        %v5300 = vsel %vm1043, %v5290, %v5294
        %5305 = vst [vmem:[#allocation4 + $0x78] sm:$0xff] %v5296
        %5306 = vst [vmem:[#allocation4 + $0x80] sm:$0xf] %v5297
        %5307 = vst [vmem:[#allocation4 + $0x84] sm:$0xff] %v5299
        %5308 = vst [vmem:[#allocation4 + $0x8c] sm:$0xf] %v5300
        %5309 = vrot.lane.b32.xlu0 %v5143, 5
        %v5310 = vpop.permute.xlu0 %5309
        %5311 = vrot.lane.b32.xlu0 %v5144, 5
        %v5312 = vpop.permute.xlu0 %5311
        %5313 = vrot.lane.b32.xlu0 %v5146, 5
        %v5314 = vpop.permute.xlu0 %5313
        %5315 = vrot.lane.b32.xlu0 %v5147, 5
        %v5316 = vpop.permute.xlu0 %5315
        %v5317 = vrot.slane %v5310, 4
        %v5318 = vrot.slane %v5312, 4
        %v5319 = vrot.slane %v5314, 4
        %v5320 = vrot.slane %v5316, 4
        %v5321 = vsel %vm906, %v5317, %v5318
        %v5322 = vsel %vm1070, %v5310, %v5321
        %v5323 = vsel %vm1070, %v5312, %v5318
        %v5324 = vsel %vm906, %v5319, %v5320
        %v5325 = vsel %vm1070, %v5314, %v5324
        %v5326 = vsel %vm1070, %v5316, %v5320
        %5331 = vst [vmem:[#allocation4 + $0x90] sm:$0xff] %v5322
        %5332 = vst [vmem:[#allocation4 + $0x98] sm:$0xf] %v5323
        %5333 = vst [vmem:[#allocation4 + $0x9c] sm:$0xff] %v5325
        %5334 = vst [vmem:[#allocation4 + $0xa4] sm:$0xf] %v5326
        %5335 = vrot.lane.b32.xlu0 %v5143, 4
        %v5336 = vpop.permute.xlu0 %5335
        %5337 = vrot.lane.b32.xlu0 %v5144, 4
        %v5338 = vpop.permute.xlu0 %5337
        %5339 = vrot.lane.b32.xlu0 %v5146, 4
        %v5340 = vpop.permute.xlu0 %5339
        %5341 = vrot.lane.b32.xlu0 %v5147, 4
        %v5342 = vpop.permute.xlu0 %5341
        %v5343 = vrot.slane %v5336, 4
        %v5344 = vrot.slane %v5338, 4
        %v5345 = vrot.slane %v5340, 4
        %v5346 = vrot.slane %v5342, 4
        %v5347 = vsel %vm906, %v5343, %v5344
        %v5348 = vsel %vm1097, %v5336, %v5347
        %v5349 = vsel %vm1097, %v5338, %v5344
        %v5350 = vsel %vm906, %v5345, %v5346
        %v5351 = vsel %vm1097, %v5340, %v5350
        %v5352 = vsel %vm1097, %v5342, %v5346
        %5357 = vst [vmem:[#allocation4 + $0xa8] sm:$0xff] %v5348
        %5358 = vst [vmem:[#allocation4 + $0xb0] sm:$0xf] %v5349
        %5359 = vst [vmem:[#allocation4 + $0xb4] sm:$0xff] %v5351
        %5360 = vst [vmem:[#allocation4 + $0xbc] sm:$0xf] %v5352
        %5361 = vrot.lane.b32.xlu0 %v5143, 3
        %v5362 = vpop.permute.xlu0 %5361
        %5363 = vrot.lane.b32.xlu0 %v5144, 3
        %v5364 = vpop.permute.xlu0 %5363
        %5365 = vrot.lane.b32.xlu0 %v5146, 3
        %v5366 = vpop.permute.xlu0 %5365
        %5367 = vrot.lane.b32.xlu0 %v5147, 3
        %v5368 = vpop.permute.xlu0 %5367
        %v5369 = vrot.slane %v5362, 4
        %v5370 = vrot.slane %v5364, 4
        %v5371 = vrot.slane %v5366, 4
        %v5372 = vrot.slane %v5368, 4
        %v5373 = vsel %vm906, %v5369, %v5370
        %v5374 = vsel %vm1124, %v5362, %v5373
        %v5375 = vsel %vm1124, %v5364, %v5370
        %v5376 = vsel %vm906, %v5371, %v5372
        %v5377 = vsel %vm1124, %v5366, %v5376
        %v5378 = vsel %vm1124, %v5368, %v5372
        %5383 = vst [vmem:[#allocation4 + $0xc0] sm:$0xff] %v5374
        %5384 = vst [vmem:[#allocation4 + $0xc8] sm:$0xf] %v5375
        %5385 = vst [vmem:[#allocation4 + $0xcc] sm:$0xff] %v5377
        %5386 = vst [vmem:[#allocation4 + $0xd4] sm:$0xf] %v5378
        %5387 = vrot.lane.b32.xlu0 %v5143, 78
        %v5388 = vpop.permute.xlu0 %5387
        %5389 = vrot.lane.b32.xlu0 %v5144, 78
        %v5390 = vpop.permute.xlu0 %5389
        %5391 = vrot.lane.b32.xlu0 %v5146, 78
        %v5392 = vpop.permute.xlu0 %5391
        %5393 = vrot.lane.b32.xlu0 %v5147, 78
        %v5394 = vpop.permute.xlu0 %5393
        %v5395 = vrot.slane %v5388, 4
        %v5396 = vrot.slane %v5390, 4
        %v5397 = vrot.slane %v5392, 4
        %v5398 = vrot.slane %v5394, 4
        %v5399 = vsel %vm906, %v5395, %v5396
        %v5400 = vsel %vm1151, %v5388, %v5399
        %v5401 = vsel %vm1151, %v5390, %v5396
        %v5402 = vsel %vm906, %v5397, %v5398
        %v5403 = vsel %vm1151, %v5392, %v5402
        %v5404 = vsel %vm1151, %v5394, %v5398
        %5409 = vst [vmem:[#allocation4 + $0xd8] sm:$0xff] %v5400
        %5410 = vst [vmem:[#allocation4 + $0xe0] sm:$0xf] %v5401
        %5411 = vst [vmem:[#allocation4 + $0xe4] sm:$0xff] %v5403
        %5412 = vst [vmem:[#allocation4 + $0xec] sm:$0xf] %v5404
        %5413 = vrot.lane.b32.xlu0 %v5143, 76
        %v5414 = vpop.permute.xlu0 %5413
        %5415 = vrot.lane.b32.xlu0 %v5144, 76
        %v5416 = vpop.permute.xlu0 %5415
        %5417 = vrot.lane.b32.xlu0 %v5146, 76
        %v5418 = vpop.permute.xlu0 %5417
        %5419 = vrot.lane.b32.xlu0 %v5147, 76
        %v5420 = vpop.permute.xlu0 %5419
        %v5421 = vrot.slane %v5414, 4
        %v5422 = vrot.slane %v5416, 4
        %v5423 = vrot.slane %v5418, 4
        %v5424 = vrot.slane %v5420, 4
        %v5425 = vsel %vm906, %v5421, %v5422
        %v5426 = vsel %vm1178, %v5414, %v5425
        %v5427 = vsel %vm1178, %v5416, %v5422
        %v5428 = vsel %vm906, %v5423, %v5424
        %v5429 = vsel %vm1178, %v5418, %v5428
        %v5430 = vsel %vm1178, %v5420, %v5424
        %5435 = vst [vmem:[#allocation4 + $0xf0] sm:$0xff] %v5426
        %5436 = vst [vmem:[#allocation4 + $0xf8] sm:$0xf] %v5427
        %5437 = vst [vmem:[#allocation4 + $0xfc] sm:$0xff] %v5429
        %5438 = vst [vmem:[#allocation4 + $0x104] sm:$0xf] %v5430
        %5439 = vrot.lane.b32.xlu0 %v5143, 74
        %v5440 = vpop.permute.xlu0 %5439
        %5441 = vrot.lane.b32.xlu0 %v5144, 74
        %v5442 = vpop.permute.xlu0 %5441
        %5443 = vrot.lane.b32.xlu0 %v5146, 74
        %v5444 = vpop.permute.xlu0 %5443
        %5445 = vrot.lane.b32.xlu0 %v5147, 74
        %v5446 = vpop.permute.xlu0 %5445
        %v5447 = vrot.slane %v5440, 4
        %v5448 = vrot.slane %v5442, 4
        %v5449 = vrot.slane %v5444, 4
        %v5450 = vrot.slane %v5446, 4
        %v5451 = vsel %vm906, %v5447, %v5448
        %v5452 = vsel %vm1205, %v5440, %v5451
        %v5453 = vsel %vm1205, %v5442, %v5448
        %v5454 = vsel %vm906, %v5449, %v5450
        %v5455 = vsel %vm1205, %v5444, %v5454
        %v5456 = vsel %vm1205, %v5446, %v5450
        %5461 = vst [vmem:[#allocation4 + $0x108] sm:$0xff] %v5452
        %5462 = vst [vmem:[#allocation4 + $0x110] sm:$0xf] %v5453
        %5463 = vst [vmem:[#allocation4 + $0x114] sm:$0xff] %v5455
        %5464 = vst [vmem:[#allocation4 + $0x11c] sm:$0xf] %v5456
        %5465 = vrot.lane.b32.xlu0 %v5143, 30
        %v5466 = vpop.permute.xlu0 %5465
        %5467 = vrot.lane.b32.xlu0 %v5144, 30
        %v5468 = vpop.permute.xlu0 %5467
        %5469 = vrot.lane.b32.xlu0 %v5146, 30
        %v5470 = vpop.permute.xlu0 %5469
        %5471 = vrot.lane.b32.xlu0 %v5147, 30
        %v5472 = vpop.permute.xlu0 %5471
        %v5473 = vrot.slane %v5466, 4
        %v5474 = vrot.slane %v5468, 4
        %v5475 = vrot.slane %v5470, 4
        %v5476 = vrot.slane %v5472, 4
        %v5477 = vsel %vm906, %v5473, %v5474
        %v5478 = vsel %vm1232, %v5466, %v5477
        %v5479 = vsel %vm1232, %v5468, %v5474
        %v5480 = vsel %vm906, %v5475, %v5476
        %v5481 = vsel %vm1232, %v5470, %v5480
        %v5482 = vsel %vm1232, %v5472, %v5476
        %5487 = vst [vmem:[#allocation4 + $0x120] sm:$0xff] %v5478
        %5488 = vst [vmem:[#allocation4 + $0x128] sm:$0xf] %v5479
        %5489 = vst [vmem:[#allocation4 + $0x12c] sm:$0xff] %v5481
        %5490 = vst [vmem:[#allocation4 + $0x134] sm:$0xf] %v5482
        %5491 = vst [vmem:[#allocation4 + $0x138] sm:$0xff] %v5270
        %5492 = vst [vmem:[#allocation4 + $0x140] sm:$0xf] %v5271
        %5493 = vst [vmem:[#allocation4 + $0x144] sm:$0xff] %v5273
        %5494 = vst [vmem:[#allocation4 + $0x14c] sm:$0xf] %v5274
        %5495 = vrot.lane.b32.xlu0 %v5143, 26
        %v5496 = vpop.permute.xlu0 %5495
        %5497 = vrot.lane.b32.xlu0 %v5144, 26
        %v5498 = vpop.permute.xlu0 %5497
        %5499 = vrot.lane.b32.xlu0 %v5146, 26
        %v5500 = vpop.permute.xlu0 %5499
        %5501 = vrot.lane.b32.xlu0 %v5147, 26
        %v5502 = vpop.permute.xlu0 %5501
        %v5503 = vrot.slane %v5496, 4
        %v5504 = vrot.slane %v5498, 4
        %v5505 = vrot.slane %v5500, 4
        %v5506 = vrot.slane %v5502, 4
        %v5507 = vsel %vm906, %v5503, %v5504
        %v5508 = vsel %vm1263, %v5496, %v5507
        %v5509 = vsel %vm1263, %v5498, %v5504
        %v5510 = vsel %vm906, %v5505, %v5506
        %v5511 = vsel %vm1263, %v5500, %v5510
        %v5512 = vsel %vm1263, %v5502, %v5506
        %5517 = vst [vmem:[#allocation4 + $0x150] sm:$0xff] %v5508
        %5518 = vst [vmem:[#allocation4 + $0x158] sm:$0xf] %v5509
        %5519 = vst [vmem:[#allocation4 + $0x15c] sm:$0xff] %v5511
        %5520 = vst [vmem:[#allocation4 + $0x164] sm:$0xf] %v5512
        %5523 = vrot.lane.b32.xlu0 %v5143, 110
        %v5524 = vpop.permute.xlu0 %5523
        %5525 = vrot.lane.b32.xlu0 %v5144, 110
        %v5526 = vpop.permute.xlu0 %5525
        %5527 = vrot.lane.b32.xlu0 %v5145, 110
        %v5528 = vpop.permute.xlu0 %5527
        %5529 = vrot.lane.b32.xlu0 %v5146, 110
        %v5530 = vpop.permute.xlu0 %5529
        %5531 = vrot.lane.b32.xlu0 %v5147, 110
        %v5532 = vpop.permute.xlu0 %5531
        %5533 = vrot.lane.b32.xlu0 %v5148, 110
        %v5534 = vpop.permute.xlu0 %5533
        %v5535 = vrot.slane %v5524, 4
        %v5536 = vrot.slane %v5526, 4
        %v5537 = vrot.slane %v5530, 4
        %v5538 = vrot.slane %v5532, 4
        %v5539 = vsel %vm906, %v5535, %v5536
        %v5540 = vsel %vm1296, %v5539, %v5526
        %v5541 = vsel %vm1296, %v5536, %v5528
        %v5542 = vsel %vm906, %v5537, %v5538
        %v5543 = vsel %vm1296, %v5542, %v5532
        %v5544 = vsel %vm1296, %v5538, %v5534
        %5549 = vst [vmem:[#allocation4 + $0x168] sm:$0xff] %v5540
        %5550 = vst [vmem:[#allocation4 + $0x170] sm:$0xf] %v5541
        %5551 = vst [vmem:[#allocation4 + $0x174] sm:$0xff] %v5543
        %5552 = vst [vmem:[#allocation4 + $0x17c] sm:$0xf] %v5544
        %5553 = vrot.lane.b32.xlu0 %v5143, 108
        %v5554 = vpop.permute.xlu0 %5553
        %5555 = vrot.lane.b32.xlu0 %v5144, 108
        %v5556 = vpop.permute.xlu0 %5555
        %5557 = vrot.lane.b32.xlu0 %v5145, 108
        %v5558 = vpop.permute.xlu0 %5557
        %5559 = vrot.lane.b32.xlu0 %v5146, 108
        %v5560 = vpop.permute.xlu0 %5559
        %5561 = vrot.lane.b32.xlu0 %v5147, 108
        %v5562 = vpop.permute.xlu0 %5561
        %5563 = vrot.lane.b32.xlu0 %v5148, 108
        %v5564 = vpop.permute.xlu0 %5563
        %v5565 = vrot.slane %v5554, 4
        %v5566 = vrot.slane %v5556, 4
        %v5567 = vrot.slane %v5560, 4
        %v5568 = vrot.slane %v5562, 4
        %v5569 = vsel %vm906, %v5565, %v5566
        %v5570 = vsel %vm1327, %v5569, %v5556
        %v5571 = vsel %vm1327, %v5566, %v5558
        %v5572 = vsel %vm906, %v5567, %v5568
        %v5573 = vsel %vm1327, %v5572, %v5562
        %v5574 = vsel %vm1327, %v5568, %v5564
        %5579 = vst [vmem:[#allocation4 + $0x180] sm:$0xff] %v5570
        %5580 = vst [vmem:[#allocation4 + $0x188] sm:$0xf] %v5571
        %5581 = vst [vmem:[#allocation4 + $0x18c] sm:$0xff] %v5573
        %5582 = vst [vmem:[#allocation4 + $0x194] sm:$0xf] %v5574
        %5583 = vrot.lane.b32.xlu0 %v5143, 106
        %v5584 = vpop.permute.xlu0 %5583
        %5585 = vrot.lane.b32.xlu0 %v5144, 106
        %v5586 = vpop.permute.xlu0 %5585
        %5587 = vrot.lane.b32.xlu0 %v5145, 106
        %v5588 = vpop.permute.xlu0 %5587
        %5589 = vrot.lane.b32.xlu0 %v5146, 106
        %v5590 = vpop.permute.xlu0 %5589
        %5591 = vrot.lane.b32.xlu0 %v5147, 106
        %v5592 = vpop.permute.xlu0 %5591
        %5593 = vrot.lane.b32.xlu0 %v5148, 106
        %v5594 = vpop.permute.xlu0 %5593
        %v5595 = vrot.slane %v5584, 4
        %v5596 = vrot.slane %v5586, 4
        %v5597 = vrot.slane %v5590, 4
        %v5598 = vrot.slane %v5592, 4
        %v5599 = vsel %vm906, %v5595, %v5596
        %v5600 = vsel %vm1358, %v5599, %v5586
        %v5601 = vsel %vm1358, %v5596, %v5588
        %v5602 = vsel %vm906, %v5597, %v5598
        %v5603 = vsel %vm1358, %v5602, %v5592
        %v5604 = vsel %vm1358, %v5598, %v5594
        %5609 = vst [vmem:[#allocation4 + $0x198] sm:$0xff] %v5600
        %5610 = vst [vmem:[#allocation4 + $0x1a0] sm:$0xf] %v5601
        %5611 = vst [vmem:[#allocation4 + $0x1a4] sm:$0xff] %v5603
        %5612 = vst [vmem:[#allocation4 + $0x1ac] sm:$0xf] %v5604
        %5613 = vrot.lane.b32.xlu0 %v5143, 103
        %v5614 = vpop.permute.xlu0 %5613
        %5615 = vrot.lane.b32.xlu0 %v5144, 103
        %v5616 = vpop.permute.xlu0 %5615
        %5617 = vrot.lane.b32.xlu0 %v5146, 103
        %v5618 = vpop.permute.xlu0 %5617
        %5619 = vrot.lane.b32.xlu0 %v5147, 103
        %v5620 = vpop.permute.xlu0 %5619
        %v5621 = vrot.slane %v5614, 4
        %v5622 = vrot.slane %v5616, 4
        %v5623 = vrot.slane %v5618, 4
        %v5624 = vrot.slane %v5620, 4
        %v5625 = vsel %vm906, %v5621, %v5622
        %v5626 = vsel %vm1385, %v5614, %v5625
        %v5627 = vsel %vm1385, %v5616, %v5622
        %v5628 = vsel %vm906, %v5623, %v5624
        %v5629 = vsel %vm1385, %v5618, %v5628
        %v5630 = vsel %vm1385, %v5620, %v5624
        %5635 = vst [vmem:[#allocation4 + $0x1b0] sm:$0xff] %v5626
        %5636 = vst [vmem:[#allocation4 + $0x1b8] sm:$0xf] %v5627
        %5637 = vst [vmem:[#allocation4 + $0x1bc] sm:$0xff] %v5629
        %5638 = vst [vmem:[#allocation4 + $0x1c4] sm:$0xf] %v5630
        %5639 = vrot.lane.b32.xlu0 %v5143, 100
        %v5640 = vpop.permute.xlu0 %5639
        %5641 = vrot.lane.b32.xlu0 %v5144, 100
        %v5642 = vpop.permute.xlu0 %5641
        %5643 = vrot.lane.b32.xlu0 %v5146, 100
        %v5644 = vpop.permute.xlu0 %5643
        %5645 = vrot.lane.b32.xlu0 %v5147, 100
        %v5646 = vpop.permute.xlu0 %5645
        %v5647 = vrot.slane %v5640, 4
        %v5648 = vrot.slane %v5642, 4
        %v5649 = vrot.slane %v5644, 4
        %v5650 = vrot.slane %v5646, 4
        %v5651 = vsel %vm906, %v5647, %v5648
        %v5652 = vsel %vm1412, %v5640, %v5651
        %v5653 = vsel %vm1412, %v5642, %v5648
        %v5654 = vsel %vm906, %v5649, %v5650
        %v5655 = vsel %vm1412, %v5644, %v5654
        %v5656 = vsel %vm1412, %v5646, %v5650
        %5661 = vst [vmem:[#allocation4 + $0x1c8] sm:$0xff] %v5652
        %5662 = vst [vmem:[#allocation4 + $0x1d0] sm:$0xf] %v5653
        %5663 = vst [vmem:[#allocation4 + $0x1d4] sm:$0xff] %v5655
        %5664 = vst [vmem:[#allocation4 + $0x1dc] sm:$0xf] %v5656
        %5665 = vrot.lane.b32.xlu0 %v5143, 97
        %v5666 = vpop.permute.xlu0 %5665
        %5667 = vrot.lane.b32.xlu0 %v5144, 97
        %v5668 = vpop.permute.xlu0 %5667
        %5669 = vrot.lane.b32.xlu0 %v5146, 97
        %v5670 = vpop.permute.xlu0 %5669
        %5671 = vrot.lane.b32.xlu0 %v5147, 97
        %v5672 = vpop.permute.xlu0 %5671
        %v5673 = vrot.slane %v5666, 4
        %v5674 = vrot.slane %v5668, 4
        %v5675 = vrot.slane %v5670, 4
        %v5676 = vrot.slane %v5672, 4
        %v5677 = vsel %vm906, %v5673, %v5674
        %v5678 = vsel %vm1439, %v5666, %v5677
        %v5679 = vsel %vm1439, %v5668, %v5674
        %v5680 = vsel %vm906, %v5675, %v5676
        %v5681 = vsel %vm1439, %v5670, %v5680
        %v5682 = vsel %vm1439, %v5672, %v5676
        %5687 = vst [vmem:[#allocation4 + $0x1e0] sm:$0xff] %v5678
        %5688 = vst [vmem:[#allocation4 + $0x1e8] sm:$0xf] %v5679
        %5689 = vst [vmem:[#allocation4 + $0x1ec] sm:$0xff] %v5681
        %5690 = vst [vmem:[#allocation4 + $0x1f4] sm:$0xf] %v5682
        %5691 = vrot.lane.b32.xlu0 %v5143, 31
        %v5692 = vpop.permute.xlu0 %5691
        %5693 = vrot.lane.b32.xlu0 %v5144, 31
        %v5694 = vpop.permute.xlu0 %5693
        %5695 = vrot.lane.b32.xlu0 %v5146, 31
        %v5696 = vpop.permute.xlu0 %5695
        %5697 = vrot.lane.b32.xlu0 %v5147, 31
        %v5698 = vpop.permute.xlu0 %5697
        %v5699 = vrot.slane %v5692, 4
        %v5700 = vrot.slane %v5694, 4
        %v5701 = vrot.slane %v5696, 4
        %v5702 = vrot.slane %v5698, 4
        %v5703 = vsel %vm906, %v5699, %v5700
        %v5704 = vsel %vm1466, %v5692, %v5703
        %v5705 = vsel %vm1466, %v5694, %v5700
        %v5706 = vsel %vm906, %v5701, %v5702
        %v5707 = vsel %vm1466, %v5696, %v5706
        %v5708 = vsel %vm1466, %v5698, %v5702
        %5713 = vst [vmem:[#allocation4 + $0x1f8] sm:$0xff] %v5704
        %5714 = vst [vmem:[#allocation4 + $0x200] sm:$0xf] %v5705
        %5715 = vst [vmem:[#allocation4 + $0x204] sm:$0xff] %v5707
        %5716 = vst [vmem:[#allocation4 + $0x20c] sm:$0xf] %v5708
        %5717 = vst [vmem:[#allocation4 + $0x210] sm:$0xff] %v5270
        %5718 = vst [vmem:[#allocation4 + $0x218] sm:$0xf] %v5271
        %5719 = vst [vmem:[#allocation4 + $0x21c] sm:$0xff] %v5273
        %5720 = vst [vmem:[#allocation4 + $0x224] sm:$0xf] %v5274
        %5721 = vrot.lane.b32.xlu0 %v5143, 25
        %v5722 = vpop.permute.xlu0 %5721
        %5723 = vrot.lane.b32.xlu0 %v5144, 25
        %v5724 = vpop.permute.xlu0 %5723
        %5725 = vrot.lane.b32.xlu0 %v5146, 25
        %v5726 = vpop.permute.xlu0 %5725
        %5727 = vrot.lane.b32.xlu0 %v5147, 25
        %v5728 = vpop.permute.xlu0 %5727
        %v5729 = vrot.slane %v5722, 4
        %v5730 = vrot.slane %v5724, 4
        %v5731 = vrot.slane %v5726, 4
        %v5732 = vrot.slane %v5728, 4
        %v5733 = vsel %vm906, %v5729, %v5730
        %v5734 = vsel %vm1497, %v5722, %v5733
        %v5735 = vsel %vm1497, %v5724, %v5730
        %v5736 = vsel %vm906, %v5731, %v5732
        %v5737 = vsel %vm1497, %v5726, %v5736
        %v5738 = vsel %vm1497, %v5728, %v5732
        %5743 = vst [vmem:[#allocation4 + $0x228] sm:$0xff] %v5734
        %5744 = vst [vmem:[#allocation4 + $0x230] sm:$0xf] %v5735
        %5745 = vst [vmem:[#allocation4 + $0x234] sm:$0xff] %v5737
        %5746 = vst [vmem:[#allocation4 + $0x23c] sm:$0xf] %v5738
        %5747 = vrot.lane.b32.xlu0 %v5143, 87
        %v5748 = vpop.permute.xlu0 %5747
        %5749 = vrot.lane.b32.xlu0 %v5144, 87
        %v5750 = vpop.permute.xlu0 %5749
        %5751 = vrot.lane.b32.xlu0 %v5145, 87
        %v5752 = vpop.permute.xlu0 %5751
        %5753 = vrot.lane.b32.xlu0 %v5146, 87
        %v5754 = vpop.permute.xlu0 %5753
        %5755 = vrot.lane.b32.xlu0 %v5147, 87
        %v5756 = vpop.permute.xlu0 %5755
        %5757 = vrot.lane.b32.xlu0 %v5148, 87
        %v5758 = vpop.permute.xlu0 %5757
        %v5759 = vrot.slane %v5748, 4
        %v5760 = vrot.slane %v5750, 4
        %v5761 = vrot.slane %v5754, 4
        %v5762 = vrot.slane %v5756, 4
        %v5763 = vsel %vm906, %v5759, %v5760
        %v5764 = vsel %vm1528, %v5763, %v5750
        %v5765 = vsel %vm1528, %v5760, %v5752
        %v5766 = vsel %vm906, %v5761, %v5762
        %v5767 = vsel %vm1528, %v5766, %v5756
        %v5768 = vsel %vm1528, %v5762, %v5758
        %5773 = vst [vmem:[#allocation4 + $0x240] sm:$0xff] %v5764
        %5774 = vst [vmem:[#allocation4 + $0x248] sm:$0xf] %v5765
        %5775 = vst [vmem:[#allocation4 + $0x24c] sm:$0xff] %v5767
        %5776 = vst [vmem:[#allocation4 + $0x254] sm:$0xf] %v5768
        %5777 = vrot.lane.b32.xlu0 %v5143, 84
        %v5778 = vpop.permute.xlu0 %5777
        %5779 = vrot.lane.b32.xlu0 %v5144, 84
        %v5780 = vpop.permute.xlu0 %5779
        %5781 = vrot.lane.b32.xlu0 %v5145, 84
        %v5782 = vpop.permute.xlu0 %5781
        %5783 = vrot.lane.b32.xlu0 %v5146, 84
        %v5784 = vpop.permute.xlu0 %5783
        %5785 = vrot.lane.b32.xlu0 %v5147, 84
        %v5786 = vpop.permute.xlu0 %5785
        %5787 = vrot.lane.b32.xlu0 %v5148, 84
        %v5788 = vpop.permute.xlu0 %5787
        %v5789 = vrot.slane %v5778, 4
        %v5790 = vrot.slane %v5780, 4
        %v5791 = vrot.slane %v5784, 4
        %v5792 = vrot.slane %v5786, 4
        %v5793 = vsel %vm906, %v5789, %v5790
        %v5794 = vsel %vm1559, %v5793, %v5780
        %v5795 = vsel %vm1559, %v5790, %v5782
        %v5796 = vsel %vm906, %v5791, %v5792
        %v5797 = vsel %vm1559, %v5796, %v5786
        %v5798 = vsel %vm1559, %v5792, %v5788
        %5803 = vst [vmem:[#allocation4 + $0x258] sm:$0xff] %v5794
        %5804 = vst [vmem:[#allocation4 + $0x260] sm:$0xf] %v5795
        %5805 = vst [vmem:[#allocation4 + $0x264] sm:$0xff] %v5797
        %5806 = vst [vmem:[#allocation4 + $0x26c] sm:$0xf] %v5798
        %5807 = vrot.lane.b32.xlu0 %v5143, 81
        %v5808 = vpop.permute.xlu0 %5807
        %5809 = vrot.lane.b32.xlu0 %v5144, 81
        %v5810 = vpop.permute.xlu0 %5809
        %5811 = vrot.lane.b32.xlu0 %v5145, 81
        %v5812 = vpop.permute.xlu0 %5811
        %5813 = vrot.lane.b32.xlu0 %v5146, 81
        %v5814 = vpop.permute.xlu0 %5813
        %5815 = vrot.lane.b32.xlu0 %v5147, 81
        %v5816 = vpop.permute.xlu0 %5815
        %5817 = vrot.lane.b32.xlu0 %v5148, 81
        %v5818 = vpop.permute.xlu0 %5817
        %v5819 = vrot.slane %v5808, 4
        %v5820 = vrot.slane %v5810, 4
        %v5821 = vrot.slane %v5814, 4
        %v5822 = vrot.slane %v5816, 4
        %v5823 = vsel %vm906, %v5819, %v5820
        %v5824 = vsel %vm1590, %v5823, %v5810
        %v5825 = vsel %vm1590, %v5820, %v5812
        %v5826 = vsel %vm906, %v5821, %v5822
        %v5827 = vsel %vm1590, %v5826, %v5816
        %v5828 = vsel %vm1590, %v5822, %v5818
        %5833 = vst [vmem:[#allocation4 + $0x270] sm:$0xff] %v5824
        %5834 = vst [vmem:[#allocation4 + $0x278] sm:$0xf] %v5825
        %5835 = vst [vmem:[#allocation4 + $0x27c] sm:$0xff] %v5827
        %5836 = vst [vmem:[#allocation4 + $0x284] sm:$0xf] %v5828
        %5837 = vst [vmem:[#allocation4 + $0x288] sm:$0xff] %v5143
        %5838 = vst [vmem:[#allocation4 + $0x290] sm:$0xf] %v5144
        %5839 = vst [vmem:[#allocation4 + $0x294] sm:$0xff] %v5146
        %5840 = vst [vmem:[#allocation4 + $0x29c] sm:$0xf] %v5147
        %5841 = vrot.lane.b32.xlu0 %v5143, 124
        %v5842 = vpop.permute.xlu0 %5841
        %5843 = vrot.lane.b32.xlu0 %v5144, 124
        %v5844 = vpop.permute.xlu0 %5843
        %5845 = vrot.lane.b32.xlu0 %v5146, 124
        %v5846 = vpop.permute.xlu0 %5845
        %5847 = vrot.lane.b32.xlu0 %v5147, 124
        %v5848 = vpop.permute.xlu0 %5847
        %v5849 = vrot.slane %v5842, 4
        %v5850 = vrot.slane %v5844, 4
        %v5851 = vrot.slane %v5846, 4
        %v5852 = vrot.slane %v5848, 4
        %v5853 = vsel %vm906, %v5849, %v5850
        %v5854 = vsel %vm1621, %v5842, %v5853
        %v5855 = vsel %vm1621, %v5844, %v5850
        %v5856 = vsel %vm906, %v5851, %v5852
        %v5857 = vsel %vm1621, %v5846, %v5856
        %v5858 = vsel %vm1621, %v5848, %v5852
        %5863 = vst [vmem:[#allocation4 + $0x2a0] sm:$0xff] %v5854
        %5864 = vst [vmem:[#allocation4 + $0x2a8] sm:$0xf] %v5855
        %5865 = vst [vmem:[#allocation4 + $0x2ac] sm:$0xff] %v5857
        %5866 = vst [vmem:[#allocation4 + $0x2b4] sm:$0xf] %v5858
        %5867 = vrot.lane.b32.xlu0 %v5143, 120
        %v5868 = vpop.permute.xlu0 %5867
        %5869 = vrot.lane.b32.xlu0 %v5144, 120
        %v5870 = vpop.permute.xlu0 %5869
        %5871 = vrot.lane.b32.xlu0 %v5146, 120
        %v5872 = vpop.permute.xlu0 %5871
        %5873 = vrot.lane.b32.xlu0 %v5147, 120
        %v5874 = vpop.permute.xlu0 %5873
        %v5875 = vrot.slane %v5868, 4
        %v5876 = vrot.slane %v5870, 4
        %v5877 = vrot.slane %v5872, 4
        %v5878 = vrot.slane %v5874, 4
        %v5879 = vsel %vm906, %v5875, %v5876
        %v5880 = vsel %vm1648, %v5868, %v5879
        %v5881 = vsel %vm1648, %v5870, %v5876
        %v5882 = vsel %vm906, %v5877, %v5878
        %v5883 = vsel %vm1648, %v5872, %v5882
        %v5884 = vsel %vm1648, %v5874, %v5878
        %5889 = vst [vmem:[#allocation4 + $0x2b8] sm:$0xff] %v5880
        %5890 = vst [vmem:[#allocation4 + $0x2c0] sm:$0xf] %v5881
        %5891 = vst [vmem:[#allocation4 + $0x2c4] sm:$0xff] %v5883
        %5892 = vst [vmem:[#allocation4 + $0x2cc] sm:$0xf] %v5884
        %5893 = vrot.lane.b32.xlu0 %v5143, 32
        %v5894 = vpop.permute.xlu0 %5893
        %5895 = vrot.lane.b32.xlu0 %v5144, 32
        %v5896 = vpop.permute.xlu0 %5895
        %5897 = vrot.lane.b32.xlu0 %v5146, 32
        %v5898 = vpop.permute.xlu0 %5897
        %5899 = vrot.lane.b32.xlu0 %v5147, 32
        %v5900 = vpop.permute.xlu0 %5899
        %v5901 = vrot.slane %v5894, 4
        %v5902 = vrot.slane %v5896, 4
        %v5903 = vrot.slane %v5898, 4
        %v5904 = vrot.slane %v5900, 4
        %v5905 = vsel %vm906, %v5901, %v5902
        %v5906 = vsel %vm1675, %v5894, %v5905
        %v5907 = vsel %vm1675, %v5896, %v5902
        %v5908 = vsel %vm906, %v5903, %v5904
        %v5909 = vsel %vm1675, %v5898, %v5908
        %v5910 = vsel %vm1675, %v5900, %v5904
        %5915 = vst [vmem:[#allocation4 + $0x2d0] sm:$0xff] %v5906
        %5916 = vst [vmem:[#allocation4 + $0x2d8] sm:$0xf] %v5907
        %5917 = vst [vmem:[#allocation4 + $0x2dc] sm:$0xff] %v5909
        %5918 = vst [vmem:[#allocation4 + $0x2e4] sm:$0xf] %v5910
        %5919 = vst [vmem:[#allocation4 + $0x2e8] sm:$0xff] %v5270
        %5920 = vst [vmem:[#allocation4 + $0x2f0] sm:$0xf] %v5271
        %5921 = vst [vmem:[#allocation4 + $0x2f4] sm:$0xff] %v5273
        %5922 = vst [vmem:[#allocation4 + $0x2fc] sm:$0xf] %v5274
        %5923 = vrot.lane.b32.xlu0 %v5143, 24
        %v5924 = vpop.permute.xlu0 %5923
        %5925 = vrot.lane.b32.xlu0 %v5144, 24
        %v5926 = vpop.permute.xlu0 %5925
        %5927 = vrot.lane.b32.xlu0 %v5146, 24
        %v5928 = vpop.permute.xlu0 %5927
        %5929 = vrot.lane.b32.xlu0 %v5147, 24
        %v5930 = vpop.permute.xlu0 %5929
        %v5931 = vrot.slane %v5924, 4
        %v5932 = vrot.slane %v5926, 4
        %v5933 = vrot.slane %v5928, 4
        %v5934 = vrot.slane %v5930, 4
        %v5935 = vsel %vm906, %v5931, %v5932
        %v5936 = vsel %vm1706, %v5924, %v5935
        %v5937 = vsel %vm1706, %v5926, %v5932
        %v5938 = vsel %vm906, %v5933, %v5934
        %v5939 = vsel %vm1706, %v5928, %v5938
        %v5940 = vsel %vm1706, %v5930, %v5934
        %5945 = vst [vmem:[#allocation4 + $0x300] sm:$0xff] %v5936
        %5946 = vst [vmem:[#allocation4 + $0x308] sm:$0xf] %v5937
        %5947 = vst [vmem:[#allocation4 + $0x30c] sm:$0xff] %v5939
        %5948 = vst [vmem:[#allocation4 + $0x314] sm:$0xf] %v5940
        %5949 = vrot.lane.b32.xlu0 %v5143, 64
        %v5950 = vpop.permute.xlu0 %5949
        %5951 = vrot.lane.b32.xlu0 %v5144, 64
        %v5952 = vpop.permute.xlu0 %5951
        %5953 = vrot.lane.b32.xlu0 %v5145, 64
        %v5954 = vpop.permute.xlu0 %5953
        %5955 = vrot.lane.b32.xlu0 %v5146, 64
        %v5956 = vpop.permute.xlu0 %5955
        %5957 = vrot.lane.b32.xlu0 %v5147, 64
        %v5958 = vpop.permute.xlu0 %5957
        %5959 = vrot.lane.b32.xlu0 %v5148, 64
        %v5960 = vpop.permute.xlu0 %5959
        %v5961 = vrot.slane %v5950, 4
        %v5962 = vrot.slane %v5952, 4
        %v5963 = vrot.slane %v5956, 4
        %v5964 = vrot.slane %v5958, 4
        %v5965 = vsel %vm906, %v5961, %v5962
        %v5966 = vsel %vm1737, %v5965, %v5952
        %v5967 = vsel %vm1737, %v5962, %v5954
        %v5968 = vsel %vm906, %v5963, %v5964
        %v5969 = vsel %vm1737, %v5968, %v5958
        %v5970 = vsel %vm1737, %v5964, %v5960
        %5975 = vst [vmem:[#allocation4 + $0x318] sm:$0xff] %v5966
        %5976 = vst [vmem:[#allocation4 + $0x320] sm:$0xf] %v5967
        %5977 = vst [vmem:[#allocation4 + $0x324] sm:$0xff] %v5969
        %5978 = vst [vmem:[#allocation4 + $0x32c] sm:$0xf] %v5970
        %5979 = vrot.lane.b32.xlu0 %v5143, 60
        %v5980 = vpop.permute.xlu0 %5979
        %5981 = vrot.lane.b32.xlu0 %v5144, 60
        %v5982 = vpop.permute.xlu0 %5981
        %5983 = vrot.lane.b32.xlu0 %v5145, 60
        %v5984 = vpop.permute.xlu0 %5983
        %5985 = vrot.lane.b32.xlu0 %v5146, 60
        %v5986 = vpop.permute.xlu0 %5985
        %5987 = vrot.lane.b32.xlu0 %v5147, 60
        %v5988 = vpop.permute.xlu0 %5987
        %5989 = vrot.lane.b32.xlu0 %v5148, 60
        %v5990 = vpop.permute.xlu0 %5989
        %v5991 = vrot.slane %v5980, 4
        %v5992 = vrot.slane %v5982, 4
        %v5993 = vrot.slane %v5986, 4
        %v5994 = vrot.slane %v5988, 4
        %v5995 = vsel %vm906, %v5991, %v5992
        %v5996 = vsel %vm1768, %v5995, %v5982
        %v5997 = vsel %vm1768, %v5992, %v5984
        %v5998 = vsel %vm906, %v5993, %v5994
        %v5999 = vsel %vm1768, %v5998, %v5988
        %v6000 = vsel %vm1768, %v5994, %v5990
        %6005 = vst [vmem:[#allocation4 + $0x330] sm:$0xff] %v5996
        %6006 = vst [vmem:[#allocation4 + $0x338] sm:$0xf] %v5997
        %6007 = vst [vmem:[#allocation4 + $0x33c] sm:$0xff] %v5999
        %6008 = vst [vmem:[#allocation4 + $0x344] sm:$0xf] %v6000
        %6009 = vrot.lane.b32.xlu0 %v5143, 56
        %v6010 = vpop.permute.xlu0 %6009
        %6011 = vrot.lane.b32.xlu0 %v5144, 56
        %v6012 = vpop.permute.xlu0 %6011
        %6013 = vrot.lane.b32.xlu0 %v5145, 56
        %v6014 = vpop.permute.xlu0 %6013
        %6015 = vrot.lane.b32.xlu0 %v5146, 56
        %v6016 = vpop.permute.xlu0 %6015
        %6017 = vrot.lane.b32.xlu0 %v5147, 56
        %v6018 = vpop.permute.xlu0 %6017
        %6019 = vrot.lane.b32.xlu0 %v5148, 56
        %v6020 = vpop.permute.xlu0 %6019
        %v6021 = vrot.slane %v6010, 4
        %v6022 = vrot.slane %v6012, 4
        %v6023 = vrot.slane %v6016, 4
        %v6024 = vrot.slane %v6018, 4
        %v6025 = vsel %vm906, %v6021, %v6022
        %v6026 = vsel %vm1799, %v6025, %v6012
        %v6027 = vsel %vm1799, %v6022, %v6014
        %v6028 = vsel %vm906, %v6023, %v6024
        %v6029 = vsel %vm1799, %v6028, %v6018
        %v6030 = vsel %vm1799, %v6024, %v6020
        %6035 = vst [vmem:[#allocation4 + $0x348] sm:$0xff] %v6026
        %6036 = vst [vmem:[#allocation4 + $0x350] sm:$0xf] %v6027
        %6037 = vst [vmem:[#allocation4 + $0x354] sm:$0xff] %v6029
        %6038 = vst [vmem:[#allocation4 + $0x35c] sm:$0xf] %v6030
        %v6039 = vld [vmem:[#allocation18] sm:$0xff]
        %v6040 = vld [vmem:[#allocation18 + $0x8] sm:$0xff]
        %v6041 = vld [vmem:[#allocation18 + $0x10] sm:$0xf]
        %v6042 = vld [vmem:[#allocation18 + $0x14] sm:$0xff]
        %v6043 = vld [vmem:[#allocation18 + $0x1c] sm:$0xff]
        %v6044 = vld [vmem:[#allocation18 + $0x24] sm:$0xf]
        %v6045 = vld [vmem:[#allocation18 + $0x28] sm:$0xff]
        %v6046 = vld [vmem:[#allocation18 + $0x30] sm:$0xff]
        %v6047 = vld [vmem:[#allocation18 + $0x38] sm:$0xf]
        %v6048 = vld [vmem:[#allocation18 + $0x3c] sm:$0xff]
        %v6049 = vld [vmem:[#allocation18 + $0x44] sm:$0xff]
        %v6050 = vld [vmem:[#allocation18 + $0x4c] sm:$0xf]
        %v6051 = vld [vmem:[#allocation4] sm:$0xff]
        %v6052 = vld [vmem:[#allocation4 + $0x8] sm:$0xf]
        %v6053 = vld [vmem:[#allocation4 + $0xc] sm:$0xff]
        %v6054 = vld [vmem:[#allocation4 + $0x14] sm:$0xf]
        %v6055 = vld [vmem:[#allocation4 + $0x18] sm:$0xff]
        %v6056 = vld [vmem:[#allocation4 + $0x20] sm:$0xf]
        %v6057 = vld [vmem:[#allocation4 + $0x24] sm:$0xff]
        %v6058 = vld [vmem:[#allocation4 + $0x2c] sm:$0xf]
        %v6059 = vld [vmem:[#allocation4 + $0x30] sm:$0xff]
        %v6060 = vld [vmem:[#allocation4 + $0x38] sm:$0xf]
        %v6061 = vld [vmem:[#allocation4 + $0x3c] sm:$0xff]
        %v6062 = vld [vmem:[#allocation4 + $0x44] sm:$0xf]
        %v6063 = vld [vmem:[#allocation4 + $0x48] sm:$0xff]
        %v6064 = vld [vmem:[#allocation4 + $0x50] sm:$0xf]
        %v6065 = vld [vmem:[#allocation4 + $0x54] sm:$0xff]
        %v6066 = vld [vmem:[#allocation4 + $0x5c] sm:$0xf]
        %v6067 = vld [vmem:[#allocation4 + $0x60] sm:$0xff]
        %v6068 = vld [vmem:[#allocation4 + $0x68] sm:$0xf]
        %v6069 = vld [vmem:[#allocation4 + $0x6c] sm:$0xff]
        %v6070 = vld [vmem:[#allocation4 + $0x74] sm:$0xf]
        %v6071 = vld [vmem:[#allocation4 + $0x78] sm:$0xff]
        %v6072 = vld [vmem:[#allocation4 + $0x80] sm:$0xf]
        %v6073 = vld [vmem:[#allocation4 + $0x84] sm:$0xff]
        %v6074 = vld [vmem:[#allocation4 + $0x8c] sm:$0xf]
        %v6075 = vld [vmem:[#allocation4 + $0x90] sm:$0xff]
        %v6076 = vld [vmem:[#allocation4 + $0x98] sm:$0xf]
        %v6077 = vld [vmem:[#allocation4 + $0x9c] sm:$0xff]
        %v6078 = vld [vmem:[#allocation4 + $0xa4] sm:$0xf]
        %v6079 = vld [vmem:[#allocation4 + $0xa8] sm:$0xff]
        %v6080 = vld [vmem:[#allocation4 + $0xb0] sm:$0xf]
        %v6081 = vld [vmem:[#allocation4 + $0xb4] sm:$0xff]
        %v6082 = vld [vmem:[#allocation4 + $0xbc] sm:$0xf]
        %v6083 = vld [vmem:[#allocation4 + $0xc0] sm:$0xff]
        %v6084 = vld [vmem:[#allocation4 + $0xc8] sm:$0xf]
        %v6085 = vld [vmem:[#allocation4 + $0xcc] sm:$0xff]
        %v6086 = vld [vmem:[#allocation4 + $0xd4] sm:$0xf]
        %v6087 = vld [vmem:[#allocation4 + $0xd8] sm:$0xff]
        %v6088 = vld [vmem:[#allocation4 + $0xe0] sm:$0xf]
        %v6089 = vld [vmem:[#allocation4 + $0xe4] sm:$0xff]
        %v6090 = vld [vmem:[#allocation4 + $0xec] sm:$0xf]
        %v6091 = vld [vmem:[#allocation4 + $0xf0] sm:$0xff]
        %v6092 = vld [vmem:[#allocation4 + $0xf8] sm:$0xf]
        %v6093 = vld [vmem:[#allocation4 + $0xfc] sm:$0xff]
        %v6094 = vld [vmem:[#allocation4 + $0x104] sm:$0xf]
        %v6095 = vld [vmem:[#allocation4 + $0x108] sm:$0xff]
        %v6096 = vld [vmem:[#allocation4 + $0x110] sm:$0xf]
        %v6097 = vld [vmem:[#allocation4 + $0x114] sm:$0xff]
        %v6098 = vld [vmem:[#allocation4 + $0x11c] sm:$0xf]
        %v6099 = vld [vmem:[#allocation4 + $0x120] sm:$0xff]
        %v6100 = vld [vmem:[#allocation4 + $0x128] sm:$0xf]
        %v6101 = vld [vmem:[#allocation4 + $0x12c] sm:$0xff]
        %v6102 = vld [vmem:[#allocation4 + $0x134] sm:$0xf]
        %v6103 = vld [vmem:[#allocation4 + $0x138] sm:$0xff]
        %v6104 = vld [vmem:[#allocation4 + $0x140] sm:$0xf]
        %v6105 = vld [vmem:[#allocation4 + $0x144] sm:$0xff]
        %v6106 = vld [vmem:[#allocation4 + $0x14c] sm:$0xf]
        %v6107 = vld [vmem:[#allocation4 + $0x150] sm:$0xff]
        %v6108 = vld [vmem:[#allocation4 + $0x158] sm:$0xf]
        %v6109 = vld [vmem:[#allocation4 + $0x15c] sm:$0xff]
        %v6110 = vld [vmem:[#allocation4 + $0x164] sm:$0xf]
        %v6111 = vld [vmem:[#allocation4 + $0x168] sm:$0xff]
        %v6112 = vld [vmem:[#allocation4 + $0x170] sm:$0xf]
        %v6113 = vld [vmem:[#allocation4 + $0x174] sm:$0xff]
        %v6114 = vld [vmem:[#allocation4 + $0x17c] sm:$0xf]
        %v6115 = vld [vmem:[#allocation4 + $0x180] sm:$0xff]
        %v6116 = vld [vmem:[#allocation4 + $0x188] sm:$0xf]
        %v6117 = vld [vmem:[#allocation4 + $0x18c] sm:$0xff]
        %v6118 = vld [vmem:[#allocation4 + $0x194] sm:$0xf]
        %v6119 = vld [vmem:[#allocation4 + $0x198] sm:$0xff]
        %v6120 = vld [vmem:[#allocation4 + $0x1a0] sm:$0xf]
        %v6121 = vld [vmem:[#allocation4 + $0x1a4] sm:$0xff]
        %v6122 = vld [vmem:[#allocation4 + $0x1ac] sm:$0xf]
        %v6123 = vld [vmem:[#allocation4 + $0x1b0] sm:$0xff]
        %v6124 = vld [vmem:[#allocation4 + $0x1b8] sm:$0xf]
        %v6125 = vld [vmem:[#allocation4 + $0x1bc] sm:$0xff]
        %v6126 = vld [vmem:[#allocation4 + $0x1c4] sm:$0xf]
        %v6127 = vld [vmem:[#allocation4 + $0x1c8] sm:$0xff]
        %v6128 = vld [vmem:[#allocation4 + $0x1d0] sm:$0xf]
        %v6129 = vld [vmem:[#allocation4 + $0x1d4] sm:$0xff]
        %v6130 = vld [vmem:[#allocation4 + $0x1dc] sm:$0xf]
        %v6131 = vld [vmem:[#allocation4 + $0x1e0] sm:$0xff]
        %v6132 = vld [vmem:[#allocation4 + $0x1e8] sm:$0xf]
        %v6133 = vld [vmem:[#allocation4 + $0x1ec] sm:$0xff]
        %v6134 = vld [vmem:[#allocation4 + $0x1f4] sm:$0xf]
        %v6135 = vld [vmem:[#allocation4 + $0x1f8] sm:$0xff]
        %v6136 = vld [vmem:[#allocation4 + $0x200] sm:$0xf]
        %v6137 = vld [vmem:[#allocation4 + $0x204] sm:$0xff]
        %v6138 = vld [vmem:[#allocation4 + $0x20c] sm:$0xf]
        %v6139 = vld [vmem:[#allocation4 + $0x210] sm:$0xff]
        %v6140 = vld [vmem:[#allocation4 + $0x218] sm:$0xf]
        %v6141 = vld [vmem:[#allocation4 + $0x21c] sm:$0xff]
        %v6142 = vld [vmem:[#allocation4 + $0x224] sm:$0xf]
        %v6143 = vld [vmem:[#allocation4 + $0x228] sm:$0xff]
        %v6144 = vld [vmem:[#allocation4 + $0x230] sm:$0xf]
        %v6145 = vld [vmem:[#allocation4 + $0x234] sm:$0xff]
        %v6146 = vld [vmem:[#allocation4 + $0x23c] sm:$0xf]
        %v6147 = vld [vmem:[#allocation4 + $0x240] sm:$0xff]
        %v6148 = vld [vmem:[#allocation4 + $0x248] sm:$0xf]
        %v6149 = vld [vmem:[#allocation4 + $0x24c] sm:$0xff]
        %v6150 = vld [vmem:[#allocation4 + $0x254] sm:$0xf]
        %v6151 = vld [vmem:[#allocation4 + $0x258] sm:$0xff]
        %v6152 = vld [vmem:[#allocation4 + $0x260] sm:$0xf]
        %v6153 = vld [vmem:[#allocation4 + $0x264] sm:$0xff]
        %v6154 = vld [vmem:[#allocation4 + $0x26c] sm:$0xf]
        %v6155 = vld [vmem:[#allocation4 + $0x270] sm:$0xff]
        %v6156 = vld [vmem:[#allocation4 + $0x278] sm:$0xf]
        %v6157 = vld [vmem:[#allocation4 + $0x27c] sm:$0xff]
        %v6158 = vld [vmem:[#allocation4 + $0x284] sm:$0xf]
        %v6159 = vld [vmem:[#allocation4 + $0x288] sm:$0xff]
        %v6160 = vld [vmem:[#allocation4 + $0x290] sm:$0xf]
        %v6161 = vld [vmem:[#allocation4 + $0x294] sm:$0xff]
        %v6162 = vld [vmem:[#allocation4 + $0x29c] sm:$0xf]
        %v6163 = vld [vmem:[#allocation4 + $0x2a0] sm:$0xff]
        %v6164 = vld [vmem:[#allocation4 + $0x2a8] sm:$0xf]
        %v6165 = vld [vmem:[#allocation4 + $0x2ac] sm:$0xff]
        %v6166 = vld [vmem:[#allocation4 + $0x2b4] sm:$0xf]
        %v6167 = vld [vmem:[#allocation4 + $0x2b8] sm:$0xff]
        %v6168 = vld [vmem:[#allocation4 + $0x2c0] sm:$0xf]
        %v6169 = vld [vmem:[#allocation4 + $0x2c4] sm:$0xff]
        %v6170 = vld [vmem:[#allocation4 + $0x2cc] sm:$0xf]
        %v6171 = vld [vmem:[#allocation4 + $0x2d0] sm:$0xff]
        %v6172 = vld [vmem:[#allocation4 + $0x2d8] sm:$0xf]
        %v6173 = vld [vmem:[#allocation4 + $0x2dc] sm:$0xff]
        %v6174 = vld [vmem:[#allocation4 + $0x2e4] sm:$0xf]
        %v6175 = vld [vmem:[#allocation4 + $0x2e8] sm:$0xff]
        %v6176 = vld [vmem:[#allocation4 + $0x2f0] sm:$0xf]
        %v6177 = vld [vmem:[#allocation4 + $0x2f4] sm:$0xff]
        %v6178 = vld [vmem:[#allocation4 + $0x2fc] sm:$0xf]
        %v6179 = vld [vmem:[#allocation4 + $0x300] sm:$0xff]
        %v6180 = vld [vmem:[#allocation4 + $0x308] sm:$0xf]
        %v6181 = vld [vmem:[#allocation4 + $0x30c] sm:$0xff]
        %v6182 = vld [vmem:[#allocation4 + $0x314] sm:$0xf]
        %v6183 = vld [vmem:[#allocation4 + $0x318] sm:$0xff]
        %v6184 = vld [vmem:[#allocation4 + $0x320] sm:$0xf]
        %v6185 = vld [vmem:[#allocation4 + $0x324] sm:$0xff]
        %v6186 = vld [vmem:[#allocation4 + $0x32c] sm:$0xf]
        %v6187 = vld [vmem:[#allocation4 + $0x330] sm:$0xff]
        %v6188 = vld [vmem:[#allocation4 + $0x338] sm:$0xf]
        %v6189 = vld [vmem:[#allocation4 + $0x33c] sm:$0xff]
        %v6190 = vld [vmem:[#allocation4 + $0x344] sm:$0xf]
        %v6191 = vld [vmem:[#allocation4 + $0x348] sm:$0xff]
        %v6192 = vld [vmem:[#allocation4 + $0x350] sm:$0xf]
        %v6193 = vld [vmem:[#allocation4 + $0x354] sm:$0xff]
        %v6194 = vld [vmem:[#allocation4 + $0x35c] sm:$0xf]
        %v6195 = vld [vmem:[%s12] sm:$0xff]
        %v6196 = vld [vmem:[%s12 + $0x8] sm:$0xff]
        %v6197 = vld [vmem:[%s12 + $0x10] sm:$0xff]
        %v6198 = vld [vmem:[%s12 + $0x18] sm:$0xff]
        %6200 = vset.pattern.permute.xlu0 0
        %6201 = vperm.xlu0 %6200, %v6195
        %v6202 = vpop.permute.xlu0 %6201
        %6205 = vset.pattern.permute.xlu0 0
        %6206 = vperm.xlu0 %6205, %v6196
        %v6207 = vpop.permute.xlu0 %6206
        %6210 = vset.pattern.permute.xlu0 0
        %6211 = vperm.xlu0 %6210, %v6197
        %v6212 = vpop.permute.xlu0 %6211
        %6215 = vset.pattern.permute.xlu0 0
        %6216 = vperm.xlu0 %6215, %v6198
        %v6217 = vpop.permute.xlu0 %6216
        %v6231 = vunpack.c.l.b16 %v6039
        %v6232 = vunpack.c.h.b16 %v6039
        %v6233 = vunpack.c.l.b16 %v6040
        %v6234 = vunpack.c.h.b16 %v6040
        %v6235 = vunpack.c.l.b16 %v6041
        %v6236 = vunpack.c.l.b16 %v6042
        %v6237 = vunpack.c.h.b16 %v6042
        %v6238 = vunpack.c.l.b16 %v6043
        %v6239 = vunpack.c.h.b16 %v6043
        %v6240 = vunpack.c.l.b16 %v6044
        %v6241 = vunpack.c.l.b16 %v6045
        %v6242 = vunpack.c.h.b16 %v6045
        %v6243 = vunpack.c.l.b16 %v6046
        %v6244 = vunpack.c.h.b16 %v6046
        %v6245 = vunpack.c.l.b16 %v6047
        %v6246 = vunpack.c.l.b16 %v6048
        %v6247 = vunpack.c.h.b16 %v6048
        %v6248 = vunpack.c.l.b16 %v6049
        %v6249 = vunpack.c.h.b16 %v6049
        %v6250 = vunpack.c.l.b16 %v6050
        %v6251 = vpack.c.b16 %v6236, %v6231
        %v6252 = vpack.c.b16 %v6237, %v6232
        %v6253 = vpack.c.b16 %v6238, %v6233
        %v6254 = vpack.c.b16 %v6239, %v6234
        %v6255 = vpack.c.b16 %v6240, %v6235
        %v6256 = vpack.c.b16 %v6246, %v6241
        %v6257 = vpack.c.b16 %v6247, %v6242
        %v6258 = vpack.c.b16 %v6248, %v6243
        %v6259 = vpack.c.b16 %v6249, %v6244
        %v6260 = vpack.c.b16 %v6250, %v6245
        %v6413 = vunpack.c.l.b16 %v6051
        %v6414 = vunpack.c.h.b16 %v6051
        %v6415 = vunpack.c.l.b16 %v6052
        %v6416 = vunpack.c.l.b16 %v6053
        %v6417 = vunpack.c.h.b16 %v6053
        %v6418 = vunpack.c.l.b16 %v6054
        %v6419 = vunpack.c.l.b16 %v6055
        %v6420 = vunpack.c.h.b16 %v6055
        %v6421 = vunpack.c.l.b16 %v6056
        %v6422 = vunpack.c.l.b16 %v6057
        %v6423 = vunpack.c.h.b16 %v6057
        %v6424 = vunpack.c.l.b16 %v6058
        %v6425 = vunpack.c.l.b16 %v6059
        %v6426 = vunpack.c.h.b16 %v6059
        %v6427 = vunpack.c.l.b16 %v6060
        %v6428 = vunpack.c.l.b16 %v6061
        %v6429 = vunpack.c.h.b16 %v6061
        %v6430 = vunpack.c.l.b16 %v6062
        %v6431 = vunpack.c.l.b16 %v6063
        %v6432 = vunpack.c.h.b16 %v6063
        %v6433 = vunpack.c.l.b16 %v6064
        %v6434 = vunpack.c.l.b16 %v6065
        %v6435 = vunpack.c.h.b16 %v6065
        %v6436 = vunpack.c.l.b16 %v6066
        %v6437 = vunpack.c.l.b16 %v6067
        %v6438 = vunpack.c.h.b16 %v6067
        %v6439 = vunpack.c.l.b16 %v6068
        %v6440 = vunpack.c.l.b16 %v6069
        %v6441 = vunpack.c.h.b16 %v6069
        %v6442 = vunpack.c.l.b16 %v6070
        %v6443 = vunpack.c.l.b16 %v6071
        %v6444 = vunpack.c.h.b16 %v6071
        %v6445 = vunpack.c.l.b16 %v6072
        %v6446 = vunpack.c.l.b16 %v6073
        %v6447 = vunpack.c.h.b16 %v6073
        %v6448 = vunpack.c.l.b16 %v6074
        %v6449 = vunpack.c.l.b16 %v6075
        %v6450 = vunpack.c.h.b16 %v6075
        %v6451 = vunpack.c.l.b16 %v6076
        %v6452 = vunpack.c.l.b16 %v6077
        %v6453 = vunpack.c.h.b16 %v6077
        %v6454 = vunpack.c.l.b16 %v6078
        %v6455 = vunpack.c.l.b16 %v6079
        %v6456 = vunpack.c.h.b16 %v6079
        %v6457 = vunpack.c.l.b16 %v6080
        %v6458 = vunpack.c.l.b16 %v6081
        %v6459 = vunpack.c.h.b16 %v6081
        %v6460 = vunpack.c.l.b16 %v6082
        %v6461 = vunpack.c.l.b16 %v6083
        %v6462 = vunpack.c.h.b16 %v6083
        %v6463 = vunpack.c.l.b16 %v6084
        %v6464 = vunpack.c.l.b16 %v6085
        %v6465 = vunpack.c.h.b16 %v6085
        %v6466 = vunpack.c.l.b16 %v6086
        %v6467 = vunpack.c.l.b16 %v6087
        %v6468 = vunpack.c.h.b16 %v6087
        %v6469 = vunpack.c.l.b16 %v6088
        %v6470 = vunpack.c.l.b16 %v6089
        %v6471 = vunpack.c.h.b16 %v6089
        %v6472 = vunpack.c.l.b16 %v6090
        %v6473 = vunpack.c.l.b16 %v6091
        %v6474 = vunpack.c.h.b16 %v6091
        %v6475 = vunpack.c.l.b16 %v6092
        %v6476 = vunpack.c.l.b16 %v6093
        %v6477 = vunpack.c.h.b16 %v6093
        %v6478 = vunpack.c.l.b16 %v6094
        %v6479 = vunpack.c.l.b16 %v6095
        %v6480 = vunpack.c.h.b16 %v6095
        %v6481 = vunpack.c.l.b16 %v6096
        %v6482 = vunpack.c.l.b16 %v6097
        %v6483 = vunpack.c.h.b16 %v6097
        %v6484 = vunpack.c.l.b16 %v6098
        %v6485 = vunpack.c.l.b16 %v6099
        %v6486 = vunpack.c.h.b16 %v6099
        %v6487 = vunpack.c.l.b16 %v6100
        %v6488 = vunpack.c.l.b16 %v6101
        %v6489 = vunpack.c.h.b16 %v6101
        %v6490 = vunpack.c.l.b16 %v6102
        %v6491 = vunpack.c.l.b16 %v6103
        %v6492 = vunpack.c.h.b16 %v6103
        %v6493 = vunpack.c.l.b16 %v6104
        %v6494 = vunpack.c.l.b16 %v6105
        %v6495 = vunpack.c.h.b16 %v6105
        %v6496 = vunpack.c.l.b16 %v6106
        %v6497 = vunpack.c.l.b16 %v6107
        %v6498 = vunpack.c.h.b16 %v6107
        %v6499 = vunpack.c.l.b16 %v6108
        %v6500 = vunpack.c.l.b16 %v6109
        %v6501 = vunpack.c.h.b16 %v6109
        %v6502 = vunpack.c.l.b16 %v6110
        %v6503 = vunpack.c.l.b16 %v6111
        %v6504 = vunpack.c.h.b16 %v6111
        %v6505 = vunpack.c.l.b16 %v6112
        %v6506 = vunpack.c.l.b16 %v6113
        %v6507 = vunpack.c.h.b16 %v6113
        %v6508 = vunpack.c.l.b16 %v6114
        %v6509 = vunpack.c.l.b16 %v6115
        %v6510 = vunpack.c.h.b16 %v6115
        %v6511 = vunpack.c.l.b16 %v6116
        %v6512 = vunpack.c.l.b16 %v6117
        %v6513 = vunpack.c.h.b16 %v6117
        %v6514 = vunpack.c.l.b16 %v6118
        %v6515 = vunpack.c.l.b16 %v6119
        %v6516 = vunpack.c.h.b16 %v6119
        %v6517 = vunpack.c.l.b16 %v6120
        %v6518 = vunpack.c.l.b16 %v6121
        %v6519 = vunpack.c.h.b16 %v6121
        %v6520 = vunpack.c.l.b16 %v6122
        %v6521 = vunpack.c.l.b16 %v6123
        %v6522 = vunpack.c.h.b16 %v6123
        %v6523 = vunpack.c.l.b16 %v6124
        %v6524 = vunpack.c.l.b16 %v6125
        %v6525 = vunpack.c.h.b16 %v6125
        %v6526 = vunpack.c.l.b16 %v6126
        %v6527 = vunpack.c.l.b16 %v6127
        %v6528 = vunpack.c.h.b16 %v6127
        %v6529 = vunpack.c.l.b16 %v6128
        %v6530 = vunpack.c.l.b16 %v6129
        %v6531 = vunpack.c.h.b16 %v6129
        %v6532 = vunpack.c.l.b16 %v6130
        %v6533 = vunpack.c.l.b16 %v6131
        %v6534 = vunpack.c.h.b16 %v6131
        %v6535 = vunpack.c.l.b16 %v6132
        %v6536 = vunpack.c.l.b16 %v6133
        %v6537 = vunpack.c.h.b16 %v6133
        %v6538 = vunpack.c.l.b16 %v6134
        %v6539 = vunpack.c.l.b16 %v6135
        %v6540 = vunpack.c.h.b16 %v6135
        %v6541 = vunpack.c.l.b16 %v6136
        %v6542 = vunpack.c.l.b16 %v6137
        %v6543 = vunpack.c.h.b16 %v6137
        %v6544 = vunpack.c.l.b16 %v6138
        %v6545 = vunpack.c.l.b16 %v6139
        %v6546 = vunpack.c.h.b16 %v6139
        %v6547 = vunpack.c.l.b16 %v6140
        %v6548 = vunpack.c.l.b16 %v6141
        %v6549 = vunpack.c.h.b16 %v6141
        %v6550 = vunpack.c.l.b16 %v6142
        %v6551 = vunpack.c.l.b16 %v6143
        %v6552 = vunpack.c.h.b16 %v6143
        %v6553 = vunpack.c.l.b16 %v6144
        %v6554 = vunpack.c.l.b16 %v6145
        %v6555 = vunpack.c.h.b16 %v6145
        %v6556 = vunpack.c.l.b16 %v6146
        %v6557 = vunpack.c.l.b16 %v6147
        %v6558 = vunpack.c.h.b16 %v6147
        %v6559 = vunpack.c.l.b16 %v6148
        %v6560 = vunpack.c.l.b16 %v6149
        %v6561 = vunpack.c.h.b16 %v6149
        %v6562 = vunpack.c.l.b16 %v6150
        %v6563 = vunpack.c.l.b16 %v6151
        %v6564 = vunpack.c.h.b16 %v6151
        %v6565 = vunpack.c.l.b16 %v6152
        %v6566 = vunpack.c.l.b16 %v6153
        %v6567 = vunpack.c.h.b16 %v6153
        %v6568 = vunpack.c.l.b16 %v6154
        %v6569 = vunpack.c.l.b16 %v6155
        %v6570 = vunpack.c.h.b16 %v6155
        %v6571 = vunpack.c.l.b16 %v6156
        %v6572 = vunpack.c.l.b16 %v6157
        %v6573 = vunpack.c.h.b16 %v6157
        %v6574 = vunpack.c.l.b16 %v6158
        %v6575 = vunpack.c.l.b16 %v6159
        %v6576 = vunpack.c.h.b16 %v6159
        %v6577 = vunpack.c.l.b16 %v6160
        %v6578 = vunpack.c.l.b16 %v6161
        %v6579 = vunpack.c.h.b16 %v6161
        %v6580 = vunpack.c.l.b16 %v6162
        %v6581 = vunpack.c.l.b16 %v6163
        %v6582 = vunpack.c.h.b16 %v6163
        %v6583 = vunpack.c.l.b16 %v6164
        %v6584 = vunpack.c.l.b16 %v6165
        %v6585 = vunpack.c.h.b16 %v6165
        %v6586 = vunpack.c.l.b16 %v6166
        %v6587 = vunpack.c.l.b16 %v6167
        %v6588 = vunpack.c.h.b16 %v6167
        %v6589 = vunpack.c.l.b16 %v6168
        %v6590 = vunpack.c.l.b16 %v6169
        %v6591 = vunpack.c.h.b16 %v6169
        %v6592 = vunpack.c.l.b16 %v6170
        %v6593 = vunpack.c.l.b16 %v6171
        %v6594 = vunpack.c.h.b16 %v6171
        %v6595 = vunpack.c.l.b16 %v6172
        %v6596 = vunpack.c.l.b16 %v6173
        %v6597 = vunpack.c.h.b16 %v6173
        %v6598 = vunpack.c.l.b16 %v6174
        %v6599 = vunpack.c.l.b16 %v6175
        %v6600 = vunpack.c.h.b16 %v6175
        %v6601 = vunpack.c.l.b16 %v6176
        %v6602 = vunpack.c.l.b16 %v6177
        %v6603 = vunpack.c.h.b16 %v6177
        %v6604 = vunpack.c.l.b16 %v6178
        %v6605 = vunpack.c.l.b16 %v6179
        %v6606 = vunpack.c.h.b16 %v6179
        %v6607 = vunpack.c.l.b16 %v6180
        %v6608 = vunpack.c.l.b16 %v6181
        %v6609 = vunpack.c.h.b16 %v6181
        %v6610 = vunpack.c.l.b16 %v6182
        %v6611 = vunpack.c.l.b16 %v6183
        %v6612 = vunpack.c.h.b16 %v6183
        %v6613 = vunpack.c.l.b16 %v6184
        %v6614 = vunpack.c.l.b16 %v6185
        %v6615 = vunpack.c.h.b16 %v6185
        %v6616 = vunpack.c.l.b16 %v6186
        %v6617 = vunpack.c.l.b16 %v6187
        %v6618 = vunpack.c.h.b16 %v6187
        %v6619 = vunpack.c.l.b16 %v6188
        %v6620 = vunpack.c.l.b16 %v6189
        %v6621 = vunpack.c.h.b16 %v6189
        %v6622 = vunpack.c.l.b16 %v6190
        %v6623 = vunpack.c.l.b16 %v6191
        %v6624 = vunpack.c.h.b16 %v6191
        %v6625 = vunpack.c.l.b16 %v6192
        %v6626 = vunpack.c.l.b16 %v6193
        %v6627 = vunpack.c.h.b16 %v6193
        %v6628 = vunpack.c.l.b16 %v6194
        %v6629 = vpack.c.b16 %v6416, %v6413
        %v6630 = vpack.c.b16 %v6417, %v6414
        %v6631 = vpack.c.b16 %v6418, %v6415
        %v6632 = vpack.c.b16 %v6422, %v6419
        %v6633 = vpack.c.b16 %v6423, %v6420
        %v6634 = vpack.c.b16 %v6424, %v6421
        %v6635 = vpack.c.b16 %v6428, %v6425
        %v6636 = vpack.c.b16 %v6429, %v6426
        %v6637 = vpack.c.b16 %v6430, %v6427
        %v6638 = vpack.c.b16 %v6434, %v6431
        %v6639 = vpack.c.b16 %v6435, %v6432
        %v6640 = vpack.c.b16 %v6436, %v6433
        %v6641 = vpack.c.b16 %v6440, %v6437
        %v6642 = vpack.c.b16 %v6441, %v6438
        %v6643 = vpack.c.b16 %v6442, %v6439
        %v6644 = vpack.c.b16 %v6446, %v6443
        %v6645 = vpack.c.b16 %v6447, %v6444
        %v6646 = vpack.c.b16 %v6448, %v6445
        %v6647 = vpack.c.b16 %v6452, %v6449
        %v6648 = vpack.c.b16 %v6453, %v6450
        %v6649 = vpack.c.b16 %v6454, %v6451
        %v6650 = vpack.c.b16 %v6458, %v6455
        %v6651 = vpack.c.b16 %v6459, %v6456
        %v6652 = vpack.c.b16 %v6460, %v6457
        %v6653 = vpack.c.b16 %v6464, %v6461
        %v6654 = vpack.c.b16 %v6465, %v6462
        %v6655 = vpack.c.b16 %v6466, %v6463
        %v6656 = vpack.c.b16 %v6470, %v6467
        %v6657 = vpack.c.b16 %v6471, %v6468
        %v6658 = vpack.c.b16 %v6472, %v6469
        %v6659 = vpack.c.b16 %v6476, %v6473
        %v6660 = vpack.c.b16 %v6477, %v6474
        %v6661 = vpack.c.b16 %v6478, %v6475
        %v6662 = vpack.c.b16 %v6482, %v6479
        %v6663 = vpack.c.b16 %v6483, %v6480
        %v6664 = vpack.c.b16 %v6484, %v6481
        %v6665 = vpack.c.b16 %v6488, %v6485
        %v6666 = vpack.c.b16 %v6489, %v6486
        %v6667 = vpack.c.b16 %v6490, %v6487
        %v6668 = vpack.c.b16 %v6494, %v6491
        %v6669 = vpack.c.b16 %v6495, %v6492
        %v6670 = vpack.c.b16 %v6496, %v6493
        %v6671 = vpack.c.b16 %v6500, %v6497
        %v6672 = vpack.c.b16 %v6501, %v6498
        %v6673 = vpack.c.b16 %v6502, %v6499
        %v6674 = vpack.c.b16 %v6506, %v6503
        %v6675 = vpack.c.b16 %v6507, %v6504
        %v6676 = vpack.c.b16 %v6508, %v6505
        %v6677 = vpack.c.b16 %v6512, %v6509
        %v6678 = vpack.c.b16 %v6513, %v6510
        %v6679 = vpack.c.b16 %v6514, %v6511
        %v6680 = vpack.c.b16 %v6518, %v6515
        %v6681 = vpack.c.b16 %v6519, %v6516
        %v6682 = vpack.c.b16 %v6520, %v6517
        %v6683 = vpack.c.b16 %v6524, %v6521
        %v6684 = vpack.c.b16 %v6525, %v6522
        %v6685 = vpack.c.b16 %v6526, %v6523
        %v6686 = vpack.c.b16 %v6530, %v6527
        %v6687 = vpack.c.b16 %v6531, %v6528
        %v6688 = vpack.c.b16 %v6532, %v6529
        %v6689 = vpack.c.b16 %v6536, %v6533
        %v6690 = vpack.c.b16 %v6537, %v6534
        %v6691 = vpack.c.b16 %v6538, %v6535
        %v6692 = vpack.c.b16 %v6542, %v6539
        %v6693 = vpack.c.b16 %v6543, %v6540
        %v6694 = vpack.c.b16 %v6544, %v6541
        %v6695 = vpack.c.b16 %v6548, %v6545
        %v6696 = vpack.c.b16 %v6549, %v6546
        %v6697 = vpack.c.b16 %v6550, %v6547
        %v6698 = vpack.c.b16 %v6554, %v6551
        %v6699 = vpack.c.b16 %v6555, %v6552
        %v6700 = vpack.c.b16 %v6556, %v6553
        %v6701 = vpack.c.b16 %v6560, %v6557
        %v6702 = vpack.c.b16 %v6561, %v6558
        %v6703 = vpack.c.b16 %v6562, %v6559
        %v6704 = vpack.c.b16 %v6566, %v6563
        %v6705 = vpack.c.b16 %v6567, %v6564
        %v6706 = vpack.c.b16 %v6568, %v6565
        %v6707 = vpack.c.b16 %v6572, %v6569
        %v6708 = vpack.c.b16 %v6573, %v6570
        %v6709 = vpack.c.b16 %v6574, %v6571
        %v6710 = vpack.c.b16 %v6578, %v6575
        %v6711 = vpack.c.b16 %v6579, %v6576
        %v6712 = vpack.c.b16 %v6580, %v6577
        %v6713 = vpack.c.b16 %v6584, %v6581
        %v6714 = vpack.c.b16 %v6585, %v6582
        %v6715 = vpack.c.b16 %v6586, %v6583
        %v6716 = vpack.c.b16 %v6590, %v6587
        %v6717 = vpack.c.b16 %v6591, %v6588
        %v6718 = vpack.c.b16 %v6592, %v6589
        %v6719 = vpack.c.b16 %v6596, %v6593
        %v6720 = vpack.c.b16 %v6597, %v6594
        %v6721 = vpack.c.b16 %v6598, %v6595
        %v6722 = vpack.c.b16 %v6602, %v6599
        %v6723 = vpack.c.b16 %v6603, %v6600
        %v6724 = vpack.c.b16 %v6604, %v6601
        %v6725 = vpack.c.b16 %v6608, %v6605
        %v6726 = vpack.c.b16 %v6609, %v6606
        %v6727 = vpack.c.b16 %v6610, %v6607
        %v6728 = vpack.c.b16 %v6614, %v6611
        %v6729 = vpack.c.b16 %v6615, %v6612
        %v6730 = vpack.c.b16 %v6616, %v6613
        %v6731 = vpack.c.b16 %v6620, %v6617
        %v6732 = vpack.c.b16 %v6621, %v6618
        %v6733 = vpack.c.b16 %v6622, %v6619
        %v6734 = vpack.c.b16 %v6626, %v6623
        %v6735 = vpack.c.b16 %v6627, %v6624
        %v6736 = vpack.c.b16 %v6628, %v6625
        %v6846 = vsel %vm2576, %v6255, 0
        %v6849 = vsel %vm2576, %v6260, 0
        %6851 = vmatpush.bf16.msra.mxu0 %v6650
        %6852 = vmatpush.bf16.msra.mxu0 %v6647
        %6853 = vmatpush.bf16.msra.mxu0 %v6644
        %6854 = vmatpush.bf16.msra.mxu0 %v6641
        %6855 = vmatpush.bf16.msra.mxu0 %v6638
        %6856 = vmatpush.bf16.msra.mxu0 %v6635
        %6857 = vmatpush.bf16.msra.mxu0 %v6632
        %6858 = vmatpush.bf16.msra.mxu0 %v6629
        %6859 = vmatmul.bf16.gmra.mxu0 %v6251
        %v6860 = vpop.f32.mrf.mxu0
        %v6861 = vadd.f32 %v6202, %v6860
        %v6862 = vpop.f32.mrf.mxu0
        %v6863 = vadd.f32 %v6207, %v6862
        %6864 = vmatmul.bf16.gmra.mxu0 %v6256
        %v6865 = vpop.f32.mrf.mxu0
        %v6866 = vadd.f32 %v6212, %v6865
        %v6867 = vpop.f32.mrf.mxu0
        %v6868 = vadd.f32 %v6217, %v6867
        %6869 = vdwg.mxu0
        %6870 = vmatpush.bf16.msra.mxu0 %v6674
        %6871 = vmatpush.bf16.msra.mxu0 %v6671
        %6872 = vmatpush.bf16.msra.mxu0 %v6668
        %6873 = vmatpush.bf16.msra.mxu0 %v6665
        %6874 = vmatpush.bf16.msra.mxu0 %v6662
        %6875 = vmatpush.bf16.msra.mxu0 %v6659
        %6876 = vmatpush.bf16.msra.mxu0 %v6656
        %6877 = vmatpush.bf16.msra.mxu0 %v6653
        %6878 = vmatmul.bf16.gmra.mxu0 %v6252
        %v6879 = vpop.f32.mrf.mxu0
        %v6880 = vadd.f32 %v6861, %v6879
        %v6881 = vpop.f32.mrf.mxu0
        %v6882 = vadd.f32 %v6863, %v6881
        %6883 = vmatmul.bf16.gmra.mxu0 %v6257
        %v6884 = vpop.f32.mrf.mxu0
        %v6885 = vadd.f32 %v6866, %v6884
        %v6886 = vpop.f32.mrf.mxu0
        %v6887 = vadd.f32 %v6868, %v6886
        %6888 = vdwg.mxu0
        %6889 = vmatpush.bf16.msra.mxu0 %v6698
        %6890 = vmatpush.bf16.msra.mxu0 %v6695
        %6891 = vmatpush.bf16.msra.mxu0 %v6692
        %6892 = vmatpush.bf16.msra.mxu0 %v6689
        %6893 = vmatpush.bf16.msra.mxu0 %v6686
        %6894 = vmatpush.bf16.msra.mxu0 %v6683
        %6895 = vmatpush.bf16.msra.mxu0 %v6680
        %6896 = vmatpush.bf16.msra.mxu0 %v6677
        %6897 = vmatmul.bf16.gmra.mxu0 %v6253
        %v6898 = vpop.f32.mrf.mxu0
        %v6899 = vadd.f32 %v6880, %v6898
        %v6900 = vpop.f32.mrf.mxu0
        %v6901 = vadd.f32 %v6882, %v6900
        %6902 = vmatmul.bf16.gmra.mxu0 %v6258
        %v6903 = vpop.f32.mrf.mxu0
        %v6904 = vadd.f32 %v6885, %v6903
        %v6905 = vpop.f32.mrf.mxu0
        %v6906 = vadd.f32 %v6887, %v6905
        %6907 = vdwg.mxu0
        %6908 = vmatpush.bf16.msra.mxu0 %v6722
        %6909 = vmatpush.bf16.msra.mxu0 %v6719
        %6910 = vmatpush.bf16.msra.mxu0 %v6716
        %6911 = vmatpush.bf16.msra.mxu0 %v6713
        %6912 = vmatpush.bf16.msra.mxu0 %v6710
        %6913 = vmatpush.bf16.msra.mxu0 %v6707
        %6914 = vmatpush.bf16.msra.mxu0 %v6704
        %6915 = vmatpush.bf16.msra.mxu0 %v6701
        %6916 = vmatmul.bf16.gmra.mxu0 %v6254
        %v6917 = vpop.f32.mrf.mxu0
        %v6918 = vadd.f32 %v6899, %v6917
        %v6919 = vpop.f32.mrf.mxu0
        %v6920 = vadd.f32 %v6901, %v6919
        %6921 = vmatmul.bf16.gmra.mxu0 %v6259
        %v6922 = vpop.f32.mrf.mxu0
        %v6923 = vadd.f32 %v6904, %v6922
        %v6924 = vpop.f32.mrf.mxu0
        %v6925 = vadd.f32 %v6906, %v6924
        %6926 = vdwg.mxu0
        %6927 = vmatpush.bf16.msra.mxu0 0
        %6928 = vmatpush.bf16.msra.mxu0 0
        %6929 = vmatpush.bf16.msra.mxu0 0
        %6930 = vmatpush.bf16.msra.mxu0 0
        %6931 = vmatpush.bf16.msra.mxu0 %v6734
        %6932 = vmatpush.bf16.msra.mxu0 %v6731
        %6933 = vmatpush.bf16.msra.mxu0 %v6728
        %6934 = vmatpush.bf16.msra.mxu0 %v6725
        %6935 = vmatmul.bf16.gmra.mxu0 %v6846
        %v6936 = vpop.f32.mrf.mxu0
        %v6937 = vadd.f32 %v6918, %v6936
        %v6938 = vpop.f32.mrf.mxu0
        %v6939 = vadd.f32 %v6920, %v6938
        %6940 = vmatmul.bf16.gmra.mxu0 %v6849
        %v6941 = vpop.f32.mrf.mxu0
        %v6942 = vadd.f32 %v6923, %v6941
        %v6943 = vpop.f32.mrf.mxu0
        %v6944 = vadd.f32 %v6925, %v6943
        %6945 = vdwg.mxu0
        %6946 = vmatpush.bf16.msra.mxu0 %v6651
        %6947 = vmatpush.bf16.msra.mxu0 %v6648
        %6948 = vmatpush.bf16.msra.mxu0 %v6645
        %6949 = vmatpush.bf16.msra.mxu0 %v6642
        %6950 = vmatpush.bf16.msra.mxu0 %v6639
        %6951 = vmatpush.bf16.msra.mxu0 %v6636
        %6952 = vmatpush.bf16.msra.mxu0 %v6633
        %6953 = vmatpush.bf16.msra.mxu0 %v6630
        %6954 = vmatmul.bf16.gmra.mxu0 %v6251
        %v6955 = vpop.f32.mrf.mxu0
        %v6956 = vadd.f32 %v6202, %v6955
        %v6957 = vpop.f32.mrf.mxu0
        %v6958 = vadd.f32 %v6207, %v6957
        %6959 = vmatmul.bf16.gmra.mxu0 %v6256
        %v6960 = vpop.f32.mrf.mxu0
        %v6961 = vadd.f32 %v6212, %v6960
        %v6962 = vpop.f32.mrf.mxu0
        %v6963 = vadd.f32 %v6217, %v6962
        %6964 = vdwg.mxu0
        %6965 = vmatpush.bf16.msra.mxu0 %v6675
        %6966 = vmatpush.bf16.msra.mxu0 %v6672
        %6967 = vmatpush.bf16.msra.mxu0 %v6669
        %6968 = vmatpush.bf16.msra.mxu0 %v6666
        %6969 = vmatpush.bf16.msra.mxu0 %v6663
        %6970 = vmatpush.bf16.msra.mxu0 %v6660
        %6971 = vmatpush.bf16.msra.mxu0 %v6657
        %6972 = vmatpush.bf16.msra.mxu0 %v6654
        %6973 = vmatmul.bf16.gmra.mxu0 %v6252
        %v6974 = vpop.f32.mrf.mxu0
        %v6975 = vadd.f32 %v6956, %v6974
        %v6976 = vpop.f32.mrf.mxu0
        %v6977 = vadd.f32 %v6958, %v6976
        %6978 = vmatmul.bf16.gmra.mxu0 %v6257
        %v6979 = vpop.f32.mrf.mxu0
        %v6980 = vadd.f32 %v6961, %v6979
        %v6981 = vpop.f32.mrf.mxu0
        %v6982 = vadd.f32 %v6963, %v6981
        %6983 = vdwg.mxu0
        %6984 = vmatpush.bf16.msra.mxu0 %v6699
        %6985 = vmatpush.bf16.msra.mxu0 %v6696
        %6986 = vmatpush.bf16.msra.mxu0 %v6693
        %6987 = vmatpush.bf16.msra.mxu0 %v6690
        %6988 = vmatpush.bf16.msra.mxu0 %v6687
        %6989 = vmatpush.bf16.msra.mxu0 %v6684
        %6990 = vmatpush.bf16.msra.mxu0 %v6681
        %6991 = vmatpush.bf16.msra.mxu0 %v6678
        %6992 = vmatmul.bf16.gmra.mxu0 %v6253
        %v6993 = vpop.f32.mrf.mxu0
        %v6994 = vadd.f32 %v6975, %v6993
        %v6995 = vpop.f32.mrf.mxu0
        %v6996 = vadd.f32 %v6977, %v6995
        %6997 = vmatmul.bf16.gmra.mxu0 %v6258
        %v6998 = vpop.f32.mrf.mxu0
        %v6999 = vadd.f32 %v6980, %v6998
        %v7000 = vpop.f32.mrf.mxu0
        %v7001 = vadd.f32 %v6982, %v7000
        %7002 = vdwg.mxu0
        %7003 = vmatpush.bf16.msra.mxu0 %v6723
        %7004 = vmatpush.bf16.msra.mxu0 %v6720
        %7005 = vmatpush.bf16.msra.mxu0 %v6717
        %7006 = vmatpush.bf16.msra.mxu0 %v6714
        %7007 = vmatpush.bf16.msra.mxu0 %v6711
        %7008 = vmatpush.bf16.msra.mxu0 %v6708
        %7009 = vmatpush.bf16.msra.mxu0 %v6705
        %7010 = vmatpush.bf16.msra.mxu0 %v6702
        %7011 = vmatmul.bf16.gmra.mxu0 %v6254
        %v7012 = vpop.f32.mrf.mxu0
        %v7013 = vadd.f32 %v6994, %v7012
        %v7014 = vpop.f32.mrf.mxu0
        %v7015 = vadd.f32 %v6996, %v7014
        %7016 = vmatmul.bf16.gmra.mxu0 %v6259
        %v7017 = vpop.f32.mrf.mxu0
        %v7018 = vadd.f32 %v6999, %v7017
        %v7019 = vpop.f32.mrf.mxu0
        %v7020 = vadd.f32 %v7001, %v7019
        %7021 = vdwg.mxu0
        %7022 = vmatpush.bf16.msra.mxu0 0
        %7023 = vmatpush.bf16.msra.mxu0 0
        %7024 = vmatpush.bf16.msra.mxu0 0
        %7025 = vmatpush.bf16.msra.mxu0 0
        %7026 = vmatpush.bf16.msra.mxu0 %v6735
        %7027 = vmatpush.bf16.msra.mxu0 %v6732
        %7028 = vmatpush.bf16.msra.mxu0 %v6729
        %7029 = vmatpush.bf16.msra.mxu0 %v6726
        %7030 = vmatmul.bf16.gmra.mxu0 %v6846
        %v7031 = vpop.f32.mrf.mxu0
        %v7032 = vadd.f32 %v7013, %v7031
        %v7033 = vpop.f32.mrf.mxu0
        %v7034 = vadd.f32 %v7015, %v7033
        %7035 = vmatmul.bf16.gmra.mxu0 %v6849
        %v7036 = vpop.f32.mrf.mxu0
        %v7037 = vadd.f32 %v7018, %v7036
        %v7038 = vpop.f32.mrf.mxu0
        %v7039 = vadd.f32 %v7020, %v7038
        %7040 = vdwg.mxu0
        %7041 = vmatpush.bf16.msra.mxu0 %v6652
        %7042 = vmatpush.bf16.msra.mxu0 %v6649
        %7043 = vmatpush.bf16.msra.mxu0 %v6646
        %7044 = vmatpush.bf16.msra.mxu0 %v6643
        %7045 = vmatpush.bf16.msra.mxu0 %v6640
        %7046 = vmatpush.bf16.msra.mxu0 %v6637
        %7047 = vmatpush.bf16.msra.mxu0 %v6634
        %7048 = vmatpush.bf16.msra.mxu0 %v6631
        %7049 = vmatmul.bf16.gmra.mxu0 %v6251
        %v7050 = vpop.f32.mrf.mxu0
        %v7051 = vadd.f32 %v6202, %v7050
        %v7052 = vpop.f32.mrf.mxu0
        %v7053 = vadd.f32 %v6207, %v7052
        %7054 = vmatmul.bf16.gmra.mxu0 %v6256
        %v7055 = vpop.f32.mrf.mxu0
        %v7056 = vadd.f32 %v6212, %v7055
        %v7057 = vpop.f32.mrf.mxu0
        %v7058 = vadd.f32 %v6217, %v7057
        %7059 = vdwg.mxu0
        %7060 = vmatpush.bf16.msra.mxu0 %v6676
        %7061 = vmatpush.bf16.msra.mxu0 %v6673
        %7062 = vmatpush.bf16.msra.mxu0 %v6670
        %7063 = vmatpush.bf16.msra.mxu0 %v6667
        %7064 = vmatpush.bf16.msra.mxu0 %v6664
        %7065 = vmatpush.bf16.msra.mxu0 %v6661
        %7066 = vmatpush.bf16.msra.mxu0 %v6658
        %7067 = vmatpush.bf16.msra.mxu0 %v6655
        %7068 = vmatmul.bf16.gmra.mxu0 %v6252
        %v7069 = vpop.f32.mrf.mxu0
        %v7070 = vadd.f32 %v7051, %v7069
        %v7071 = vpop.f32.mrf.mxu0
        %v7072 = vadd.f32 %v7053, %v7071
        %7073 = vmatmul.bf16.gmra.mxu0 %v6257
        %v7074 = vpop.f32.mrf.mxu0
        %v7075 = vadd.f32 %v7056, %v7074
        %v7076 = vpop.f32.mrf.mxu0
        %v7077 = vadd.f32 %v7058, %v7076
        %7078 = vdwg.mxu0
        %7079 = vmatpush.bf16.msra.mxu0 %v6700
        %7080 = vmatpush.bf16.msra.mxu0 %v6697
        %7081 = vmatpush.bf16.msra.mxu0 %v6694
        %7082 = vmatpush.bf16.msra.mxu0 %v6691
        %7083 = vmatpush.bf16.msra.mxu0 %v6688
        %7084 = vmatpush.bf16.msra.mxu0 %v6685
        %7085 = vmatpush.bf16.msra.mxu0 %v6682
        %7086 = vmatpush.bf16.msra.mxu0 %v6679
        %7087 = vmatmul.bf16.gmra.mxu0 %v6253
        %v7088 = vpop.f32.mrf.mxu0
        %v7089 = vadd.f32 %v7070, %v7088
        %v7090 = vpop.f32.mrf.mxu0
        %v7091 = vadd.f32 %v7072, %v7090
        %7092 = vmatmul.bf16.gmra.mxu0 %v6258
        %v7093 = vpop.f32.mrf.mxu0
        %v7094 = vadd.f32 %v7075, %v7093
        %v7095 = vpop.f32.mrf.mxu0
        %v7096 = vadd.f32 %v7077, %v7095
        %7097 = vdwg.mxu0
        %7098 = vmatpush.bf16.msra.mxu0 %v6724
        %7099 = vmatpush.bf16.msra.mxu0 %v6721
        %7100 = vmatpush.bf16.msra.mxu0 %v6718
        %7101 = vmatpush.bf16.msra.mxu0 %v6715
        %7102 = vmatpush.bf16.msra.mxu0 %v6712
        %7103 = vmatpush.bf16.msra.mxu0 %v6709
        %7104 = vmatpush.bf16.msra.mxu0 %v6706
        %7105 = vmatpush.bf16.msra.mxu0 %v6703
        %7106 = vmatmul.bf16.gmra.mxu0 %v6254
        %v7107 = vpop.f32.mrf.mxu0
        %v7108 = vadd.f32 %v7089, %v7107
        %v7109 = vpop.f32.mrf.mxu0
        %v7110 = vadd.f32 %v7091, %v7109
        %7111 = vmatmul.bf16.gmra.mxu0 %v6259
        %v7112 = vpop.f32.mrf.mxu0
        %v7113 = vadd.f32 %v7094, %v7112
        %v7114 = vpop.f32.mrf.mxu0
        %v7115 = vadd.f32 %v7096, %v7114
        %7116 = vdwg.mxu0
        %7117 = vmatpush.bf16.msra.mxu0 0
        %7118 = vmatpush.bf16.msra.mxu0 0
        %7119 = vmatpush.bf16.msra.mxu0 0
        %7120 = vmatpush.bf16.msra.mxu0 0
        %7121 = vmatpush.bf16.msra.mxu0 %v6736
        %7122 = vmatpush.bf16.msra.mxu0 %v6733
        %7123 = vmatpush.bf16.msra.mxu0 %v6730
        %7124 = vmatpush.bf16.msra.mxu0 %v6727
        %7125 = vmatmul.bf16.gmra.mxu0 %v6846
        %v7126 = vpop.f32.mrf.mxu0
        %v7127 = vadd.f32 %v7108, %v7126
        %v7128 = vpop.f32.mrf.mxu0
        %v7129 = vadd.f32 %v7110, %v7128
        %7130 = vmatmul.bf16.gmra.mxu0 %v6849
        %v7131 = vpop.f32.mrf.mxu0
        %v7132 = vadd.f32 %v7113, %v7131
        %v7133 = vpop.f32.mrf.mxu0
        %v7134 = vadd.f32 %v7115, %v7133
        %7135 = vdwg.mxu0
        %v7136 = vmax.f32 %v6937, 0.0
        %v7137 = vmax.f32 %v7032, 0.0
        %v7138 = vmax.f32 %v7127, 0.0
        %v7139 = vmax.f32 %v6939, 0.0
        %v7140 = vmax.f32 %v7034, 0.0
        %v7141 = vmax.f32 %v7129, 0.0
        %v7142 = vmax.f32 %v6942, 0.0
        %v7143 = vmax.f32 %v7037, 0.0
        %v7144 = vmax.f32 %v7132, 0.0
        %v7145 = vmax.f32 %v6944, 0.0
        %v7146 = vmax.f32 %v7039, 0.0
        %v7147 = vmax.f32 %v7134, 0.0
        %7148 = vst [vmem:[%s863] sm:$0xff] %v7136
        %7149 = vst [vmem:[%s863 + $0x8] sm:$0xff] %v7137
        %7150 = vst [vmem:[%s863 + $0x10] sm:$0xff] %v7138
        %7151 = vst [vmem:[%s863 + $0x18] sm:$0xff] %v7139
        %7152 = vst [vmem:[%s863 + $0x20] sm:$0xff] %v7140
        %7153 = vst [vmem:[%s863 + $0x28] sm:$0xff] %v7141
        %7154 = vst [vmem:[%s863 + $0x30] sm:$0xff] %v7142
        %7155 = vst [vmem:[%s863 + $0x38] sm:$0xff] %v7143
        %7156 = vst [vmem:[%s863 + $0x40] sm:$0xff] %v7144
        %7157 = vst [vmem:[%s863 + $0x48] sm:$0xff] %v7145
        %7158 = vst [vmem:[%s863 + $0x50] sm:$0xff] %v7146
        %7159 = vst [vmem:[%s863 + $0x58] sm:$0xff] %v7147
        %v7160 = vld [vmem:[%s882] sm:$0xff]
        %v7161 = vld [vmem:[%s882 + $0x8] sm:$0xff]
        %v7162 = vld [vmem:[%s882 + $0x10] sm:$0xff]
        %v7163 = vld [vmem:[%s882 + $0x18] sm:$0xff]
        %7168 = vrot.lane.b32.xlu0 %v7160, 118
        %v7169 = vpop.permute.xlu0 %7168
        %7170 = vrot.lane.b32.xlu0 %v7161, 118
        %v7171 = vpop.permute.xlu0 %7170
        %7172 = vrot.lane.b32.xlu0 %v7162, 118
        %v7173 = vpop.permute.xlu0 %7172
        %7174 = vrot.lane.b32.xlu0 %v7163, 118
        %v7175 = vpop.permute.xlu0 %7174
        %v7176 = vrot.slane %v7169, 4
        %v7177 = vrot.slane %v7171, 4
        %v7178 = vrot.slane %v7173, 4
        %v7179 = vrot.slane %v7175, 4
        %v7180 = vsel %vm906, %v7176, %v7177
        %vm7181 = vcmask 965632
        %v7182 = vsel %vm7181, %v7180, %v7171
        %v7183 = vsel %vm906, %v7178, %v7179
        %v7184 = vsel %vm7181, %v7183, %v7175
        %vm7187 = vcmask 392196
        %vm7188 = vmor %vm7187, %vm2848
        %7189 = vst.msk [vmem:[#allocation5] sm:$0xff] %vm7188, %v7182
        %7190 = vst.msk [vmem:[#allocation5 + $0x8] sm:$0xff] %vm7188, %v7184
        %7191 = vrot.lane.b32.xlu0 %v7160, 117
        %v7192 = vpop.permute.xlu0 %7191
        %7193 = vrot.lane.b32.xlu0 %v7161, 117
        %v7194 = vpop.permute.xlu0 %7193
        %7195 = vrot.lane.b32.xlu0 %v7162, 117
        %v7196 = vpop.permute.xlu0 %7195
        %7197 = vrot.lane.b32.xlu0 %v7163, 117
        %v7198 = vpop.permute.xlu0 %7197
        %v7199 = vrot.slane %v7192, 4
        %v7200 = vrot.slane %v7194, 4
        %v7201 = vrot.slane %v7196, 4
        %v7202 = vrot.slane %v7198, 4
        %v7203 = vsel %vm906, %v7199, %v7200
        %vm7204 = vcmask 957440
        %v7205 = vsel %vm7204, %v7203, %v7194
        %v7206 = vsel %vm906, %v7201, %v7202
        %v7207 = vsel %vm7204, %v7206, %v7198
        %7210 = vst.msk [vmem:[#allocation5 + $0x10] sm:$0xff] %vm7188, %v7205
        %7211 = vst.msk [vmem:[#allocation5 + $0x18] sm:$0xff] %vm7188, %v7207
        %7212 = vrot.lane.b32.xlu0 %v7160, 116
        %v7213 = vpop.permute.xlu0 %7212
        %7214 = vrot.lane.b32.xlu0 %v7161, 116
        %v7215 = vpop.permute.xlu0 %7214
        %7216 = vrot.lane.b32.xlu0 %v7162, 116
        %v7217 = vpop.permute.xlu0 %7216
        %7218 = vrot.lane.b32.xlu0 %v7163, 116
        %v7219 = vpop.permute.xlu0 %7218
        %v7220 = vrot.slane %v7213, 4
        %v7221 = vrot.slane %v7215, 4
        %v7222 = vrot.slane %v7217, 4
        %v7223 = vrot.slane %v7219, 4
        %v7224 = vsel %vm906, %v7220, %v7221
        %vm7225 = vcmask 949248
        %v7226 = vsel %vm7225, %v7224, %v7215
        %v7227 = vsel %vm906, %v7222, %v7223
        %v7228 = vsel %vm7225, %v7227, %v7219
        %7231 = vst.msk [vmem:[#allocation5 + $0x20] sm:$0xff] %vm7188, %v7226
        %7232 = vst.msk [vmem:[#allocation5 + $0x28] sm:$0xff] %vm7188, %v7228
        %7233 = vrot.lane.b32.xlu0 %v7160, 96
        %v7234 = vpop.permute.xlu0 %7233
        %7235 = vrot.lane.b32.xlu0 %v7161, 96
        %v7236 = vpop.permute.xlu0 %7235
        %7237 = vrot.lane.b32.xlu0 %v7162, 96
        %v7238 = vpop.permute.xlu0 %7237
        %7239 = vrot.lane.b32.xlu0 %v7163, 96
        %v7240 = vpop.permute.xlu0 %7239
        %v7241 = vrot.slane %v7234, 4
        %v7242 = vrot.slane %v7236, 4
        %v7243 = vrot.slane %v7238, 4
        %v7244 = vrot.slane %v7240, 4
        %v7245 = vsel %vm906, %v7241, %v7242
        %vm7246 = vcmask 785408
        %v7247 = vsel %vm7246, %v7245, %v7236
        %v7248 = vsel %vm906, %v7243, %v7244
        %v7249 = vsel %vm7246, %v7248, %v7240
        %7252 = vst.msk [vmem:[#allocation5 + $0x30] sm:$0xff] %vm7188, %v7247
        %7253 = vst.msk [vmem:[#allocation5 + $0x38] sm:$0xff] %vm7188, %v7249
        %7254 = vrot.lane.b32.xlu0 %v7160, 95
        %v7255 = vpop.permute.xlu0 %7254
        %7256 = vrot.lane.b32.xlu0 %v7161, 95
        %v7257 = vpop.permute.xlu0 %7256
        %7258 = vrot.lane.b32.xlu0 %v7162, 95
        %v7259 = vpop.permute.xlu0 %7258
        %7260 = vrot.lane.b32.xlu0 %v7163, 95
        %v7261 = vpop.permute.xlu0 %7260
        %v7262 = vrot.slane %v7255, 4
        %v7263 = vrot.slane %v7257, 4
        %v7264 = vrot.slane %v7259, 4
        %v7265 = vrot.slane %v7261, 4
        %v7266 = vsel %vm906, %v7262, %v7263
        %vm7267 = vcmask 777216
        %v7268 = vsel %vm7267, %v7266, %v7257
        %v7269 = vsel %vm906, %v7264, %v7265
        %v7270 = vsel %vm7267, %v7269, %v7261
        %7273 = vst.msk [vmem:[#allocation5 + $0x40] sm:$0xff] %vm7188, %v7268
        %7274 = vst.msk [vmem:[#allocation5 + $0x48] sm:$0xff] %vm7188, %v7270
        %7275 = vrot.lane.b32.xlu0 %v7160, 94
        %v7276 = vpop.permute.xlu0 %7275
        %7277 = vrot.lane.b32.xlu0 %v7161, 94
        %v7278 = vpop.permute.xlu0 %7277
        %7279 = vrot.lane.b32.xlu0 %v7162, 94
        %v7280 = vpop.permute.xlu0 %7279
        %7281 = vrot.lane.b32.xlu0 %v7163, 94
        %v7282 = vpop.permute.xlu0 %7281
        %v7283 = vrot.slane %v7276, 4
        %v7284 = vrot.slane %v7278, 4
        %v7285 = vrot.slane %v7280, 4
        %v7286 = vrot.slane %v7282, 4
        %v7287 = vsel %vm906, %v7283, %v7284
        %vm7288 = vcmask 769024
        %v7289 = vsel %vm7288, %v7287, %v7278
        %v7290 = vsel %vm906, %v7285, %v7286
        %v7291 = vsel %vm7288, %v7290, %v7282
        %7294 = vst.msk [vmem:[#allocation5 + $0x50] sm:$0xff] %vm7188, %v7289
        %7295 = vst.msk [vmem:[#allocation5 + $0x58] sm:$0xff] %vm7188, %v7291
        %7296 = vrot.lane.b32.xlu0 %v7160, 74
        %v7297 = vpop.permute.xlu0 %7296
        %7298 = vrot.lane.b32.xlu0 %v7161, 74
        %v7299 = vpop.permute.xlu0 %7298
        %7300 = vrot.lane.b32.xlu0 %v7162, 74
        %v7301 = vpop.permute.xlu0 %7300
        %7302 = vrot.lane.b32.xlu0 %v7163, 74
        %v7303 = vpop.permute.xlu0 %7302
        %v7304 = vrot.slane %v7297, 4
        %v7305 = vrot.slane %v7299, 4
        %v7306 = vrot.slane %v7301, 4
        %v7307 = vrot.slane %v7303, 4
        %v7308 = vsel %vm906, %v7304, %v7305
        %v7309 = vsel %vm1205, %v7308, %v7299
        %v7310 = vsel %vm906, %v7306, %v7307
        %v7311 = vsel %vm1205, %v7310, %v7303
        %7314 = vst.msk [vmem:[#allocation5 + $0x60] sm:$0xff] %vm7188, %v7309
        %7315 = vst.msk [vmem:[#allocation5 + $0x68] sm:$0xff] %vm7188, %v7311
        %7316 = vrot.lane.b32.xlu0 %v7160, 73
        %v7317 = vpop.permute.xlu0 %7316
        %7318 = vrot.lane.b32.xlu0 %v7161, 73
        %v7319 = vpop.permute.xlu0 %7318
        %7320 = vrot.lane.b32.xlu0 %v7162, 73
        %v7321 = vpop.permute.xlu0 %7320
        %7322 = vrot.lane.b32.xlu0 %v7163, 73
        %v7323 = vpop.permute.xlu0 %7322
        %v7324 = vrot.slane %v7317, 4
        %v7325 = vrot.slane %v7319, 4
        %v7326 = vrot.slane %v7321, 4
        %v7327 = vrot.slane %v7323, 4
        %v7328 = vsel %vm906, %v7324, %v7325
        %vm7329 = vcmask 596992
        %v7330 = vsel %vm7329, %v7328, %v7319
        %v7331 = vsel %vm906, %v7326, %v7327
        %v7332 = vsel %vm7329, %v7331, %v7323
        %7335 = vst.msk [vmem:[#allocation5 + $0x70] sm:$0xff] %vm7188, %v7330
        %7336 = vst.msk [vmem:[#allocation5 + $0x78] sm:$0xff] %vm7188, %v7332
        %7337 = vrot.lane.b32.xlu0 %v7160, 72
        %v7338 = vpop.permute.xlu0 %7337
        %7339 = vrot.lane.b32.xlu0 %v7161, 72
        %v7340 = vpop.permute.xlu0 %7339
        %7341 = vrot.lane.b32.xlu0 %v7162, 72
        %v7342 = vpop.permute.xlu0 %7341
        %7343 = vrot.lane.b32.xlu0 %v7163, 72
        %v7344 = vpop.permute.xlu0 %7343
        %v7345 = vrot.slane %v7338, 4
        %v7346 = vrot.slane %v7340, 4
        %v7347 = vrot.slane %v7342, 4
        %v7348 = vrot.slane %v7344, 4
        %v7349 = vsel %vm906, %v7345, %v7346
        %vm7350 = vcmask 588800
        %v7351 = vsel %vm7350, %v7349, %v7340
        %v7352 = vsel %vm906, %v7347, %v7348
        %v7353 = vsel %vm7350, %v7352, %v7344
        %7356 = vst.msk [vmem:[#allocation5 + $0x80] sm:$0xff] %vm7188, %v7351
        %7357 = vst.msk [vmem:[#allocation5 + $0x88] sm:$0xff] %vm7188, %v7353
        %7358 = vrot.lane.b32.xlu0 %v7160, 36
        %v7359 = vpop.permute.xlu0 %7358
        %7360 = vrot.lane.b32.xlu0 %v7161, 36
        %v7361 = vpop.permute.xlu0 %7360
        %7362 = vrot.lane.b32.xlu0 %v7162, 36
        %v7363 = vpop.permute.xlu0 %7362
        %7364 = vrot.lane.b32.xlu0 %v7163, 36
        %v7365 = vpop.permute.xlu0 %7364
        %v7366 = vrot.slane %v7359, 4
        %v7367 = vrot.slane %v7361, 4
        %v7368 = vrot.slane %v7363, 4
        %v7369 = vrot.slane %v7365, 4
        %v7370 = vsel %vm906, %v7366, %v7367
        %v7371 = vsel %vm3296, %v7359, %v7370
        %v7372 = vsel %vm906, %v7368, %v7369
        %v7373 = vsel %vm3296, %v7363, %v7372
        %7376 = vst.msk [vmem:[#allocation5 + $0x90] sm:$0xff] %vm7188, %v7371
        %7377 = vst.msk [vmem:[#allocation5 + $0x98] sm:$0xff] %vm7188, %v7373
        %7378 = vrot.lane.b32.xlu0 %v7160, 33
        %v7379 = vpop.permute.xlu0 %7378
        %7380 = vrot.lane.b32.xlu0 %v7161, 33
        %v7381 = vpop.permute.xlu0 %7380
        %7382 = vrot.lane.b32.xlu0 %v7162, 33
        %v7383 = vpop.permute.xlu0 %7382
        %7384 = vrot.lane.b32.xlu0 %v7163, 33
        %v7385 = vpop.permute.xlu0 %7384
        %v7386 = vrot.slane %v7379, 4
        %v7387 = vrot.slane %v7381, 4
        %v7388 = vrot.slane %v7383, 4
        %v7389 = vrot.slane %v7385, 4
        %v7390 = vsel %vm906, %v7386, %v7387
        %vm7391 = vcmask 269312
        %v7392 = vsel %vm7391, %v7379, %v7390
        %v7393 = vsel %vm906, %v7388, %v7389
        %v7394 = vsel %vm7391, %v7383, %v7393
        %7397 = vst.msk [vmem:[#allocation5 + $0xa0] sm:$0xff] %vm7188, %v7392
        %7398 = vst.msk [vmem:[#allocation5 + $0xa8] sm:$0xff] %vm7188, %v7394
        %7399 = vrot.lane.b32.xlu0 %v7160, 30
        %v7400 = vpop.permute.xlu0 %7399
        %7401 = vrot.lane.b32.xlu0 %v7161, 30
        %v7402 = vpop.permute.xlu0 %7401
        %7403 = vrot.lane.b32.xlu0 %v7162, 30
        %v7404 = vpop.permute.xlu0 %7403
        %7405 = vrot.lane.b32.xlu0 %v7163, 30
        %v7406 = vpop.permute.xlu0 %7405
        %v7407 = vrot.slane %v7400, 4
        %v7408 = vrot.slane %v7402, 4
        %v7409 = vrot.slane %v7404, 4
        %v7410 = vrot.slane %v7406, 4
        %v7411 = vsel %vm906, %v7407, %v7408
        %v7412 = vsel %vm1232, %v7400, %v7411
        %v7413 = vsel %vm906, %v7409, %v7410
        %v7414 = vsel %vm1232, %v7404, %v7413
        %7417 = vst.msk [vmem:[#allocation5 + $0xb0] sm:$0xff] %vm7188, %v7412
        %7418 = vst.msk [vmem:[#allocation5 + $0xb8] sm:$0xff] %vm7188, %v7414
        %7419 = vrot.lane.b32.xlu0 %v7160, 98
        %v7420 = vpop.permute.xlu0 %7419
        %7421 = vrot.lane.b32.xlu0 %v7161, 98
        %v7422 = vpop.permute.xlu0 %7421
        %7423 = vrot.lane.b32.xlu0 %v7162, 98
        %v7424 = vpop.permute.xlu0 %7423
        %7425 = vrot.lane.b32.xlu0 %v7163, 98
        %v7426 = vpop.permute.xlu0 %7425
        %v7427 = vrot.slane %v7420, 4
        %v7428 = vrot.slane %v7422, 4
        %v7429 = vrot.slane %v7424, 4
        %v7430 = vrot.slane %v7426, 4
        %v7431 = vsel %vm906, %v7427, %v7428
        %vm7432 = vcmask 801792
        %v7433 = vsel %vm7432, %v7431, %v7422
        %v7434 = vsel %vm906, %v7429, %v7430
        %v7435 = vsel %vm7432, %v7434, %v7426
        %7438 = vst.msk [vmem:[#allocation5 + $0xc0] sm:$0xff] %vm7188, %v7433
        %7439 = vst.msk [vmem:[#allocation5 + $0xc8] sm:$0xff] %vm7188, %v7435
        %7440 = vst.msk [vmem:[#allocation5 + $0xd0] sm:$0xff] %vm7188, %v7268
        %7441 = vst.msk [vmem:[#allocation5 + $0xd8] sm:$0xff] %vm7188, %v7270
        %7442 = vrot.lane.b32.xlu0 %v7160, 92
        %v7443 = vpop.permute.xlu0 %7442
        %7444 = vrot.lane.b32.xlu0 %v7161, 92
        %v7445 = vpop.permute.xlu0 %7444
        %7446 = vrot.lane.b32.xlu0 %v7162, 92
        %v7447 = vpop.permute.xlu0 %7446
        %7448 = vrot.lane.b32.xlu0 %v7163, 92
        %v7449 = vpop.permute.xlu0 %7448
        %v7450 = vrot.slane %v7443, 4
        %v7451 = vrot.slane %v7445, 4
        %v7452 = vrot.slane %v7447, 4
        %v7453 = vrot.slane %v7449, 4
        %v7454 = vsel %vm906, %v7450, %v7451
        %v7455 = vsel %vm3851, %v7454, %v7445
        %v7456 = vsel %vm906, %v7452, %v7453
        %v7457 = vsel %vm3851, %v7456, %v7449
        %7460 = vst.msk [vmem:[#allocation5 + $0xe0] sm:$0xff] %vm7188, %v7455
        %7461 = vst.msk [vmem:[#allocation5 + $0xe8] sm:$0xff] %vm7188, %v7457
        %7462 = vrot.lane.b32.xlu0 %v7160, 32
        %v7463 = vpop.permute.xlu0 %7462
        %7464 = vrot.lane.b32.xlu0 %v7161, 32
        %v7465 = vpop.permute.xlu0 %7464
        %7466 = vrot.lane.b32.xlu0 %v7162, 32
        %v7467 = vpop.permute.xlu0 %7466
        %7468 = vrot.lane.b32.xlu0 %v7163, 32
        %v7469 = vpop.permute.xlu0 %7468
        %v7470 = vrot.slane %v7463, 4
        %v7471 = vrot.slane %v7465, 4
        %v7472 = vrot.slane %v7467, 4
        %v7473 = vrot.slane %v7469, 4
        %v7474 = vsel %vm906, %v7470, %v7471
        %v7475 = vsel %vm1675, %v7474, %v7465
        %v7476 = vsel %vm906, %v7472, %v7473
        %v7477 = vsel %vm1675, %v7476, %v7469
        %7480 = vst.msk [vmem:[#allocation5 + $0xf0] sm:$0xff] %vm7188, %v7475
        %7481 = vst.msk [vmem:[#allocation5 + $0xf8] sm:$0xff] %vm7188, %v7477
        %7482 = vrot.lane.b32.xlu0 %v7160, 29
        %v7483 = vpop.permute.xlu0 %7482
        %7484 = vrot.lane.b32.xlu0 %v7161, 29
        %v7485 = vpop.permute.xlu0 %7484
        %7486 = vrot.lane.b32.xlu0 %v7162, 29
        %v7487 = vpop.permute.xlu0 %7486
        %7488 = vrot.lane.b32.xlu0 %v7163, 29
        %v7489 = vpop.permute.xlu0 %7488
        %v7490 = vrot.slane %v7483, 4
        %v7491 = vrot.slane %v7485, 4
        %v7492 = vrot.slane %v7487, 4
        %v7493 = vrot.slane %v7489, 4
        %v7494 = vsel %vm906, %v7490, %v7491
        %v7495 = vsel %vm989, %v7494, %v7485
        %v7496 = vsel %vm906, %v7492, %v7493
        %v7497 = vsel %vm989, %v7496, %v7489
        %7500 = vst.msk [vmem:[#allocation5 + $0x100] sm:$0xff] %vm7188, %v7495
        %7501 = vst.msk [vmem:[#allocation5 + $0x108] sm:$0xff] %vm7188, %v7497
        %7502 = vrot.lane.b32.xlu0 %v7160, 26
        %v7503 = vpop.permute.xlu0 %7502
        %7504 = vrot.lane.b32.xlu0 %v7161, 26
        %v7505 = vpop.permute.xlu0 %7504
        %7506 = vrot.lane.b32.xlu0 %v7162, 26
        %v7507 = vpop.permute.xlu0 %7506
        %7508 = vrot.lane.b32.xlu0 %v7163, 26
        %v7509 = vpop.permute.xlu0 %7508
        %v7510 = vrot.slane %v7503, 4
        %v7511 = vrot.slane %v7505, 4
        %v7512 = vrot.slane %v7507, 4
        %v7513 = vrot.slane %v7509, 4
        %v7514 = vsel %vm906, %v7510, %v7511
        %v7515 = vsel %vm1263, %v7514, %v7505
        %v7516 = vsel %vm906, %v7512, %v7513
        %v7517 = vsel %vm1263, %v7516, %v7509
        %7520 = vst.msk [vmem:[#allocation5 + $0x110] sm:$0xff] %vm7188, %v7515
        %7521 = vst.msk [vmem:[#allocation5 + $0x118] sm:$0xff] %vm7188, %v7517
        %7522 = vrot.lane.b32.xlu0 %v7160, 82
        %v7523 = vpop.permute.xlu0 %7522
        %7524 = vrot.lane.b32.xlu0 %v7162, 82
        %v7525 = vpop.permute.xlu0 %7524
        %v7526 = vrot.slane %v7523, 4
        %v7527 = vrot.slane %v7525, 4
        %vm7528 = vcmask 670720
        %v7529 = vsel %vm7528, %v7523, %v7526
        %v7530 = vsel %vm7528, %v7525, %v7527
        %7533 = vst.msk [vmem:[#allocation5 + $0x120] sm:$0xff] %vm7188, %v7529
        %7534 = vst.msk [vmem:[#allocation5 + $0x128] sm:$0xff] %vm7188, %v7530
        %7535 = vrot.lane.b32.xlu0 %v7160, 77
        %v7536 = vpop.permute.xlu0 %7535
        %7537 = vrot.lane.b32.xlu0 %v7162, 77
        %v7538 = vpop.permute.xlu0 %7537
        %v7539 = vrot.slane %v7536, 4
        %v7540 = vrot.slane %v7538, 4
        %v7541 = vsel %vm3368, %v7536, %v7539
        %v7542 = vsel %vm3368, %v7538, %v7540
        %7545 = vst.msk [vmem:[#allocation5 + $0x130] sm:$0xff] %vm7188, %v7541
        %7546 = vst.msk [vmem:[#allocation5 + $0x138] sm:$0xff] %vm7188, %v7542
        %v7547 = vsel %vm7350, %v7338, %v7345
        %v7548 = vsel %vm7350, %v7342, %v7347
        %7551 = vst.msk [vmem:[#allocation5 + $0x140] sm:$0xff] %vm7188, %v7547
        %7552 = vst.msk [vmem:[#allocation5 + $0x148] sm:$0xff] %vm7188, %v7548
        %7553 = vrot.lane.b32.xlu0 %v7160, 100
        %v7554 = vpop.permute.xlu0 %7553
        %7555 = vrot.lane.b32.xlu0 %v7161, 100
        %v7556 = vpop.permute.xlu0 %7555
        %7557 = vrot.lane.b32.xlu0 %v7162, 100
        %v7558 = vpop.permute.xlu0 %7557
        %7559 = vrot.lane.b32.xlu0 %v7163, 100
        %v7560 = vpop.permute.xlu0 %7559
        %v7561 = vrot.slane %v7554, 4
        %v7562 = vrot.slane %v7556, 4
        %v7563 = vrot.slane %v7558, 4
        %v7564 = vrot.slane %v7560, 4
        %v7565 = vsel %vm906, %v7561, %v7562
        %v7566 = vsel %vm1412, %v7565, %v7556
        %v7567 = vsel %vm906, %v7563, %v7564
        %v7568 = vsel %vm1412, %v7567, %v7560
        %7571 = vst.msk [vmem:[#allocation5 + $0x150] sm:$0xff] %vm7188, %v7566
        %7572 = vst.msk [vmem:[#allocation5 + $0x158] sm:$0xff] %vm7188, %v7568
        %7573 = vst.msk [vmem:[#allocation5 + $0x160] sm:$0xff] %vm7188, %v7268
        %7574 = vst.msk [vmem:[#allocation5 + $0x168] sm:$0xff] %vm7188, %v7270
        %7575 = vrot.lane.b32.xlu0 %v7160, 90
        %v7576 = vpop.permute.xlu0 %7575
        %7577 = vrot.lane.b32.xlu0 %v7161, 90
        %v7578 = vpop.permute.xlu0 %7577
        %7579 = vrot.lane.b32.xlu0 %v7162, 90
        %v7580 = vpop.permute.xlu0 %7579
        %7581 = vrot.lane.b32.xlu0 %v7163, 90
        %v7582 = vpop.permute.xlu0 %7581
        %v7583 = vrot.slane %v7576, 4
        %v7584 = vrot.slane %v7578, 4
        %v7585 = vrot.slane %v7580, 4
        %v7586 = vrot.slane %v7582, 4
        %v7587 = vsel %vm906, %v7583, %v7584
        %vm7588 = vcmask 736256
        %v7589 = vsel %vm7588, %v7587, %v7578
        %v7590 = vsel %vm906, %v7585, %v7586
        %v7591 = vsel %vm7588, %v7590, %v7582
        %7594 = vst.msk [vmem:[#allocation5 + $0x170] sm:$0xff] %vm7188, %v7589
        %7595 = vst.msk [vmem:[#allocation5 + $0x178] sm:$0xff] %vm7188, %v7591
        %v7596 = vsel %vm7181, %v7171, %v7177
        %v7597 = vsel %vm7181, %v7175, %v7179
        %7600 = vst.msk [vmem:[#allocation5 + $0x180] sm:$0xff] %vm7188, %v7596
        %7601 = vst.msk [vmem:[#allocation5 + $0x188] sm:$0xff] %vm7188, %v7597
        %7602 = vrot.lane.b32.xlu0 %v7161, 113
        %v7603 = vpop.permute.xlu0 %7602
        %7604 = vrot.lane.b32.xlu0 %v7163, 113
        %v7605 = vpop.permute.xlu0 %7604
        %v7606 = vrot.slane %v7603, 4
        %v7607 = vrot.slane %v7605, 4
        %vm7608 = vcmask 924672
        %v7609 = vsel %vm7608, %v7603, %v7606
        %v7610 = vsel %vm7608, %v7605, %v7607
        %7613 = vst.msk [vmem:[#allocation5 + $0x190] sm:$0xff] %vm7188, %v7609
        %7614 = vst.msk [vmem:[#allocation5 + $0x198] sm:$0xff] %vm7188, %v7610
        %7615 = vrot.lane.b32.xlu0 %v7161, 108
        %v7616 = vpop.permute.xlu0 %7615
        %7617 = vrot.lane.b32.xlu0 %v7163, 108
        %v7618 = vpop.permute.xlu0 %7617
        %v7619 = vrot.slane %v7616, 4
        %v7620 = vrot.slane %v7618, 4
        %v7621 = vsel %vm1327, %v7616, %v7619
        %v7622 = vsel %vm1327, %v7618, %v7620
        %7625 = vst.msk [vmem:[#allocation5 + $0x1a0] sm:$0xff] %vm7188, %v7621
        %7626 = vst.msk [vmem:[#allocation5 + $0x1a8] sm:$0xff] %vm7188, %v7622
        %7627 = vst.msk [vmem:[#allocation5 + $0x1b0] sm:$0xff] %vm7188, %v7160
        %7628 = vst.msk [vmem:[#allocation5 + $0x1b8] sm:$0xff] %vm7188, %v7162
        %7629 = vrot.lane.b32.xlu0 %v7160, 121
        %v7630 = vpop.permute.xlu0 %7629
        %7631 = vrot.lane.b32.xlu0 %v7162, 121
        %v7632 = vpop.permute.xlu0 %7631
        %v7633 = vrot.slane %v7630, 4
        %v7634 = vrot.slane %v7632, 4
        %v7635 = vsel %vm3718, %v7630, %v7633
        %v7636 = vsel %vm3718, %v7632, %v7634
        %7639 = vst.msk [vmem:[#allocation5 + $0x1c0] sm:$0xff] %vm7188, %v7635
        %7640 = vst.msk [vmem:[#allocation5 + $0x1c8] sm:$0xff] %vm7188, %v7636
        %7641 = vrot.lane.b32.xlu0 %v7160, 114
        %v7642 = vpop.permute.xlu0 %7641
        %7643 = vrot.lane.b32.xlu0 %v7162, 114
        %v7644 = vpop.permute.xlu0 %7643
        %v7645 = vrot.slane %v7642, 4
        %v7646 = vrot.slane %v7644, 4
        %v7647 = vsel %vm3745, %v7642, %v7645
        %v7648 = vsel %vm3745, %v7644, %v7646
        %7651 = vst.msk [vmem:[#allocation5 + $0x1d0] sm:$0xff] %vm7188, %v7647
        %7652 = vst.msk [vmem:[#allocation5 + $0x1d8] sm:$0xff] %vm7188, %v7648
        %7653 = vrot.lane.b32.xlu0 %v7160, 102
        %v7654 = vpop.permute.xlu0 %7653
        %7655 = vrot.lane.b32.xlu0 %v7161, 102
        %v7656 = vpop.permute.xlu0 %7655
        %7657 = vrot.lane.b32.xlu0 %v7162, 102
        %v7658 = vpop.permute.xlu0 %7657
        %7659 = vrot.lane.b32.xlu0 %v7163, 102
        %v7660 = vpop.permute.xlu0 %7659
        %v7661 = vrot.slane %v7654, 4
        %v7662 = vrot.slane %v7656, 4
        %v7663 = vrot.slane %v7658, 4
        %v7664 = vrot.slane %v7660, 4
        %v7665 = vsel %vm906, %v7661, %v7662
        %vm7666 = vcmask 834560
        %v7667 = vsel %vm7666, %v7665, %v7656
        %v7668 = vsel %vm906, %v7663, %v7664
        %v7669 = vsel %vm7666, %v7668, %v7660
        %7672 = vst.msk [vmem:[#allocation5 + $0x1e0] sm:$0xff] %vm7188, %v7667
        %7673 = vst.msk [vmem:[#allocation5 + $0x1e8] sm:$0xff] %vm7188, %v7669
        %7674 = vst.msk [vmem:[#allocation5 + $0x1f0] sm:$0xff] %vm7188, %v7268
        %7675 = vst.msk [vmem:[#allocation5 + $0x1f8] sm:$0xff] %vm7188, %v7270
        %7676 = vrot.lane.b32.xlu0 %v7160, 88
        %v7677 = vpop.permute.xlu0 %7676
        %7678 = vrot.lane.b32.xlu0 %v7161, 88
        %v7679 = vpop.permute.xlu0 %7678
        %7680 = vrot.lane.b32.xlu0 %v7162, 88
        %v7681 = vpop.permute.xlu0 %7680
        %7682 = vrot.lane.b32.xlu0 %v7163, 88
        %v7683 = vpop.permute.xlu0 %7682
        %v7684 = vrot.slane %v7677, 4
        %v7685 = vrot.slane %v7679, 4
        %v7686 = vrot.slane %v7681, 4
        %v7687 = vrot.slane %v7683, 4
        %v7688 = vsel %vm906, %v7684, %v7685
        %vm7689 = vcmask 719872
        %v7690 = vsel %vm7689, %v7688, %v7679
        %v7691 = vsel %vm906, %v7686, %v7687
        %v7692 = vsel %vm7689, %v7691, %v7683
        %7695 = vst.msk [vmem:[#allocation5 + $0x200] sm:$0xff] %vm7188, %v7690
        %7696 = vst.msk [vmem:[#allocation5 + $0x208] sm:$0xff] %vm7188, %v7692
        %7697 = vrot.lane.b32.xlu0 %v7161, 76
        %v7698 = vpop.permute.xlu0 %7697
        %7699 = vrot.lane.b32.xlu0 %v7163, 76
        %v7700 = vpop.permute.xlu0 %7699
        %v7701 = vrot.slane %v7698, 4
        %v7702 = vrot.slane %v7700, 4
        %v7703 = vsel %vm1178, %v7698, %v7701
        %v7704 = vsel %vm1178, %v7700, %v7702
        %7707 = vst.msk [vmem:[#allocation5 + $0x210] sm:$0xff] %vm7188, %v7703
        %7708 = vst.msk [vmem:[#allocation5 + $0x218] sm:$0xff] %vm7188, %v7704
        %7709 = vrot.lane.b32.xlu0 %v7161, 69
        %v7710 = vpop.permute.xlu0 %7709
        %7711 = vrot.lane.b32.xlu0 %v7163, 69
        %v7712 = vpop.permute.xlu0 %7711
        %v7713 = vrot.slane %v7710, 4
        %v7714 = vrot.slane %v7712, 4
        %v7715 = vsel %vm2873, %v7710, %v7713
        %v7716 = vsel %vm2873, %v7712, %v7714
        %7719 = vst.msk [vmem:[#allocation5 + $0x220] sm:$0xff] %vm7188, %v7715
        %7720 = vst.msk [vmem:[#allocation5 + $0x228] sm:$0xff] %vm7188, %v7716
        %7721 = vrot.lane.b32.xlu0 %v7161, 62
        %v7722 = vpop.permute.xlu0 %7721
        %7723 = vrot.lane.b32.xlu0 %v7163, 62
        %v7724 = vpop.permute.xlu0 %7723
        %v7725 = vrot.slane %v7722, 4
        %v7726 = vrot.slane %v7724, 4
        %vm7727 = vcmask 506880
        %v7728 = vsel %vm7727, %v7722, %v7725
        %v7729 = vsel %vm7727, %v7724, %v7726
        %7732 = vst.msk [vmem:[#allocation5 + $0x230] sm:$0xff] %vm7188, %v7728
        %7733 = vst.msk [vmem:[#allocation5 + $0x238] sm:$0xff] %vm7188, %v7729
        %v7734 = vld [vmem:[#allocation19] sm:$0xff]
        %v7735 = vld [vmem:[#allocation19 + $0x8] sm:$0xff]
        %v7736 = vld [vmem:[#allocation19 + $0x10] sm:$0xf]
        %v7737 = vld [vmem:[#allocation19 + $0x14] sm:$0xff]
        %v7738 = vld [vmem:[#allocation19 + $0x1c] sm:$0xff]
        %v7739 = vld [vmem:[#allocation19 + $0x24] sm:$0xf]
        %v7740 = vld [vmem:[#allocation19 + $0x28] sm:$0xff]
        %v7741 = vld [vmem:[#allocation19 + $0x30] sm:$0xff]
        %v7742 = vld [vmem:[#allocation19 + $0x38] sm:$0xf]
        %v7743 = vld [vmem:[#allocation19 + $0x3c] sm:$0xff]
        %v7744 = vld [vmem:[#allocation19 + $0x44] sm:$0xff]
        %v7745 = vld [vmem:[#allocation19 + $0x4c] sm:$0xf]
        %v7746 = vld [vmem:[#allocation5] sm:$0xff]
        %v7747 = vld [vmem:[#allocation5 + $0x8] sm:$0xff]
        %v7748 = vld [vmem:[#allocation5 + $0x10] sm:$0xff]
        %v7749 = vld [vmem:[#allocation5 + $0x18] sm:$0xff]
        %v7750 = vld [vmem:[#allocation5 + $0x20] sm:$0xff]
        %v7751 = vld [vmem:[#allocation5 + $0x28] sm:$0xff]
        %v7752 = vld [vmem:[#allocation5 + $0x30] sm:$0xff]
        %v7753 = vld [vmem:[#allocation5 + $0x38] sm:$0xff]
        %v7754 = vld [vmem:[#allocation5 + $0x40] sm:$0xff]
        %v7755 = vld [vmem:[#allocation5 + $0x48] sm:$0xff]
        %v7756 = vld [vmem:[#allocation5 + $0x50] sm:$0xff]
        %v7757 = vld [vmem:[#allocation5 + $0x58] sm:$0xff]
        %v7758 = vld [vmem:[#allocation5 + $0x60] sm:$0xff]
        %v7759 = vld [vmem:[#allocation5 + $0x68] sm:$0xff]
        %v7760 = vld [vmem:[#allocation5 + $0x70] sm:$0xff]
        %v7761 = vld [vmem:[#allocation5 + $0x78] sm:$0xff]
        %v7762 = vld [vmem:[#allocation5 + $0x80] sm:$0xff]
        %v7763 = vld [vmem:[#allocation5 + $0x88] sm:$0xff]
        %v7764 = vld [vmem:[#allocation5 + $0x90] sm:$0xff]
        %v7765 = vld [vmem:[#allocation5 + $0x98] sm:$0xff]
        %v7766 = vld [vmem:[#allocation5 + $0xa0] sm:$0xff]
        %v7767 = vld [vmem:[#allocation5 + $0xa8] sm:$0xff]
        %v7768 = vld [vmem:[#allocation5 + $0xb0] sm:$0xff]
        %v7769 = vld [vmem:[#allocation5 + $0xb8] sm:$0xff]
        %v7770 = vld [vmem:[#allocation5 + $0xc0] sm:$0xff]
        %v7771 = vld [vmem:[#allocation5 + $0xc8] sm:$0xff]
        %v7772 = vld [vmem:[#allocation5 + $0xd0] sm:$0xff]
        %v7773 = vld [vmem:[#allocation5 + $0xd8] sm:$0xff]
        %v7774 = vld [vmem:[#allocation5 + $0xe0] sm:$0xff]
        %v7775 = vld [vmem:[#allocation5 + $0xe8] sm:$0xff]
        %v7776 = vld [vmem:[#allocation5 + $0xf0] sm:$0xff]
        %v7777 = vld [vmem:[#allocation5 + $0xf8] sm:$0xff]
        %v7778 = vld [vmem:[#allocation5 + $0x100] sm:$0xff]
        %v7779 = vld [vmem:[#allocation5 + $0x108] sm:$0xff]
        %v7780 = vld [vmem:[#allocation5 + $0x110] sm:$0xff]
        %v7781 = vld [vmem:[#allocation5 + $0x118] sm:$0xff]
        %v7782 = vld [vmem:[#allocation5 + $0x120] sm:$0xff]
        %v7783 = vld [vmem:[#allocation5 + $0x128] sm:$0xff]
        %v7784 = vld [vmem:[#allocation5 + $0x130] sm:$0xff]
        %v7785 = vld [vmem:[#allocation5 + $0x138] sm:$0xff]
        %v7786 = vld [vmem:[#allocation5 + $0x140] sm:$0xff]
        %v7787 = vld [vmem:[#allocation5 + $0x148] sm:$0xff]
        %v7788 = vld [vmem:[#allocation5 + $0x150] sm:$0xff]
        %v7789 = vld [vmem:[#allocation5 + $0x158] sm:$0xff]
        %v7790 = vld [vmem:[#allocation5 + $0x160] sm:$0xff]
        %v7791 = vld [vmem:[#allocation5 + $0x168] sm:$0xff]
        %v7792 = vld [vmem:[#allocation5 + $0x170] sm:$0xff]
        %v7793 = vld [vmem:[#allocation5 + $0x178] sm:$0xff]
        %v7794 = vld [vmem:[#allocation5 + $0x180] sm:$0xff]
        %v7795 = vld [vmem:[#allocation5 + $0x188] sm:$0xff]
        %v7796 = vld [vmem:[#allocation5 + $0x190] sm:$0xff]
        %v7797 = vld [vmem:[#allocation5 + $0x198] sm:$0xff]
        %v7798 = vld [vmem:[#allocation5 + $0x1a0] sm:$0xff]
        %v7799 = vld [vmem:[#allocation5 + $0x1a8] sm:$0xff]
        %v7800 = vld [vmem:[#allocation5 + $0x1b0] sm:$0xff]
        %v7801 = vld [vmem:[#allocation5 + $0x1b8] sm:$0xff]
        %v7802 = vld [vmem:[#allocation5 + $0x1c0] sm:$0xff]
        %v7803 = vld [vmem:[#allocation5 + $0x1c8] sm:$0xff]
        %v7804 = vld [vmem:[#allocation5 + $0x1d0] sm:$0xff]
        %v7805 = vld [vmem:[#allocation5 + $0x1d8] sm:$0xff]
        %v7806 = vld [vmem:[#allocation5 + $0x1e0] sm:$0xff]
        %v7807 = vld [vmem:[#allocation5 + $0x1e8] sm:$0xff]
        %v7808 = vld [vmem:[#allocation5 + $0x1f0] sm:$0xff]
        %v7809 = vld [vmem:[#allocation5 + $0x1f8] sm:$0xff]
        %v7810 = vld [vmem:[#allocation5 + $0x200] sm:$0xff]
        %v7811 = vld [vmem:[#allocation5 + $0x208] sm:$0xff]
        %v7812 = vld [vmem:[#allocation5 + $0x210] sm:$0xff]
        %v7813 = vld [vmem:[#allocation5 + $0x218] sm:$0xff]
        %v7814 = vld [vmem:[#allocation5 + $0x220] sm:$0xff]
        %v7815 = vld [vmem:[#allocation5 + $0x228] sm:$0xff]
        %v7816 = vld [vmem:[#allocation5 + $0x230] sm:$0xff]
        %v7817 = vld [vmem:[#allocation5 + $0x238] sm:$0xff]
        %v7818 = vld [vmem:[%s13] sm:$0xff]
        %v7819 = vld [vmem:[%s13 + $0x8] sm:$0xff]
        %v7820 = vld [vmem:[%s13 + $0x10] sm:$0xff]
        %v7821 = vld [vmem:[%s13 + $0x18] sm:$0xff]
        %7823 = vset.pattern.permute.xlu0 0
        %7824 = vperm.xlu0 %7823, %v7818
        %v7825 = vpop.permute.xlu0 %7824
        %7828 = vset.pattern.permute.xlu0 0
        %7829 = vperm.xlu0 %7828, %v7819
        %v7830 = vpop.permute.xlu0 %7829
        %7833 = vset.pattern.permute.xlu0 0
        %7834 = vperm.xlu0 %7833, %v7820
        %v7835 = vpop.permute.xlu0 %7834
        %7838 = vset.pattern.permute.xlu0 0
        %7839 = vperm.xlu0 %7838, %v7821
        %v7840 = vpop.permute.xlu0 %7839
        %v7854 = vunpack.c.l.b16 %v7734
        %v7855 = vunpack.c.h.b16 %v7734
        %v7856 = vunpack.c.l.b16 %v7735
        %v7857 = vunpack.c.h.b16 %v7735
        %v7858 = vunpack.c.l.b16 %v7736
        %v7859 = vunpack.c.l.b16 %v7737
        %v7860 = vunpack.c.h.b16 %v7737
        %v7861 = vunpack.c.l.b16 %v7738
        %v7862 = vunpack.c.h.b16 %v7738
        %v7863 = vunpack.c.l.b16 %v7739
        %v7864 = vunpack.c.l.b16 %v7740
        %v7865 = vunpack.c.h.b16 %v7740
        %v7866 = vunpack.c.l.b16 %v7741
        %v7867 = vunpack.c.h.b16 %v7741
        %v7868 = vunpack.c.l.b16 %v7742
        %v7869 = vunpack.c.l.b16 %v7743
        %v7870 = vunpack.c.h.b16 %v7743
        %v7871 = vunpack.c.l.b16 %v7744
        %v7872 = vunpack.c.h.b16 %v7744
        %v7873 = vunpack.c.l.b16 %v7745
        %v7874 = vpack.c.b16 %v7859, %v7854
        %v7875 = vpack.c.b16 %v7860, %v7855
        %v7876 = vpack.c.b16 %v7861, %v7856
        %v7877 = vpack.c.b16 %v7862, %v7857
        %v7878 = vpack.c.b16 %v7863, %v7858
        %v7879 = vpack.c.b16 %v7869, %v7864
        %v7880 = vpack.c.b16 %v7870, %v7865
        %v7881 = vpack.c.b16 %v7871, %v7866
        %v7882 = vpack.c.b16 %v7872, %v7867
        %v7883 = vpack.c.b16 %v7873, %v7868
        %v7964 = vunpack.c.l.b16 %v7746
        %v7965 = vunpack.c.h.b16 %v7746
        %v7966 = vunpack.c.l.b16 %v7747
        %v7967 = vunpack.c.h.b16 %v7747
        %v7968 = vunpack.c.l.b16 %v7748
        %v7969 = vunpack.c.h.b16 %v7748
        %v7970 = vunpack.c.l.b16 %v7749
        %v7971 = vunpack.c.h.b16 %v7749
        %v7972 = vunpack.c.l.b16 %v7750
        %v7973 = vunpack.c.h.b16 %v7750
        %v7974 = vunpack.c.l.b16 %v7751
        %v7975 = vunpack.c.h.b16 %v7751
        %v7976 = vunpack.c.l.b16 %v7752
        %v7977 = vunpack.c.h.b16 %v7752
        %v7978 = vunpack.c.l.b16 %v7753
        %v7979 = vunpack.c.h.b16 %v7753
        %v7980 = vunpack.c.l.b16 %v7754
        %v7981 = vunpack.c.h.b16 %v7754
        %v7982 = vunpack.c.l.b16 %v7755
        %v7983 = vunpack.c.h.b16 %v7755
        %v7984 = vunpack.c.l.b16 %v7756
        %v7985 = vunpack.c.h.b16 %v7756
        %v7986 = vunpack.c.l.b16 %v7757
        %v7987 = vunpack.c.h.b16 %v7757
        %v7988 = vunpack.c.l.b16 %v7758
        %v7989 = vunpack.c.h.b16 %v7758
        %v7990 = vunpack.c.l.b16 %v7759
        %v7991 = vunpack.c.h.b16 %v7759
        %v7992 = vunpack.c.l.b16 %v7760
        %v7993 = vunpack.c.h.b16 %v7760
        %v7994 = vunpack.c.l.b16 %v7761
        %v7995 = vunpack.c.h.b16 %v7761
        %v7996 = vunpack.c.l.b16 %v7762
        %v7997 = vunpack.c.h.b16 %v7762
        %v7998 = vunpack.c.l.b16 %v7763
        %v7999 = vunpack.c.h.b16 %v7763
        %v8000 = vunpack.c.l.b16 %v7764
        %v8001 = vunpack.c.h.b16 %v7764
        %v8002 = vunpack.c.l.b16 %v7765
        %v8003 = vunpack.c.h.b16 %v7765
        %v8004 = vunpack.c.l.b16 %v7766
        %v8005 = vunpack.c.h.b16 %v7766
        %v8006 = vunpack.c.l.b16 %v7767
        %v8007 = vunpack.c.h.b16 %v7767
        %v8008 = vunpack.c.l.b16 %v7768
        %v8009 = vunpack.c.h.b16 %v7768
        %v8010 = vunpack.c.l.b16 %v7769
        %v8011 = vunpack.c.h.b16 %v7769
        %v8012 = vunpack.c.l.b16 %v7770
        %v8013 = vunpack.c.h.b16 %v7770
        %v8014 = vunpack.c.l.b16 %v7771
        %v8015 = vunpack.c.h.b16 %v7771
        %v8016 = vunpack.c.l.b16 %v7772
        %v8017 = vunpack.c.h.b16 %v7772
        %v8018 = vunpack.c.l.b16 %v7773
        %v8019 = vunpack.c.h.b16 %v7773
        %v8020 = vunpack.c.l.b16 %v7774
        %v8021 = vunpack.c.h.b16 %v7774
        %v8022 = vunpack.c.l.b16 %v7775
        %v8023 = vunpack.c.h.b16 %v7775
        %v8024 = vunpack.c.l.b16 %v7776
        %v8025 = vunpack.c.h.b16 %v7776
        %v8026 = vunpack.c.l.b16 %v7777
        %v8027 = vunpack.c.h.b16 %v7777
        %v8028 = vunpack.c.l.b16 %v7778
        %v8029 = vunpack.c.h.b16 %v7778
        %v8030 = vunpack.c.l.b16 %v7779
        %v8031 = vunpack.c.h.b16 %v7779
        %v8032 = vunpack.c.l.b16 %v7780
        %v8033 = vunpack.c.h.b16 %v7780
        %v8034 = vunpack.c.l.b16 %v7781
        %v8035 = vunpack.c.h.b16 %v7781
        %v8036 = vunpack.c.l.b16 %v7782
        %v8037 = vunpack.c.h.b16 %v7782
        %v8038 = vunpack.c.l.b16 %v7783
        %v8039 = vunpack.c.h.b16 %v7783
        %v8040 = vunpack.c.l.b16 %v7784
        %v8041 = vunpack.c.h.b16 %v7784
        %v8042 = vunpack.c.l.b16 %v7785
        %v8043 = vunpack.c.h.b16 %v7785
        %v8044 = vunpack.c.l.b16 %v7786
        %v8045 = vunpack.c.h.b16 %v7786
        %v8046 = vunpack.c.l.b16 %v7787
        %v8047 = vunpack.c.h.b16 %v7787
        %v8048 = vunpack.c.l.b16 %v7788
        %v8049 = vunpack.c.h.b16 %v7788
        %v8050 = vunpack.c.l.b16 %v7789
        %v8051 = vunpack.c.h.b16 %v7789
        %v8052 = vunpack.c.l.b16 %v7790
        %v8053 = vunpack.c.h.b16 %v7790
        %v8054 = vunpack.c.l.b16 %v7791
        %v8055 = vunpack.c.h.b16 %v7791
        %v8056 = vunpack.c.l.b16 %v7792
        %v8057 = vunpack.c.h.b16 %v7792
        %v8058 = vunpack.c.l.b16 %v7793
        %v8059 = vunpack.c.h.b16 %v7793
        %v8060 = vunpack.c.l.b16 %v7794
        %v8061 = vunpack.c.h.b16 %v7794
        %v8062 = vunpack.c.l.b16 %v7795
        %v8063 = vunpack.c.h.b16 %v7795
        %v8064 = vunpack.c.l.b16 %v7796
        %v8065 = vunpack.c.h.b16 %v7796
        %v8066 = vunpack.c.l.b16 %v7797
        %v8067 = vunpack.c.h.b16 %v7797
        %v8068 = vunpack.c.l.b16 %v7798
        %v8069 = vunpack.c.h.b16 %v7798
        %v8070 = vunpack.c.l.b16 %v7799
        %v8071 = vunpack.c.h.b16 %v7799
        %v8072 = vunpack.c.l.b16 %v7800
        %v8073 = vunpack.c.h.b16 %v7800
        %v8074 = vunpack.c.l.b16 %v7801
        %v8075 = vunpack.c.h.b16 %v7801
        %v8076 = vunpack.c.l.b16 %v7802
        %v8077 = vunpack.c.h.b16 %v7802
        %v8078 = vunpack.c.l.b16 %v7803
        %v8079 = vunpack.c.h.b16 %v7803
        %v8080 = vunpack.c.l.b16 %v7804
        %v8081 = vunpack.c.h.b16 %v7804
        %v8082 = vunpack.c.l.b16 %v7805
        %v8083 = vunpack.c.h.b16 %v7805
        %v8084 = vunpack.c.l.b16 %v7806
        %v8085 = vunpack.c.h.b16 %v7806
        %v8086 = vunpack.c.l.b16 %v7807
        %v8087 = vunpack.c.h.b16 %v7807
        %v8088 = vunpack.c.l.b16 %v7808
        %v8089 = vunpack.c.h.b16 %v7808
        %v8090 = vunpack.c.l.b16 %v7809
        %v8091 = vunpack.c.h.b16 %v7809
        %v8092 = vunpack.c.l.b16 %v7810
        %v8093 = vunpack.c.h.b16 %v7810
        %v8094 = vunpack.c.l.b16 %v7811
        %v8095 = vunpack.c.h.b16 %v7811
        %v8096 = vunpack.c.l.b16 %v7812
        %v8097 = vunpack.c.h.b16 %v7812
        %v8098 = vunpack.c.l.b16 %v7813
        %v8099 = vunpack.c.h.b16 %v7813
        %v8100 = vunpack.c.l.b16 %v7814
        %v8101 = vunpack.c.h.b16 %v7814
        %v8102 = vunpack.c.l.b16 %v7815
        %v8103 = vunpack.c.h.b16 %v7815
        %v8104 = vunpack.c.l.b16 %v7816
        %v8105 = vunpack.c.h.b16 %v7816
        %v8106 = vunpack.c.l.b16 %v7817
        %v8107 = vunpack.c.h.b16 %v7817
        %v8108 = vpack.c.b16 %v7966, %v7964
        %v8109 = vpack.c.b16 %v7967, %v7965
        %v8110 = vpack.c.b16 %v7970, %v7968
        %v8111 = vpack.c.b16 %v7971, %v7969
        %v8112 = vpack.c.b16 %v7974, %v7972
        %v8113 = vpack.c.b16 %v7975, %v7973
        %v8114 = vpack.c.b16 %v7978, %v7976
        %v8115 = vpack.c.b16 %v7979, %v7977
        %v8116 = vpack.c.b16 %v7982, %v7980
        %v8117 = vpack.c.b16 %v7983, %v7981
        %v8118 = vpack.c.b16 %v7986, %v7984
        %v8119 = vpack.c.b16 %v7987, %v7985
        %v8120 = vpack.c.b16 %v7990, %v7988
        %v8121 = vpack.c.b16 %v7991, %v7989
        %v8122 = vpack.c.b16 %v7994, %v7992
        %v8123 = vpack.c.b16 %v7995, %v7993
        %v8124 = vpack.c.b16 %v7998, %v7996
        %v8125 = vpack.c.b16 %v7999, %v7997
        %v8126 = vpack.c.b16 %v8002, %v8000
        %v8127 = vpack.c.b16 %v8003, %v8001
        %v8128 = vpack.c.b16 %v8006, %v8004
        %v8129 = vpack.c.b16 %v8007, %v8005
        %v8130 = vpack.c.b16 %v8010, %v8008
        %v8131 = vpack.c.b16 %v8011, %v8009
        %v8132 = vpack.c.b16 %v8014, %v8012
        %v8133 = vpack.c.b16 %v8015, %v8013
        %v8134 = vpack.c.b16 %v8018, %v8016
        %v8135 = vpack.c.b16 %v8019, %v8017
        %v8136 = vpack.c.b16 %v8022, %v8020
        %v8137 = vpack.c.b16 %v8023, %v8021
        %v8138 = vpack.c.b16 %v8026, %v8024
        %v8139 = vpack.c.b16 %v8027, %v8025
        %v8140 = vpack.c.b16 %v8030, %v8028
        %v8141 = vpack.c.b16 %v8031, %v8029
        %v8142 = vpack.c.b16 %v8034, %v8032
        %v8143 = vpack.c.b16 %v8035, %v8033
        %v8144 = vpack.c.b16 %v8038, %v8036
        %v8145 = vpack.c.b16 %v8039, %v8037
        %v8146 = vpack.c.b16 %v8042, %v8040
        %v8147 = vpack.c.b16 %v8043, %v8041
        %v8148 = vpack.c.b16 %v8046, %v8044
        %v8149 = vpack.c.b16 %v8047, %v8045
        %v8150 = vpack.c.b16 %v8050, %v8048
        %v8151 = vpack.c.b16 %v8051, %v8049
        %v8152 = vpack.c.b16 %v8054, %v8052
        %v8153 = vpack.c.b16 %v8055, %v8053
        %v8154 = vpack.c.b16 %v8058, %v8056
        %v8155 = vpack.c.b16 %v8059, %v8057
        %v8156 = vpack.c.b16 %v8062, %v8060
        %v8157 = vpack.c.b16 %v8063, %v8061
        %v8158 = vpack.c.b16 %v8066, %v8064
        %v8159 = vpack.c.b16 %v8067, %v8065
        %v8160 = vpack.c.b16 %v8070, %v8068
        %v8161 = vpack.c.b16 %v8071, %v8069
        %v8162 = vpack.c.b16 %v8074, %v8072
        %v8163 = vpack.c.b16 %v8075, %v8073
        %v8164 = vpack.c.b16 %v8078, %v8076
        %v8165 = vpack.c.b16 %v8079, %v8077
        %v8166 = vpack.c.b16 %v8082, %v8080
        %v8167 = vpack.c.b16 %v8083, %v8081
        %v8168 = vpack.c.b16 %v8086, %v8084
        %v8169 = vpack.c.b16 %v8087, %v8085
        %v8170 = vpack.c.b16 %v8090, %v8088
        %v8171 = vpack.c.b16 %v8091, %v8089
        %v8172 = vpack.c.b16 %v8094, %v8092
        %v8173 = vpack.c.b16 %v8095, %v8093
        %v8174 = vpack.c.b16 %v8098, %v8096
        %v8175 = vpack.c.b16 %v8099, %v8097
        %v8176 = vpack.c.b16 %v8102, %v8100
        %v8177 = vpack.c.b16 %v8103, %v8101
        %v8178 = vpack.c.b16 %v8106, %v8104
        %v8179 = vpack.c.b16 %v8107, %v8105
        %v8253 = vsel %vm2576, %v7878, 0
        %v8256 = vsel %vm2576, %v7883, 0
        %8258 = vmatpush.bf16.msra.mxu0 %v8122
        %8259 = vmatpush.bf16.msra.mxu0 %v8120
        %8260 = vmatpush.bf16.msra.mxu0 %v8118
        %8261 = vmatpush.bf16.msra.mxu0 %v8116
        %8262 = vmatpush.bf16.msra.mxu0 %v8114
        %8263 = vmatpush.bf16.msra.mxu0 %v8112
        %8264 = vmatpush.bf16.msra.mxu0 %v8110
        %8265 = vmatpush.bf16.msra.mxu0 %v8108
        %8266 = vmatmul.bf16.gmra.mxu0 %v7874
        %v8267 = vpop.f32.mrf.mxu0
        %v8268 = vadd.f32 %v7825, %v8267
        %v8269 = vpop.f32.mrf.mxu0
        %v8270 = vadd.f32 %v7830, %v8269
        %8271 = vmatmul.bf16.gmra.mxu0 %v7879
        %v8272 = vpop.f32.mrf.mxu0
        %v8273 = vadd.f32 %v7835, %v8272
        %v8274 = vpop.f32.mrf.mxu0
        %v8275 = vadd.f32 %v7840, %v8274
        %8276 = vdwg.mxu0
        %8277 = vmatpush.bf16.msra.mxu0 %v8138
        %8278 = vmatpush.bf16.msra.mxu0 %v8136
        %8279 = vmatpush.bf16.msra.mxu0 %v8134
        %8280 = vmatpush.bf16.msra.mxu0 %v8132
        %8281 = vmatpush.bf16.msra.mxu0 %v8130
        %8282 = vmatpush.bf16.msra.mxu0 %v8128
        %8283 = vmatpush.bf16.msra.mxu0 %v8126
        %8284 = vmatpush.bf16.msra.mxu0 %v8124
        %8285 = vmatmul.bf16.gmra.mxu0 %v7875
        %v8286 = vpop.f32.mrf.mxu0
        %v8287 = vadd.f32 %v8268, %v8286
        %v8288 = vpop.f32.mrf.mxu0
        %v8289 = vadd.f32 %v8270, %v8288
        %8290 = vmatmul.bf16.gmra.mxu0 %v7880
        %v8291 = vpop.f32.mrf.mxu0
        %v8292 = vadd.f32 %v8273, %v8291
        %v8293 = vpop.f32.mrf.mxu0
        %v8294 = vadd.f32 %v8275, %v8293
        %8295 = vdwg.mxu0
        %8296 = vmatpush.bf16.msra.mxu0 %v8154
        %8297 = vmatpush.bf16.msra.mxu0 %v8152
        %8298 = vmatpush.bf16.msra.mxu0 %v8150
        %8299 = vmatpush.bf16.msra.mxu0 %v8148
        %8300 = vmatpush.bf16.msra.mxu0 %v8146
        %8301 = vmatpush.bf16.msra.mxu0 %v8144
        %8302 = vmatpush.bf16.msra.mxu0 %v8142
        %8303 = vmatpush.bf16.msra.mxu0 %v8140
        %8304 = vmatmul.bf16.gmra.mxu0 %v7876
        %v8305 = vpop.f32.mrf.mxu0
        %v8306 = vadd.f32 %v8287, %v8305
        %v8307 = vpop.f32.mrf.mxu0
        %v8308 = vadd.f32 %v8289, %v8307
        %8309 = vmatmul.bf16.gmra.mxu0 %v7881
        %v8310 = vpop.f32.mrf.mxu0
        %v8311 = vadd.f32 %v8292, %v8310
        %v8312 = vpop.f32.mrf.mxu0
        %v8313 = vadd.f32 %v8294, %v8312
        %8314 = vdwg.mxu0
        %8315 = vmatpush.bf16.msra.mxu0 %v8170
        %8316 = vmatpush.bf16.msra.mxu0 %v8168
        %8317 = vmatpush.bf16.msra.mxu0 %v8166
        %8318 = vmatpush.bf16.msra.mxu0 %v8164
        %8319 = vmatpush.bf16.msra.mxu0 %v8162
        %8320 = vmatpush.bf16.msra.mxu0 %v8160
        %8321 = vmatpush.bf16.msra.mxu0 %v8158
        %8322 = vmatpush.bf16.msra.mxu0 %v8156
        %8323 = vmatmul.bf16.gmra.mxu0 %v7877
        %v8324 = vpop.f32.mrf.mxu0
        %v8325 = vadd.f32 %v8306, %v8324
        %v8326 = vpop.f32.mrf.mxu0
        %v8327 = vadd.f32 %v8308, %v8326
        %8328 = vmatmul.bf16.gmra.mxu0 %v7882
        %v8329 = vpop.f32.mrf.mxu0
        %v8330 = vadd.f32 %v8311, %v8329
        %v8331 = vpop.f32.mrf.mxu0
        %v8332 = vadd.f32 %v8313, %v8331
        %8333 = vdwg.mxu0
        %8334 = vmatpush.bf16.msra.mxu0 0
        %8335 = vmatpush.bf16.msra.mxu0 0
        %8336 = vmatpush.bf16.msra.mxu0 0
        %8337 = vmatpush.bf16.msra.mxu0 0
        %8338 = vmatpush.bf16.msra.mxu0 %v8178
        %8339 = vmatpush.bf16.msra.mxu0 %v8176
        %8340 = vmatpush.bf16.msra.mxu0 %v8174
        %8341 = vmatpush.bf16.msra.mxu0 %v8172
        %8342 = vmatmul.bf16.gmra.mxu0 %v8253
        %v8343 = vpop.f32.mrf.mxu0
        %v8344 = vadd.f32 %v8325, %v8343
        %v8345 = vpop.f32.mrf.mxu0
        %v8346 = vadd.f32 %v8327, %v8345
        %8347 = vmatmul.bf16.gmra.mxu0 %v8256
        %v8348 = vpop.f32.mrf.mxu0
        %v8349 = vadd.f32 %v8330, %v8348
        %v8350 = vpop.f32.mrf.mxu0
        %v8351 = vadd.f32 %v8332, %v8350
        %8352 = vdwg.mxu0
        %8353 = vmatpush.bf16.msra.mxu0 %v8123
        %8354 = vmatpush.bf16.msra.mxu0 %v8121
        %8355 = vmatpush.bf16.msra.mxu0 %v8119
        %8356 = vmatpush.bf16.msra.mxu0 %v8117
        %8357 = vmatpush.bf16.msra.mxu0 %v8115
        %8358 = vmatpush.bf16.msra.mxu0 %v8113
        %8359 = vmatpush.bf16.msra.mxu0 %v8111
        %8360 = vmatpush.bf16.msra.mxu0 %v8109
        %8361 = vmatmul.bf16.gmra.mxu0 %v7874
        %v8362 = vpop.f32.mrf.mxu0
        %v8363 = vadd.f32 %v7825, %v8362
        %v8364 = vpop.f32.mrf.mxu0
        %v8365 = vadd.f32 %v7830, %v8364
        %8366 = vmatmul.bf16.gmra.mxu0 %v7879
        %v8367 = vpop.f32.mrf.mxu0
        %v8368 = vadd.f32 %v7835, %v8367
        %v8369 = vpop.f32.mrf.mxu0
        %v8370 = vadd.f32 %v7840, %v8369
        %8371 = vdwg.mxu0
        %8372 = vmatpush.bf16.msra.mxu0 %v8139
        %8373 = vmatpush.bf16.msra.mxu0 %v8137
        %8374 = vmatpush.bf16.msra.mxu0 %v8135
        %8375 = vmatpush.bf16.msra.mxu0 %v8133
        %8376 = vmatpush.bf16.msra.mxu0 %v8131
        %8377 = vmatpush.bf16.msra.mxu0 %v8129
        %8378 = vmatpush.bf16.msra.mxu0 %v8127
        %8379 = vmatpush.bf16.msra.mxu0 %v8125
        %8380 = vmatmul.bf16.gmra.mxu0 %v7875
        %v8381 = vpop.f32.mrf.mxu0
        %v8382 = vadd.f32 %v8363, %v8381
        %v8383 = vpop.f32.mrf.mxu0
        %v8384 = vadd.f32 %v8365, %v8383
        %8385 = vmatmul.bf16.gmra.mxu0 %v7880
        %v8386 = vpop.f32.mrf.mxu0
        %v8387 = vadd.f32 %v8368, %v8386
        %v8388 = vpop.f32.mrf.mxu0
        %v8389 = vadd.f32 %v8370, %v8388
        %8390 = vdwg.mxu0
        %8391 = vmatpush.bf16.msra.mxu0 %v8155
        %8392 = vmatpush.bf16.msra.mxu0 %v8153
        %8393 = vmatpush.bf16.msra.mxu0 %v8151
        %8394 = vmatpush.bf16.msra.mxu0 %v8149
        %8395 = vmatpush.bf16.msra.mxu0 %v8147
        %8396 = vmatpush.bf16.msra.mxu0 %v8145
        %8397 = vmatpush.bf16.msra.mxu0 %v8143
        %8398 = vmatpush.bf16.msra.mxu0 %v8141
        %8399 = vmatmul.bf16.gmra.mxu0 %v7876
        %v8400 = vpop.f32.mrf.mxu0
        %v8401 = vadd.f32 %v8382, %v8400
        %v8402 = vpop.f32.mrf.mxu0
        %v8403 = vadd.f32 %v8384, %v8402
        %8404 = vmatmul.bf16.gmra.mxu0 %v7881
        %v8405 = vpop.f32.mrf.mxu0
        %v8406 = vadd.f32 %v8387, %v8405
        %v8407 = vpop.f32.mrf.mxu0
        %v8408 = vadd.f32 %v8389, %v8407
        %8409 = vdwg.mxu0
        %8410 = vmatpush.bf16.msra.mxu0 %v8171
        %8411 = vmatpush.bf16.msra.mxu0 %v8169
        %8412 = vmatpush.bf16.msra.mxu0 %v8167
        %8413 = vmatpush.bf16.msra.mxu0 %v8165
        %8414 = vmatpush.bf16.msra.mxu0 %v8163
        %8415 = vmatpush.bf16.msra.mxu0 %v8161
        %8416 = vmatpush.bf16.msra.mxu0 %v8159
        %8417 = vmatpush.bf16.msra.mxu0 %v8157
        %8418 = vmatmul.bf16.gmra.mxu0 %v7877
        %v8419 = vpop.f32.mrf.mxu0
        %v8420 = vadd.f32 %v8401, %v8419
        %v8421 = vpop.f32.mrf.mxu0
        %v8422 = vadd.f32 %v8403, %v8421
        %8423 = vmatmul.bf16.gmra.mxu0 %v7882
        %v8424 = vpop.f32.mrf.mxu0
        %v8425 = vadd.f32 %v8406, %v8424
        %v8426 = vpop.f32.mrf.mxu0
        %v8427 = vadd.f32 %v8408, %v8426
        %8428 = vdwg.mxu0
        %8429 = vmatpush.bf16.msra.mxu0 0
        %8430 = vmatpush.bf16.msra.mxu0 0
        %8431 = vmatpush.bf16.msra.mxu0 0
        %8432 = vmatpush.bf16.msra.mxu0 0
        %8433 = vmatpush.bf16.msra.mxu0 %v8179
        %8434 = vmatpush.bf16.msra.mxu0 %v8177
        %8435 = vmatpush.bf16.msra.mxu0 %v8175
        %8436 = vmatpush.bf16.msra.mxu0 %v8173
        %8437 = vmatmul.bf16.gmra.mxu0 %v8253
        %v8438 = vpop.f32.mrf.mxu0
        %v8439 = vadd.f32 %v8420, %v8438
        %v8440 = vpop.f32.mrf.mxu0
        %v8441 = vadd.f32 %v8422, %v8440
        %8442 = vmatmul.bf16.gmra.mxu0 %v8256
        %v8443 = vpop.f32.mrf.mxu0
        %v8444 = vadd.f32 %v8425, %v8443
        %v8445 = vpop.f32.mrf.mxu0
        %v8446 = vadd.f32 %v8427, %v8445
        %8447 = vdwg.mxu0
        %v8448 = vmax.f32 %v8344, 0.0
        %v8449 = vmax.f32 %v8439, 0.0
        %v8450 = vmax.f32 %v8346, 0.0
        %v8451 = vmax.f32 %v8441, 0.0
        %v8452 = vmax.f32 %v8349, 0.0
        %v8453 = vmax.f32 %v8444, 0.0
        %v8454 = vmax.f32 %v8351, 0.0
        %v8455 = vmax.f32 %v8446, 0.0
        %8456 = vst [vmem:[%s870] sm:$0xff] %v8448
        %vm8457 = vcmask 392192
        %8458 = vst.msk [vmem:[%s870 + $0x8] sm:$0xff] %vm8457, %v8449
        %8459 = vst [vmem:[%s870 + $0x10] sm:$0xff] %v8450
        %8460 = vst.msk [vmem:[%s870 + $0x18] sm:$0xff] %vm8457, %v8451
        %8461 = vst [vmem:[%s870 + $0x20] sm:$0xff] %v8452
        %8462 = vst.msk [vmem:[%s870 + $0x28] sm:$0xff] %vm8457, %v8453
        %8463 = vst [vmem:[%s870 + $0x30] sm:$0xff] %v8454
        %8464 = vst.msk [vmem:[%s870 + $0x38] sm:$0xff] %vm8457, %v8455
        %v8465 = vld [vmem:[%s757] sm:$0xff]
        %v8466 = vld [vmem:[%s757 + $0x8] sm:$0xf]
        %v8467 = vld [vmem:[%s757 + $0xc] sm:$0xff]
        %v8468 = vld [vmem:[%s757 + $0x14] sm:$0xf]
        %8471 = vrot.lane.b32.xlu0 %v8465, 77
        %v8472 = vpop.permute.xlu0 %8471
        %8473 = vrot.lane.b32.xlu0 %v8467, 77
        %v8474 = vpop.permute.xlu0 %8473
        %v8475 = vrot.slane %v8472, 4
        %v8476 = vrot.slane %v8474, 4
        %v8477 = vsel %vm3368, %v8472, %v8475
        %v8478 = vsel %vm3368, %v8474, %v8476
        %8481 = vst [vmem:[#allocation6] sm:$0xf] %v8477
        %8482 = vst [vmem:[#allocation6 + $0x4] sm:$0xf] %v8478
        %8483 = vrot.lane.b32.xlu0 %v8465, 76
        %v8484 = vpop.permute.xlu0 %8483
        %8485 = vrot.lane.b32.xlu0 %v8467, 76
        %v8486 = vpop.permute.xlu0 %8485
        %v8487 = vrot.slane %v8484, 4
        %v8488 = vrot.slane %v8486, 4
        %v8489 = vsel %vm1178, %v8484, %v8487
        %v8490 = vsel %vm1178, %v8486, %v8488
        %8493 = vst [vmem:[#allocation6 + $0x8] sm:$0xf] %v8489
        %8494 = vst [vmem:[#allocation6 + $0xc] sm:$0xf] %v8490
        %8495 = vrot.lane.b32.xlu0 %v8465, 75
        %v8496 = vpop.permute.xlu0 %8495
        %8497 = vrot.lane.b32.xlu0 %v8467, 75
        %v8498 = vpop.permute.xlu0 %8497
        %v8499 = vrot.slane %v8496, 4
        %v8500 = vrot.slane %v8498, 4
        %vm8501 = vcmask 613376
        %v8502 = vsel %vm8501, %v8496, %v8499
        %v8503 = vsel %vm8501, %v8498, %v8500
        %8506 = vst [vmem:[#allocation6 + $0x10] sm:$0xf] %v8502
        %8507 = vst [vmem:[#allocation6 + $0x14] sm:$0xf] %v8503
        %8508 = vrot.lane.b32.xlu0 %v8465, 61
        %v8509 = vpop.permute.xlu0 %8508
        %8510 = vrot.lane.b32.xlu0 %v8467, 61
        %v8511 = vpop.permute.xlu0 %8510
        %v8512 = vrot.slane %v8509, 4
        %v8513 = vrot.slane %v8511, 4
        %v8514 = vsel %vm3472, %v8509, %v8512
        %v8515 = vsel %vm3472, %v8511, %v8513
        %8518 = vst [vmem:[#allocation6 + $0x18] sm:$0xf] %v8514
        %8519 = vst [vmem:[#allocation6 + $0x1c] sm:$0xf] %v8515
        %8520 = vrot.lane.b32.xlu0 %v8465, 60
        %v8521 = vpop.permute.xlu0 %8520
        %8522 = vrot.lane.b32.xlu0 %v8467, 60
        %v8523 = vpop.permute.xlu0 %8522
        %v8524 = vrot.slane %v8521, 4
        %v8525 = vrot.slane %v8523, 4
        %v8526 = vsel %vm1768, %v8521, %v8524
        %v8527 = vsel %vm1768, %v8523, %v8525
        %8530 = vst [vmem:[#allocation6 + $0x20] sm:$0xf] %v8526
        %8531 = vst [vmem:[#allocation6 + $0x24] sm:$0xf] %v8527
        %8532 = vrot.lane.b32.xlu0 %v8465, 59
        %v8533 = vpop.permute.xlu0 %8532
        %8534 = vrot.lane.b32.xlu0 %v8467, 59
        %v8535 = vpop.permute.xlu0 %8534
        %v8536 = vrot.slane %v8533, 4
        %v8537 = vrot.slane %v8535, 4
        %vm8538 = vcmask 482304
        %v8539 = vsel %vm8538, %v8533, %v8536
        %v8540 = vsel %vm8538, %v8535, %v8537
        %8543 = vst [vmem:[#allocation6 + $0x28] sm:$0xf] %v8539
        %8544 = vst [vmem:[#allocation6 + $0x2c] sm:$0xf] %v8540
        %8545 = vrot.lane.b32.xlu0 %v8465, 45
        %v8546 = vpop.permute.xlu0 %8545
        %8547 = vrot.lane.b32.xlu0 %v8467, 45
        %v8548 = vpop.permute.xlu0 %8547
        %v8549 = vrot.slane %v8546, 4
        %v8550 = vrot.slane %v8548, 4
        %vm8551 = vcmask 367616
        %v8552 = vsel %vm8551, %v8546, %v8549
        %v8553 = vsel %vm8551, %v8548, %v8550
        %8556 = vst [vmem:[#allocation6 + $0x30] sm:$0xf] %v8552
        %8557 = vst [vmem:[#allocation6 + $0x34] sm:$0xf] %v8553
        %8558 = vrot.lane.b32.xlu0 %v8465, 44
        %v8559 = vpop.permute.xlu0 %8558
        %8560 = vrot.lane.b32.xlu0 %v8467, 44
        %v8561 = vpop.permute.xlu0 %8560
        %v8562 = vrot.slane %v8559, 4
        %v8563 = vrot.slane %v8561, 4
        %v8564 = vsel %vm3541, %v8559, %v8562
        %v8565 = vsel %vm3541, %v8561, %v8563
        %8568 = vst [vmem:[#allocation6 + $0x38] sm:$0xf] %v8564
        %8569 = vst [vmem:[#allocation6 + $0x3c] sm:$0xf] %v8565
        %8570 = vrot.lane.b32.xlu0 %v8465, 43
        %v8571 = vpop.permute.xlu0 %8570
        %8572 = vrot.lane.b32.xlu0 %v8467, 43
        %v8573 = vpop.permute.xlu0 %8572
        %v8574 = vrot.slane %v8571, 4
        %v8575 = vrot.slane %v8573, 4
        %vm8576 = vcmask 351232
        %v8577 = vsel %vm8576, %v8571, %v8574
        %v8578 = vsel %vm8576, %v8573, %v8575
        %8581 = vst [vmem:[#allocation6 + $0x40] sm:$0xf] %v8577
        %8582 = vst [vmem:[#allocation6 + $0x44] sm:$0xf] %v8578
        %8583 = vrot.lane.b32.xlu0 %v8465, 94
        %v8584 = vpop.permute.xlu0 %8583
        %8585 = vrot.lane.b32.xlu0 %v8467, 94
        %v8586 = vpop.permute.xlu0 %8585
        %v8587 = vrot.slane %v8584, 4
        %v8588 = vrot.slane %v8586, 4
        %v8589 = vsel %vm7288, %v8584, %v8587
        %v8590 = vsel %vm7288, %v8586, %v8588
        %8593 = vst [vmem:[#allocation6 + $0x48] sm:$0xf] %v8589
        %8594 = vst [vmem:[#allocation6 + $0x4c] sm:$0xf] %v8590
        %8595 = vrot.lane.b32.xlu0 %v8465, 92
        %v8596 = vpop.permute.xlu0 %8595
        %8597 = vrot.lane.b32.xlu0 %v8467, 92
        %v8598 = vpop.permute.xlu0 %8597
        %v8599 = vrot.slane %v8596, 4
        %v8600 = vrot.slane %v8598, 4
        %v8601 = vsel %vm3851, %v8596, %v8599
        %v8602 = vsel %vm3851, %v8598, %v8600
        %8605 = vst [vmem:[#allocation6 + $0x50] sm:$0xf] %v8601
        %8606 = vst [vmem:[#allocation6 + $0x54] sm:$0xf] %v8602
        %8607 = vrot.lane.b32.xlu0 %v8465, 90
        %v8608 = vpop.permute.xlu0 %8607
        %8609 = vrot.lane.b32.xlu0 %v8467, 90
        %v8610 = vpop.permute.xlu0 %8609
        %v8611 = vrot.slane %v8608, 4
        %v8612 = vrot.slane %v8610, 4
        %v8613 = vsel %vm7588, %v8608, %v8611
        %v8614 = vsel %vm7588, %v8610, %v8612
        %8617 = vst [vmem:[#allocation6 + $0x58] sm:$0xf] %v8613
        %8618 = vst [vmem:[#allocation6 + $0x5c] sm:$0xf] %v8614
        %8619 = vrot.lane.b32.xlu0 %v8465, 62
        %v8620 = vpop.permute.xlu0 %8619
        %8621 = vrot.lane.b32.xlu0 %v8467, 62
        %v8622 = vpop.permute.xlu0 %8621
        %v8623 = vrot.slane %v8620, 4
        %v8624 = vrot.slane %v8622, 4
        %v8625 = vsel %vm7727, %v8620, %v8623
        %v8626 = vsel %vm7727, %v8622, %v8624
        %8629 = vst [vmem:[#allocation6 + $0x60] sm:$0xf] %v8625
        %8630 = vst [vmem:[#allocation6 + $0x64] sm:$0xf] %v8626
        %8631 = vst [vmem:[#allocation6 + $0x68] sm:$0xf] %v8526
        %8632 = vst [vmem:[#allocation6 + $0x6c] sm:$0xf] %v8527
        %8633 = vrot.lane.b32.xlu0 %v8465, 58
        %v8634 = vpop.permute.xlu0 %8633
        %8635 = vrot.lane.b32.xlu0 %v8467, 58
        %v8636 = vpop.permute.xlu0 %8635
        %v8637 = vrot.slane %v8634, 4
        %v8638 = vrot.slane %v8636, 4
        %vm8639 = vcmask 474112
        %v8640 = vsel %vm8639, %v8634, %v8637
        %v8641 = vsel %vm8639, %v8636, %v8638
        %8644 = vst [vmem:[#allocation6 + $0x70] sm:$0xf] %v8640
        %8645 = vst [vmem:[#allocation6 + $0x74] sm:$0xf] %v8641
        %8646 = vrot.lane.b32.xlu0 %v8465, 30
        %v8647 = vpop.permute.xlu0 %8646
        %8648 = vrot.lane.b32.xlu0 %v8467, 30
        %v8649 = vpop.permute.xlu0 %8648
        %v8650 = vrot.slane %v8647, 4
        %v8651 = vrot.slane %v8649, 4
        %v8652 = vsel %vm1232, %v8647, %v8650
        %v8653 = vsel %vm1232, %v8649, %v8651
        %8656 = vst [vmem:[#allocation6 + $0x78] sm:$0xf] %v8652
        %8657 = vst [vmem:[#allocation6 + $0x7c] sm:$0xf] %v8653
        %8658 = vrot.lane.b32.xlu0 %v8465, 28
        %v8659 = vpop.permute.xlu0 %8658
        %8660 = vrot.lane.b32.xlu0 %v8467, 28
        %v8661 = vpop.permute.xlu0 %8660
        %v8662 = vrot.slane %v8659, 4
        %v8663 = vrot.slane %v8661, 4
        %v8664 = vsel %vm1016, %v8659, %v8662
        %v8665 = vsel %vm1016, %v8661, %v8663
        %8668 = vst [vmem:[#allocation6 + $0x80] sm:$0xf] %v8664
        %8669 = vst [vmem:[#allocation6 + $0x84] sm:$0xf] %v8665
        %8670 = vrot.lane.b32.xlu0 %v8465, 26
        %v8671 = vpop.permute.xlu0 %8670
        %8672 = vrot.lane.b32.xlu0 %v8467, 26
        %v8673 = vpop.permute.xlu0 %8672
        %v8674 = vrot.slane %v8671, 4
        %v8675 = vrot.slane %v8673, 4
        %v8676 = vsel %vm1263, %v8671, %v8674
        %v8677 = vsel %vm1263, %v8673, %v8675
        %8680 = vst [vmem:[#allocation6 + $0x88] sm:$0xf] %v8676
        %8681 = vst [vmem:[#allocation6 + $0x8c] sm:$0xf] %v8677
        %8682 = vrot.lane.b32.xlu0 %v8465, 111
        %v8683 = vpop.permute.xlu0 %8682
        %8684 = vrot.lane.b32.xlu0 %v8467, 111
        %v8685 = vpop.permute.xlu0 %8684
        %v8686 = vrot.slane %v8683, 4
        %v8687 = vrot.slane %v8685, 4
        %vm8688 = vcmask 908288
        %v8689 = vsel %vm8688, %v8683, %v8686
        %v8690 = vsel %vm8688, %v8685, %v8687
        %8693 = vst [vmem:[#allocation6 + $0x90] sm:$0xf] %v8689
        %8694 = vst [vmem:[#allocation6 + $0x94] sm:$0xf] %v8690
        %8695 = vrot.lane.b32.xlu0 %v8465, 108
        %v8696 = vpop.permute.xlu0 %8695
        %8697 = vrot.lane.b32.xlu0 %v8467, 108
        %v8698 = vpop.permute.xlu0 %8697
        %v8699 = vrot.slane %v8696, 4
        %v8700 = vrot.slane %v8698, 4
        %v8701 = vsel %vm1327, %v8696, %v8699
        %v8702 = vsel %vm1327, %v8698, %v8700
        %8705 = vst [vmem:[#allocation6 + $0x98] sm:$0xf] %v8701
        %8706 = vst [vmem:[#allocation6 + $0x9c] sm:$0xf] %v8702
        %8707 = vrot.lane.b32.xlu0 %v8465, 105
        %v8708 = vpop.permute.xlu0 %8707
        %8709 = vrot.lane.b32.xlu0 %v8467, 105
        %v8710 = vpop.permute.xlu0 %8709
        %v8711 = vrot.slane %v8708, 4
        %v8712 = vrot.slane %v8710, 4
        %vm8713 = vcmask 859136
        %v8714 = vsel %vm8713, %v8708, %v8711
        %v8715 = vsel %vm8713, %v8710, %v8712
        %8718 = vst [vmem:[#allocation6 + $0xa0] sm:$0xf] %v8714
        %8719 = vst [vmem:[#allocation6 + $0xa4] sm:$0xf] %v8715
        %8720 = vrot.lane.b32.xlu0 %v8465, 63
        %v8721 = vpop.permute.xlu0 %8720
        %8722 = vrot.lane.b32.xlu0 %v8467, 63
        %v8723 = vpop.permute.xlu0 %8722
        %v8724 = vrot.slane %v8721, 4
        %v8725 = vrot.slane %v8723, 4
        %vm8726 = vcmask 515072
        %v8727 = vsel %vm8726, %v8721, %v8724
        %v8728 = vsel %vm8726, %v8723, %v8725
        %8731 = vst [vmem:[#allocation6 + $0xa8] sm:$0xf] %v8727
        %8732 = vst [vmem:[#allocation6 + $0xac] sm:$0xf] %v8728
        %8733 = vst [vmem:[#allocation6 + $0xb0] sm:$0xf] %v8526
        %8734 = vst [vmem:[#allocation6 + $0xb4] sm:$0xf] %v8527
        %8735 = vrot.lane.b32.xlu0 %v8465, 57
        %v8736 = vpop.permute.xlu0 %8735
        %8737 = vrot.lane.b32.xlu0 %v8467, 57
        %v8738 = vpop.permute.xlu0 %8737
        %v8739 = vrot.slane %v8736, 4
        %v8740 = vrot.slane %v8738, 4
        %vm8741 = vcmask 465920
        %v8742 = vsel %vm8741, %v8736, %v8739
        %v8743 = vsel %vm8741, %v8738, %v8740
        %8746 = vst [vmem:[#allocation6 + $0xb8] sm:$0xf] %v8742
        %8747 = vst [vmem:[#allocation6 + $0xbc] sm:$0xf] %v8743
        %8748 = vrot.lane.b32.xlu0 %v8465, 15
        %v8749 = vpop.permute.xlu0 %8748
        %8750 = vrot.lane.b32.xlu0 %v8467, 15
        %v8751 = vpop.permute.xlu0 %8750
        %v8752 = vrot.slane %v8749, 4
        %v8753 = vrot.slane %v8751, 4
        %vm8754 = vcmask 121856
        %v8755 = vsel %vm8754, %v8749, %v8752
        %v8756 = vsel %vm8754, %v8751, %v8753
        %8759 = vst [vmem:[#allocation6 + $0xc0] sm:$0xf] %v8755
        %8760 = vst [vmem:[#allocation6 + $0xc4] sm:$0xf] %v8756
        %8761 = vrot.lane.b32.xlu0 %v8465, 12
        %v8762 = vpop.permute.xlu0 %8761
        %8763 = vrot.lane.b32.xlu0 %v8467, 12
        %v8764 = vpop.permute.xlu0 %8763
        %v8765 = vrot.slane %v8762, 4
        %v8766 = vrot.slane %v8764, 4
        %v8767 = vsel %vm3685, %v8762, %v8765
        %v8768 = vsel %vm3685, %v8764, %v8766
        %8771 = vst [vmem:[#allocation6 + $0xc8] sm:$0xf] %v8767
        %8772 = vst [vmem:[#allocation6 + $0xcc] sm:$0xf] %v8768
        %8773 = vrot.lane.b32.xlu0 %v8465, 9
        %v8774 = vpop.permute.xlu0 %8773
        %8775 = vrot.lane.b32.xlu0 %v8467, 9
        %v8776 = vpop.permute.xlu0 %8775
        %v8777 = vrot.slane %v8774, 4
        %v8778 = vrot.slane %v8776, 4
        %v8779 = vsel %vm3083, %v8774, %v8777
        %v8780 = vsel %vm3083, %v8776, %v8778
        %8783 = vst [vmem:[#allocation6 + $0xd0] sm:$0xf] %v8779
        %8784 = vst [vmem:[#allocation6 + $0xd4] sm:$0xf] %v8780
        %8785 = vst [vmem:[#allocation6 + $0xd8] sm:$0xf] %v8465
        %8786 = vst [vmem:[#allocation6 + $0xdc] sm:$0xf] %v8467
        %8787 = vrot.lane.b32.xlu0 %v8465, 124
        %v8788 = vpop.permute.xlu0 %8787
        %8789 = vrot.lane.b32.xlu0 %v8467, 124
        %v8790 = vpop.permute.xlu0 %8789
        %v8791 = vrot.slane %v8788, 4
        %v8792 = vrot.slane %v8790, 4
        %v8793 = vsel %vm1621, %v8788, %v8791
        %v8794 = vsel %vm1621, %v8790, %v8792
        %8797 = vst [vmem:[#allocation6 + $0xe0] sm:$0xf] %v8793
        %8798 = vst [vmem:[#allocation6 + $0xe4] sm:$0xf] %v8794
        %8799 = vrot.lane.b32.xlu0 %v8465, 120
        %v8800 = vpop.permute.xlu0 %8799
        %8801 = vrot.lane.b32.xlu0 %v8467, 120
        %v8802 = vpop.permute.xlu0 %8801
        %v8803 = vrot.slane %v8800, 4
        %v8804 = vrot.slane %v8802, 4
        %v8805 = vsel %vm1648, %v8800, %v8803
        %v8806 = vsel %vm1648, %v8802, %v8804
        %8809 = vst [vmem:[#allocation6 + $0xe8] sm:$0xf] %v8805
        %8810 = vst [vmem:[#allocation6 + $0xec] sm:$0xf] %v8806
        %8811 = vrot.lane.b32.xlu0 %v8465, 64
        %v8812 = vpop.permute.xlu0 %8811
        %8813 = vrot.lane.b32.xlu0 %v8467, 64
        %v8814 = vpop.permute.xlu0 %8813
        %v8815 = vrot.slane %v8812, 4
        %v8816 = vrot.slane %v8814, 4
        %v8817 = vsel %vm1737, %v8812, %v8815
        %v8818 = vsel %vm1737, %v8814, %v8816
        %8821 = vst [vmem:[#allocation6 + $0xf0] sm:$0xf] %v8817
        %8822 = vst [vmem:[#allocation6 + $0xf4] sm:$0xf] %v8818
        %8823 = vst [vmem:[#allocation6 + $0xf8] sm:$0xf] %v8526
        %8824 = vst [vmem:[#allocation6 + $0xfc] sm:$0xf] %v8527
        %8825 = vrot.lane.b32.xlu0 %v8465, 56
        %v8826 = vpop.permute.xlu0 %8825
        %8827 = vrot.lane.b32.xlu0 %v8467, 56
        %v8828 = vpop.permute.xlu0 %8827
        %v8829 = vrot.slane %v8826, 4
        %v8830 = vrot.slane %v8828, 4
        %v8831 = vsel %vm1799, %v8826, %v8829
        %v8832 = vsel %vm1799, %v8828, %v8830
        %8835 = vst [vmem:[#allocation6 + $0x100] sm:$0xf] %v8831
        %8836 = vst [vmem:[#allocation6 + $0x104] sm:$0xf] %v8832
        %v8837 = vrot.slane %v8465, 4
        %v8838 = vrot.slane %v8467, 4
        %8841 = vst [vmem:[#allocation6 + $0x108] sm:$0xf] %v8837
        %8842 = vst [vmem:[#allocation6 + $0x10c] sm:$0xf] %v8838
        %8845 = vrot.lane.b32.xlu0 %v8466, 124
        %v8846 = vpop.permute.xlu0 %8845
        %8847 = vrot.lane.b32.xlu0 %v8468, 124
        %v8848 = vpop.permute.xlu0 %8847
        %v8849 = vsel %vm1621, %v8791, %v8846
        %v8850 = vsel %vm1621, %v8792, %v8848
        %8853 = vst [vmem:[#allocation6 + $0x110] sm:$0xf] %v8849
        %8854 = vst [vmem:[#allocation6 + $0x114] sm:$0xf] %v8850
        %8855 = vrot.lane.b32.xlu0 %v8466, 120
        %v8856 = vpop.permute.xlu0 %8855
        %8857 = vrot.lane.b32.xlu0 %v8468, 120
        %v8858 = vpop.permute.xlu0 %8857
        %v8859 = vsel %vm1648, %v8803, %v8856
        %v8860 = vsel %vm1648, %v8804, %v8858
        %8863 = vst [vmem:[#allocation6 + $0x118] sm:$0xf] %v8859
        %8864 = vst [vmem:[#allocation6 + $0x11c] sm:$0xf] %v8860
        %v8865 = vld [vmem:[#allocation21] sm:$0xff]
        %v8866 = vld [vmem:[#allocation21 + $0x8] sm:$0xff]
        %v8867 = vld [vmem:[#allocation21 + $0x10] sm:$0xf]
        %v8868 = vld [vmem:[#allocation21 + $0x14] sm:$0xff]
        %v8869 = vld [vmem:[#allocation21 + $0x1c] sm:$0xff]
        %v8870 = vld [vmem:[#allocation21 + $0x24] sm:$0xf]
        %v8871 = vld [vmem:[#allocation21 + $0x28] sm:$0xff]
        %v8872 = vld [vmem:[#allocation21 + $0x30] sm:$0xff]
        %v8873 = vld [vmem:[#allocation21 + $0x38] sm:$0xf]
        %v8874 = vld [vmem:[#allocation21 + $0x3c] sm:$0xff]
        %v8875 = vld [vmem:[#allocation21 + $0x44] sm:$0xff]
        %v8876 = vld [vmem:[#allocation21 + $0x4c] sm:$0xf]
        %v8877 = vld [vmem:[#allocation6] sm:$0xf]
        %v8878 = vld [vmem:[#allocation6 + $0x4] sm:$0xf]
        %v8879 = vld [vmem:[#allocation6 + $0x8] sm:$0xf]
        %v8880 = vld [vmem:[#allocation6 + $0xc] sm:$0xf]
        %v8881 = vld [vmem:[#allocation6 + $0x10] sm:$0xf]
        %v8882 = vld [vmem:[#allocation6 + $0x14] sm:$0xf]
        %v8883 = vld [vmem:[#allocation6 + $0x18] sm:$0xf]
        %v8884 = vld [vmem:[#allocation6 + $0x1c] sm:$0xf]
        %v8885 = vld [vmem:[#allocation6 + $0x20] sm:$0xf]
        %v8886 = vld [vmem:[#allocation6 + $0x24] sm:$0xf]
        %v8887 = vld [vmem:[#allocation6 + $0x28] sm:$0xf]
        %v8888 = vld [vmem:[#allocation6 + $0x2c] sm:$0xf]
        %v8889 = vld [vmem:[#allocation6 + $0x30] sm:$0xf]
        %v8890 = vld [vmem:[#allocation6 + $0x34] sm:$0xf]
        %v8891 = vld [vmem:[#allocation6 + $0x38] sm:$0xf]
        %v8892 = vld [vmem:[#allocation6 + $0x3c] sm:$0xf]
        %v8893 = vld [vmem:[#allocation6 + $0x40] sm:$0xf]
        %v8894 = vld [vmem:[#allocation6 + $0x44] sm:$0xf]
        %v8895 = vld [vmem:[#allocation6 + $0x48] sm:$0xf]
        %v8896 = vld [vmem:[#allocation6 + $0x4c] sm:$0xf]
        %v8897 = vld [vmem:[#allocation6 + $0x50] sm:$0xf]
        %v8898 = vld [vmem:[#allocation6 + $0x54] sm:$0xf]
        %v8899 = vld [vmem:[#allocation6 + $0x58] sm:$0xf]
        %v8900 = vld [vmem:[#allocation6 + $0x5c] sm:$0xf]
        %v8901 = vld [vmem:[#allocation6 + $0x60] sm:$0xf]
        %v8902 = vld [vmem:[#allocation6 + $0x64] sm:$0xf]
        %v8903 = vld [vmem:[#allocation6 + $0x68] sm:$0xf]
        %v8904 = vld [vmem:[#allocation6 + $0x6c] sm:$0xf]
        %v8905 = vld [vmem:[#allocation6 + $0x70] sm:$0xf]
        %v8906 = vld [vmem:[#allocation6 + $0x74] sm:$0xf]
        %v8907 = vld [vmem:[#allocation6 + $0x78] sm:$0xf]
        %v8908 = vld [vmem:[#allocation6 + $0x7c] sm:$0xf]
        %v8909 = vld [vmem:[#allocation6 + $0x80] sm:$0xf]
        %v8910 = vld [vmem:[#allocation6 + $0x84] sm:$0xf]
        %v8911 = vld [vmem:[#allocation6 + $0x88] sm:$0xf]
        %v8912 = vld [vmem:[#allocation6 + $0x8c] sm:$0xf]
        %v8913 = vld [vmem:[#allocation6 + $0x90] sm:$0xf]
        %v8914 = vld [vmem:[#allocation6 + $0x94] sm:$0xf]
        %v8915 = vld [vmem:[#allocation6 + $0x98] sm:$0xf]
        %v8916 = vld [vmem:[#allocation6 + $0x9c] sm:$0xf]
        %v8917 = vld [vmem:[#allocation6 + $0xa0] sm:$0xf]
        %v8918 = vld [vmem:[#allocation6 + $0xa4] sm:$0xf]
        %v8919 = vld [vmem:[#allocation6 + $0xa8] sm:$0xf]
        %v8920 = vld [vmem:[#allocation6 + $0xac] sm:$0xf]
        %v8921 = vld [vmem:[#allocation6 + $0xb0] sm:$0xf]
        %v8922 = vld [vmem:[#allocation6 + $0xb4] sm:$0xf]
        %v8923 = vld [vmem:[#allocation6 + $0xb8] sm:$0xf]
        %v8924 = vld [vmem:[#allocation6 + $0xbc] sm:$0xf]
        %v8925 = vld [vmem:[#allocation6 + $0xc0] sm:$0xf]
        %v8926 = vld [vmem:[#allocation6 + $0xc4] sm:$0xf]
        %v8927 = vld [vmem:[#allocation6 + $0xc8] sm:$0xf]
        %v8928 = vld [vmem:[#allocation6 + $0xcc] sm:$0xf]
        %v8929 = vld [vmem:[#allocation6 + $0xd0] sm:$0xf]
        %v8930 = vld [vmem:[#allocation6 + $0xd4] sm:$0xf]
        %v8931 = vld [vmem:[#allocation6 + $0xd8] sm:$0xf]
        %v8932 = vld [vmem:[#allocation6 + $0xdc] sm:$0xf]
        %v8933 = vld [vmem:[#allocation6 + $0xe0] sm:$0xf]
        %v8934 = vld [vmem:[#allocation6 + $0xe4] sm:$0xf]
        %v8935 = vld [vmem:[#allocation6 + $0xe8] sm:$0xf]
        %v8936 = vld [vmem:[#allocation6 + $0xec] sm:$0xf]
        %v8937 = vld [vmem:[#allocation6 + $0xf0] sm:$0xf]
        %v8938 = vld [vmem:[#allocation6 + $0xf4] sm:$0xf]
        %v8939 = vld [vmem:[#allocation6 + $0xf8] sm:$0xf]
        %v8940 = vld [vmem:[#allocation6 + $0xfc] sm:$0xf]
        %v8941 = vld [vmem:[#allocation6 + $0x100] sm:$0xf]
        %v8942 = vld [vmem:[#allocation6 + $0x104] sm:$0xf]
        %v8943 = vld [vmem:[#allocation6 + $0x108] sm:$0xf]
        %v8944 = vld [vmem:[#allocation6 + $0x10c] sm:$0xf]
        %v8945 = vld [vmem:[#allocation6 + $0x110] sm:$0xf]
        %v8946 = vld [vmem:[#allocation6 + $0x114] sm:$0xf]
        %v8947 = vld [vmem:[#allocation6 + $0x118] sm:$0xf]
        %v8948 = vld [vmem:[#allocation6 + $0x11c] sm:$0xf]
        %v8949 = vld [vmem:[%s14] sm:$0xff]
        %v8950 = vld [vmem:[%s14 + $0x8] sm:$0xff]
        %v8951 = vld [vmem:[%s14 + $0x10] sm:$0xff]
        %v8952 = vld [vmem:[%s14 + $0x18] sm:$0xff]
        %8954 = vset.pattern.permute.xlu0 0
        %8955 = vperm.xlu0 %8954, %v8949
        %v8956 = vpop.permute.xlu0 %8955
        %8959 = vset.pattern.permute.xlu0 0
        %8960 = vperm.xlu0 %8959, %v8950
        %v8961 = vpop.permute.xlu0 %8960
        %8964 = vset.pattern.permute.xlu0 0
        %8965 = vperm.xlu0 %8964, %v8951
        %v8966 = vpop.permute.xlu0 %8965
        %8969 = vset.pattern.permute.xlu0 0
        %8970 = vperm.xlu0 %8969, %v8952
        %v8971 = vpop.permute.xlu0 %8970
        %v8985 = vunpack.c.l.b16 %v8865
        %v8986 = vunpack.c.h.b16 %v8865
        %v8987 = vunpack.c.l.b16 %v8866
        %v8988 = vunpack.c.h.b16 %v8866
        %v8989 = vunpack.c.l.b16 %v8867
        %v8990 = vunpack.c.l.b16 %v8868
        %v8991 = vunpack.c.h.b16 %v8868
        %v8992 = vunpack.c.l.b16 %v8869
        %v8993 = vunpack.c.h.b16 %v8869
        %v8994 = vunpack.c.l.b16 %v8870
        %v8995 = vunpack.c.l.b16 %v8871
        %v8996 = vunpack.c.h.b16 %v8871
        %v8997 = vunpack.c.l.b16 %v8872
        %v8998 = vunpack.c.h.b16 %v8872
        %v8999 = vunpack.c.l.b16 %v8873
        %v9000 = vunpack.c.l.b16 %v8874
        %v9001 = vunpack.c.h.b16 %v8874
        %v9002 = vunpack.c.l.b16 %v8875
        %v9003 = vunpack.c.h.b16 %v8875
        %v9004 = vunpack.c.l.b16 %v8876
        %v9005 = vpack.c.b16 %v8990, %v8985
        %v9006 = vpack.c.b16 %v8991, %v8986
        %v9007 = vpack.c.b16 %v8992, %v8987
        %v9008 = vpack.c.b16 %v8993, %v8988
        %v9009 = vpack.c.b16 %v8994, %v8989
        %v9010 = vpack.c.b16 %v9000, %v8995
        %v9011 = vpack.c.b16 %v9001, %v8996
        %v9012 = vpack.c.b16 %v9002, %v8997
        %v9013 = vpack.c.b16 %v9003, %v8998
        %v9014 = vpack.c.b16 %v9004, %v8999
        %v9095 = vunpack.c.l.b16 %v8877
        %v9096 = vunpack.c.l.b16 %v8878
        %v9097 = vunpack.c.l.b16 %v8879
        %v9098 = vunpack.c.l.b16 %v8880
        %v9099 = vunpack.c.l.b16 %v8881
        %v9100 = vunpack.c.l.b16 %v8882
        %v9101 = vunpack.c.l.b16 %v8883
        %v9102 = vunpack.c.l.b16 %v8884
        %v9103 = vunpack.c.l.b16 %v8885
        %v9104 = vunpack.c.l.b16 %v8886
        %v9105 = vunpack.c.l.b16 %v8887
        %v9106 = vunpack.c.l.b16 %v8888
        %v9107 = vunpack.c.l.b16 %v8889
        %v9108 = vunpack.c.l.b16 %v8890
        %v9109 = vunpack.c.l.b16 %v8891
        %v9110 = vunpack.c.l.b16 %v8892
        %v9111 = vunpack.c.l.b16 %v8893
        %v9112 = vunpack.c.l.b16 %v8894
        %v9113 = vunpack.c.l.b16 %v8895
        %v9114 = vunpack.c.l.b16 %v8896
        %v9115 = vunpack.c.l.b16 %v8897
        %v9116 = vunpack.c.l.b16 %v8898
        %v9117 = vunpack.c.l.b16 %v8899
        %v9118 = vunpack.c.l.b16 %v8900
        %v9119 = vunpack.c.l.b16 %v8901
        %v9120 = vunpack.c.l.b16 %v8902
        %v9121 = vunpack.c.l.b16 %v8903
        %v9122 = vunpack.c.l.b16 %v8904
        %v9123 = vunpack.c.l.b16 %v8905
        %v9124 = vunpack.c.l.b16 %v8906
        %v9125 = vunpack.c.l.b16 %v8907
        %v9126 = vunpack.c.l.b16 %v8908
        %v9127 = vunpack.c.l.b16 %v8909
        %v9128 = vunpack.c.l.b16 %v8910
        %v9129 = vunpack.c.l.b16 %v8911
        %v9130 = vunpack.c.l.b16 %v8912
        %v9131 = vunpack.c.l.b16 %v8913
        %v9132 = vunpack.c.l.b16 %v8914
        %v9133 = vunpack.c.l.b16 %v8915
        %v9134 = vunpack.c.l.b16 %v8916
        %v9135 = vunpack.c.l.b16 %v8917
        %v9136 = vunpack.c.l.b16 %v8918
        %v9137 = vunpack.c.l.b16 %v8919
        %v9138 = vunpack.c.l.b16 %v8920
        %v9139 = vunpack.c.l.b16 %v8921
        %v9140 = vunpack.c.l.b16 %v8922
        %v9141 = vunpack.c.l.b16 %v8923
        %v9142 = vunpack.c.l.b16 %v8924
        %v9143 = vunpack.c.l.b16 %v8925
        %v9144 = vunpack.c.l.b16 %v8926
        %v9145 = vunpack.c.l.b16 %v8927
        %v9146 = vunpack.c.l.b16 %v8928
        %v9147 = vunpack.c.l.b16 %v8929
        %v9148 = vunpack.c.l.b16 %v8930
        %v9149 = vunpack.c.l.b16 %v8931
        %v9150 = vunpack.c.l.b16 %v8932
        %v9151 = vunpack.c.l.b16 %v8933
        %v9152 = vunpack.c.l.b16 %v8934
        %v9153 = vunpack.c.l.b16 %v8935
        %v9154 = vunpack.c.l.b16 %v8936
        %v9155 = vunpack.c.l.b16 %v8937
        %v9156 = vunpack.c.l.b16 %v8938
        %v9157 = vunpack.c.l.b16 %v8939
        %v9158 = vunpack.c.l.b16 %v8940
        %v9159 = vunpack.c.l.b16 %v8941
        %v9160 = vunpack.c.l.b16 %v8942
        %v9161 = vunpack.c.l.b16 %v8943
        %v9162 = vunpack.c.l.b16 %v8944
        %v9163 = vunpack.c.l.b16 %v8945
        %v9164 = vunpack.c.l.b16 %v8946
        %v9165 = vunpack.c.l.b16 %v8947
        %v9166 = vunpack.c.l.b16 %v8948
        %v9167 = vpack.c.b16 %v9096, %v9095
        %v9168 = vpack.c.b16 %v9098, %v9097
        %v9169 = vpack.c.b16 %v9100, %v9099
        %v9170 = vpack.c.b16 %v9102, %v9101
        %v9171 = vpack.c.b16 %v9104, %v9103
        %v9172 = vpack.c.b16 %v9106, %v9105
        %v9173 = vpack.c.b16 %v9108, %v9107
        %v9174 = vpack.c.b16 %v9110, %v9109
        %v9175 = vpack.c.b16 %v9112, %v9111
        %v9176 = vpack.c.b16 %v9114, %v9113
        %v9177 = vpack.c.b16 %v9116, %v9115
        %v9178 = vpack.c.b16 %v9118, %v9117
        %v9179 = vpack.c.b16 %v9120, %v9119
        %v9180 = vpack.c.b16 %v9122, %v9121
        %v9181 = vpack.c.b16 %v9124, %v9123
        %v9182 = vpack.c.b16 %v9126, %v9125
        %v9183 = vpack.c.b16 %v9128, %v9127
        %v9184 = vpack.c.b16 %v9130, %v9129
        %v9185 = vpack.c.b16 %v9132, %v9131
        %v9186 = vpack.c.b16 %v9134, %v9133
        %v9187 = vpack.c.b16 %v9136, %v9135
        %v9188 = vpack.c.b16 %v9138, %v9137
        %v9189 = vpack.c.b16 %v9140, %v9139
        %v9190 = vpack.c.b16 %v9142, %v9141
        %v9191 = vpack.c.b16 %v9144, %v9143
        %v9192 = vpack.c.b16 %v9146, %v9145
        %v9193 = vpack.c.b16 %v9148, %v9147
        %v9194 = vpack.c.b16 %v9150, %v9149
        %v9195 = vpack.c.b16 %v9152, %v9151
        %v9196 = vpack.c.b16 %v9154, %v9153
        %v9197 = vpack.c.b16 %v9156, %v9155
        %v9198 = vpack.c.b16 %v9158, %v9157
        %v9199 = vpack.c.b16 %v9160, %v9159
        %v9200 = vpack.c.b16 %v9162, %v9161
        %v9201 = vpack.c.b16 %v9164, %v9163
        %v9202 = vpack.c.b16 %v9166, %v9165
        %v9240 = vsel %vm2576, %v9009, 0
        %v9243 = vsel %vm2576, %v9014, 0
        %9245 = vmatpush.bf16.msra.mxu0 %v9174
        %9246 = vmatpush.bf16.msra.mxu0 %v9173
        %9247 = vmatpush.bf16.msra.mxu0 %v9172
        %9248 = vmatpush.bf16.msra.mxu0 %v9171
        %9249 = vmatpush.bf16.msra.mxu0 %v9170
        %9250 = vmatpush.bf16.msra.mxu0 %v9169
        %9251 = vmatpush.bf16.msra.mxu0 %v9168
        %9252 = vmatpush.bf16.msra.mxu0 %v9167
        %9253 = vmatmul.bf16.gmra.mxu0 %v9005
        %v9254 = vpop.f32.mrf.mxu0
        %v9255 = vadd.f32 %v8956, %v9254
        %v9256 = vpop.f32.mrf.mxu0
        %v9257 = vadd.f32 %v8961, %v9256
        %9258 = vmatmul.bf16.gmra.mxu0 %v9010
        %v9259 = vpop.f32.mrf.mxu0
        %v9260 = vadd.f32 %v8966, %v9259
        %v9261 = vpop.f32.mrf.mxu0
        %v9262 = vadd.f32 %v8971, %v9261
        %9263 = vdwg.mxu0
        %9264 = vmatpush.bf16.msra.mxu0 %v9182
        %9265 = vmatpush.bf16.msra.mxu0 %v9181
        %9266 = vmatpush.bf16.msra.mxu0 %v9180
        %9267 = vmatpush.bf16.msra.mxu0 %v9179
        %9268 = vmatpush.bf16.msra.mxu0 %v9178
        %9269 = vmatpush.bf16.msra.mxu0 %v9177
        %9270 = vmatpush.bf16.msra.mxu0 %v9176
        %9271 = vmatpush.bf16.msra.mxu0 %v9175
        %9272 = vmatmul.bf16.gmra.mxu0 %v9006
        %v9273 = vpop.f32.mrf.mxu0
        %v9274 = vadd.f32 %v9255, %v9273
        %v9275 = vpop.f32.mrf.mxu0
        %v9276 = vadd.f32 %v9257, %v9275
        %9277 = vmatmul.bf16.gmra.mxu0 %v9011
        %v9278 = vpop.f32.mrf.mxu0
        %v9279 = vadd.f32 %v9260, %v9278
        %v9280 = vpop.f32.mrf.mxu0
        %v9281 = vadd.f32 %v9262, %v9280
        %9282 = vdwg.mxu0
        %9283 = vmatpush.bf16.msra.mxu0 %v9190
        %9284 = vmatpush.bf16.msra.mxu0 %v9189
        %9285 = vmatpush.bf16.msra.mxu0 %v9188
        %9286 = vmatpush.bf16.msra.mxu0 %v9187
        %9287 = vmatpush.bf16.msra.mxu0 %v9186
        %9288 = vmatpush.bf16.msra.mxu0 %v9185
        %9289 = vmatpush.bf16.msra.mxu0 %v9184
        %9290 = vmatpush.bf16.msra.mxu0 %v9183
        %9291 = vmatmul.bf16.gmra.mxu0 %v9007
        %v9292 = vpop.f32.mrf.mxu0
        %v9293 = vadd.f32 %v9274, %v9292
        %v9294 = vpop.f32.mrf.mxu0
        %v9295 = vadd.f32 %v9276, %v9294
        %9296 = vmatmul.bf16.gmra.mxu0 %v9012
        %v9297 = vpop.f32.mrf.mxu0
        %v9298 = vadd.f32 %v9279, %v9297
        %v9299 = vpop.f32.mrf.mxu0
        %v9300 = vadd.f32 %v9281, %v9299
        %9301 = vdwg.mxu0
        %9302 = vmatpush.bf16.msra.mxu0 %v9198
        %9303 = vmatpush.bf16.msra.mxu0 %v9197
        %9304 = vmatpush.bf16.msra.mxu0 %v9196
        %9305 = vmatpush.bf16.msra.mxu0 %v9195
        %9306 = vmatpush.bf16.msra.mxu0 %v9194
        %9307 = vmatpush.bf16.msra.mxu0 %v9193
        %9308 = vmatpush.bf16.msra.mxu0 %v9192
        %9309 = vmatpush.bf16.msra.mxu0 %v9191
        %9310 = vmatmul.bf16.gmra.mxu0 %v9008
        %v9311 = vpop.f32.mrf.mxu0
        %v9312 = vadd.f32 %v9293, %v9311
        %v9313 = vpop.f32.mrf.mxu0
        %v9314 = vadd.f32 %v9295, %v9313
        %9315 = vmatmul.bf16.gmra.mxu0 %v9013
        %v9316 = vpop.f32.mrf.mxu0
        %v9317 = vadd.f32 %v9298, %v9316
        %v9318 = vpop.f32.mrf.mxu0
        %v9319 = vadd.f32 %v9300, %v9318
        %9320 = vdwg.mxu0
        %9321 = vmatpush.bf16.msra.mxu0 0
        %9322 = vmatpush.bf16.msra.mxu0 0
        %9323 = vmatpush.bf16.msra.mxu0 0
        %9324 = vmatpush.bf16.msra.mxu0 0
        %9325 = vmatpush.bf16.msra.mxu0 %v9202
        %9326 = vmatpush.bf16.msra.mxu0 %v9201
        %9327 = vmatpush.bf16.msra.mxu0 %v9200
        %9328 = vmatpush.bf16.msra.mxu0 %v9199
        %9329 = vmatmul.bf16.gmra.mxu0 %v9240
        %v9330 = vpop.f32.mrf.mxu0
        %v9331 = vadd.f32 %v9312, %v9330
        %v9332 = vpop.f32.mrf.mxu0
        %v9333 = vadd.f32 %v9314, %v9332
        %9334 = vmatmul.bf16.gmra.mxu0 %v9243
        %v9335 = vpop.f32.mrf.mxu0
        %v9336 = vadd.f32 %v9317, %v9335
        %v9337 = vpop.f32.mrf.mxu0
        %v9338 = vadd.f32 %v9319, %v9337
        %9339 = vdwg.mxu0
        %v9340 = vmax.f32 %v9331, 0.0
        %v9341 = vmax.f32 %v9333, 0.0
        %v9342 = vmax.f32 %v9336, 0.0
        %v9343 = vmax.f32 %v9338, 0.0
        %9344 = vst [vmem:[%s877] sm:$0xff] %v9340
        %9345 = vst [vmem:[%s877 + $0x8] sm:$0xff] %v9341
        %9346 = vst [vmem:[%s877 + $0x10] sm:$0xff] %v9342
        %9347 = vst [vmem:[%s877 + $0x18] sm:$0xff] %v9343
        %s9348 = sand.u32 %s399, 1
        %s9349 = scalar_lea.sflag [#allocation9], %s9348
        %s9350 = sand.u32 %s399, 1
        %s9351 = smul.addr %s9350, 48
        %s9352 = scalar_lea.vmem [#allocation22], %s9351
        %s9353 = sand.u32 %s51, 1
        %s9354 = scalar_lea.sflag [#allocation24], %s9353
        %s9355 = sand.u32 %s425, 1
        %s9356 = smul.addr %s9355, 64
        %s9357 = scalar_lea.vmem [#allocation23], %s9356
        %s9358 = sand.u32 %s51, 1
        %s9359 = scalar_lea.sflag [#allocation24], %s9358
        %s9360 = sand.u32 %s451, 1
        %s9361 = smul.addr %s9360, 96
        %s9362 = scalar_lea.vmem [#allocation25], %s9361
        %s9363 = sand.u32 %s51, 1
        %s9364 = scalar_lea.sflag [#allocation27], %s9363
        %s9365 = sand.u32 %s477, 1
        %s9366 = smul.addr %s9365, 64
        %s9367 = scalar_lea.vmem [#allocation26], %s9366
        %s9368 = sand.u32 %s51, 1
        %s9369 = scalar_lea.sflag [#allocation27], %s9368
        %s9370 = sand.u32 %s503, 1
        %s9371 = smul.addr %s9370, 32
        %s9372 = scalar_lea.vmem [#allocation28], %s9371
        // Predicated region
        $region117: #{tpu_custom_call.1} parent=79 // pred_check
          %p9373 = pneg %p409
        $region118: #{tpu_custom_call.1} parent=79 // pred_check_branch
          %9375 = sbr.rel (%p9373) target = $region120
        $region119: #{tpu_custom_call.1} parent=79 // pred_region
          %9377 = vsyncadd %s9349, 0
          %s9378 = smul.addr %s51, 6
          %s9379 = smul.addr %s9378, 8
          %s9380 = scalar_lea.hbm %s15, %s9379
          %s9381 = sshll.u32 %s9352, 4
          %s9382 = int_to_ptr.vmem [resolvable:$true] %s9381
          %s9383 = sshll.u32 %s9380, 4
          %s9384 = int_to_ptr.hbm [resolvable:$true] %s9383
          %9389 = dma.vmem_to_hbm [thread:$0]  %s9382, 768, %s9384, %s9349, 384, 384, 24
        $region120: #{tpu_custom_call.1} parent=79 // pred_fallthru
          _
        // Predicated region
        $region121: #{tpu_custom_call.1} parent=79 // pred_check
          %p9390 = pneg %p435
        $region122: #{tpu_custom_call.1} parent=79 // pred_check_branch
          %9392 = sbr.rel (%p9390) target = $region124
        $region123: #{tpu_custom_call.1} parent=79 // pred_region
          %9394 = vsyncadd %s9354, 0
          %s9395 = smul.addr %s51, 8
          %s9396 = smul.addr %s9395, 8
          %s9397 = scalar_lea.hbm %s16, %s9396
          %s9398 = sshll.u32 %s9357, 4
          %s9399 = int_to_ptr.vmem [resolvable:$true] %s9398
          %s9400 = sshll.u32 %s9397, 4
          %s9401 = int_to_ptr.hbm [resolvable:$true] %s9400
          %9406 = dma.vmem_to_hbm [thread:$0]  %s9399, 1024, %s9401, %s9354, 512, 512, 32
        $region124: #{tpu_custom_call.1} parent=79 // pred_fallthru
          _
        // Predicated region
        $region125: #{tpu_custom_call.1} parent=79 // pred_check
          %p9407 = pneg %p461
        $region126: #{tpu_custom_call.1} parent=79 // pred_check_branch
          %9409 = sbr.rel (%p9407) target = $region128
        $region127: #{tpu_custom_call.1} parent=79 // pred_region
          %9411 = vsyncadd %s9359, 0
          %s9412 = smul.addr %s51, 12
          %s9413 = smul.addr %s9412, 8
          %s9414 = scalar_lea.hbm %s17, %s9413
          %s9415 = sshll.u32 %s9362, 4
          %s9416 = int_to_ptr.vmem [resolvable:$true] %s9415
          %s9417 = sshll.u32 %s9414, 4
          %s9418 = int_to_ptr.hbm [resolvable:$true] %s9417
          %9423 = dma.vmem_to_hbm [thread:$0]  %s9416, 1536, %s9418, %s9359, 384, 384, 24
        $region128: #{tpu_custom_call.1} parent=79 // pred_fallthru
          _
        // Predicated region
        $region129: #{tpu_custom_call.1} parent=79 // pred_check
          %p9424 = pneg %p487
        $region130: #{tpu_custom_call.1} parent=79 // pred_check_branch
          %9426 = sbr.rel (%p9424) target = $region132
        $region131: #{tpu_custom_call.1} parent=79 // pred_region
          %9428 = vsyncadd %s9364, 0
          %s9429 = smul.addr %s51, 8
          %s9430 = smul.addr %s9429, 8
          %s9431 = scalar_lea.hbm %s18, %s9430
          %s9432 = sshll.u32 %s9367, 4
          %s9433 = int_to_ptr.vmem [resolvable:$true] %s9432
          %s9434 = sshll.u32 %s9431, 4
          %s9435 = int_to_ptr.hbm [resolvable:$true] %s9434
          %9440 = dma.vmem_to_hbm [thread:$0]  %s9433, 1024, %s9435, %s9364, 256, 256, 16
        $region132: #{tpu_custom_call.1} parent=79 // pred_fallthru
          _
        // Predicated region
        $region133: #{tpu_custom_call.1} parent=79 // pred_check
          %p9441 = pneg %p513
        $region134: #{tpu_custom_call.1} parent=79 // pred_check_branch
          %9443 = sbr.rel (%p9441) target = $region136
        $region135: #{tpu_custom_call.1} parent=79 // pred_region
          %9445 = vsyncadd %s9369, 0
          %s9446 = smul.addr %s51, 4
          %s9447 = smul.addr %s9446, 8
          %s9448 = scalar_lea.hbm %s19, %s9447
          %s9449 = sshll.u32 %s9372, 4
          %s9450 = int_to_ptr.vmem [resolvable:$true] %s9449
          %s9451 = sshll.u32 %s9448, 4
          %s9452 = int_to_ptr.hbm [resolvable:$true] %s9451
          %9457 = dma.vmem_to_hbm [thread:$0]  %s9450, 512, %s9452, %s9369, 128, 128, 8
        $region136: #{tpu_custom_call.1} parent=79 // pred_fallthru
          _
      $region80: #{tpu_custom_call.1} parent=5 // pred_fallthru
        _
      %p9458 = scmp.le.s32.totalorder 2, %s46
      // Predicated region
      $region137: #{tpu_custom_call.1} parent=5 // pred_check
        %p9459 = pneg %p9458
      $region138: #{tpu_custom_call.1} parent=5 // pred_check_branch
        %9461 = sbr.rel (%p9459) target = $region140
      $region139: #{tpu_custom_call.1} parent=5 // pred_region
        %s9462 = ssub.s32 %s46, 2
        // Predicated region
        $region141: #{tpu_custom_call.1} parent=139 // pred_check
          %p9463 = pneg %p415
        $region142: #{tpu_custom_call.1} parent=139 // pred_check_branch
          %9465 = sbr.rel (%p9463) target = $region144
        $region143: #{tpu_custom_call.1} parent=139 // pred_region
          %s9466 = sand.u32 %s400, 1
          %s9467 = scalar_lea.sflag [#allocation9], %s9466
          %s9468 = sand.u32 %s400, 1
          %s9469 = smul.addr %s9468, 48
          %s9470 = scalar_lea.vmem [#allocation22], %s9469
          %9472 = dma.done %s9467, 768
        $region144: #{tpu_custom_call.1} parent=139 // pred_fallthru
          _
        // Predicated region
        $region145: #{tpu_custom_call.1} parent=139 // pred_check
          %p9473 = pneg %p441
        $region146: #{tpu_custom_call.1} parent=139 // pred_check_branch
          %9475 = sbr.rel (%p9473) target = $region148
        $region147: #{tpu_custom_call.1} parent=139 // pred_region
          %s9476 = sand.u32 %s52, 1
          %s9477 = scalar_lea.sflag [#allocation24], %s9476
          %s9478 = sand.u32 %s426, 1
          %s9479 = smul.addr %s9478, 64
          %s9480 = scalar_lea.vmem [#allocation23], %s9479
          %9482 = dma.done %s9477, 1024
        $region148: #{tpu_custom_call.1} parent=139 // pred_fallthru
          _
        // Predicated region
        $region149: #{tpu_custom_call.1} parent=139 // pred_check
          %p9483 = pneg %p467
        $region150: #{tpu_custom_call.1} parent=139 // pred_check_branch
          %9485 = sbr.rel (%p9483) target = $region152
        $region151: #{tpu_custom_call.1} parent=139 // pred_region
          %s9486 = sand.u32 %s52, 1
          %s9487 = scalar_lea.sflag [#allocation24], %s9486
          %s9488 = sand.u32 %s452, 1
          %s9489 = smul.addr %s9488, 96
          %s9490 = scalar_lea.vmem [#allocation25], %s9489
          %9492 = dma.done %s9487, 1536
        $region152: #{tpu_custom_call.1} parent=139 // pred_fallthru
          _
        // Predicated region
        $region153: #{tpu_custom_call.1} parent=139 // pred_check
          %p9493 = pneg %p493
        $region154: #{tpu_custom_call.1} parent=139 // pred_check_branch
          %9495 = sbr.rel (%p9493) target = $region156
        $region155: #{tpu_custom_call.1} parent=139 // pred_region
          %s9496 = sand.u32 %s52, 1
          %s9497 = scalar_lea.sflag [#allocation27], %s9496
          %s9498 = sand.u32 %s478, 1
          %s9499 = smul.addr %s9498, 64
          %s9500 = scalar_lea.vmem [#allocation26], %s9499
          %9502 = dma.done %s9497, 1024
        $region156: #{tpu_custom_call.1} parent=139 // pred_fallthru
          _
        // Predicated region
        $region157: #{tpu_custom_call.1} parent=139 // pred_check
          %p9503 = pneg %p519
        $region158: #{tpu_custom_call.1} parent=139 // pred_check_branch
          %9505 = sbr.rel (%p9503) target = $region160
        $region159: #{tpu_custom_call.1} parent=139 // pred_region
          %s9506 = sand.u32 %s52, 1
          %s9507 = scalar_lea.sflag [#allocation27], %s9506
          %s9508 = sand.u32 %s504, 1
          %s9509 = smul.addr %s9508, 32
          %s9510 = scalar_lea.vmem [#allocation28], %s9509
          %9512 = dma.done %s9507, 512
        $region160: #{tpu_custom_call.1} parent=139 // pred_fallthru
          _
      $region140: #{tpu_custom_call.1} parent=5 // pred_fallthru
        _
    $region6: #{tpu_custom_call.1} parent=1 // loop_footer
      %s50 = sadd.s32 1, %s46
    $region7: #{tpu_custom_call.1} parent=1 // loop_footer_branch
      %45 = sbr.rel target = $region3
    $region8: #{tpu_custom_call.1} parent=1 // loop_exit
      _
    %9513 = vsyncpa [#allocation8], 1
    %s9514 = scalar_lea.sflag [#allocation8], 1
    %9515 = vsyncpa %s9514, 1
    %9516 = vsyncpa [#allocation11], 1
    %s9517 = scalar_lea.sflag [#allocation11], 1
    %9518 = vsyncpa %s9517, 1
    %9519 = vsyncpa [#allocation14], 1
    %s9520 = scalar_lea.sflag [#allocation14], 1
    %9521 = vsyncpa %s9520, 1
    %9522 = vsyncpa [#allocation17], 1
    %9523 = vsyncpa [#allocation20], 1
    %9524 = vsyncpa [#allocation9], 1
    %s9525 = scalar_lea.sflag [#allocation9], 1
    %9526 = vsyncpa %s9525, 1
    %9527 = vsyncpa [#allocation24], 1
    %s9528 = scalar_lea.sflag [#allocation24], 1
    %9529 = vsyncpa %s9528, 1
    %9530 = vsyncpa [#allocation27], 1
    %s9531 = scalar_lea.sflag [#allocation27], 1
    %9532 = vsyncpa %s9531, 1

</llo_original>
